<compile_context>
chip_gen: v5e
topology: v5e:2x2
jax: 0.10.0
libtpu: 0.0.40
codegen_flags: <defaults>
</compile_context>

<pallas_src>
import functools

import jax
import jax.numpy as jnp
from jax.experimental import pallas as pl
from jax.experimental.pallas import tpu as pltpu

BN_EPS = 1e-5
LANE = 128


def _round_up(x, m):
    return (x + m - 1) // m * m


def _pick_h_tile(H, W, target_rows=512):
    """Largest divisor of H with tile*W <= ~target_rows, preferring tile*W % 8 == 0."""
    target = max(1, target_rows // max(W, 1))
    best = None
    for c in range(min(H, target), 0, -1):
        if H % c == 0:
            if best is None:
                best = c
            if (c * W) % 8 == 0:
                return c
    return best if best is not None else H


def _pick_row_tile(rows, target):
    """Largest divisor of `rows` that is a multiple of 8 and <= target, else rows."""
    c = (min(rows, target) // 8) * 8
    while c >= 8:
        if rows % c == 0:
            return c
        c -= 8
    return rows  # block dim == full array dim is always legal


def _vmem_limit(footprint_bytes):
    """Scoped-VMEM request sized from the actual chip, with headroom."""
    cap = 0
    try:
        cap = int(getattr(pltpu.get_tpu_info(), "vmem_capacity_bytes", 0) or 0)
    except Exception:
        cap = 0
    if cap <= 0:
        cap = 64 << 20
    cap = int(cap * 0.85)  # leave headroom for compiler-internal scratch
    return int(min(cap, max(3 * footprint_bytes, 16 << 20)))


# --------------------------------------------------------------------------- #
# Kernel 1: fused [prev-layer BN+ReLU] -> 3x3 conv (9 accumulating MXU dots)   #
#           + per-channel sum / sumsq statistics of the conv output.           #
# --------------------------------------------------------------------------- #
def _conv_stats_kernel(x_ref, scale_ref, shift_ref, w_ref, y_ref, stats_ref,
                       xp_ref, *, apply_input_act):
    # x_ref:     (1, H, W, Cp)   bf16 raw pre-activation (resident across h)
    # scale_ref: (1, Cp)         f32 BN scale of the *previous* layer
    # shift_ref: (1, Cp)         f32 BN shift of the *previous* layer
    # w_ref:     (9, Cp, Cop)    bf16 per-tap weight slabs
    # y_ref:     (1, TH, W, Cop) bf16 conv output tile (pre-BN)
    # stats_ref: (1, 2, Cop)     f32 per-image [sum, sumsq], revisited over h
    # xp_ref:    (H+2, W+2, Cp)  bf16 scratch: zero-padded, activated input
    h = pl.program_id(1)
    _, H, W, Cp = x_ref.shape
    _, TH, _, Cop = y_ref.shape

    @pl.when(h == 0)
    def _init():
        # Zero only the 1-pixel halo ring; the interior is overwritten below.
        z_row = jnp.zeros((1, W + 2, Cp), xp_ref.dtype)
        z_col = jnp.zeros((H, 1, Cp), xp_ref.dtype)
        xp_ref[pl.ds(0, 1), :, :] = z_row
        xp_ref[pl.ds(H + 1, 1), :, :] = z_row
        xp_ref[pl.ds(1, H), pl.ds(0, 1), :] = z_col
        xp_ref[pl.ds(1, H), pl.ds(W + 1, 1), :] = z_col

        xin = x_ref[0]                                          # (H, W, Cp)
        if apply_input_act:
            # Fused BatchNorm affine + ReLU of the previous layer.
            a = xin.astype(jnp.float32) * scale_ref[...] + shift_ref[...]
            xin = jnp.maximum(a, 0.0)
        xp_ref[pl.ds(1, H), pl.ds(1, W), :] = xin.astype(xp_ref.dtype)

        stats_ref[...] = jnp.zeros(stats_ref.shape, stats_ref.dtype)

    # 3x3 conv = 9 accumulating MXU dots on shifted views (no im2col staging).
    r0 = h * TH
    acc = None
    for dh in range(3):
        for dw in range(3):
            src = xp_ref[pl.ds(r0 + dh, TH), pl.ds(dw, W), :]   # (TH, W, Cp)
            lhs = src.reshape(TH * W, Cp)
            d = jnp.dot(lhs, w_ref[dh * 3 + dw],
                        preferred_element_type=jnp.float32)     # (TH*W, Cop)
            acc = d if acc is None else acc + d

    # Conv output stored as bf16; statistics taken from the f32 accumulator.
    y_ref[...] = acc.reshape(1, TH, W, Cop).astype(y_ref.dtype)
    stats_ref[0, 0:1, :] = stats_ref[0, 0:1, :] + jnp.sum(
        acc, axis=0, keepdims=True)
    stats_ref[0, 1:2, :] = stats_ref[0, 1:2, :] + jnp.sum(
        acc * acc, axis=0, keepdims=True)


# --------------------------------------------------------------------------- #
# Kernel 2: final BatchNorm affine + ReLU epilogue (lane-dense).               #
# --------------------------------------------------------------------------- #
def _bn_relu_kernel(y_ref, scale_ref, shift_ref, o_ref):
    y = y_ref[...].astype(jnp.float32)
    o_ref[...] = jnp.maximum(y * scale_ref[...] + shift_ref[...], 0.0)


def _conv_stats(x, scale_prev, shift_prev, w_taps, th, apply_input_act):
    N, H, W, Cp = x.shape
    Cop = w_taps.shape[2]
    n_hb = H // th
    footprint = (2 * H * W * Cp * 2            # input image, double-buffered (bf16)
                 + 2 * 9 * Cp * Cop * 2        # weights (bf16)
                 + 2 * th * W * Cop * 2        # output tile (bf16)
                 + 2 * 2 * Cop * 4             # stats
                 + 2 * 2 * Cp * 4              # scale / shift
                 + (H + 2) * (W + 2) * Cp * 2  # padded-image scratch (bf16)
                 + th * W * Cop * 4)           # f32 accumulator
    kernel = functools.partial(_conv_stats_kernel,
                               apply_input_act=apply_input_act)
    return pl.pallas_call(
        kernel,
        out_shape=(jax.ShapeDtypeStruct((N, H, W, Cop), jnp.bfloat16),
                   jax.ShapeDtypeStruct((N, 2, Cop), jnp.float32)),
        grid_spec=pltpu.PrefetchScalarGridSpec(
            num_scalar_prefetch=0,
            grid=(N, n_hb),
            in_specs=[
                pl.BlockSpec((1, H, W, Cp), lambda n, h: (n, 0, 0, 0)),
                pl.BlockSpec((1, Cp), lambda n, h: (0, 0)),
                pl.BlockSpec((1, Cp), lambda n, h: (0, 0)),
                pl.BlockSpec((9, Cp, Cop), lambda n, h: (0, 0, 0)),
            ],
            out_specs=[
                pl.BlockSpec((1, th, W, Cop), lambda n, h: (n, h, 0, 0)),
                pl.BlockSpec((1, 2, Cop), lambda n, h: (n, 0, 0)),
            ],
            scratch_shapes=[
                pltpu.VMEM((H + 2, W + 2, Cp), jnp.bfloat16),
            ]),
        compiler_params=pltpu.CompilerParams(
            dimension_semantics=("parallel", "arbitrary"),
            vmem_limit_bytes=_vmem_limit(footprint)),
    )(x, scale_prev, shift_prev, w_taps)


def _bn_relu(y, scale, shift, tr):
    rows, Cp = y.shape
    footprint = 2 * tr * Cp * 2 + 2 * tr * Cp * 4 + 8 * Cp * 4
    return pl.pallas_call(
        _bn_relu_kernel,
        out_shape=jax.ShapeDtypeStruct((rows, Cp), jnp.float32),
        grid_spec=pltpu.PrefetchScalarGridSpec(
            num_scalar_prefetch=0,
            grid=(rows // tr,),
            in_specs=[
                pl.BlockSpec((tr, Cp), lambda r: (r, 0)),
                pl.BlockSpec((1, Cp), lambda r: (0, 0)),
                pl.BlockSpec((1, Cp), lambda r: (0, 0)),
            ],
            out_specs=pl.BlockSpec((tr, Cp), lambda r: (r, 0))),
        compiler_params=pltpu.CompilerParams(
            dimension_semantics=("parallel",),
            vmem_limit_bytes=_vmem_limit(footprint)),
    )(y, scale, shift)


def _finalize_bn(stats, gamma_p, beta_p, count):
    # Training-mode BatchNorm: biased variance over (N, H, W), in f32.
    # TODO(synk): switch to shifted / Welford-style partial sums for very large
    # N*H*W counts where E[x^2]-mean^2 could lose precision.
    tot = jnp.sum(stats, axis=0)                 # (2, Cop)
    mean = tot[0] / count
    var = jnp.maximum(tot[1] / count - mean * mean, 0.0)
    scale = gamma_p * jax.lax.rsqrt(var + BN_EPS)             # (1, Cop)
    shift = beta_p - mean * scale                             # (1, Cop)
    return scale, shift


def tripple_conv(x_nchw, params):
    """params: list of 3 tuples (w_hwio (3,3,Cin,Cout), gamma (Cout,), beta (Cout,))."""
    x = jnp.transpose(x_nchw, (0, 2, 3, 1))                   # NCHW -> NHWC
    N, H, W, c = x.shape
    cp = _round_up(c, LANE)
    x = jnp.pad(x, ((0, 0), (0, 0), (0, 0), (0, cp - c))).astype(jnp.bfloat16)

    scale = jnp.zeros((1, cp), jnp.float32)      # unused for the first layer
    shift = jnp.zeros((1, cp), jnp.float32)
    y = x
    cop = cp
    for li, (wt, g, b) in enumerate(params):
        cin, cout = wt.shape[2], wt.shape[3]
        assert cin == c
        cop = _round_up(cout, LANE)
        # Zero-pad weight to (3,3,cp,cop); per-tap (9, cp, cop) bf16 slabs.
        w_p = jnp.zeros((3, 3, cp, cop), jnp.float32).at[:, :, :cin, :cout].set(wt)
        w_taps = w_p.reshape(9, cp, cop).astype(jnp.bfloat16)
        # gamma/beta padded with 0 so padded channels stay exactly 0 through BN+ReLU.
        g_p = jnp.zeros((1, cop), jnp.float32).at[0, :cout].set(g)
        b_p = jnp.zeros((1, cop), jnp.float32).at[0, :cout].set(b)

        th = _pick_h_tile(H, W, target_rows=512)
        # Conv of this layer with the *previous* layer's BN+ReLU fused at the
        # padded-input build stage (no separate activation pass in HBM).
        y, stats = _conv_stats(x, scale, shift, w_taps, th,
                               apply_input_act=(li > 0))
        scale, shift = _finalize_bn(stats, g_p, b_p, float(N * H * W))

        x = y                                    # bf16 raw conv output
        c, cp = cout, cop

    # Final BN + ReLU epilogue (only remaining standalone activation pass).
    rows = N * H * W
    tr = _pick_row_tile(rows, 4096)
    out = _bn_relu(y.reshape(rows, cop), scale, shift, tr).reshape(N, H, W, cop)
    out = out[..., :c]
    return jnp.transpose(out, (0, 3, 1, 2))      # NHWC -> NCHW


def _reference(x_nchw, params):
    # Pure-JAX (XLA, f32) reference for the correctness check.
    x = jnp.transpose(x_nchw, (0, 2, 3, 1))
    for (wt, g, b) in params:
        y = jax.lax.conv_general_dilated(
            x, wt, window_strides=(1, 1), padding=((1, 1), (1, 1)),
            dimension_numbers=("NHWC", "HWIO", "NHWC"))
        mean = jnp.mean(y, axis=(0, 1, 2), keepdims=True)
        var = jnp.mean((y - mean) ** 2, axis=(0, 1, 2), keepdims=True)
        y = (y - mean) * jax.lax.rsqrt(var + BN_EPS) * g + b
        x = jnp.maximum(y, 0.0)
    return jnp.transpose(x, (0, 3, 1, 2))


if __name__ == "__main__":
    N, Cin, Cout, H, W = 2, 4, 8, 16, 16
    key = jax.random.PRNGKey(0)
    k1, k2, k3, kx = jax.random.split(key, 4)

    def make_layer(k, cin, cout):
        wt = jax.random.normal(k, (3, 3, cin, cout), jnp.float32) * 0.1
        g = jnp.ones((cout,), jnp.float32)    # BatchNorm2d default weight
        b = jnp.zeros((cout,), jnp.float32)   # BatchNorm2d default bias
        return (wt, g, b)

    params = [make_layer(k1, Cin, Cout),
              make_layer(k2, Cout, Cout),
              make_layer(k3, Cout, Cout)]
    x = jax.random.normal(kx, (N, Cin, H, W), jnp.float32)

    out = jax.block_until_ready(jax.jit(tripple_conv)(x, params))
    ref = jax.block_until_ready(_reference(x, params))
    assert out.shape == (N, Cout, H, W)
    # Tolerance sized for bf16 MXU operands + bf16 inter-layer activations
    # (f32 accumulation and f32 BN statistics) over 3 layers.
    max_err = float(jnp.max(jnp.abs(out - ref)))
    assert jnp.allclose(out, ref, atol=5e-2, rtol=5e-2), max_err
    print("KERNEL_OK")
</pallas_src>

<mosaic_0001>
module attributes {stable_mosaic.version = 11 : i64} {
  func.func @_conv_stats_kernel(%arg0: i32, %arg1: i32, %arg2: memref<1x16x16x128xbf16, #tpu.memory_space<vmem>>, %arg3: memref<1x128xf32, #tpu.memory_space<vmem>>, %arg4: memref<1x128xf32, #tpu.memory_space<vmem>>, %arg5: memref<9x128x128xbf16, #tpu.memory_space<vmem>>, %arg6: memref<1x16x16x128xbf16, #tpu.memory_space<vmem>>, %arg7: memref<1x2x128xf32, #tpu.memory_space<vmem>>, %arg8: memref<18x18x128xbf16, #tpu.memory_space<vmem>>) attributes {dimension_semantics = [#tpu.dimension_semantics<parallel>, #tpu.dimension_semantics<arbitrary>], iteration_bounds = array<i64: 2, 1>, scalar_prefetch = 0 : i64, scratch_operands = 1 : i64, tpu.core_type = #tpu.core_type<tc>, window_params = [{transform_indices = @transform_0, window_bounds = array<i64: 1, 16, 16, 128>}, {pipeline_mode = #tpu.pipeline_mode<synchronous>, transform_indices = @transform_1, window_bounds = array<i64: 1, 128>}, {pipeline_mode = #tpu.pipeline_mode<synchronous>, transform_indices = @transform_2, window_bounds = array<i64: 1, 128>}, {pipeline_mode = #tpu.pipeline_mode<synchronous>, transform_indices = @transform_3, window_bounds = array<i64: 9, 128, 128>}, {transform_indices = @transform_4, window_bounds = array<i64: 1, 16, 16, 128>}, {transform_indices = @transform_5, window_bounds = array<i64: 1, 2, 128>}]} {
    %c0_i32 = arith.constant 0 : i32
    %0 = arith.cmpi eq, %arg1, %c0_i32 : i32
    %1 = arith.extui %0 : i1 to i32
    %c0_i32_0 = arith.constant 0 : i32
    %2 = arith.cmpi ne, %1, %c0_i32_0 : i32
    scf.if %2 {
      %cst_70 = arith.constant 0.000000e+00 : bf16
      %95 = vector.broadcast %cst_70 : bf16 to vector<1x18x128xbf16>
      %cst_71 = arith.constant 0.000000e+00 : bf16
      %96 = vector.broadcast %cst_71 : bf16 to vector<16x1x128xbf16>
      %c0_72 = arith.constant 0 : index
      %c0_73 = arith.constant 0 : index
      %c0_74 = arith.constant 0 : index
      %97 = vector.load %arg8[%c0_72, %c0_73, %c0_74] : memref<18x18x128xbf16, #tpu.memory_space<vmem>>, vector<1x18x128xbf16>
      tpu.vector_store %arg8[%c0_72, %c0_73, %c0_74], %95 {strides = array<i32>} : memref<18x18x128xbf16, #tpu.memory_space<vmem>>, vector<1x18x128xbf16>,
      %c17 = arith.constant 17 : index
      %c0_75 = arith.constant 0 : index
      %c0_76 = arith.constant 0 : index
      %98 = vector.load %arg8[%c17, %c0_75, %c0_76] : memref<18x18x128xbf16, #tpu.memory_space<vmem>>, vector<1x18x128xbf16>
      tpu.vector_store %arg8[%c17, %c0_75, %c0_76], %95 {strides = array<i32>} : memref<18x18x128xbf16, #tpu.memory_space<vmem>>, vector<1x18x128xbf16>,
      %c1_77 = arith.constant 1 : index
      %c0_78 = arith.constant 0 : index
      %c0_79 = arith.constant 0 : index
      %99 = vector.load %arg8[%c1_77, %c0_78, %c0_79] : memref<18x18x128xbf16, #tpu.memory_space<vmem>>, vector<16x1x128xbf16>
      tpu.vector_store %arg8[%c1_77, %c0_78, %c0_79], %96 {strides = array<i32>} : memref<18x18x128xbf16, #tpu.memory_space<vmem>>, vector<16x1x128xbf16>,
      %c1_80 = arith.constant 1 : index
      %c17_81 = arith.constant 17 : index
      %c0_82 = arith.constant 0 : index
      %100 = vector.load %arg8[%c1_80, %c17_81, %c0_82] : memref<18x18x128xbf16, #tpu.memory_space<vmem>>, vector<16x1x128xbf16>
      tpu.vector_store %arg8[%c1_80, %c17_81, %c0_82], %96 {strides = array<i32>} : memref<18x18x128xbf16, #tpu.memory_space<vmem>>, vector<16x1x128xbf16>,
      %c0_83 = arith.constant 0 : index
      %c0_84 = arith.constant 0 : index
      %c0_85 = arith.constant 0 : index
      %c0_86 = arith.constant 0 : index
      %101 = vector.load %arg2[%c0_83, %c0_84, %c0_85, %c0_86] : memref<1x16x16x128xbf16, #tpu.memory_space<vmem>>, vector<1x16x16x128xbf16>
      %102 = vector.shape_cast %101 : vector<1x16x16x128xbf16> to vector<16x16x128xbf16>
      %c1_87 = arith.constant 1 : index
      %c1_88 = arith.constant 1 : index
      %c0_89 = arith.constant 0 : index
      %103 = vector.load %arg8[%c1_87, %c1_88, %c0_89] : memref<18x18x128xbf16, #tpu.memory_space<vmem>>, vector<16x16x128xbf16>
      tpu.vector_store %arg8[%c1_87, %c1_88, %c0_89], %102 {strides = array<i32>} : memref<18x18x128xbf16, #tpu.memory_space<vmem>>, vector<16x16x128xbf16>,
      %cst_90 = arith.constant 0.000000e+00 : f32
      %104 = vector.broadcast %cst_90 : f32 to vector<1x2x128xf32>
      %c0_91 = arith.constant 0 : index
      %c0_92 = arith.constant 0 : index
      %c0_93 = arith.constant 0 : index
      %105 = vector.load %arg7[%c0_91, %c0_92, %c0_93] : memref<1x2x128xf32, #tpu.memory_space<vmem>>, vector<1x2x128xf32>
      tpu.vector_store %arg7[%c0_91, %c0_92, %c0_93], %104 {strides = array<i32>} : memref<1x2x128xf32, #tpu.memory_space<vmem>>, vector<1x2x128xf32>,
    } else {
    }
    %c16_i32 = arith.constant 16 : i32
    %3 = arith.muli %arg1, %c16_i32 : i32
    %c0_i32_1 = arith.constant 0 : i32
    %4 = arith.addi %3, %c0_i32_1 : i32
    %5 = arith.index_cast %4 : i32 to index
    %c0 = arith.constant 0 : index
    %c0_2 = arith.constant 0 : index
    %6 = vector.load %arg8[%5, %c0, %c0_2] : memref<18x18x128xbf16, #tpu.memory_space<vmem>>, vector<16x16x128xbf16>
    %7 = vector.shape_cast %6 : vector<16x16x128xbf16> to vector<256x128xbf16>
    %c0_3 = arith.constant 0 : index
    %c0_4 = arith.constant 0 : index
    %c0_5 = arith.constant 0 : index
    %8 = vector.load %arg5[%c0_3, %c0_4, %c0_5] : memref<9x128x128xbf16, #tpu.memory_space<vmem>>, vector<1x128x128xbf16>
    %9 = vector.shape_cast %8 : vector<1x128x128xbf16> to vector<128x128xbf16>
    %cst = arith.constant dense<0.000000e+00> : vector<256x128xf32>
    %10 = tpu.matmul %7, %9, %cst {dimension_numbers = #tpu.dot_dimension_numbers<[1], [0], [0], [1], [0, 0, 1, 1], [], []>} : vector<256x128xbf16>, vector<128x128xbf16>, vector<256x128xf32> -> vector<256x128xf32>
    %c0_i32_6 = arith.constant 0 : i32
    %11 = arith.addi %3, %c0_i32_6 : i32
    %12 = arith.index_cast %11 : i32 to index
    %c1 = arith.constant 1 : index
    %c0_7 = arith.constant 0 : index
    %13 = vector.load %arg8[%12, %c1, %c0_7] : memref<18x18x128xbf16, #tpu.memory_space<vmem>>, vector<16x16x128xbf16>
    %14 = vector.shape_cast %13 : vector<16x16x128xbf16> to vector<256x128xbf16>
    %c1_8 = arith.constant 1 : index
    %c0_9 = arith.constant 0 : index
    %c0_10 = arith.constant 0 : index
    %15 = vector.load %arg5[%c1_8, %c0_9, %c0_10] : memref<9x128x128xbf16, #tpu.memory_space<vmem>>, vector<1x128x128xbf16>
    %16 = vector.shape_cast %15 : vector<1x128x128xbf16> to vector<128x128xbf16>
    %cst_11 = arith.constant dense<0.000000e+00> : vector<256x128xf32>
    %17 = tpu.matmul %14, %16, %cst_11 {dimension_numbers = #tpu.dot_dimension_numbers<[1], [0], [0], [1], [0, 0, 1, 1], [], []>} : vector<256x128xbf16>, vector<128x128xbf16>, vector<256x128xf32> -> vector<256x128xf32>
    %18 = arith.addf %10, %17 : vector<256x128xf32>
    %c0_i32_12 = arith.constant 0 : i32
    %19 = arith.addi %3, %c0_i32_12 : i32
    %20 = arith.index_cast %19 : i32 to index
    %c2 = arith.constant 2 : index
    %c0_13 = arith.constant 0 : index
    %21 = vector.load %arg8[%20, %c2, %c0_13] : memref<18x18x128xbf16, #tpu.memory_space<vmem>>, vector<16x16x128xbf16>
    %22 = vector.shape_cast %21 : vector<16x16x128xbf16> to vector<256x128xbf16>
    %c2_14 = arith.constant 2 : index
    %c0_15 = arith.constant 0 : index
    %c0_16 = arith.constant 0 : index
    %23 = vector.load %arg5[%c2_14, %c0_15, %c0_16] : memref<9x128x128xbf16, #tpu.memory_space<vmem>>, vector<1x128x128xbf16>
    %24 = vector.shape_cast %23 : vector<1x128x128xbf16> to vector<128x128xbf16>
    %cst_17 = arith.constant dense<0.000000e+00> : vector<256x128xf32>
    %25 = tpu.matmul %22, %24, %cst_17 {dimension_numbers = #tpu.dot_dimension_numbers<[1], [0], [0], [1], [0, 0, 1, 1], [], []>} : vector<256x128xbf16>, vector<128x128xbf16>, vector<256x128xf32> -> vector<256x128xf32>
    %26 = arith.addf %18, %25 : vector<256x128xf32>
    %c1_i32 = arith.constant 1 : i32
    %27 = arith.addi %3, %c1_i32 : i32
    %28 = arith.index_cast %27 : i32 to index
    %c0_18 = arith.constant 0 : index
    %c0_19 = arith.constant 0 : index
    %29 = vector.load %arg8[%28, %c0_18, %c0_19] : memref<18x18x128xbf16, #tpu.memory_space<vmem>>, vector<16x16x128xbf16>
    %30 = vector.shape_cast %29 : vector<16x16x128xbf16> to vector<256x128xbf16>
    %c3 = arith.constant 3 : index
    %c0_20 = arith.constant 0 : index
    %c0_21 = arith.constant 0 : index
    %31 = vector.load %arg5[%c3, %c0_20, %c0_21] : memref<9x128x128xbf16, #tpu.memory_space<vmem>>, vector<1x128x128xbf16>
    %32 = vector.shape_cast %31 : vector<1x128x128xbf16> to vector<128x128xbf16>
    %cst_22 = arith.constant dense<0.000000e+00> : vector<256x128xf32>
    %33 = tpu.matmul %30, %32, %cst_22 {dimension_numbers = #tpu.dot_dimension_numbers<[1], [0], [0], [1], [0, 0, 1, 1], [], []>} : vector<256x128xbf16>, vector<128x128xbf16>, vector<256x128xf32> -> vector<256x128xf32>
    %34 = arith.addf %26, %33 : vector<256x128xf32>
    %c1_i32_23 = arith.constant 1 : i32
    %35 = arith.addi %3, %c1_i32_23 : i32
    %36 = arith.index_cast %35 : i32 to index
    %c1_24 = arith.constant 1 : index
    %c0_25 = arith.constant 0 : index
    %37 = vector.load %arg8[%36, %c1_24, %c0_25] : memref<18x18x128xbf16, #tpu.memory_space<vmem>>, vector<16x16x128xbf16>
    %38 = vector.shape_cast %37 : vector<16x16x128xbf16> to vector<256x128xbf16>
    %c4 = arith.constant 4 : index
    %c0_26 = arith.constant 0 : index
    %c0_27 = arith.constant 0 : index
    %39 = vector.load %arg5[%c4, %c0_26, %c0_27] : memref<9x128x128xbf16, #tpu.memory_space<vmem>>, vector<1x128x128xbf16>
    %40 = vector.shape_cast %39 : vector<1x128x128xbf16> to vector<128x128xbf16>
    %cst_28 = arith.constant dense<0.000000e+00> : vector<256x128xf32>
    %41 = tpu.matmul %38, %40, %cst_28 {dimension_numbers = #tpu.dot_dimension_numbers<[1], [0], [0], [1], [0, 0, 1, 1], [], []>} : vector<256x128xbf16>, vector<128x128xbf16>, vector<256x128xf32> -> vector<256x128xf32>
    %42 = arith.addf %34, %41 : vector<256x128xf32>
    %c1_i32_29 = arith.constant 1 : i32
    %43 = arith.addi %3, %c1_i32_29 : i32
    %44 = arith.index_cast %43 : i32 to index
    %c2_30 = arith.constant 2 : index
    %c0_31 = arith.constant 0 : index
    %45 = vector.load %arg8[%44, %c2_30, %c0_31] : memref<18x18x128xbf16, #tpu.memory_space<vmem>>, vector<16x16x128xbf16>
    %46 = vector.shape_cast %45 : vector<16x16x128xbf16> to vector<256x128xbf16>
    %c5 = arith.constant 5 : index
    %c0_32 = arith.constant 0 : index
    %c0_33 = arith.constant 0 : index
    %47 = vector.load %arg5[%c5, %c0_32, %c0_33] : memref<9x128x128xbf16, #tpu.memory_space<vmem>>, vector<1x128x128xbf16>
    %48 = vector.shape_cast %47 : vector<1x128x128xbf16> to vector<128x128xbf16>
    %cst_34 = arith.constant dense<0.000000e+00> : vector<256x128xf32>
    %49 = tpu.matmul %46, %48, %cst_34 {dimension_numbers = #tpu.dot_dimension_numbers<[1], [0], [0], [1], [0, 0, 1, 1], [], []>} : vector<256x128xbf16>, vector<128x128xbf16>, vector<256x128xf32> -> vector<256x128xf32>
    %50 = arith.addf %42, %49 : vector<256x128xf32>
    %c2_i32 = arith.constant 2 : i32
    %51 = arith.addi %3, %c2_i32 : i32
    %52 = arith.index_cast %51 : i32 to index
    %c0_35 = arith.constant 0 : index
    %c0_36 = arith.constant 0 : index
    %53 = vector.load %arg8[%52, %c0_35, %c0_36] : memref<18x18x128xbf16, #tpu.memory_space<vmem>>, vector<16x16x128xbf16>
    %54 = vector.shape_cast %53 : vector<16x16x128xbf16> to vector<256x128xbf16>
    %c6 = arith.constant 6 : index
    %c0_37 = arith.constant 0 : index
    %c0_38 = arith.constant 0 : index
    %55 = vector.load %arg5[%c6, %c0_37, %c0_38] : memref<9x128x128xbf16, #tpu.memory_space<vmem>>, vector<1x128x128xbf16>
    %56 = vector.shape_cast %55 : vector<1x128x128xbf16> to vector<128x128xbf16>
    %cst_39 = arith.constant dense<0.000000e+00> : vector<256x128xf32>
    %57 = tpu.matmul %54, %56, %cst_39 {dimension_numbers = #tpu.dot_dimension_numbers<[1], [0], [0], [1], [0, 0, 1, 1], [], []>} : vector<256x128xbf16>, vector<128x128xbf16>, vector<256x128xf32> -> vector<256x128xf32>
    %58 = arith.addf %50, %57 : vector<256x128xf32>
    %c2_i32_40 = arith.constant 2 : i32
    %59 = arith.addi %3, %c2_i32_40 : i32
    %60 = arith.index_cast %59 : i32 to index
    %c1_41 = arith.constant 1 : index
    %c0_42 = arith.constant 0 : index
    %61 = vector.load %arg8[%60, %c1_41, %c0_42] : memref<18x18x128xbf16, #tpu.memory_space<vmem>>, vector<16x16x128xbf16>
    %62 = vector.shape_cast %61 : vector<16x16x128xbf16> to vector<256x128xbf16>
    %c7 = arith.constant 7 : index
    %c0_43 = arith.constant 0 : index
    %c0_44 = arith.constant 0 : index
    %63 = vector.load %arg5[%c7, %c0_43, %c0_44] : memref<9x128x128xbf16, #tpu.memory_space<vmem>>, vector<1x128x128xbf16>
    %64 = vector.shape_cast %63 : vector<1x128x128xbf16> to vector<128x128xbf16>
    %cst_45 = arith.constant dense<0.000000e+00> : vector<256x128xf32>
    %65 = tpu.matmul %62, %64, %cst_45 {dimension_numbers = #tpu.dot_dimension_numbers<[1], [0], [0], [1], [0, 0, 1, 1], [], []>} : vector<256x128xbf16>, vector<128x128xbf16>, vector<256x128xf32> -> vector<256x128xf32>
    %66 = arith.addf %58, %65 : vector<256x128xf32>
    %c2_i32_46 = arith.constant 2 : i32
    %67 = arith.addi %3, %c2_i32_46 : i32
    %68 = arith.index_cast %67 : i32 to index
    %c2_47 = arith.constant 2 : index
    %c0_48 = arith.constant 0 : index
    %69 = vector.load %arg8[%68, %c2_47, %c0_48] : memref<18x18x128xbf16, #tpu.memory_space<vmem>>, vector<16x16x128xbf16>
    %70 = vector.shape_cast %69 : vector<16x16x128xbf16> to vector<256x128xbf16>
    %c8 = arith.constant 8 : index
    %c0_49 = arith.constant 0 : index
    %c0_50 = arith.constant 0 : index
    %71 = vector.load %arg5[%c8, %c0_49, %c0_50] : memref<9x128x128xbf16, #tpu.memory_space<vmem>>, vector<1x128x128xbf16>
    %72 = vector.shape_cast %71 : vector<1x128x128xbf16> to vector<128x128xbf16>
    %cst_51 = arith.constant dense<0.000000e+00> : vector<256x128xf32>
    %73 = tpu.matmul %70, %72, %cst_51 {dimension_numbers = #tpu.dot_dimension_numbers<[1], [0], [0], [1], [0, 0, 1, 1], [], []>} : vector<256x128xbf16>, vector<128x128xbf16>, vector<256x128xf32> -> vector<256x128xf32>
    %74 = arith.addf %66, %73 : vector<256x128xf32>
    %75 = vector.shape_cast %74 : vector<256x128xf32> to vector<1x16x16x128xf32>
    %76 = arith.truncf %75 : vector<1x16x16x128xf32> to vector<1x16x16x128xbf16>
    %c0_52 = arith.constant 0 : index
    %c0_53 = arith.constant 0 : index
    %c0_54 = arith.constant 0 : index
    %c0_55 = arith.constant 0 : index
    %77 = vector.load %arg6[%c0_52, %c0_53, %c0_54, %c0_55] : memref<1x16x16x128xbf16, #tpu.memory_space<vmem>>, vector<1x16x16x128xbf16>
    tpu.vector_store %arg6[%c0_52, %c0_53, %c0_54, %c0_55], %76 {strides = array<i32>} : memref<1x16x16x128xbf16, #tpu.memory_space<vmem>>, vector<1x16x16x128xbf16>,
    %c0_56 = arith.constant 0 : index
    %c0_57 = arith.constant 0 : index
    %c0_58 = arith.constant 0 : index
    %78 = vector.load %arg7[%c0_56, %c0_57, %c0_58] : memref<1x2x128xf32, #tpu.memory_space<vmem>>, vector<1x1x128xf32>
    %79 = vector.shape_cast %78 : vector<1x1x128xf32> to vector<1x128xf32>
    %cst_59 = arith.constant dense<0.000000e+00> : vector<128xf32>
    %80 = vector.multi_reduction <add>, %74, %cst_59 [0] : vector<256x128xf32> to vector<128xf32>
    %81 = vector.shape_cast %80 : vector<128xf32> to vector<1x128xf32>
    %82 = arith.addf %79, %81 : vector<1x128xf32>
    %c0_60 = arith.constant 0 : index
    %c0_61 = arith.constant 0 : index
    %c0_62 = arith.constant 0 : index
    %83 = vector.load %arg7[%c0_60, %c0_61, %c0_62] : memref<1x2x128xf32, #tpu.memory_space<vmem>>, vector<1x1x128xf32>
    %84 = vector.shape_cast %83 : vector<1x1x128xf32> to vector<1x128xf32>
    %85 = vector.shape_cast %82 : vector<1x128xf32> to vector<1x1x128xf32>
    tpu.vector_store %arg7[%c0_60, %c0_61, %c0_62], %85 {strides = array<i32>} : memref<1x2x128xf32, #tpu.memory_space<vmem>>, vector<1x1x128xf32>,
    %c0_63 = arith.constant 0 : index
    %c1_64 = arith.constant 1 : index
    %c0_65 = arith.constant 0 : index
    %86 = vector.load %arg7[%c0_63, %c1_64, %c0_65] : memref<1x2x128xf32, #tpu.memory_space<vmem>>, vector<1x1x128xf32>
    %87 = vector.shape_cast %86 : vector<1x1x128xf32> to vector<1x128xf32>
    %88 = arith.mulf %74, %74 : vector<256x128xf32>
    %cst_66 = arith.constant dense<0.000000e+00> : vector<128xf32>
    %89 = vector.multi_reduction <add>, %88, %cst_66 [0] : vector<256x128xf32> to vector<128xf32>
    %90 = vector.shape_cast %89 : vector<128xf32> to vector<1x128xf32>
    %91 = arith.addf %87, %90 : vector<1x128xf32>
    %c0_67 = arith.constant 0 : index
    %c1_68 = arith.constant 1 : index
    %c0_69 = arith.constant 0 : index
    %92 = vector.load %arg7[%c0_67, %c1_68, %c0_69] : memref<1x2x128xf32, #tpu.memory_space<vmem>>, vector<1x1x128xf32>
    %93 = vector.shape_cast %92 : vector<1x1x128xf32> to vector<1x128xf32>
    %94 = vector.shape_cast %91 : vector<1x128xf32> to vector<1x1x128xf32>
    tpu.vector_store %arg7[%c0_67, %c1_68, %c0_69], %94 {strides = array<i32>} : memref<1x2x128xf32, #tpu.memory_space<vmem>>, vector<1x1x128xf32>,
    return
  }
  func.func @transform_0(%arg0: i32, %arg1: i32) -> (i32, i32, i32, i32) {
    %c0_i32 = arith.constant 0 : i32
    %c0_i32_0 = arith.constant 0 : i32
    %c0_i32_1 = arith.constant 0 : i32
    %c0_i32_2 = arith.constant 0 : i32
    return %arg0, %c0_i32, %c0_i32_0, %c0_i32_1 : i32, i32, i32, i32
  }
  func.func @transform_1(%arg0: i32, %arg1: i32) -> (i32, i32) {
    %c0_i32 = arith.constant 0 : i32
    %c0_i32_0 = arith.constant 0 : i32
    %c0_i32_1 = arith.constant 0 : i32
    return %c0_i32, %c0_i32_0 : i32, i32
  }
  func.func @transform_2(%arg0: i32, %arg1: i32) -> (i32, i32) {
    %c0_i32 = arith.constant 0 : i32
    %c0_i32_0 = arith.constant 0 : i32
    %c0_i32_1 = arith.constant 0 : i32
    return %c0_i32, %c0_i32_0 : i32, i32
  }
  func.func @transform_3(%arg0: i32, %arg1: i32) -> (i32, i32, i32) {
    %c0_i32 = arith.constant 0 : i32
    %c0_i32_0 = arith.constant 0 : i32
    %c0_i32_1 = arith.constant 0 : i32
    %c0_i32_2 = arith.constant 0 : i32
    return %c0_i32, %c0_i32_0, %c0_i32_1 : i32, i32, i32
  }
  func.func @transform_4(%arg0: i32, %arg1: i32) -> (i32, i32, i32, i32) {
    %c0_i32 = arith.constant 0 : i32
    %c0_i32_0 = arith.constant 0 : i32
    %c0_i32_1 = arith.constant 0 : i32
    return %arg0, %arg1, %c0_i32, %c0_i32_0 : i32, i32, i32, i32
  }
  func.func @transform_5(%arg0: i32, %arg1: i32) -> (i32, i32, i32) {
    %c0_i32 = arith.constant 0 : i32
    %c0_i32_0 = arith.constant 0 : i32
    %c0_i32_1 = arith.constant 0 : i32
    return %arg0, %c0_i32, %c0_i32_0 : i32, i32, i32
  }
}

module attributes {stable_mosaic.version = 11 : i64} {
  func.func @_conv_stats_kernel(%arg0: i32, %arg1: i32, %arg2: memref<1x16x16x128xbf16, #tpu.memory_space<vmem>>, %arg3: memref<1x128xf32, #tpu.memory_space<vmem>>, %arg4: memref<1x128xf32, #tpu.memory_space<vmem>>, %arg5: memref<9x128x128xbf16, #tpu.memory_space<vmem>>, %arg6: memref<1x16x16x128xbf16, #tpu.memory_space<vmem>>, %arg7: memref<1x2x128xf32, #tpu.memory_space<vmem>>, %arg8: memref<18x18x128xbf16, #tpu.memory_space<vmem>>) attributes {dimension_semantics = [#tpu.dimension_semantics<parallel>, #tpu.dimension_semantics<arbitrary>], iteration_bounds = array<i64: 2, 1>, scalar_prefetch = 0 : i64, scratch_operands = 1 : i64, tpu.core_type = #tpu.core_type<tc>, window_params = [{transform_indices = @transform_0, window_bounds = array<i64: 1, 16, 16, 128>}, {pipeline_mode = #tpu.pipeline_mode<synchronous>, transform_indices = @transform_1, window_bounds = array<i64: 1, 128>}, {pipeline_mode = #tpu.pipeline_mode<synchronous>, transform_indices = @transform_2, window_bounds = array<i64: 1, 128>}, {pipeline_mode = #tpu.pipeline_mode<synchronous>, transform_indices = @transform_3, window_bounds = array<i64: 9, 128, 128>}, {transform_indices = @transform_4, window_bounds = array<i64: 1, 16, 16, 128>}, {transform_indices = @transform_5, window_bounds = array<i64: 1, 2, 128>}]} {
    %c0_i32 = arith.constant 0 : i32
    %0 = arith.cmpi eq, %arg1, %c0_i32 : i32
    %1 = arith.extui %0 : i1 to i32
    %c0_i32_0 = arith.constant 0 : i32
    %2 = arith.cmpi ne, %1, %c0_i32_0 : i32
    scf.if %2 {
      %cst_70 = arith.constant 0.000000e+00 : bf16
      %95 = vector.broadcast %cst_70 : bf16 to vector<1x18x128xbf16>
      %cst_71 = arith.constant 0.000000e+00 : bf16
      %96 = vector.broadcast %cst_71 : bf16 to vector<16x1x128xbf16>
      %c0_72 = arith.constant 0 : index
      %c0_73 = arith.constant 0 : index
      %c0_74 = arith.constant 0 : index
      %97 = vector.load %arg8[%c0_72, %c0_73, %c0_74] : memref<18x18x128xbf16, #tpu.memory_space<vmem>>, vector<1x18x128xbf16>
      tpu.vector_store %arg8[%c0_72, %c0_73, %c0_74], %95 {strides = array<i32>} : memref<18x18x128xbf16, #tpu.memory_space<vmem>>, vector<1x18x128xbf16>,
      %c17 = arith.constant 17 : index
      %c0_75 = arith.constant 0 : index
      %c0_76 = arith.constant 0 : index
      %98 = vector.load %arg8[%c17, %c0_75, %c0_76] : memref<18x18x128xbf16, #tpu.memory_space<vmem>>, vector<1x18x128xbf16>
      tpu.vector_store %arg8[%c17, %c0_75, %c0_76], %95 {strides = array<i32>} : memref<18x18x128xbf16, #tpu.memory_space<vmem>>, vector<1x18x128xbf16>,
      %c1_77 = arith.constant 1 : index
      %c0_78 = arith.constant 0 : index
      %c0_79 = arith.constant 0 : index
      %99 = vector.load %arg8[%c1_77, %c0_78, %c0_79] : memref<18x18x128xbf16, #tpu.memory_space<vmem>>, vector<16x1x128xbf16>
      tpu.vector_store %arg8[%c1_77, %c0_78, %c0_79], %96 {strides = array<i32>} : memref<18x18x128xbf16, #tpu.memory_space<vmem>>, vector<16x1x128xbf16>,
      %c1_80 = arith.constant 1 : index
      %c17_81 = arith.constant 17 : index
      %c0_82 = arith.constant 0 : index
      %100 = vector.load %arg8[%c1_80, %c17_81, %c0_82] : memref<18x18x128xbf16, #tpu.memory_space<vmem>>, vector<16x1x128xbf16>
      tpu.vector_store %arg8[%c1_80, %c17_81, %c0_82], %96 {strides = array<i32>} : memref<18x18x128xbf16, #tpu.memory_space<vmem>>, vector<16x1x128xbf16>,
      %c0_83 = arith.constant 0 : index
      %c0_84 = arith.constant 0 : index
      %c0_85 = arith.constant 0 : index
      %c0_86 = arith.constant 0 : index
      %101 = vector.load %arg2[%c0_83, %c0_84, %c0_85, %c0_86] : memref<1x16x16x128xbf16, #tpu.memory_space<vmem>>, vector<1x16x16x128xbf16>
      %102 = vector.shape_cast %101 : vector<1x16x16x128xbf16> to vector<16x16x128xbf16>
      %103 = arith.extf %102 : vector<16x16x128xbf16> to vector<16x16x128xf32>
      %c0_87 = arith.constant 0 : index
      %c0_88 = arith.constant 0 : index
      %104 = vector.load %arg3[%c0_87, %c0_88] : memref<1x128xf32, #tpu.memory_space<vmem>>, vector<1x128xf32>
      %105 = vector.shape_cast %104 : vector<1x128xf32> to vector<1x1x128xf32>
      %106 = vector.broadcast %105 : vector<1x1x128xf32> to vector<16x16x128xf32>
      %107 = arith.mulf %103, %106 : vector<16x16x128xf32>
      %c0_89 = arith.constant 0 : index
      %c0_90 = arith.constant 0 : index
      %108 = vector.load %arg4[%c0_89, %c0_90] : memref<1x128xf32, #tpu.memory_space<vmem>>, vector<1x128xf32>
      %109 = vector.shape_cast %108 : vector<1x128xf32> to vector<1x1x128xf32>
      %110 = vector.broadcast %109 : vector<1x1x128xf32> to vector<16x16x128xf32>
      %111 = arith.addf %107, %110 : vector<16x16x128xf32>
      %cst_91 = arith.constant 0.000000e+00 : f32
      %112 = vector.broadcast %cst_91 : f32 to vector<16x16x128xf32>
      %113 = arith.maximumf %111, %112 : vector<16x16x128xf32>
      %114 = arith.truncf %113 : vector<16x16x128xf32> to vector<16x16x128xbf16>
      %c1_92 = arith.constant 1 : index
      %c1_93 = arith.constant 1 : index
      %c0_94 = arith.constant 0 : index
      %115 = vector.load %arg8[%c1_92, %c1_93, %c0_94] : memref<18x18x128xbf16, #tpu.memory_space<vmem>>, vector<16x16x128xbf16>
      tpu.vector_store %arg8[%c1_92, %c1_93, %c0_94], %114 {strides = array<i32>} : memref<18x18x128xbf16, #tpu.memory_space<vmem>>, vector<16x16x128xbf16>,
      %cst_95 = arith.constant 0.000000e+00 : f32
      %116 = vector.broadcast %cst_95 : f32 to vector<1x2x128xf32>
      %c0_96 = arith.constant 0 : index
      %c0_97 = arith.constant 0 : index
      %c0_98 = arith.constant 0 : index
      %117 = vector.load %arg7[%c0_96, %c0_97, %c0_98] : memref<1x2x128xf32, #tpu.memory_space<vmem>>, vector<1x2x128xf32>
      tpu.vector_store %arg7[%c0_96, %c0_97, %c0_98], %116 {strides = array<i32>} : memref<1x2x128xf32, #tpu.memory_space<vmem>>, vector<1x2x128xf32>,
    } else {
    }
    %c16_i32 = arith.constant 16 : i32
    %3 = arith.muli %arg1, %c16_i32 : i32
    %c0_i32_1 = arith.constant 0 : i32
    %4 = arith.addi %3, %c0_i32_1 : i32
    %5 = arith.index_cast %4 : i32 to index
    %c0 = arith.constant 0 : index
    %c0_2 = arith.constant 0 : index
    %6 = vector.load %arg8[%5, %c0, %c0_2] : memref<18x18x128xbf16, #tpu.memory_space<vmem>>, vector<16x16x128xbf16>
    %7 = vector.shape_cast %6 : vector<16x16x128xbf16> to vector<256x128xbf16>
    %c0_3 = arith.constant 0 : index
    %c0_4 = arith.constant 0 : index
    %c0_5 = arith.constant 0 : index
    %8 = vector.load %arg5[%c0_3, %c0_4, %c0_5] : memref<9x128x128xbf16, #tpu.memory_space<vmem>>, vector<1x128x128xbf16>
    %9 = vector.shape_cast %8 : vector<1x128x128xbf16> to vector<128x128xbf16>
    %cst = arith.constant dense<0.000000e+00> : vector<256x128xf32>
    %10 = tpu.matmul %7, %9, %cst {dimension_numbers = #tpu.dot_dimension_numbers<[1], [0], [0], [1], [0, 0, 1, 1], [], []>} : vector<256x128xbf16>, vector<128x128xbf16>, vector<256x128xf32> -> vector<256x128xf32>
    %c0_i32_6 = arith.constant 0 : i32
    %11 = arith.addi %3, %c0_i32_6 : i32
    %12 = arith.index_cast %11 : i32 to index
    %c1 = arith.constant 1 : index
    %c0_7 = arith.constant 0 : index
    %13 = vector.load %arg8[%12, %c1, %c0_7] : memref<18x18x128xbf16, #tpu.memory_space<vmem>>, vector<16x16x128xbf16>
    %14 = vector.shape_cast %13 : vector<16x16x128xbf16> to vector<256x128xbf16>
    %c1_8 = arith.constant 1 : index
    %c0_9 = arith.constant 0 : index
    %c0_10 = arith.constant 0 : index
    %15 = vector.load %arg5[%c1_8, %c0_9, %c0_10] : memref<9x128x128xbf16, #tpu.memory_space<vmem>>, vector<1x128x128xbf16>
    %16 = vector.shape_cast %15 : vector<1x128x128xbf16> to vector<128x128xbf16>
    %cst_11 = arith.constant dense<0.000000e+00> : vector<256x128xf32>
    %17 = tpu.matmul %14, %16, %cst_11 {dimension_numbers = #tpu.dot_dimension_numbers<[1], [0], [0], [1], [0, 0, 1, 1], [], []>} : vector<256x128xbf16>, vector<128x128xbf16>, vector<256x128xf32> -> vector<256x128xf32>
    %18 = arith.addf %10, %17 : vector<256x128xf32>
    %c0_i32_12 = arith.constant 0 : i32
    %19 = arith.addi %3, %c0_i32_12 : i32
    %20 = arith.index_cast %19 : i32 to index
    %c2 = arith.constant 2 : index
    %c0_13 = arith.constant 0 : index
    %21 = vector.load %arg8[%20, %c2, %c0_13] : memref<18x18x128xbf16, #tpu.memory_space<vmem>>, vector<16x16x128xbf16>
    %22 = vector.shape_cast %21 : vector<16x16x128xbf16> to vector<256x128xbf16>
    %c2_14 = arith.constant 2 : index
    %c0_15 = arith.constant 0 : index
    %c0_16 = arith.constant 0 : index
    %23 = vector.load %arg5[%c2_14, %c0_15, %c0_16] : memref<9x128x128xbf16, #tpu.memory_space<vmem>>, vector<1x128x128xbf16>
    %24 = vector.shape_cast %23 : vector<1x128x128xbf16> to vector<128x128xbf16>
    %cst_17 = arith.constant dense<0.000000e+00> : vector<256x128xf32>
    %25 = tpu.matmul %22, %24, %cst_17 {dimension_numbers = #tpu.dot_dimension_numbers<[1], [0], [0], [1], [0, 0, 1, 1], [], []>} : vector<256x128xbf16>, vector<128x128xbf16>, vector<256x128xf32> -> vector<256x128xf32>
    %26 = arith.addf %18, %25 : vector<256x128xf32>
    %c1_i32 = arith.constant 1 : i32
    %27 = arith.addi %3, %c1_i32 : i32
    %28 = arith.index_cast %27 : i32 to index
    %c0_18 = arith.constant 0 : index
    %c0_19 = arith.constant 0 : index
    %29 = vector.load %arg8[%28, %c0_18, %c0_19] : memref<18x18x128xbf16, #tpu.memory_space<vmem>>, vector<16x16x128xbf16>
    %30 = vector.shape_cast %29 : vector<16x16x128xbf16> to vector<256x128xbf16>
    %c3 = arith.constant 3 : index
    %c0_20 = arith.constant 0 : index
    %c0_21 = arith.constant 0 : index
    %31 = vector.load %arg5[%c3, %c0_20, %c0_21] : memref<9x128x128xbf16, #tpu.memory_space<vmem>>, vector<1x128x128xbf16>
    %32 = vector.shape_cast %31 : vector<1x128x128xbf16> to vector<128x128xbf16>
    %cst_22 = arith.constant dense<0.000000e+00> : vector<256x128xf32>
    %33 = tpu.matmul %30, %32, %cst_22 {dimension_numbers = #tpu.dot_dimension_numbers<[1], [0], [0], [1], [0, 0, 1, 1], [], []>} : vector<256x128xbf16>, vector<128x128xbf16>, vector<256x128xf32> -> vector<256x128xf32>
    %34 = arith.addf %26, %33 : vector<256x128xf32>
    %c1_i32_23 = arith.constant 1 : i32
    %35 = arith.addi %3, %c1_i32_23 : i32
    %36 = arith.index_cast %35 : i32 to index
    %c1_24 = arith.constant 1 : index
    %c0_25 = arith.constant 0 : index
    %37 = vector.load %arg8[%36, %c1_24, %c0_25] : memref<18x18x128xbf16, #tpu.memory_space<vmem>>, vector<16x16x128xbf16>
    %38 = vector.shape_cast %37 : vector<16x16x128xbf16> to vector<256x128xbf16>
    %c4 = arith.constant 4 : index
    %c0_26 = arith.constant 0 : index
    %c0_27 = arith.constant 0 : index
    %39 = vector.load %arg5[%c4, %c0_26, %c0_27] : memref<9x128x128xbf16, #tpu.memory_space<vmem>>, vector<1x128x128xbf16>
    %40 = vector.shape_cast %39 : vector<1x128x128xbf16> to vector<128x128xbf16>
    %cst_28 = arith.constant dense<0.000000e+00> : vector<256x128xf32>
    %41 = tpu.matmul %38, %40, %cst_28 {dimension_numbers = #tpu.dot_dimension_numbers<[1], [0], [0], [1], [0, 0, 1, 1], [], []>} : vector<256x128xbf16>, vector<128x128xbf16>, vector<256x128xf32> -> vector<256x128xf32>
    %42 = arith.addf %34, %41 : vector<256x128xf32>
    %c1_i32_29 = arith.constant 1 : i32
    %43 = arith.addi %3, %c1_i32_29 : i32
    %44 = arith.index_cast %43 : i32 to index
    %c2_30 = arith.constant 2 : index
    %c0_31 = arith.constant 0 : index
    %45 = vector.load %arg8[%44, %c2_30, %c0_31] : memref<18x18x128xbf16, #tpu.memory_space<vmem>>, vector<16x16x128xbf16>
    %46 = vector.shape_cast %45 : vector<16x16x128xbf16> to vector<256x128xbf16>
    %c5 = arith.constant 5 : index
    %c0_32 = arith.constant 0 : index
    %c0_33 = arith.constant 0 : index
    %47 = vector.load %arg5[%c5, %c0_32, %c0_33] : memref<9x128x128xbf16, #tpu.memory_space<vmem>>, vector<1x128x128xbf16>
    %48 = vector.shape_cast %47 : vector<1x128x128xbf16> to vector<128x128xbf16>
    %cst_34 = arith.constant dense<0.000000e+00> : vector<256x128xf32>
    %49 = tpu.matmul %46, %48, %cst_34 {dimension_numbers = #tpu.dot_dimension_numbers<[1], [0], [0], [1], [0, 0, 1, 1], [], []>} : vector<256x128xbf16>, vector<128x128xbf16>, vector<256x128xf32> -> vector<256x128xf32>
    %50 = arith.addf %42, %49 : vector<256x128xf32>
    %c2_i32 = arith.constant 2 : i32
    %51 = arith.addi %3, %c2_i32 : i32
    %52 = arith.index_cast %51 : i32 to index
    %c0_35 = arith.constant 0 : index
    %c0_36 = arith.constant 0 : index
    %53 = vector.load %arg8[%52, %c0_35, %c0_36] : memref<18x18x128xbf16, #tpu.memory_space<vmem>>, vector<16x16x128xbf16>
    %54 = vector.shape_cast %53 : vector<16x16x128xbf16> to vector<256x128xbf16>
    %c6 = arith.constant 6 : index
    %c0_37 = arith.constant 0 : index
    %c0_38 = arith.constant 0 : index
    %55 = vector.load %arg5[%c6, %c0_37, %c0_38] : memref<9x128x128xbf16, #tpu.memory_space<vmem>>, vector<1x128x128xbf16>
    %56 = vector.shape_cast %55 : vector<1x128x128xbf16> to vector<128x128xbf16>
    %cst_39 = arith.constant dense<0.000000e+00> : vector<256x128xf32>
    %57 = tpu.matmul %54, %56, %cst_39 {dimension_numbers = #tpu.dot_dimension_numbers<[1], [0], [0], [1], [0, 0, 1, 1], [], []>} : vector<256x128xbf16>, vector<128x128xbf16>, vector<256x128xf32> -> vector<256x128xf32>
    %58 = arith.addf %50, %57 : vector<256x128xf32>
    %c2_i32_40 = arith.constant 2 : i32
    %59 = arith.addi %3, %c2_i32_40 : i32
    %60 = arith.index_cast %59 : i32 to index
    %c1_41 = arith.constant 1 : index
    %c0_42 = arith.constant 0 : index
    %61 = vector.load %arg8[%60, %c1_41, %c0_42] : memref<18x18x128xbf16, #tpu.memory_space<vmem>>, vector<16x16x128xbf16>
    %62 = vector.shape_cast %61 : vector<16x16x128xbf16> to vector<256x128xbf16>
    %c7 = arith.constant 7 : index
    %c0_43 = arith.constant 0 : index
    %c0_44 = arith.constant 0 : index
    %63 = vector.load %arg5[%c7, %c0_43, %c0_44] : memref<9x128x128xbf16, #tpu.memory_space<vmem>>, vector<1x128x128xbf16>
    %64 = vector.shape_cast %63 : vector<1x128x128xbf16> to vector<128x128xbf16>
    %cst_45 = arith.constant dense<0.000000e+00> : vector<256x128xf32>
    %65 = tpu.matmul %62, %64, %cst_45 {dimension_numbers = #tpu.dot_dimension_numbers<[1], [0], [0], [1], [0, 0, 1, 1], [], []>} : vector<256x128xbf16>, vector<128x128xbf16>, vector<256x128xf32> -> vector<256x128xf32>
    %66 = arith.addf %58, %65 : vector<256x128xf32>
    %c2_i32_46 = arith.constant 2 : i32
    %67 = arith.addi %3, %c2_i32_46 : i32
    %68 = arith.index_cast %67 : i32 to index
    %c2_47 = arith.constant 2 : index
    %c0_48 = arith.constant 0 : index
    %69 = vector.load %arg8[%68, %c2_47, %c0_48] : memref<18x18x128xbf16, #tpu.memory_space<vmem>>, vector<16x16x128xbf16>
    %70 = vector.shape_cast %69 : vector<16x16x128xbf16> to vector<256x128xbf16>
    %c8 = arith.constant 8 : index
    %c0_49 = arith.constant 0 : index
    %c0_50 = arith.constant 0 : index
    %71 = vector.load %arg5[%c8, %c0_49, %c0_50] : memref<9x128x128xbf16, #tpu.memory_space<vmem>>, vector<1x128x128xbf16>
    %72 = vector.shape_cast %71 : vector<1x128x128xbf16> to vector<128x128xbf16>
    %cst_51 = arith.constant dense<0.000000e+00> : vector<256x128xf32>
    %73 = tpu.matmul %70, %72, %cst_51 {dimension_numbers = #tpu.dot_dimension_numbers<[1], [0], [0], [1], [0, 0, 1, 1], [], []>} : vector<256x128xbf16>, vector<128x128xbf16>, vector<256x128xf32> -> vector<256x128xf32>
    %74 = arith.addf %66, %73 : vector<256x128xf32>
    %75 = vector.shape_cast %74 : vector<256x128xf32> to vector<1x16x16x128xf32>
    %76 = arith.truncf %75 : vector<1x16x16x128xf32> to vector<1x16x16x128xbf16>
    %c0_52 = arith.constant 0 : index
    %c0_53 = arith.constant 0 : index
    %c0_54 = arith.constant 0 : index
    %c0_55 = arith.constant 0 : index
    %77 = vector.load %arg6[%c0_52, %c0_53, %c0_54, %c0_55] : memref<1x16x16x128xbf16, #tpu.memory_space<vmem>>, vector<1x16x16x128xbf16>
    tpu.vector_store %arg6[%c0_52, %c0_53, %c0_54, %c0_55], %76 {strides = array<i32>} : memref<1x16x16x128xbf16, #tpu.memory_space<vmem>>, vector<1x16x16x128xbf16>,
    %c0_56 = arith.constant 0 : index
    %c0_57 = arith.constant 0 : index
    %c0_58 = arith.constant 0 : index
    %78 = vector.load %arg7[%c0_56, %c0_57, %c0_58] : memref<1x2x128xf32, #tpu.memory_space<vmem>>, vector<1x1x128xf32>
    %79 = vector.shape_cast %78 : vector<1x1x128xf32> to vector<1x128xf32>
    %cst_59 = arith.constant dense<0.000000e+00> : vector<128xf32>
    %80 = vector.multi_reduction <add>, %74, %cst_59 [0] : vector<256x128xf32> to vector<128xf32>
    %81 = vector.shape_cast %80 : vector<128xf32> to vector<1x128xf32>
    %82 = arith.addf %79, %81 : vector<1x128xf32>
    %c0_60 = arith.constant 0 : index
    %c0_61 = arith.constant 0 : index
    %c0_62 = arith.constant 0 : index
    %83 = vector.load %arg7[%c0_60, %c0_61, %c0_62] : memref<1x2x128xf32, #tpu.memory_space<vmem>>, vector<1x1x128xf32>
    %84 = vector.shape_cast %83 : vector<1x1x128xf32> to vector<1x128xf32>
    %85 = vector.shape_cast %82 : vector<1x128xf32> to vector<1x1x128xf32>
    tpu.vector_store %arg7[%c0_60, %c0_61, %c0_62], %85 {strides = array<i32>} : memref<1x2x128xf32, #tpu.memory_space<vmem>>, vector<1x1x128xf32>,
    %c0_63 = arith.constant 0 : index
    %c1_64 = arith.constant 1 : index
    %c0_65 = arith.constant 0 : index
    %86 = vector.load %arg7[%c0_63, %c1_64, %c0_65] : memref<1x2x128xf32, #tpu.memory_space<vmem>>, vector<1x1x128xf32>
    %87 = vector.shape_cast %86 : vector<1x1x128xf32> to vector<1x128xf32>
    %88 = arith.mulf %74, %74 : vector<256x128xf32>
    %cst_66 = arith.constant dense<0.000000e+00> : vector<128xf32>
    %89 = vector.multi_reduction <add>, %88, %cst_66 [0] : vector<256x128xf32> to vector<128xf32>
    %90 = vector.shape_cast %89 : vector<128xf32> to vector<1x128xf32>
    %91 = arith.addf %87, %90 : vector<1x128xf32>
    %c0_67 = arith.constant 0 : index
    %c1_68 = arith.constant 1 : index
    %c0_69 = arith.constant 0 : index
    %92 = vector.load %arg7[%c0_67, %c1_68, %c0_69] : memref<1x2x128xf32, #tpu.memory_space<vmem>>, vector<1x1x128xf32>
    %93 = vector.shape_cast %92 : vector<1x1x128xf32> to vector<1x128xf32>
    %94 = vector.shape_cast %91 : vector<1x128xf32> to vector<1x1x128xf32>
    tpu.vector_store %arg7[%c0_67, %c1_68, %c0_69], %94 {strides = array<i32>} : memref<1x2x128xf32, #tpu.memory_space<vmem>>, vector<1x1x128xf32>,
    return
  }
  func.func @transform_0(%arg0: i32, %arg1: i32) -> (i32, i32, i32, i32) {
    %c0_i32 = arith.constant 0 : i32
    %c0_i32_0 = arith.constant 0 : i32
    %c0_i32_1 = arith.constant 0 : i32
    %c0_i32_2 = arith.constant 0 : i32
    return %arg0, %c0_i32, %c0_i32_0, %c0_i32_1 : i32, i32, i32, i32
  }
  func.func @transform_1(%arg0: i32, %arg1: i32) -> (i32, i32) {
    %c0_i32 = arith.constant 0 : i32
    %c0_i32_0 = arith.constant 0 : i32
    %c0_i32_1 = arith.constant 0 : i32
    return %c0_i32, %c0_i32_0 : i32, i32
  }
  func.func @transform_2(%arg0: i32, %arg1: i32) -> (i32, i32) {
    %c0_i32 = arith.constant 0 : i32
    %c0_i32_0 = arith.constant 0 : i32
    %c0_i32_1 = arith.constant 0 : i32
    return %c0_i32, %c0_i32_0 : i32, i32
  }
  func.func @transform_3(%arg0: i32, %arg1: i32) -> (i32, i32, i32) {
    %c0_i32 = arith.constant 0 : i32
    %c0_i32_0 = arith.constant 0 : i32
    %c0_i32_1 = arith.constant 0 : i32
    %c0_i32_2 = arith.constant 0 : i32
    return %c0_i32, %c0_i32_0, %c0_i32_1 : i32, i32, i32
  }
  func.func @transform_4(%arg0: i32, %arg1: i32) -> (i32, i32, i32, i32) {
    %c0_i32 = arith.constant 0 : i32
    %c0_i32_0 = arith.constant 0 : i32
    %c0_i32_1 = arith.constant 0 : i32
    return %arg0, %arg1, %c0_i32, %c0_i32_0 : i32, i32, i32, i32
  }
  func.func @transform_5(%arg0: i32, %arg1: i32) -> (i32, i32, i32) {
    %c0_i32 = arith.constant 0 : i32
    %c0_i32_0 = arith.constant 0 : i32
    %c0_i32_1 = arith.constant 0 : i32
    return %arg0, %c0_i32, %c0_i32_0 : i32, i32, i32
  }
}

module attributes {stable_mosaic.version = 11 : i64} {
  func.func @_bn_relu_kernel(%arg0: i32, %arg1: memref<512x128xbf16, #tpu.memory_space<vmem>>, %arg2: memref<1x128xf32, #tpu.memory_space<vmem>>, %arg3: memref<1x128xf32, #tpu.memory_space<vmem>>, %arg4: memref<512x128xf32, #tpu.memory_space<vmem>>) attributes {dimension_semantics = [#tpu.dimension_semantics<parallel>], iteration_bounds = array<i64: 1>, scalar_prefetch = 0 : i64, scratch_operands = 0 : i64, tpu.core_type = #tpu.core_type<tc>, window_params = [{transform_indices = @transform_0, window_bounds = array<i64: 512, 128>}, {pipeline_mode = #tpu.pipeline_mode<synchronous>, transform_indices = @transform_1, window_bounds = array<i64: 1, 128>}, {pipeline_mode = #tpu.pipeline_mode<synchronous>, transform_indices = @transform_2, window_bounds = array<i64: 1, 128>}, {transform_indices = @transform_3, window_bounds = array<i64: 512, 128>}]} {
    %c0 = arith.constant 0 : index
    %c0_0 = arith.constant 0 : index
    %0 = vector.load %arg1[%c0, %c0_0] : memref<512x128xbf16, #tpu.memory_space<vmem>>, vector<512x128xbf16>
    %1 = arith.extf %0 : vector<512x128xbf16> to vector<512x128xf32>
    %c0_1 = arith.constant 0 : index
    %c0_2 = arith.constant 0 : index
    %2 = vector.load %arg2[%c0_1, %c0_2] : memref<1x128xf32, #tpu.memory_space<vmem>>, vector<1x128xf32>
    %3 = vector.broadcast %2 : vector<1x128xf32> to vector<512x128xf32>
    %4 = arith.mulf %1, %3 : vector<512x128xf32>
    %c0_3 = arith.constant 0 : index
    %c0_4 = arith.constant 0 : index
    %5 = vector.load %arg3[%c0_3, %c0_4] : memref<1x128xf32, #tpu.memory_space<vmem>>, vector<1x128xf32>
    %6 = vector.broadcast %5 : vector<1x128xf32> to vector<512x128xf32>
    %7 = arith.addf %4, %6 : vector<512x128xf32>
    %cst = arith.constant 0.000000e+00 : f32
    %8 = vector.broadcast %cst : f32 to vector<512x128xf32>
    %9 = arith.maximumf %7, %8 : vector<512x128xf32>
    %c0_5 = arith.constant 0 : index
    %c0_6 = arith.constant 0 : index
    %10 = vector.load %arg4[%c0_5, %c0_6] : memref<512x128xf32, #tpu.memory_space<vmem>>, vector<512x128xf32>
    tpu.vector_store %arg4[%c0_5, %c0_6], %9 {strides = array<i32>} : memref<512x128xf32, #tpu.memory_space<vmem>>, vector<512x128xf32>,
    return
  }
  func.func @transform_0(%arg0: i32) -> (i32, i32) {
    %c0_i32 = arith.constant 0 : i32
    %c0_i32_0 = arith.constant 0 : i32
    return %arg0, %c0_i32 : i32, i32
  }
  func.func @transform_1(%arg0: i32) -> (i32, i32) {
    %c0_i32 = arith.constant 0 : i32
    %c0_i32_0 = arith.constant 0 : i32
    %c0_i32_1 = arith.constant 0 : i32
    return %c0_i32, %c0_i32_0 : i32, i32
  }
  func.func @transform_2(%arg0: i32) -> (i32, i32) {
    %c0_i32 = arith.constant 0 : i32
    %c0_i32_0 = arith.constant 0 : i32
    %c0_i32_1 = arith.constant 0 : i32
    return %c0_i32, %c0_i32_0 : i32, i32
  }
  func.func @transform_3(%arg0: i32) -> (i32, i32) {
    %c0_i32 = arith.constant 0 : i32
    %c0_i32_0 = arith.constant 0 : i32
    return %arg0, %c0_i32 : i32, i32
  }
}

</mosaic_0001>

<llo_original>
// kernel: tripple_conv.7
$region0: #{tripple_conv.7}
  #allocation0 [shape = 'u32[]', space=smem, size = 0x4, offset = 0x4, fixed_abs, tag = 'smem constant byte address 0x4 - core index']
  #allocation1 [shape = 'u32[72,128]{1,0:T(1,128)}', space=vmem, size = 0x9000, scoped, tag = 'internal scratch']
  %s0 = inlined_call_operand.vmem [shape: bf16[512,128], index: 0, kind: input, shape index: {}]
  %s1 = inlined_call_operand.vmem [shape: f32[1,128], index: 1, kind: input, shape index: {}]
  %s2 = inlined_call_operand.vmem [shape: f32[1,128], index: 2, kind: input, shape index: {}]
  %s3 = inlined_call_operand.vmem [shape: f32[512,128], index: 3, kind: output, shape index: {}]
  %s4 = sld [smem:[#allocation0]]
  $region22: #{tripple_conv.7} parent=0
    _
  %s6 = ssub.s32 1, %s4
  %s7 = scalar_select 0, %s6, %s4
  // Predicated region
  $region2: #{tripple_conv.7} parent=0 // pred_check
    _
  $region3: #{tripple_conv.7} parent=0 // pred_check_branch
    %9 = sbr.rel (0) target = $region5
  $region4: #{tripple_conv.7} parent=0 // pred_region
    _
  $region5: #{tripple_conv.7} parent=0 // pred_fallthru
    _
  // Predicated region
  $region6: #{tripple_conv.7} parent=0 // pred_check
    _
  $region7: #{tripple_conv.7} parent=0 // pred_check_branch
    %11 = sbr.rel (0) target = $region9
  $region8: #{tripple_conv.7} parent=0 // pred_region
    _
  $region9: #{tripple_conv.7} parent=0 // pred_fallthru
    _
  // Predicated region
  $region10: #{tripple_conv.7} parent=0 // pred_check
    _
  $region11: #{tripple_conv.7} parent=0 // pred_check_branch
    %13 = sbr.rel (0) target = $region13
  $region12: #{tripple_conv.7} parent=0 // pred_region
    _
  $region13: #{tripple_conv.7} parent=0 // pred_fallthru
    _
  %v14 = vld [vmem:[%s0] sm:$0xf]
  %v15 = vld [vmem:[%s0 + $0x4] sm:$0xf]
  %v16 = vld [vmem:[%s0 + $0x8] sm:$0xf]
  %v17 = vld [vmem:[%s0 + $0xc] sm:$0xf]
  %v18 = vld [vmem:[%s0 + $0x10] sm:$0xf]
  %v19 = vld [vmem:[%s0 + $0x14] sm:$0xf]
  %v20 = vld [vmem:[%s0 + $0x18] sm:$0xf]
  %v21 = vld [vmem:[%s0 + $0x1c] sm:$0xf]
  %v22 = vld [vmem:[%s0 + $0x20] sm:$0xf]
  %v23 = vld [vmem:[%s0 + $0x24] sm:$0xf]
  %v24 = vld [vmem:[%s0 + $0x28] sm:$0xf]
  %v25 = vld [vmem:[%s0 + $0x2c] sm:$0xf]
  %v26 = vld [vmem:[%s0 + $0x30] sm:$0xf]
  %v27 = vld [vmem:[%s0 + $0x34] sm:$0xf]
  %v28 = vld [vmem:[%s0 + $0x38] sm:$0xf]
  %v29 = vld [vmem:[%s0 + $0x3c] sm:$0xf]
  %v30 = vld [vmem:[%s0 + $0x40] sm:$0xf]
  %v31 = vld [vmem:[%s0 + $0x44] sm:$0xf]
  %v32 = vld [vmem:[%s0 + $0x48] sm:$0xf]
  %v33 = vld [vmem:[%s0 + $0x4c] sm:$0xf]
  %v34 = vld [vmem:[%s0 + $0x50] sm:$0xf]
  %v35 = vld [vmem:[%s0 + $0x54] sm:$0xf]
  %v36 = vld [vmem:[%s0 + $0x58] sm:$0xf]
  %v37 = vld [vmem:[%s0 + $0x5c] sm:$0xf]
  %v38 = vld [vmem:[%s0 + $0x60] sm:$0xf]
  %v39 = vld [vmem:[%s0 + $0x64] sm:$0xf]
  %v40 = vld [vmem:[%s0 + $0x68] sm:$0xf]
  %v41 = vld [vmem:[%s0 + $0x6c] sm:$0xf]
  %v42 = vld [vmem:[%s0 + $0x70] sm:$0xf]
  %v43 = vld [vmem:[%s0 + $0x74] sm:$0xf]
  %v44 = vld [vmem:[%s0 + $0x78] sm:$0xf]
  %v45 = vld [vmem:[%s0 + $0x7c] sm:$0xf]
  %v46 = vld [vmem:[%s0 + $0x80] sm:$0xf]
  %v47 = vld [vmem:[%s0 + $0x84] sm:$0xf]
  %v48 = vld [vmem:[%s0 + $0x88] sm:$0xf]
  %v49 = vld [vmem:[%s0 + $0x8c] sm:$0xf]
  %v50 = vld [vmem:[%s0 + $0x90] sm:$0xf]
  %v51 = vld [vmem:[%s0 + $0x94] sm:$0xf]
  %v52 = vld [vmem:[%s0 + $0x98] sm:$0xf]
  %v53 = vld [vmem:[%s0 + $0x9c] sm:$0xf]
  %v54 = vld [vmem:[%s0 + $0xa0] sm:$0xf]
  %v55 = vld [vmem:[%s0 + $0xa4] sm:$0xf]
  %v56 = vld [vmem:[%s0 + $0xa8] sm:$0xf]
  %v57 = vld [vmem:[%s0 + $0xac] sm:$0xf]
  %v58 = vld [vmem:[%s0 + $0xb0] sm:$0xf]
  %v59 = vld [vmem:[%s0 + $0xb4] sm:$0xf]
  %v60 = vld [vmem:[%s0 + $0xb8] sm:$0xf]
  %v61 = vld [vmem:[%s0 + $0xbc] sm:$0xf]
  %v62 = vld [vmem:[%s0 + $0xc0] sm:$0xf]
  %v63 = vld [vmem:[%s0 + $0xc4] sm:$0xf]
  %v64 = vld [vmem:[%s0 + $0xc8] sm:$0xf]
  %v65 = vld [vmem:[%s0 + $0xcc] sm:$0xf]
  %v66 = vld [vmem:[%s0 + $0xd0] sm:$0xf]
  %v67 = vld [vmem:[%s0 + $0xd4] sm:$0xf]
  %v68 = vld [vmem:[%s0 + $0xd8] sm:$0xf]
  %v69 = vld [vmem:[%s0 + $0xdc] sm:$0xf]
  %v70 = vld [vmem:[%s0 + $0xe0] sm:$0xf]
  %v71 = vld [vmem:[%s0 + $0xe4] sm:$0xf]
  %v72 = vld [vmem:[%s0 + $0xe8] sm:$0xf]
  %v73 = vld [vmem:[%s0 + $0xec] sm:$0xf]
  %v74 = vld [vmem:[%s0 + $0xf0] sm:$0xf]
  %v75 = vld [vmem:[%s0 + $0xf4] sm:$0xf]
  %v76 = vld [vmem:[%s0 + $0xf8] sm:$0xf]
  %v77 = vld [vmem:[%s0 + $0xfc] sm:$0xf]
  %v78 = vunpack.c.l.bf16 %v14
  %v79 = vunpack.c.l.bf16 %v15
  %v80 = vunpack.c.l.bf16 %v16
  %v81 = vunpack.c.l.bf16 %v17
  %v82 = vunpack.c.l.bf16 %v18
  %v83 = vunpack.c.l.bf16 %v19
  %v84 = vunpack.c.l.bf16 %v20
  %v85 = vunpack.c.l.bf16 %v21
  %v86 = vunpack.c.l.bf16 %v22
  %v87 = vunpack.c.l.bf16 %v23
  %v88 = vunpack.c.l.bf16 %v24
  %v89 = vunpack.c.l.bf16 %v25
  %v90 = vunpack.c.l.bf16 %v26
  %v91 = vunpack.c.l.bf16 %v27
  %v92 = vunpack.c.l.bf16 %v28
  %v93 = vunpack.c.l.bf16 %v29
  %v94 = vunpack.c.l.bf16 %v30
  %v95 = vunpack.c.l.bf16 %v31
  %v96 = vunpack.c.l.bf16 %v32
  %v97 = vunpack.c.l.bf16 %v33
  %v98 = vunpack.c.l.bf16 %v34
  %v99 = vunpack.c.l.bf16 %v35
  %v100 = vunpack.c.l.bf16 %v36
  %v101 = vunpack.c.l.bf16 %v37
  %v102 = vunpack.c.l.bf16 %v38
  %v103 = vunpack.c.l.bf16 %v39
  %v104 = vunpack.c.l.bf16 %v40
  %v105 = vunpack.c.l.bf16 %v41
  %v106 = vunpack.c.l.bf16 %v42
  %v107 = vunpack.c.l.bf16 %v43
  %v108 = vunpack.c.l.bf16 %v44
  %v109 = vunpack.c.l.bf16 %v45
  %v110 = vunpack.c.l.bf16 %v46
  %v111 = vunpack.c.l.bf16 %v47
  %v112 = vunpack.c.l.bf16 %v48
  %v113 = vunpack.c.l.bf16 %v49
  %v114 = vunpack.c.l.bf16 %v50
  %v115 = vunpack.c.l.bf16 %v51
  %v116 = vunpack.c.l.bf16 %v52
  %v117 = vunpack.c.l.bf16 %v53
  %v118 = vunpack.c.l.bf16 %v54
  %v119 = vunpack.c.l.bf16 %v55
  %v120 = vunpack.c.l.bf16 %v56
  %v121 = vunpack.c.l.bf16 %v57
  %v122 = vunpack.c.l.bf16 %v58
  %v123 = vunpack.c.l.bf16 %v59
  %v124 = vunpack.c.l.bf16 %v60
  %v125 = vunpack.c.l.bf16 %v61
  %v126 = vunpack.c.l.bf16 %v62
  %v127 = vunpack.c.l.bf16 %v63
  %v128 = vunpack.c.l.bf16 %v64
  %v129 = vunpack.c.l.bf16 %v65
  %v130 = vunpack.c.l.bf16 %v66
  %v131 = vunpack.c.l.bf16 %v67
  %v132 = vunpack.c.l.bf16 %v68
  %v133 = vunpack.c.l.bf16 %v69
  %v134 = vunpack.c.l.bf16 %v70
  %v135 = vunpack.c.l.bf16 %v71
  %v136 = vunpack.c.l.bf16 %v72
  %v137 = vunpack.c.l.bf16 %v73
  %v138 = vunpack.c.l.bf16 %v74
  %v139 = vunpack.c.l.bf16 %v75
  %v140 = vunpack.c.l.bf16 %v76
  %v141 = vunpack.c.l.bf16 %v77
  %v142 = vld [vmem:[%s1] sm:$0x1]
  %v144 = vperm.slane %v142, 0
  %v146 = vmul.f32 %v78, %v144
  %v147 = vmul.f32 %v79, %v144
  %v148 = vmul.f32 %v80, %v144
  %v149 = vmul.f32 %v81, %v144
  %v150 = vmul.f32 %v82, %v144
  %v151 = vmul.f32 %v83, %v144
  %v152 = vmul.f32 %v84, %v144
  %v153 = vmul.f32 %v85, %v144
  %v154 = vmul.f32 %v86, %v144
  %v155 = vmul.f32 %v87, %v144
  %v156 = vmul.f32 %v88, %v144
  %v157 = vmul.f32 %v89, %v144
  %v158 = vmul.f32 %v90, %v144
  %v159 = vmul.f32 %v91, %v144
  %v160 = vmul.f32 %v92, %v144
  %v161 = vmul.f32 %v93, %v144
  %v162 = vmul.f32 %v94, %v144
  %v163 = vmul.f32 %v95, %v144
  %v164 = vmul.f32 %v96, %v144
  %v165 = vmul.f32 %v97, %v144
  %v166 = vmul.f32 %v98, %v144
  %v167 = vmul.f32 %v99, %v144
  %v168 = vmul.f32 %v100, %v144
  %v169 = vmul.f32 %v101, %v144
  %v170 = vmul.f32 %v102, %v144
  %v171 = vmul.f32 %v103, %v144
  %v172 = vmul.f32 %v104, %v144
  %v173 = vmul.f32 %v105, %v144
  %v174 = vmul.f32 %v106, %v144
  %v175 = vmul.f32 %v107, %v144
  %v176 = vmul.f32 %v108, %v144
  %v177 = vmul.f32 %v109, %v144
  %v178 = vmul.f32 %v110, %v144
  %v179 = vmul.f32 %v111, %v144
  %v180 = vmul.f32 %v112, %v144
  %v181 = vmul.f32 %v113, %v144
  %v182 = vmul.f32 %v114, %v144
  %v183 = vmul.f32 %v115, %v144
  %v184 = vmul.f32 %v116, %v144
  %v185 = vmul.f32 %v117, %v144
  %v186 = vmul.f32 %v118, %v144
  %v187 = vmul.f32 %v119, %v144
  %v188 = vmul.f32 %v120, %v144
  %v189 = vmul.f32 %v121, %v144
  %v190 = vmul.f32 %v122, %v144
  %v191 = vmul.f32 %v123, %v144
  %v192 = vmul.f32 %v124, %v144
  %v193 = vmul.f32 %v125, %v144
  %v194 = vmul.f32 %v126, %v144
  %v195 = vmul.f32 %v127, %v144
  %v196 = vmul.f32 %v128, %v144
  %v197 = vmul.f32 %v129, %v144
  %v198 = vmul.f32 %v130, %v144
  %v199 = vmul.f32 %v131, %v144
  %v200 = vmul.f32 %v132, %v144
  %v201 = vmul.f32 %v133, %v144
  %v202 = vmul.f32 %v134, %v144
  %v203 = vmul.f32 %v135, %v144
  %v204 = vmul.f32 %v136, %v144
  %v205 = vmul.f32 %v137, %v144
  %v206 = vmul.f32 %v138, %v144
  %v207 = vmul.f32 %v139, %v144
  %v208 = vmul.f32 %v140, %v144
  %v209 = vmul.f32 %v141, %v144
  %v210 = vld [vmem:[%s2] sm:$0x1]
  %v212 = vperm.slane %v210, 0
  %v214 = vadd.f32 %v146, %v212
  %v215 = vadd.f32 %v147, %v212
  %v216 = vadd.f32 %v148, %v212
  %v217 = vadd.f32 %v149, %v212
  %v218 = vadd.f32 %v150, %v212
  %v219 = vadd.f32 %v151, %v212
  %v220 = vadd.f32 %v152, %v212
  %v221 = vadd.f32 %v153, %v212
  %v222 = vadd.f32 %v154, %v212
  %v223 = vadd.f32 %v155, %v212
  %v224 = vadd.f32 %v156, %v212
  %v225 = vadd.f32 %v157, %v212
  %v226 = vadd.f32 %v158, %v212
  %v227 = vadd.f32 %v159, %v212
  %v228 = vadd.f32 %v160, %v212
  %v229 = vadd.f32 %v161, %v212
  %v230 = vadd.f32 %v162, %v212
  %v231 = vadd.f32 %v163, %v212
  %v232 = vadd.f32 %v164, %v212
  %v233 = vadd.f32 %v165, %v212
  %v234 = vadd.f32 %v166, %v212
  %v235 = vadd.f32 %v167, %v212
  %v236 = vadd.f32 %v168, %v212
  %v237 = vadd.f32 %v169, %v212
  %v238 = vadd.f32 %v170, %v212
  %v239 = vadd.f32 %v171, %v212
  %v240 = vadd.f32 %v172, %v212
  %v241 = vadd.f32 %v173, %v212
  %v242 = vadd.f32 %v174, %v212
  %v243 = vadd.f32 %v175, %v212
  %v244 = vadd.f32 %v176, %v212
  %v245 = vadd.f32 %v177, %v212
  %v246 = vadd.f32 %v178, %v212
  %v247 = vadd.f32 %v179, %v212
  %v248 = vadd.f32 %v180, %v212
  %v249 = vadd.f32 %v181, %v212
  %v250 = vadd.f32 %v182, %v212
  %v251 = vadd.f32 %v183, %v212
  %v252 = vadd.f32 %v184, %v212
  %v253 = vadd.f32 %v185, %v212
  %v254 = vadd.f32 %v186, %v212
  %v255 = vadd.f32 %v187, %v212
  %v256 = vadd.f32 %v188, %v212
  %v257 = vadd.f32 %v189, %v212
  %v258 = vadd.f32 %v190, %v212
  %v259 = vadd.f32 %v191, %v212
  %v260 = vadd.f32 %v192, %v212
  %v261 = vadd.f32 %v193, %v212
  %v262 = vadd.f32 %v194, %v212
  %v263 = vadd.f32 %v195, %v212
  %v264 = vadd.f32 %v196, %v212
  %v265 = vadd.f32 %v197, %v212
  %v266 = vadd.f32 %v198, %v212
  %v267 = vadd.f32 %v199, %v212
  %v268 = vadd.f32 %v200, %v212
  %v269 = vadd.f32 %v201, %v212
  %v270 = vadd.f32 %v202, %v212
  %v271 = vadd.f32 %v203, %v212
  %v272 = vadd.f32 %v204, %v212
  %v273 = vadd.f32 %v205, %v212
  %v274 = vadd.f32 %v206, %v212
  %v275 = vadd.f32 %v207, %v212
  %v276 = vadd.f32 %v208, %v212
  %v277 = vadd.f32 %v209, %v212
  %v278 = vmax.f32 %v214, 0.0
  %v279 = vmax.f32 %v215, 0.0
  %v280 = vmax.f32 %v216, 0.0
  %v281 = vmax.f32 %v217, 0.0
  %v282 = vmax.f32 %v218, 0.0
  %v283 = vmax.f32 %v219, 0.0
  %v284 = vmax.f32 %v220, 0.0
  %v285 = vmax.f32 %v221, 0.0
  %v286 = vmax.f32 %v222, 0.0
  %v287 = vmax.f32 %v223, 0.0
  %v288 = vmax.f32 %v224, 0.0
  %v289 = vmax.f32 %v225, 0.0
  %v290 = vmax.f32 %v226, 0.0
  %v291 = vmax.f32 %v227, 0.0
  %v292 = vmax.f32 %v228, 0.0
  %v293 = vmax.f32 %v229, 0.0
  %v294 = vmax.f32 %v230, 0.0
  %v295 = vmax.f32 %v231, 0.0
  %v296 = vmax.f32 %v232, 0.0
  %v297 = vmax.f32 %v233, 0.0
  %v298 = vmax.f32 %v234, 0.0
  %v299 = vmax.f32 %v235, 0.0
  %v300 = vmax.f32 %v236, 0.0
  %v301 = vmax.f32 %v237, 0.0
  %v302 = vmax.f32 %v238, 0.0
  %v303 = vmax.f32 %v239, 0.0
  %v304 = vmax.f32 %v240, 0.0
  %v305 = vmax.f32 %v241, 0.0
  %v306 = vmax.f32 %v242, 0.0
  %v307 = vmax.f32 %v243, 0.0
  %v308 = vmax.f32 %v244, 0.0
  %v309 = vmax.f32 %v245, 0.0
  %v310 = vmax.f32 %v246, 0.0
  %v311 = vmax.f32 %v247, 0.0
  %v312 = vmax.f32 %v248, 0.0
  %v313 = vmax.f32 %v249, 0.0
  %v314 = vmax.f32 %v250, 0.0
  %v315 = vmax.f32 %v251, 0.0
  %v316 = vmax.f32 %v252, 0.0
  %v317 = vmax.f32 %v253, 0.0
  %v318 = vmax.f32 %v254, 0.0
  %v319 = vmax.f32 %v255, 0.0
  %v320 = vmax.f32 %v256, 0.0
  %v321 = vmax.f32 %v257, 0.0
  %v322 = vmax.f32 %v258, 0.0
  %v323 = vmax.f32 %v259, 0.0
  %v324 = vmax.f32 %v260, 0.0
  %v325 = vmax.f32 %v261, 0.0
  %v326 = vmax.f32 %v262, 0.0
  %v327 = vmax.f32 %v263, 0.0
  %v328 = vmax.f32 %v264, 0.0
  %v329 = vmax.f32 %v265, 0.0
  %v330 = vmax.f32 %v266, 0.0
  %v331 = vmax.f32 %v267, 0.0
  %v332 = vmax.f32 %v268, 0.0
  %v333 = vmax.f32 %v269, 0.0
  %v334 = vmax.f32 %v270, 0.0
  %v335 = vmax.f32 %v271, 0.0
  %v336 = vmax.f32 %v272, 0.0
  %v337 = vmax.f32 %v273, 0.0
  %v338 = vmax.f32 %v274, 0.0
  %v339 = vmax.f32 %v275, 0.0
  %v340 = vmax.f32 %v276, 0.0
  %v341 = vmax.f32 %v277, 0.0
  %342 = vst [vmem:[%s3] sm:$0xff] %v278
  %343 = vst [vmem:[%s3 + $0x8] sm:$0xff] %v279
  %344 = vst [vmem:[%s3 + $0x10] sm:$0xff] %v280
  %345 = vst [vmem:[%s3 + $0x18] sm:$0xff] %v281
  %346 = vst [vmem:[%s3 + $0x20] sm:$0xff] %v282
  %347 = vst [vmem:[%s3 + $0x28] sm:$0xff] %v283
  %348 = vst [vmem:[%s3 + $0x30] sm:$0xff] %v284
  %349 = vst [vmem:[%s3 + $0x38] sm:$0xff] %v285
  %350 = vst [vmem:[%s3 + $0x40] sm:$0xff] %v286
  %351 = vst [vmem:[%s3 + $0x48] sm:$0xff] %v287
  %352 = vst [vmem:[%s3 + $0x50] sm:$0xff] %v288
  %353 = vst [vmem:[%s3 + $0x58] sm:$0xff] %v289
  %354 = vst [vmem:[%s3 + $0x60] sm:$0xff] %v290
  %355 = vst [vmem:[%s3 + $0x68] sm:$0xff] %v291
  %356 = vst [vmem:[%s3 + $0x70] sm:$0xff] %v292
  %357 = vst [vmem:[%s3 + $0x78] sm:$0xff] %v293
  %358 = vst [vmem:[%s3 + $0x80] sm:$0xff] %v294
  %359 = vst [vmem:[%s3 + $0x88] sm:$0xff] %v295
  %360 = vst [vmem:[%s3 + $0x90] sm:$0xff] %v296
  %361 = vst [vmem:[%s3 + $0x98] sm:$0xff] %v297
  %362 = vst [vmem:[%s3 + $0xa0] sm:$0xff] %v298
  %363 = vst [vmem:[%s3 + $0xa8] sm:$0xff] %v299
  %364 = vst [vmem:[%s3 + $0xb0] sm:$0xff] %v300
  %365 = vst [vmem:[%s3 + $0xb8] sm:$0xff] %v301
  %366 = vst [vmem:[%s3 + $0xc0] sm:$0xff] %v302
  %367 = vst [vmem:[%s3 + $0xc8] sm:$0xff] %v303
  %368 = vst [vmem:[%s3 + $0xd0] sm:$0xff] %v304
  %369 = vst [vmem:[%s3 + $0xd8] sm:$0xff] %v305
  %370 = vst [vmem:[%s3 + $0xe0] sm:$0xff] %v306
  %371 = vst [vmem:[%s3 + $0xe8] sm:$0xff] %v307
  %372 = vst [vmem:[%s3 + $0xf0] sm:$0xff] %v308
  %373 = vst [vmem:[%s3 + $0xf8] sm:$0xff] %v309
  %374 = vst [vmem:[%s3 + $0x100] sm:$0xff] %v310
  %375 = vst [vmem:[%s3 + $0x108] sm:$0xff] %v311
  %376 = vst [vmem:[%s3 + $0x110] sm:$0xff] %v312
  %377 = vst [vmem:[%s3 + $0x118] sm:$0xff] %v313
  %378 = vst [vmem:[%s3 + $0x120] sm:$0xff] %v314
  %379 = vst [vmem:[%s3 + $0x128] sm:$0xff] %v315
  %380 = vst [vmem:[%s3 + $0x130] sm:$0xff] %v316
  %381 = vst [vmem:[%s3 + $0x138] sm:$0xff] %v317
  %382 = vst [vmem:[%s3 + $0x140] sm:$0xff] %v318
  %383 = vst [vmem:[%s3 + $0x148] sm:$0xff] %v319
  %384 = vst [vmem:[%s3 + $0x150] sm:$0xff] %v320
  %385 = vst [vmem:[%s3 + $0x158] sm:$0xff] %v321
  %386 = vst [vmem:[%s3 + $0x160] sm:$0xff] %v322
  %387 = vst [vmem:[%s3 + $0x168] sm:$0xff] %v323
  %388 = vst [vmem:[%s3 + $0x170] sm:$0xff] %v324
  %389 = vst [vmem:[%s3 + $0x178] sm:$0xff] %v325
  %390 = vst [vmem:[%s3 + $0x180] sm:$0xff] %v326
  %391 = vst [vmem:[%s3 + $0x188] sm:$0xff] %v327
  %392 = vst [vmem:[%s3 + $0x190] sm:$0xff] %v328
  %393 = vst [vmem:[%s3 + $0x198] sm:$0xff] %v329
  %394 = vst [vmem:[%s3 + $0x1a0] sm:$0xff] %v330
  %395 = vst [vmem:[%s3 + $0x1a8] sm:$0xff] %v331
  %396 = vst [vmem:[%s3 + $0x1b0] sm:$0xff] %v332
  %397 = vst [vmem:[%s3 + $0x1b8] sm:$0xff] %v333
  %398 = vst [vmem:[%s3 + $0x1c0] sm:$0xff] %v334
  %399 = vst [vmem:[%s3 + $0x1c8] sm:$0xff] %v335
  %400 = vst [vmem:[%s3 + $0x1d0] sm:$0xff] %v336
  %401 = vst [vmem:[%s3 + $0x1d8] sm:$0xff] %v337
  %402 = vst [vmem:[%s3 + $0x1e0] sm:$0xff] %v338
  %403 = vst [vmem:[%s3 + $0x1e8] sm:$0xff] %v339
  %404 = vst [vmem:[%s3 + $0x1f0] sm:$0xff] %v340
  %405 = vst [vmem:[%s3 + $0x1f8] sm:$0xff] %v341
  // Predicated region
  $region14: #{tripple_conv.7} parent=0 // pred_check
    _
  $region15: #{tripple_conv.7} parent=0 // pred_check_branch
    %407 = sbr.rel (0) target = $region17
  $region16: #{tripple_conv.7} parent=0 // pred_region
    _
  $region17: #{tripple_conv.7} parent=0 // pred_fallthru
    _
  // Predicated region
  $region18: #{tripple_conv.7} parent=0 // pred_check
    _
  $region19: #{tripple_conv.7} parent=0 // pred_check_branch
    %409 = sbr.rel (0) target = $region21
  $region20: #{tripple_conv.7} parent=0 // pred_region
    _
  $region21: #{tripple_conv.7} parent=0 // pred_fallthru
    _

// kernel: tripple_conv.4
$region0: #{tripple_conv.4}
  #allocation0 [shape = 'u32[]', space=smem, size = 0x4, offset = 0x4, fixed_abs, tag = 'smem constant byte address 0x4 - core index']
  #allocation1 [shape = 'u32[72,128]{1,0:T(1,128)}', space=vmem, size = 0x9000, scoped, tag = 'internal scratch']
  #allocation2 [shape = 'bf16[18,18,128]{2,1,0:T(8,128)(2,1)}', space=vmem, size = 0x1b000, scoped, tag = 'scratch operand']
  %s0 = inlined_call_operand.vmem [shape: bf16[2,16,16,128], index: 0, kind: input, shape index: {}]
  %s1 = inlined_call_operand.vmem [shape: f32[1,128], index: 1, kind: input, shape index: {}, may-alias: {1,2}]
  %s2 = inlined_call_operand.vmem [shape: f32[1,128], index: 2, kind: input, shape index: {}, may-alias: {1,2}]
  %s3 = inlined_call_operand.vmem [shape: bf16[9,128,128], index: 3, kind: input, shape index: {}]
  %s4 = inlined_call_operand.vmem [shape: bf16[2,16,16,128], index: 4, kind: output, shape index: {0}]
  %s5 = inlined_call_operand.vmem [shape: f32[2,2,128], index: 5, kind: output, shape index: {1}]
  %6 = xla_tuple %s4, %s5
  %s7 = sld [smem:[#allocation0]]
  $region61: #{tripple_conv.4} parent=0
    _
  %s9 = ssub.s32 1, %s7
  %s10 = scalar_select 0, %s9, %s7
  loop: start=0, step=1, limit=4
  $region2: #{tripple_conv.4} parent=0 // loop_pre_header
    _
  $region3: #{tripple_conv.4} parent=0 // loop_header
    %s12 = sphi 0, %s16
    %p13 = scmp.ge.s32.totalorder %s12, 4
    %s19 = sphi 0, %s31
    %s20 = sphi 0, %s27
    %s21 = sphi 0, %s19
    %s22 = sphi 0, %s20
    %s23 = sphi 0, %s21
    %s24 = sphi 0, %s22
    %s34 = sphi 0, %s36
    %s37 = sphi 0, %s34
    %s38 = sphi 0, %s37
    %s54 = sphi 0, %s38
    %s58 = sphi 0, %s58
    %s60 = sphi 0, %s58
    %s61 = sphi 0, %s60
    %s75 = sphi 0, %s61
    %s79 = sphi 0, %s79
    %s81 = sphi 0, %s79
    %s82 = sphi 0, %s81
    %s96 = sphi 0, %s82
    %s100 = sphi 0, %s100
    %s102 = sphi 0, %s100
    %s103 = sphi 0, %s102
    %s117 = sphi 0, %s103
    %s125 = sphi 0, %s127
    %s128 = sphi 0, %s125
    %s129 = sphi 0, %s128
    %s145 = sphi 0, %s129
    %s151 = sphi 0, %s153
    %s154 = sphi 0, %s151
    %s155 = sphi 0, %s154
    %s171 = sphi 0, %s155
  $region4: #{tripple_conv.4} parent=0 // loop_header_branch
    %15 = sbr.rel (%p13) target = $region8
  $region5: #{tripple_conv.4} parent=0 // loop_body
    %s17 = ssub.s32 %s12, 1
    %s18 = ssub.s32 %s12, 2
    %s25 = sadd.s32 1, %s20
    %p26 = scmp.ge.s32.totalorder %s25, 1
    %s27 = scalar_select %p26, 0, %s25
    %s28 = sadd.s32 1, %s19
    %s29 = scalar_select %p26, %s28, %s19
    %p30 = scmp.ge.s32.totalorder %s29, 2
    %s31 = scalar_select %p30, 0, %s29
    %s32 = ssub.s32 %s19, %s31
    %p33 = scmp.eq.s32.totalorder %s32, 0
    %s35 = sadd.s32 %s34, 1
    %s36 = scalar_select %p33, %s34, %s35
    %p39 = pneg %p33
    %p40 = scmp.eq.s32.totalorder %s12, 1
    %p41 = por %p39, %p40
    %p42 = scmp.ne.s32.totalorder %s34, %s37
    %p43 = scmp.eq.s32.totalorder %s12, 0
    %p44 = por %p42, %p43
    %p45 = scmp.ne.s32.totalorder %s34, %s37
    %p46 = scmp.eq.s32.totalorder %s17, 1
    %p47 = por %p45, %p46
    %p48 = scmp.ne.s32.totalorder %s37, %s38
    %p49 = scmp.eq.s32.totalorder %s17, 0
    %p50 = por %p48, %p49
    %p51 = scmp.ne.s32.totalorder %s37, %s38
    %p52 = scmp.eq.s32.totalorder %s18, 1
    %p53 = por %p51, %p52
    %p55 = scmp.ne.s32.totalorder %s38, %s54
    %p56 = scmp.eq.s32.totalorder %s18, 0
    %p57 = por %p55, %p56
    %s59 = sadd.s32 %s58, 1
    %p62 = scmp.eq.s32.totalorder %s12, 1
    %p63 = scmp.ne.s32.totalorder %s58, %s60
    %p64 = scmp.eq.s32.totalorder %s12, 0
    %p65 = por %p63, %p64
    %p66 = scmp.ne.s32.totalorder %s58, %s60
    %p67 = scmp.eq.s32.totalorder %s17, 1
    %p68 = por %p66, %p67
    %p69 = scmp.ne.s32.totalorder %s60, %s61
    %p70 = scmp.eq.s32.totalorder %s17, 0
    %p71 = por %p69, %p70
    %p72 = scmp.ne.s32.totalorder %s60, %s61
    %p73 = scmp.eq.s32.totalorder %s18, 1
    %p74 = por %p72, %p73
    %p76 = scmp.ne.s32.totalorder %s61, %s75
    %p77 = scmp.eq.s32.totalorder %s18, 0
    %p78 = por %p76, %p77
    %s80 = sadd.s32 %s79, 1
    %p83 = scmp.eq.s32.totalorder %s12, 1
    %p84 = scmp.ne.s32.totalorder %s79, %s81
    %p85 = scmp.eq.s32.totalorder %s12, 0
    %p86 = por %p84, %p85
    %p87 = scmp.ne.s32.totalorder %s79, %s81
    %p88 = scmp.eq.s32.totalorder %s17, 1
    %p89 = por %p87, %p88
    %p90 = scmp.ne.s32.totalorder %s81, %s82
    %p91 = scmp.eq.s32.totalorder %s17, 0
    %p92 = por %p90, %p91
    %p93 = scmp.ne.s32.totalorder %s81, %s82
    %p94 = scmp.eq.s32.totalorder %s18, 1
    %p95 = por %p93, %p94
    %p97 = scmp.ne.s32.totalorder %s82, %s96
    %p98 = scmp.eq.s32.totalorder %s18, 0
    %p99 = por %p97, %p98
    %s101 = sadd.s32 %s100, 1
    %p104 = scmp.eq.s32.totalorder %s12, 1
    %p105 = scmp.ne.s32.totalorder %s100, %s102
    %p106 = scmp.eq.s32.totalorder %s12, 0
    %p107 = por %p105, %p106
    %p108 = scmp.ne.s32.totalorder %s100, %s102
    %p109 = scmp.eq.s32.totalorder %s17, 1
    %p110 = por %p108, %p109
    %p111 = scmp.ne.s32.totalorder %s102, %s103
    %p112 = scmp.eq.s32.totalorder %s17, 0
    %p113 = por %p111, %p112
    %p114 = scmp.ne.s32.totalorder %s102, %s103
    %p115 = scmp.eq.s32.totalorder %s18, 1
    %p116 = por %p114, %p115
    %p118 = scmp.ne.s32.totalorder %s103, %s117
    %p119 = scmp.eq.s32.totalorder %s18, 0
    %p120 = por %p118, %p119
    %s121 = ssub.s32 %s19, %s31
    %s122 = ssub.s32 %s20, %s27
    %s123 = sor.u32 %s121, %s122
    %p124 = scmp.eq.s32.totalorder %s123, 0
    %s126 = sadd.s32 %s125, 1
    %s127 = scalar_select %p124, %s125, %s126
    %p130 = pneg %p124
    %p131 = scmp.eq.s32.totalorder %s12, 1
    %p132 = por %p130, %p131
    %p133 = scmp.ne.s32.totalorder %s125, %s128
    %p134 = scmp.eq.s32.totalorder %s12, 0
    %p135 = por %p133, %p134
    %p136 = scmp.ne.s32.totalorder %s125, %s128
    %p137 = scmp.eq.s32.totalorder %s17, 1
    %p138 = por %p136, %p137
    %p139 = scmp.ne.s32.totalorder %s128, %s129
    %p140 = scmp.eq.s32.totalorder %s17, 0
    %p141 = por %p139, %p140
    %p142 = scmp.ne.s32.totalorder %s128, %s129
    %p143 = scmp.eq.s32.totalorder %s18, 1
    %p144 = por %p142, %p143
    %p146 = scmp.ne.s32.totalorder %s129, %s145
    %p147 = scmp.eq.s32.totalorder %s18, 0
    %p148 = por %p146, %p147
    %s149 = ssub.s32 %s19, %s31
    %p150 = scmp.eq.s32.totalorder %s149, 0
    %s152 = sadd.s32 %s151, 1
    %s153 = scalar_select %p150, %s151, %s152
    %p156 = pneg %p150
    %p157 = scmp.eq.s32.totalorder %s12, 1
    %p158 = por %p156, %p157
    %p159 = scmp.ne.s32.totalorder %s151, %s154
    %p160 = scmp.eq.s32.totalorder %s12, 0
    %p161 = por %p159, %p160
    %p162 = scmp.ne.s32.totalorder %s151, %s154
    %p163 = scmp.eq.s32.totalorder %s17, 1
    %p164 = por %p162, %p163
    %p165 = scmp.ne.s32.totalorder %s154, %s155
    %p166 = scmp.eq.s32.totalorder %s17, 0
    %p167 = por %p165, %p166
    %p168 = scmp.ne.s32.totalorder %s154, %s155
    %p169 = scmp.eq.s32.totalorder %s18, 1
    %p170 = por %p168, %p169
    %p172 = scmp.ne.s32.totalorder %s155, %s171
    %p173 = scmp.eq.s32.totalorder %s18, 0
    %p174 = por %p172, %p173
    %p175 = scmp.le.s32.totalorder 1, %s12
    %p176 = scmp.lt.s32.totalorder %s12, 3
    %p177 = pnand %p175, %p176
    %p178 = pneg %p177
    // Predicated region
    $region9: #{tripple_conv.4} parent=5 // pred_check
      _
    $region10: #{tripple_conv.4} parent=5 // pred_check_branch
      %180 = sbr.rel (%p177) target = $region12
    $region11: #{tripple_conv.4} parent=5 // pred_region
      %s181 = ssub.s32 %s12, 1
      // Predicated region
      $region13: #{tripple_conv.4} parent=11 // pred_check
        %p182 = pneg %p71
      $region14: #{tripple_conv.4} parent=11 // pred_check_branch
        %184 = sbr.rel (%p182) target = $region16
      $region15: #{tripple_conv.4} parent=11 // pred_region
        _
      $region16: #{tripple_conv.4} parent=11 // pred_fallthru
        _
      // Predicated region
      $region17: #{tripple_conv.4} parent=11 // pred_check
        %p185 = pneg %p92
      $region18: #{tripple_conv.4} parent=11 // pred_check_branch
        %187 = sbr.rel (%p185) target = $region20
      $region19: #{tripple_conv.4} parent=11 // pred_region
        _
      $region20: #{tripple_conv.4} parent=11 // pred_fallthru
        _
      // Predicated region
      $region21: #{tripple_conv.4} parent=11 // pred_check
        %p188 = pneg %p113
      $region22: #{tripple_conv.4} parent=11 // pred_check_branch
        %190 = sbr.rel (%p188) target = $region24
      $region23: #{tripple_conv.4} parent=11 // pred_region
        _
      $region24: #{tripple_conv.4} parent=11 // pred_fallthru
        _
    $region12: #{tripple_conv.4} parent=5 // pred_fallthru
      _
    %p191 = scmp.lt.s32.totalorder %s12, 2
    // Predicated region
    $region25: #{tripple_conv.4} parent=5 // pred_check
      %p192 = pneg %p191
    $region26: #{tripple_conv.4} parent=5 // pred_check_branch
      %194 = sbr.rel (%p192) target = $region28
    $region27: #{tripple_conv.4} parent=5 // pred_region
      // Predicated region
      $region29: #{tripple_conv.4} parent=27 // pred_check
        %p195 = pneg %p44
      $region30: #{tripple_conv.4} parent=27 // pred_check_branch
        %197 = sbr.rel (%p195) target = $region32
      $region31: #{tripple_conv.4} parent=27 // pred_region
        %p198 = scmp.lt.s32.totalorder %s19, 1
        %s199 = scalar_select %p198, %s19, 1
        %s200 = smul.addr %s199, 32
        %s201 = smul.addr %s200, 4
        %s202 = scalar_lea.vmem %s0, %s201
      $region32: #{tripple_conv.4} parent=27 // pred_fallthru
        _
    $region28: #{tripple_conv.4} parent=5 // pred_fallthru
      _
    %p203 = scmp.le.s32.totalorder 1, %s12
    %p204 = scmp.lt.s32.totalorder %s12, 3
    %p205 = pnand %p203, %p204
    %p206 = pneg %p205
    // Predicated region
    $region33: #{tripple_conv.4} parent=5 // pred_check
      _
    $region34: #{tripple_conv.4} parent=5 // pred_check_branch
      %208 = sbr.rel (%p205) target = $region36
    $region35: #{tripple_conv.4} parent=5 // pred_region
      %s209 = ssub.s32 %s12, 1
      %p210 = scmp.lt.s32.totalorder %s21, 1
      %s211 = scalar_select %p210, %s21, 1
      %s212 = smul.addr %s211, 32
      %s213 = smul.addr %s212, 4
      %s214 = scalar_lea.vmem %s0, %s213
      %p215 = pneg %p50
      %p216 = pneg %p47
      %p217 = pneg %p71
      %p218 = pneg %p68
      %p219 = pneg %p92
      %p220 = pneg %p89
      %p221 = pneg %p113
      %p222 = pneg %p110
      %p223 = pneg %p141
      %p224 = pneg %p138
      %s225 = smul.u32 16, %s22
      %p226 = scmp.lt.s32.totalorder %s21, 1
      %s227 = scalar_select %p226, %s21, 1
      %p228 = scmp.lt.s32.totalorder %s225, 15
      %s229 = scalar_select %p228, %s225, 15
      %s230 = smul.addr %s229, 2
      %s231 = smul.addr %s227, 32
      %s232 = sadd.s32 %s230, %s231
      %s233 = smul.addr %s232, 4
      %s234 = scalar_lea.vmem %s4, %s233
      %p235 = pneg %p167
      %p236 = pneg %p164
      %p237 = scmp.lt.s32.totalorder %s21, 1
      %s238 = scalar_select %p237, %s21, 1
      %s239 = smul.addr %s238, 2
      %s240 = scalar_lea.vmem %s5, %s239
      %p241 = scmp.lt.s32.totalorder %s21, 1
      %s242 = scalar_select %p241, %s21, 1
      %s243 = smul.addr %s242, 32
      %s244 = smul.addr %s243, 4
      %s245 = scalar_lea.vmem %s0, %s244
      %s246 = smul.u32 16, %s22
      %p247 = scmp.lt.s32.totalorder %s21, 1
      %s248 = scalar_select %p247, %s21, 1
      %p249 = scmp.lt.s32.totalorder %s246, 15
      %s250 = scalar_select %p249, %s246, 15
      %s251 = smul.addr %s250, 2
      %s252 = smul.addr %s248, 32
      %s253 = sadd.s32 %s251, %s252
      %s254 = smul.addr %s253, 4
      %s255 = scalar_lea.vmem %s4, %s254
      %s256 = smul.u32 16, %s22
      %p257 = scmp.lt.s32.totalorder %s21, 1
      %s258 = scalar_select %p257, %s21, 1
      %s259 = smul.addr %s258, 2
      %s260 = scalar_lea.vmem %s5, %s259
      %p262 = scmp.eq.s32.totalorder %s22, 0
      // Predicated region
      $region37: #{tripple_conv.4} parent=35 // pred_check
        %p263 = pneg %p262
      $region38: #{tripple_conv.4} parent=35 // pred_check_branch
        %265 = sbr.rel (%p263) target = $region40
      $region39: #{tripple_conv.4} parent=35 // pred_region
        %266 = vst [vmem:[#allocation2] sm:$0xf] 0
        %267 = vst [vmem:[#allocation2 + $0x4] sm:$0xf] 0
        %268 = vst [vmem:[#allocation2 + $0x8] sm:$0x1] 0
        %s269 = scalar_lea.vmem [#allocation2], 204
        %270 = vst [vmem:[%s269] sm:$0xf] 0
        %271 = vst [vmem:[%s269 + $0x4] sm:$0xf] 0
        %272 = vst [vmem:[%s269 + $0x8] sm:$0x1] 0
        %s273 = scalar_lea.vmem [#allocation2], 12
        %vm274 = vcmask 1040384
        %vm275 = vsmask.f32 256
        %vm276 = vmand %vm274, %vm275
        %v277 = vld [vmem:[%s273] sm:$0x1]
        %v278 = vsel %vm276, 0, %v277
        %279 = vst [vmem:[%s273] sm:$0x1] %v278
        %v280 = vld [vmem:[%s273 + $0xc] sm:$0x1]
        %v281 = vsel %vm276, 0, %v280
        %282 = vst [vmem:[%s273 + $0xc] sm:$0x1] %v281
        %v283 = vld [vmem:[%s273 + $0x18] sm:$0x1]
        %v284 = vsel %vm276, 0, %v283
        %285 = vst [vmem:[%s273 + $0x18] sm:$0x1] %v284
        %v286 = vld [vmem:[%s273 + $0x24] sm:$0x1]
        %v287 = vsel %vm276, 0, %v286
        %288 = vst [vmem:[%s273 + $0x24] sm:$0x1] %v287
        %v289 = vld [vmem:[%s273 + $0x30] sm:$0x1]
        %v290 = vsel %vm276, 0, %v289
        %291 = vst [vmem:[%s273 + $0x30] sm:$0x1] %v290
        %v292 = vld [vmem:[%s273 + $0x3c] sm:$0x1]
        %v293 = vsel %vm276, 0, %v292
        %294 = vst [vmem:[%s273 + $0x3c] sm:$0x1] %v293
        %v295 = vld [vmem:[%s273 + $0x48] sm:$0x1]
        %v296 = vsel %vm276, 0, %v295
        %297 = vst [vmem:[%s273 + $0x48] sm:$0x1] %v296
        %v298 = vld [vmem:[%s273 + $0x54] sm:$0x1]
        %v299 = vsel %vm276, 0, %v298
        %300 = vst [vmem:[%s273 + $0x54] sm:$0x1] %v299
        %v301 = vld [vmem:[%s273 + $0x60] sm:$0x1]
        %v302 = vsel %vm276, 0, %v301
        %303 = vst [vmem:[%s273 + $0x60] sm:$0x1] %v302
        %v304 = vld [vmem:[%s273 + $0x6c] sm:$0x1]
        %v305 = vsel %vm276, 0, %v304
        %306 = vst [vmem:[%s273 + $0x6c] sm:$0x1] %v305
        %v307 = vld [vmem:[%s273 + $0x78] sm:$0x1]
        %v308 = vsel %vm276, 0, %v307
        %309 = vst [vmem:[%s273 + $0x78] sm:$0x1] %v308
        %v310 = vld [vmem:[%s273 + $0x84] sm:$0x1]
        %v311 = vsel %vm276, 0, %v310
        %312 = vst [vmem:[%s273 + $0x84] sm:$0x1] %v311
        %v313 = vld [vmem:[%s273 + $0x90] sm:$0x1]
        %v314 = vsel %vm276, 0, %v313
        %315 = vst [vmem:[%s273 + $0x90] sm:$0x1] %v314
        %v316 = vld [vmem:[%s273 + $0x9c] sm:$0x1]
        %v317 = vsel %vm276, 0, %v316
        %318 = vst [vmem:[%s273 + $0x9c] sm:$0x1] %v317
        %v319 = vld [vmem:[%s273 + $0xa8] sm:$0x1]
        %v320 = vsel %vm276, 0, %v319
        %321 = vst [vmem:[%s273 + $0xa8] sm:$0x1] %v320
        %v322 = vld [vmem:[%s273 + $0xb4] sm:$0x1]
        %v323 = vsel %vm276, 0, %v322
        %324 = vst [vmem:[%s273 + $0xb4] sm:$0x1] %v323
        %vm325 = vsmask.f32 7938
        %vm326 = vmand %vm274, %vm325
        %v327 = vld [vmem:[%s273 + $0x8] sm:$0x1]
        %v328 = vsel %vm326, 0, %v327
        %329 = vst [vmem:[%s273 + $0x8] sm:$0x1] %v328
        %v330 = vld [vmem:[%s273 + $0x14] sm:$0x1]
        %v331 = vsel %vm326, 0, %v330
        %332 = vst [vmem:[%s273 + $0x14] sm:$0x1] %v331
        %v333 = vld [vmem:[%s273 + $0x20] sm:$0x1]
        %v334 = vsel %vm326, 0, %v333
        %335 = vst [vmem:[%s273 + $0x20] sm:$0x1] %v334
        %v336 = vld [vmem:[%s273 + $0x2c] sm:$0x1]
        %v337 = vsel %vm326, 0, %v336
        %338 = vst [vmem:[%s273 + $0x2c] sm:$0x1] %v337
        %v339 = vld [vmem:[%s273 + $0x38] sm:$0x1]
        %v340 = vsel %vm326, 0, %v339
        %341 = vst [vmem:[%s273 + $0x38] sm:$0x1] %v340
        %v342 = vld [vmem:[%s273 + $0x44] sm:$0x1]
        %v343 = vsel %vm326, 0, %v342
        %344 = vst [vmem:[%s273 + $0x44] sm:$0x1] %v343
        %v345 = vld [vmem:[%s273 + $0x50] sm:$0x1]
        %v346 = vsel %vm326, 0, %v345
        %347 = vst [vmem:[%s273 + $0x50] sm:$0x1] %v346
        %v348 = vld [vmem:[%s273 + $0x5c] sm:$0x1]
        %v349 = vsel %vm326, 0, %v348
        %350 = vst [vmem:[%s273 + $0x5c] sm:$0x1] %v349
        %v351 = vld [vmem:[%s273 + $0x68] sm:$0x1]
        %v352 = vsel %vm326, 0, %v351
        %353 = vst [vmem:[%s273 + $0x68] sm:$0x1] %v352
        %v354 = vld [vmem:[%s273 + $0x74] sm:$0x1]
        %v355 = vsel %vm326, 0, %v354
        %356 = vst [vmem:[%s273 + $0x74] sm:$0x1] %v355
        %v357 = vld [vmem:[%s273 + $0x80] sm:$0x1]
        %v358 = vsel %vm326, 0, %v357
        %359 = vst [vmem:[%s273 + $0x80] sm:$0x1] %v358
        %v360 = vld [vmem:[%s273 + $0x8c] sm:$0x1]
        %v361 = vsel %vm326, 0, %v360
        %362 = vst [vmem:[%s273 + $0x8c] sm:$0x1] %v361
        %v363 = vld [vmem:[%s273 + $0x98] sm:$0x1]
        %v364 = vsel %vm326, 0, %v363
        %365 = vst [vmem:[%s273 + $0x98] sm:$0x1] %v364
        %v366 = vld [vmem:[%s273 + $0xa4] sm:$0x1]
        %v367 = vsel %vm326, 0, %v366
        %368 = vst [vmem:[%s273 + $0xa4] sm:$0x1] %v367
        %v369 = vld [vmem:[%s273 + $0xb0] sm:$0x1]
        %v370 = vsel %vm326, 0, %v369
        %371 = vst [vmem:[%s273 + $0xb0] sm:$0x1] %v370
        %v372 = vld [vmem:[%s273 + $0xbc] sm:$0x1]
        %v373 = vsel %vm326, 0, %v372
        %374 = vst [vmem:[%s273 + $0xbc] sm:$0x1] %v373
        %v375 = vld [vmem:[%s245] sm:$0xf]
        %v376 = vld [vmem:[%s245 + $0x4] sm:$0xf]
        %v377 = vld [vmem:[%s245 + $0x8] sm:$0xf]
        %v378 = vld [vmem:[%s245 + $0xc] sm:$0xf]
        %v379 = vld [vmem:[%s245 + $0x10] sm:$0xf]
        %v380 = vld [vmem:[%s245 + $0x14] sm:$0xf]
        %v381 = vld [vmem:[%s245 + $0x18] sm:$0xf]
        %v382 = vld [vmem:[%s245 + $0x1c] sm:$0xf]
        %v383 = vld [vmem:[%s245 + $0x20] sm:$0xf]
        %v384 = vld [vmem:[%s245 + $0x24] sm:$0xf]
        %v385 = vld [vmem:[%s245 + $0x28] sm:$0xf]
        %v386 = vld [vmem:[%s245 + $0x2c] sm:$0xf]
        %v387 = vld [vmem:[%s245 + $0x30] sm:$0xf]
        %v388 = vld [vmem:[%s245 + $0x34] sm:$0xf]
        %v389 = vld [vmem:[%s245 + $0x38] sm:$0xf]
        %v390 = vld [vmem:[%s245 + $0x3c] sm:$0xf]
        %v391 = vld [vmem:[%s245 + $0x40] sm:$0xf]
        %v392 = vld [vmem:[%s245 + $0x44] sm:$0xf]
        %v393 = vld [vmem:[%s245 + $0x48] sm:$0xf]
        %v394 = vld [vmem:[%s245 + $0x4c] sm:$0xf]
        %v395 = vld [vmem:[%s245 + $0x50] sm:$0xf]
        %v396 = vld [vmem:[%s245 + $0x54] sm:$0xf]
        %v397 = vld [vmem:[%s245 + $0x58] sm:$0xf]
        %v398 = vld [vmem:[%s245 + $0x5c] sm:$0xf]
        %v399 = vld [vmem:[%s245 + $0x60] sm:$0xf]
        %v400 = vld [vmem:[%s245 + $0x64] sm:$0xf]
        %v401 = vld [vmem:[%s245 + $0x68] sm:$0xf]
        %v402 = vld [vmem:[%s245 + $0x6c] sm:$0xf]
        %v403 = vld [vmem:[%s245 + $0x70] sm:$0xf]
        %v404 = vld [vmem:[%s245 + $0x74] sm:$0xf]
        %v405 = vld [vmem:[%s245 + $0x78] sm:$0xf]
        %v406 = vld [vmem:[%s245 + $0x7c] sm:$0xf]
        %vm407 = vsmask.f32 4368
        %vm408 = vmor %vm275, %vm407
        %v410 = vshrl.u32 %v375, 16
        %v412 = vrot.slane %v410, 7
        %v413 = vshll.u32 %v375, 16
        %v415 = vor.u32 %v412, %v413
        %v416 = vrot.slane %v412, 4
        %v418 = vshrl.u32 %v376, 16
        %v420 = vrot.slane %v418, 7
        %v421 = vshll.u32 %v376, 16
        %v423 = vor.u32 %v420, %v421
        %v424 = vsel %vm408, %v416, %v423
        %v425 = vrot.slane %v420, 4
        %v427 = vshrl.u32 %v377, 16
        %v429 = vrot.slane %v427, 7
        %v430 = vshll.u32 %v377, 16
        %v432 = vor.u32 %v429, %v430
        %v433 = vrot.slane %v429, 4
        %v435 = vshrl.u32 %v378, 16
        %v437 = vrot.slane %v435, 7
        %v438 = vshll.u32 %v378, 16
        %v440 = vor.u32 %v437, %v438
        %v441 = vsel %vm408, %v433, %v440
        %v442 = vrot.slane %v437, 4
        %v444 = vshrl.u32 %v379, 16
        %v446 = vrot.slane %v444, 7
        %v447 = vshll.u32 %v379, 16
        %v449 = vor.u32 %v446, %v447
        %v450 = vrot.slane %v446, 4
        %v452 = vshrl.u32 %v380, 16
        %v454 = vrot.slane %v452, 7
        %v455 = vshll.u32 %v380, 16
        %v457 = vor.u32 %v454, %v455
        %v458 = vsel %vm408, %v450, %v457
        %v459 = vrot.slane %v454, 4
        %v461 = vshrl.u32 %v381, 16
        %v463 = vrot.slane %v461, 7
        %v464 = vshll.u32 %v381, 16
        %v466 = vor.u32 %v463, %v464
        %v467 = vrot.slane %v463, 4
        %v469 = vshrl.u32 %v382, 16
        %v471 = vrot.slane %v469, 7
        %v472 = vshll.u32 %v382, 16
        %v474 = vor.u32 %v471, %v472
        %v475 = vsel %vm408, %v467, %v474
        %v476 = vrot.slane %v471, 4
        %v478 = vshrl.u32 %v383, 16
        %v480 = vrot.slane %v478, 7
        %v481 = vshll.u32 %v383, 16
        %v483 = vor.u32 %v480, %v481
        %v484 = vrot.slane %v480, 4
        %v486 = vshrl.u32 %v384, 16
        %v488 = vrot.slane %v486, 7
        %v489 = vshll.u32 %v384, 16
        %v491 = vor.u32 %v488, %v489
        %v492 = vsel %vm408, %v484, %v491
        %v493 = vrot.slane %v488, 4
        %v495 = vshrl.u32 %v385, 16
        %v497 = vrot.slane %v495, 7
        %v498 = vshll.u32 %v385, 16
        %v500 = vor.u32 %v497, %v498
        %v501 = vrot.slane %v497, 4
        %v503 = vshrl.u32 %v386, 16
        %v505 = vrot.slane %v503, 7
        %v506 = vshll.u32 %v386, 16
        %v508 = vor.u32 %v505, %v506
        %v509 = vsel %vm408, %v501, %v508
        %v510 = vrot.slane %v505, 4
        %v512 = vshrl.u32 %v387, 16
        %v514 = vrot.slane %v512, 7
        %v515 = vshll.u32 %v387, 16
        %v517 = vor.u32 %v514, %v515
        %v518 = vrot.slane %v514, 4
        %v520 = vshrl.u32 %v388, 16
        %v522 = vrot.slane %v520, 7
        %v523 = vshll.u32 %v388, 16
        %v525 = vor.u32 %v522, %v523
        %v526 = vsel %vm408, %v518, %v525
        %v527 = vrot.slane %v522, 4
        %v529 = vshrl.u32 %v389, 16
        %v531 = vrot.slane %v529, 7
        %v532 = vshll.u32 %v389, 16
        %v534 = vor.u32 %v531, %v532
        %v535 = vrot.slane %v531, 4
        %v537 = vshrl.u32 %v390, 16
        %v539 = vrot.slane %v537, 7
        %v540 = vshll.u32 %v390, 16
        %v542 = vor.u32 %v539, %v540
        %v543 = vsel %vm408, %v535, %v542
        %v544 = vrot.slane %v539, 4
        %v546 = vshrl.u32 %v391, 16
        %v548 = vrot.slane %v546, 7
        %v549 = vshll.u32 %v391, 16
        %v551 = vor.u32 %v548, %v549
        %v552 = vrot.slane %v548, 4
        %v554 = vshrl.u32 %v392, 16
        %v556 = vrot.slane %v554, 7
        %v557 = vshll.u32 %v392, 16
        %v559 = vor.u32 %v556, %v557
        %v560 = vsel %vm408, %v552, %v559
        %v561 = vrot.slane %v556, 4
        %v563 = vshrl.u32 %v393, 16
        %v565 = vrot.slane %v563, 7
        %v566 = vshll.u32 %v393, 16
        %v568 = vor.u32 %v565, %v566
        %v569 = vrot.slane %v565, 4
        %v571 = vshrl.u32 %v394, 16
        %v573 = vrot.slane %v571, 7
        %v574 = vshll.u32 %v394, 16
        %v576 = vor.u32 %v573, %v574
        %v577 = vsel %vm408, %v569, %v576
        %v578 = vrot.slane %v573, 4
        %v580 = vshrl.u32 %v395, 16
        %v582 = vrot.slane %v580, 7
        %v583 = vshll.u32 %v395, 16
        %v585 = vor.u32 %v582, %v583
        %v586 = vrot.slane %v582, 4
        %v588 = vshrl.u32 %v396, 16
        %v590 = vrot.slane %v588, 7
        %v591 = vshll.u32 %v396, 16
        %v593 = vor.u32 %v590, %v591
        %v594 = vsel %vm408, %v586, %v593
        %v595 = vrot.slane %v590, 4
        %v597 = vshrl.u32 %v397, 16
        %v599 = vrot.slane %v597, 7
        %v600 = vshll.u32 %v397, 16
        %v602 = vor.u32 %v599, %v600
        %v603 = vrot.slane %v599, 4
        %v605 = vshrl.u32 %v398, 16
        %v607 = vrot.slane %v605, 7
        %v608 = vshll.u32 %v398, 16
        %v610 = vor.u32 %v607, %v608
        %v611 = vsel %vm408, %v603, %v610
        %v612 = vrot.slane %v607, 4
        %v614 = vshrl.u32 %v399, 16
        %v616 = vrot.slane %v614, 7
        %v617 = vshll.u32 %v399, 16
        %v619 = vor.u32 %v616, %v617
        %v620 = vrot.slane %v616, 4
        %v622 = vshrl.u32 %v400, 16
        %v624 = vrot.slane %v622, 7
        %v625 = vshll.u32 %v400, 16
        %v627 = vor.u32 %v624, %v625
        %v628 = vsel %vm408, %v620, %v627
        %v629 = vrot.slane %v624, 4
        %v631 = vshrl.u32 %v401, 16
        %v633 = vrot.slane %v631, 7
        %v634 = vshll.u32 %v401, 16
        %v636 = vor.u32 %v633, %v634
        %v637 = vrot.slane %v633, 4
        %v639 = vshrl.u32 %v402, 16
        %v641 = vrot.slane %v639, 7
        %v642 = vshll.u32 %v402, 16
        %v644 = vor.u32 %v641, %v642
        %v645 = vsel %vm408, %v637, %v644
        %v646 = vrot.slane %v641, 4
        %v648 = vshrl.u32 %v403, 16
        %v650 = vrot.slane %v648, 7
        %v651 = vshll.u32 %v403, 16
        %v653 = vor.u32 %v650, %v651
        %v654 = vrot.slane %v650, 4
        %v656 = vshrl.u32 %v404, 16
        %v658 = vrot.slane %v656, 7
        %v659 = vshll.u32 %v404, 16
        %v661 = vor.u32 %v658, %v659
        %v662 = vsel %vm408, %v654, %v661
        %v663 = vrot.slane %v658, 4
        %v665 = vshrl.u32 %v405, 16
        %v667 = vrot.slane %v665, 7
        %v668 = vshll.u32 %v405, 16
        %v670 = vor.u32 %v667, %v668
        %v671 = vrot.slane %v667, 4
        %v673 = vshrl.u32 %v406, 16
        %v675 = vrot.slane %v673, 7
        %v676 = vshll.u32 %v406, 16
        %v678 = vor.u32 %v675, %v676
        %v679 = vsel %vm408, %v671, %v678
        %v680 = vrot.slane %v675, 4
        %vm729 = vcmask 1043456
        %vm730 = vmand %vm729, %vm325
        %v731 = vld [vmem:[%s273] sm:$0xf]
        %v732 = vsel %vm730, %v415, %v731
        %733 = vst [vmem:[%s273] sm:$0xf] %v732
        %734 = vst [vmem:[%s273 + $0x4] sm:$0xf] %v424
        %v735 = vld [vmem:[%s273 + $0x8] sm:$0x1]
        %v736 = vsel %vm276, %v425, %v735
        %737 = vst [vmem:[%s273 + $0x8] sm:$0x1] %v736
        %v738 = vld [vmem:[%s273 + $0xc] sm:$0xf]
        %v739 = vsel %vm730, %v432, %v738
        %740 = vst [vmem:[%s273 + $0xc] sm:$0xf] %v739
        %741 = vst [vmem:[%s273 + $0x10] sm:$0xf] %v441
        %v742 = vld [vmem:[%s273 + $0x14] sm:$0x1]
        %v743 = vsel %vm276, %v442, %v742
        %744 = vst [vmem:[%s273 + $0x14] sm:$0x1] %v743
        %v745 = vld [vmem:[%s273 + $0x18] sm:$0xf]
        %v746 = vsel %vm730, %v449, %v745
        %747 = vst [vmem:[%s273 + $0x18] sm:$0xf] %v746
        %748 = vst [vmem:[%s273 + $0x1c] sm:$0xf] %v458
        %v749 = vld [vmem:[%s273 + $0x20] sm:$0x1]
        %v750 = vsel %vm276, %v459, %v749
        %751 = vst [vmem:[%s273 + $0x20] sm:$0x1] %v750
        %v752 = vld [vmem:[%s273 + $0x24] sm:$0xf]
        %v753 = vsel %vm730, %v466, %v752
        %754 = vst [vmem:[%s273 + $0x24] sm:$0xf] %v753
        %755 = vst [vmem:[%s273 + $0x28] sm:$0xf] %v475
        %v756 = vld [vmem:[%s273 + $0x2c] sm:$0x1]
        %v757 = vsel %vm276, %v476, %v756
        %758 = vst [vmem:[%s273 + $0x2c] sm:$0x1] %v757
        %v759 = vld [vmem:[%s273 + $0x30] sm:$0xf]
        %v760 = vsel %vm730, %v483, %v759
        %761 = vst [vmem:[%s273 + $0x30] sm:$0xf] %v760
        %762 = vst [vmem:[%s273 + $0x34] sm:$0xf] %v492
        %v763 = vld [vmem:[%s273 + $0x38] sm:$0x1]
        %v764 = vsel %vm276, %v493, %v763
        %765 = vst [vmem:[%s273 + $0x38] sm:$0x1] %v764
        %v766 = vld [vmem:[%s273 + $0x3c] sm:$0xf]
        %v767 = vsel %vm730, %v500, %v766
        %768 = vst [vmem:[%s273 + $0x3c] sm:$0xf] %v767
        %769 = vst [vmem:[%s273 + $0x40] sm:$0xf] %v509
        %v770 = vld [vmem:[%s273 + $0x44] sm:$0x1]
        %v771 = vsel %vm276, %v510, %v770
        %772 = vst [vmem:[%s273 + $0x44] sm:$0x1] %v771
        %v773 = vld [vmem:[%s273 + $0x48] sm:$0xf]
        %v774 = vsel %vm730, %v517, %v773
        %775 = vst [vmem:[%s273 + $0x48] sm:$0xf] %v774
        %776 = vst [vmem:[%s273 + $0x4c] sm:$0xf] %v526
        %v777 = vld [vmem:[%s273 + $0x50] sm:$0x1]
        %v778 = vsel %vm276, %v527, %v777
        %779 = vst [vmem:[%s273 + $0x50] sm:$0x1] %v778
        %v780 = vld [vmem:[%s273 + $0x54] sm:$0xf]
        %v781 = vsel %vm730, %v534, %v780
        %782 = vst [vmem:[%s273 + $0x54] sm:$0xf] %v781
        %783 = vst [vmem:[%s273 + $0x58] sm:$0xf] %v543
        %v784 = vld [vmem:[%s273 + $0x5c] sm:$0x1]
        %v785 = vsel %vm276, %v544, %v784
        %786 = vst [vmem:[%s273 + $0x5c] sm:$0x1] %v785
        %v787 = vld [vmem:[%s273 + $0x60] sm:$0xf]
        %v788 = vsel %vm730, %v551, %v787
        %789 = vst [vmem:[%s273 + $0x60] sm:$0xf] %v788
        %790 = vst [vmem:[%s273 + $0x64] sm:$0xf] %v560
        %v791 = vld [vmem:[%s273 + $0x68] sm:$0x1]
        %v792 = vsel %vm276, %v561, %v791
        %793 = vst [vmem:[%s273 + $0x68] sm:$0x1] %v792
        %v794 = vld [vmem:[%s273 + $0x6c] sm:$0xf]
        %v795 = vsel %vm730, %v568, %v794
        %796 = vst [vmem:[%s273 + $0x6c] sm:$0xf] %v795
        %797 = vst [vmem:[%s273 + $0x70] sm:$0xf] %v577
        %v798 = vld [vmem:[%s273 + $0x74] sm:$0x1]
        %v799 = vsel %vm276, %v578, %v798
        %800 = vst [vmem:[%s273 + $0x74] sm:$0x1] %v799
        %v801 = vld [vmem:[%s273 + $0x78] sm:$0xf]
        %v802 = vsel %vm730, %v585, %v801
        %803 = vst [vmem:[%s273 + $0x78] sm:$0xf] %v802
        %804 = vst [vmem:[%s273 + $0x7c] sm:$0xf] %v594
        %v805 = vld [vmem:[%s273 + $0x80] sm:$0x1]
        %v806 = vsel %vm276, %v595, %v805
        %807 = vst [vmem:[%s273 + $0x80] sm:$0x1] %v806
        %v808 = vld [vmem:[%s273 + $0x84] sm:$0xf]
        %v809 = vsel %vm730, %v602, %v808
        %810 = vst [vmem:[%s273 + $0x84] sm:$0xf] %v809
        %811 = vst [vmem:[%s273 + $0x88] sm:$0xf] %v611
        %v812 = vld [vmem:[%s273 + $0x8c] sm:$0x1]
        %v813 = vsel %vm276, %v612, %v812
        %814 = vst [vmem:[%s273 + $0x8c] sm:$0x1] %v813
        %v815 = vld [vmem:[%s273 + $0x90] sm:$0xf]
        %v816 = vsel %vm730, %v619, %v815
        %817 = vst [vmem:[%s273 + $0x90] sm:$0xf] %v816
        %818 = vst [vmem:[%s273 + $0x94] sm:$0xf] %v628
        %v819 = vld [vmem:[%s273 + $0x98] sm:$0x1]
        %v820 = vsel %vm276, %v629, %v819
        %821 = vst [vmem:[%s273 + $0x98] sm:$0x1] %v820
        %v822 = vld [vmem:[%s273 + $0x9c] sm:$0xf]
        %v823 = vsel %vm730, %v636, %v822
        %824 = vst [vmem:[%s273 + $0x9c] sm:$0xf] %v823
        %825 = vst [vmem:[%s273 + $0xa0] sm:$0xf] %v645
        %v826 = vld [vmem:[%s273 + $0xa4] sm:$0x1]
        %v827 = vsel %vm276, %v646, %v826
        %828 = vst [vmem:[%s273 + $0xa4] sm:$0x1] %v827
        %v829 = vld [vmem:[%s273 + $0xa8] sm:$0xf]
        %v830 = vsel %vm730, %v653, %v829
        %831 = vst [vmem:[%s273 + $0xa8] sm:$0xf] %v830
        %832 = vst [vmem:[%s273 + $0xac] sm:$0xf] %v662
        %v833 = vld [vmem:[%s273 + $0xb0] sm:$0x1]
        %v834 = vsel %vm276, %v663, %v833
        %835 = vst [vmem:[%s273 + $0xb0] sm:$0x1] %v834
        %v836 = vld [vmem:[%s273 + $0xb4] sm:$0xf]
        %v837 = vsel %vm730, %v670, %v836
        %838 = vst [vmem:[%s273 + $0xb4] sm:$0xf] %v837
        %839 = vst [vmem:[%s273 + $0xb8] sm:$0xf] %v679
        %v840 = vld [vmem:[%s273 + $0xbc] sm:$0x1]
        %v841 = vsel %vm276, %v680, %v840
        %842 = vst [vmem:[%s273 + $0xbc] sm:$0x1] %v841
        %843 = vst [vmem:[%s260] sm:$0x3] 0.0
      $region40: #{tripple_conv.4} parent=35 // pred_fallthru
        _
      %s844 = smul.u32 %s22, 16
      %s845 = smul.u32 %s844, 3
      %s846 = smul.addr %s845, 4
      %s847 = scalar_lea.vmem [#allocation2], %s846
      %v848 = vld [vmem:[%s847] sm:$0xf]
      %v849 = vld [vmem:[%s847 + $0x4] sm:$0xf]
      %v850 = vld [vmem:[%s847 + $0xc] sm:$0xf]
      %v851 = vld [vmem:[%s847 + $0x10] sm:$0xf]
      %v852 = vld [vmem:[%s847 + $0x18] sm:$0xf]
      %v853 = vld [vmem:[%s847 + $0x1c] sm:$0xf]
      %v854 = vld [vmem:[%s847 + $0x24] sm:$0xf]
      %v855 = vld [vmem:[%s847 + $0x28] sm:$0xf]
      %v856 = vld [vmem:[%s847 + $0x30] sm:$0xf]
      %v857 = vld [vmem:[%s847 + $0x34] sm:$0xf]
      %v858 = vld [vmem:[%s847 + $0x3c] sm:$0xf]
      %v859 = vld [vmem:[%s847 + $0x40] sm:$0xf]
      %v860 = vld [vmem:[%s847 + $0x48] sm:$0xf]
      %v861 = vld [vmem:[%s847 + $0x4c] sm:$0xf]
      %v862 = vld [vmem:[%s847 + $0x54] sm:$0xf]
      %v863 = vld [vmem:[%s847 + $0x58] sm:$0xf]
      %v864 = vld [vmem:[%s847 + $0x60] sm:$0xf]
      %v865 = vld [vmem:[%s847 + $0x64] sm:$0xf]
      %v866 = vld [vmem:[%s847 + $0x6c] sm:$0xf]
      %v867 = vld [vmem:[%s847 + $0x70] sm:$0xf]
      %v868 = vld [vmem:[%s847 + $0x78] sm:$0xf]
      %v869 = vld [vmem:[%s847 + $0x7c] sm:$0xf]
      %v870 = vld [vmem:[%s847 + $0x84] sm:$0xf]
      %v871 = vld [vmem:[%s847 + $0x88] sm:$0xf]
      %v872 = vld [vmem:[%s847 + $0x90] sm:$0xf]
      %v873 = vld [vmem:[%s847 + $0x94] sm:$0xf]
      %v874 = vld [vmem:[%s847 + $0x9c] sm:$0xf]
      %v875 = vld [vmem:[%s847 + $0xa0] sm:$0xf]
      %v876 = vld [vmem:[%s847 + $0xa8] sm:$0xf]
      %v877 = vld [vmem:[%s847 + $0xac] sm:$0xf]
      %v878 = vld [vmem:[%s847 + $0xb4] sm:$0xf]
      %v879 = vld [vmem:[%s847 + $0xb8] sm:$0xf]
      %v880 = vld [vmem:[%s3] sm:$0xf]
      %v881 = vld [vmem:[%s3 + $0x4] sm:$0xf]
      %v882 = vld [vmem:[%s3 + $0x8] sm:$0xf]
      %v883 = vld [vmem:[%s3 + $0xc] sm:$0xf]
      %v884 = vld [vmem:[%s3 + $0x10] sm:$0xf]
      %v885 = vld [vmem:[%s3 + $0x14] sm:$0xf]
      %v886 = vld [vmem:[%s3 + $0x18] sm:$0xf]
      %v887 = vld [vmem:[%s3 + $0x1c] sm:$0xf]
      %v888 = vld [vmem:[%s3 + $0x20] sm:$0xf]
      %v889 = vld [vmem:[%s3 + $0x24] sm:$0xf]
      %v890 = vld [vmem:[%s3 + $0x28] sm:$0xf]
      %v891 = vld [vmem:[%s3 + $0x2c] sm:$0xf]
      %v892 = vld [vmem:[%s3 + $0x30] sm:$0xf]
      %v893 = vld [vmem:[%s3 + $0x34] sm:$0xf]
      %v894 = vld [vmem:[%s3 + $0x38] sm:$0xf]
      %v895 = vld [vmem:[%s3 + $0x3c] sm:$0xf]
      %v896 = vld [vmem:[%s847 + $0x8] sm:$0x1]
      %v897 = vld [vmem:[%s847 + $0x14] sm:$0x1]
      %v898 = vld [vmem:[%s847 + $0x20] sm:$0x1]
      %v899 = vld [vmem:[%s847 + $0x2c] sm:$0x1]
      %v900 = vld [vmem:[%s847 + $0x38] sm:$0x1]
      %v901 = vld [vmem:[%s847 + $0x44] sm:$0x1]
      %v902 = vld [vmem:[%s847 + $0x50] sm:$0x1]
      %v903 = vld [vmem:[%s847 + $0x5c] sm:$0x1]
      %v904 = vld [vmem:[%s847 + $0x68] sm:$0x1]
      %v905 = vld [vmem:[%s847 + $0x74] sm:$0x1]
      %v906 = vld [vmem:[%s847 + $0x80] sm:$0x1]
      %v907 = vld [vmem:[%s847 + $0x8c] sm:$0x1]
      %v908 = vld [vmem:[%s847 + $0x98] sm:$0x1]
      %v909 = vld [vmem:[%s847 + $0xa4] sm:$0x1]
      %v910 = vld [vmem:[%s847 + $0xb0] sm:$0x1]
      %v911 = vld [vmem:[%s847 + $0xbc] sm:$0x1]
      %vm912 = vsmask.f32 3328
      %vm913 = vsmask.f32 7440
      %vm914 = vmor %vm912, %vm913
      %v916 = vshrl.u32 %v848, 16
      %v918 = vrot.slane %v916, 4
      %v919 = vshll.u32 %v848, 16
      %v921 = vrot.slane %v919, 5
      %v922 = vor.u32 %v918, %v921
      %v923 = vrot.slane %v922, 4
      %v925 = vshll.u32 %v849, 16
      %v927 = vrot.slane %v925, 5
      %v928 = vsel %vm914, %v923, %v927
      %v929 = vshrl.u32 %v849, 16
      %v931 = vrot.slane %v929, 4
      %v932 = vor.u32 %v931, %v927
      %v933 = vrot.slane %v932, 4
      %v935 = vshll.u32 %v896, 16
      %v937 = vrot.slane %v935, 5
      %v938 = vsel %vm914, %v933, %v937
      %v940 = vshrl.u32 %v850, 16
      %v942 = vrot.slane %v940, 4
      %v943 = vshll.u32 %v850, 16
      %v945 = vrot.slane %v943, 5
      %v946 = vor.u32 %v942, %v945
      %v947 = vrot.slane %v946, 4
      %v949 = vshll.u32 %v851, 16
      %v951 = vrot.slane %v949, 5
      %v952 = vsel %vm914, %v947, %v951
      %v953 = vshrl.u32 %v851, 16
      %v955 = vrot.slane %v953, 4
      %v956 = vor.u32 %v955, %v951
      %v957 = vrot.slane %v956, 4
      %v959 = vshll.u32 %v897, 16
      %v961 = vrot.slane %v959, 5
      %v962 = vsel %vm914, %v957, %v961
      %v964 = vshrl.u32 %v852, 16
      %v966 = vrot.slane %v964, 4
      %v967 = vshll.u32 %v852, 16
      %v969 = vrot.slane %v967, 5
      %v970 = vor.u32 %v966, %v969
      %v971 = vrot.slane %v970, 4
      %v973 = vshll.u32 %v853, 16
      %v975 = vrot.slane %v973, 5
      %v976 = vsel %vm914, %v971, %v975
      %v977 = vshrl.u32 %v853, 16
      %v979 = vrot.slane %v977, 4
      %v980 = vor.u32 %v979, %v975
      %v981 = vrot.slane %v980, 4
      %v983 = vshll.u32 %v898, 16
      %v985 = vrot.slane %v983, 5
      %v986 = vsel %vm914, %v981, %v985
      %v988 = vshrl.u32 %v854, 16
      %v990 = vrot.slane %v988, 4
      %v991 = vshll.u32 %v854, 16
      %v993 = vrot.slane %v991, 5
      %v994 = vor.u32 %v990, %v993
      %v995 = vrot.slane %v994, 4
      %v997 = vshll.u32 %v855, 16
      %v999 = vrot.slane %v997, 5
      %v1000 = vsel %vm914, %v995, %v999
      %v1001 = vshrl.u32 %v855, 16
      %v1003 = vrot.slane %v1001, 4
      %v1004 = vor.u32 %v1003, %v999
      %v1005 = vrot.slane %v1004, 4
      %v1007 = vshll.u32 %v899, 16
      %v1009 = vrot.slane %v1007, 5
      %v1010 = vsel %vm914, %v1005, %v1009
      %v1012 = vshrl.u32 %v856, 16
      %v1014 = vrot.slane %v1012, 4
      %v1015 = vshll.u32 %v856, 16
      %v1017 = vrot.slane %v1015, 5
      %v1018 = vor.u32 %v1014, %v1017
      %v1019 = vrot.slane %v1018, 4
      %v1021 = vshll.u32 %v857, 16
      %v1023 = vrot.slane %v1021, 5
      %v1024 = vsel %vm914, %v1019, %v1023
      %v1025 = vshrl.u32 %v857, 16
      %v1027 = vrot.slane %v1025, 4
      %v1028 = vor.u32 %v1027, %v1023
      %v1029 = vrot.slane %v1028, 4
      %v1031 = vshll.u32 %v900, 16
      %v1033 = vrot.slane %v1031, 5
      %v1034 = vsel %vm914, %v1029, %v1033
      %v1036 = vshrl.u32 %v858, 16
      %v1038 = vrot.slane %v1036, 4
      %v1039 = vshll.u32 %v858, 16
      %v1041 = vrot.slane %v1039, 5
      %v1042 = vor.u32 %v1038, %v1041
      %v1043 = vrot.slane %v1042, 4
      %v1045 = vshll.u32 %v859, 16
      %v1047 = vrot.slane %v1045, 5
      %v1048 = vsel %vm914, %v1043, %v1047
      %v1049 = vshrl.u32 %v859, 16
      %v1051 = vrot.slane %v1049, 4
      %v1052 = vor.u32 %v1051, %v1047
      %v1053 = vrot.slane %v1052, 4
      %v1055 = vshll.u32 %v901, 16
      %v1057 = vrot.slane %v1055, 5
      %v1058 = vsel %vm914, %v1053, %v1057
      %v1060 = vshrl.u32 %v860, 16
      %v1062 = vrot.slane %v1060, 4
      %v1063 = vshll.u32 %v860, 16
      %v1065 = vrot.slane %v1063, 5
      %v1066 = vor.u32 %v1062, %v1065
      %v1067 = vrot.slane %v1066, 4
      %v1069 = vshll.u32 %v861, 16
      %v1071 = vrot.slane %v1069, 5
      %v1072 = vsel %vm914, %v1067, %v1071
      %v1073 = vshrl.u32 %v861, 16
      %v1075 = vrot.slane %v1073, 4
      %v1076 = vor.u32 %v1075, %v1071
      %v1077 = vrot.slane %v1076, 4
      %v1079 = vshll.u32 %v902, 16
      %v1081 = vrot.slane %v1079, 5
      %v1082 = vsel %vm914, %v1077, %v1081
      %v1084 = vshrl.u32 %v862, 16
      %v1086 = vrot.slane %v1084, 4
      %v1087 = vshll.u32 %v862, 16
      %v1089 = vrot.slane %v1087, 5
      %v1090 = vor.u32 %v1086, %v1089
      %v1091 = vrot.slane %v1090, 4
      %v1093 = vshll.u32 %v863, 16
      %v1095 = vrot.slane %v1093, 5
      %v1096 = vsel %vm914, %v1091, %v1095
      %v1097 = vshrl.u32 %v863, 16
      %v1099 = vrot.slane %v1097, 4
      %v1100 = vor.u32 %v1099, %v1095
      %v1101 = vrot.slane %v1100, 4
      %v1103 = vshll.u32 %v903, 16
      %v1105 = vrot.slane %v1103, 5
      %v1106 = vsel %vm914, %v1101, %v1105
      %v1108 = vshrl.u32 %v864, 16
      %v1110 = vrot.slane %v1108, 4
      %v1111 = vshll.u32 %v864, 16
      %v1113 = vrot.slane %v1111, 5
      %v1114 = vor.u32 %v1110, %v1113
      %v1115 = vrot.slane %v1114, 4
      %v1117 = vshll.u32 %v865, 16
      %v1119 = vrot.slane %v1117, 5
      %v1120 = vsel %vm914, %v1115, %v1119
      %v1121 = vshrl.u32 %v865, 16
      %v1123 = vrot.slane %v1121, 4
      %v1124 = vor.u32 %v1123, %v1119
      %v1125 = vrot.slane %v1124, 4
      %v1127 = vshll.u32 %v904, 16
      %v1129 = vrot.slane %v1127, 5
      %v1130 = vsel %vm914, %v1125, %v1129
      %v1132 = vshrl.u32 %v866, 16
      %v1134 = vrot.slane %v1132, 4
      %v1135 = vshll.u32 %v866, 16
      %v1137 = vrot.slane %v1135, 5
      %v1138 = vor.u32 %v1134, %v1137
      %v1139 = vrot.slane %v1138, 4
      %v1141 = vshll.u32 %v867, 16
      %v1143 = vrot.slane %v1141, 5
      %v1144 = vsel %vm914, %v1139, %v1143
      %v1145 = vshrl.u32 %v867, 16
      %v1147 = vrot.slane %v1145, 4
      %v1148 = vor.u32 %v1147, %v1143
      %v1149 = vrot.slane %v1148, 4
      %v1151 = vshll.u32 %v905, 16
      %v1153 = vrot.slane %v1151, 5
      %v1154 = vsel %vm914, %v1149, %v1153
      %v1156 = vshrl.u32 %v868, 16
      %v1158 = vrot.slane %v1156, 4
      %v1159 = vshll.u32 %v868, 16
      %v1161 = vrot.slane %v1159, 5
      %v1162 = vor.u32 %v1158, %v1161
      %v1163 = vrot.slane %v1162, 4
      %v1165 = vshll.u32 %v869, 16
      %v1167 = vrot.slane %v1165, 5
      %v1168 = vsel %vm914, %v1163, %v1167
      %v1169 = vshrl.u32 %v869, 16
      %v1171 = vrot.slane %v1169, 4
      %v1172 = vor.u32 %v1171, %v1167
      %v1173 = vrot.slane %v1172, 4
      %v1175 = vshll.u32 %v906, 16
      %v1177 = vrot.slane %v1175, 5
      %v1178 = vsel %vm914, %v1173, %v1177
      %v1180 = vshrl.u32 %v870, 16
      %v1182 = vrot.slane %v1180, 4
      %v1183 = vshll.u32 %v870, 16
      %v1185 = vrot.slane %v1183, 5
      %v1186 = vor.u32 %v1182, %v1185
      %v1187 = vrot.slane %v1186, 4
      %v1189 = vshll.u32 %v871, 16
      %v1191 = vrot.slane %v1189, 5
      %v1192 = vsel %vm914, %v1187, %v1191
      %v1193 = vshrl.u32 %v871, 16
      %v1195 = vrot.slane %v1193, 4
      %v1196 = vor.u32 %v1195, %v1191
      %v1197 = vrot.slane %v1196, 4
      %v1199 = vshll.u32 %v907, 16
      %v1201 = vrot.slane %v1199, 5
      %v1202 = vsel %vm914, %v1197, %v1201
      %v1204 = vshrl.u32 %v872, 16
      %v1206 = vrot.slane %v1204, 4
      %v1207 = vshll.u32 %v872, 16
      %v1209 = vrot.slane %v1207, 5
      %v1210 = vor.u32 %v1206, %v1209
      %v1211 = vrot.slane %v1210, 4
      %v1213 = vshll.u32 %v873, 16
      %v1215 = vrot.slane %v1213, 5
      %v1216 = vsel %vm914, %v1211, %v1215
      %v1217 = vshrl.u32 %v873, 16
      %v1219 = vrot.slane %v1217, 4
      %v1220 = vor.u32 %v1219, %v1215
      %v1221 = vrot.slane %v1220, 4
      %v1223 = vshll.u32 %v908, 16
      %v1225 = vrot.slane %v1223, 5
      %v1226 = vsel %vm914, %v1221, %v1225
      %v1228 = vshrl.u32 %v874, 16
      %v1230 = vrot.slane %v1228, 4
      %v1231 = vshll.u32 %v874, 16
      %v1233 = vrot.slane %v1231, 5
      %v1234 = vor.u32 %v1230, %v1233
      %v1235 = vrot.slane %v1234, 4
      %v1237 = vshll.u32 %v875, 16
      %v1239 = vrot.slane %v1237, 5
      %v1240 = vsel %vm914, %v1235, %v1239
      %v1241 = vshrl.u32 %v875, 16
      %v1243 = vrot.slane %v1241, 4
      %v1244 = vor.u32 %v1243, %v1239
      %v1245 = vrot.slane %v1244, 4
      %v1247 = vshll.u32 %v909, 16
      %v1249 = vrot.slane %v1247, 5
      %v1250 = vsel %vm914, %v1245, %v1249
      %v1252 = vshrl.u32 %v876, 16
      %v1254 = vrot.slane %v1252, 4
      %v1255 = vshll.u32 %v876, 16
      %v1257 = vrot.slane %v1255, 5
      %v1258 = vor.u32 %v1254, %v1257
      %v1259 = vrot.slane %v1258, 4
      %v1261 = vshll.u32 %v877, 16
      %v1263 = vrot.slane %v1261, 5
      %v1264 = vsel %vm914, %v1259, %v1263
      %v1265 = vshrl.u32 %v877, 16
      %v1267 = vrot.slane %v1265, 4
      %v1268 = vor.u32 %v1267, %v1263
      %v1269 = vrot.slane %v1268, 4
      %v1271 = vshll.u32 %v910, 16
      %v1273 = vrot.slane %v1271, 5
      %v1274 = vsel %vm914, %v1269, %v1273
      %v1276 = vshrl.u32 %v878, 16
      %v1278 = vrot.slane %v1276, 4
      %v1279 = vshll.u32 %v878, 16
      %v1281 = vrot.slane %v1279, 5
      %v1282 = vor.u32 %v1278, %v1281
      %v1283 = vrot.slane %v1282, 4
      %v1285 = vshll.u32 %v879, 16
      %v1287 = vrot.slane %v1285, 5
      %v1288 = vsel %vm914, %v1283, %v1287
      %v1289 = vshrl.u32 %v879, 16
      %v1291 = vrot.slane %v1289, 4
      %v1292 = vor.u32 %v1291, %v1287
      %v1293 = vrot.slane %v1292, 4
      %v1295 = vshll.u32 %v911, 16
      %v1297 = vrot.slane %v1295, 5
      %v1298 = vsel %vm914, %v1293, %v1297
      %s1299 = scalar_lea.vmem %s3, 64
      %v1300 = vld [vmem:[%s1299] sm:$0xf]
      %v1301 = vld [vmem:[%s1299 + $0x4] sm:$0xf]
      %v1302 = vld [vmem:[%s1299 + $0x8] sm:$0xf]
      %v1303 = vld [vmem:[%s1299 + $0xc] sm:$0xf]
      %v1304 = vld [vmem:[%s1299 + $0x10] sm:$0xf]
      %v1305 = vld [vmem:[%s1299 + $0x14] sm:$0xf]
      %v1306 = vld [vmem:[%s1299 + $0x18] sm:$0xf]
      %v1307 = vld [vmem:[%s1299 + $0x1c] sm:$0xf]
      %v1308 = vld [vmem:[%s1299 + $0x20] sm:$0xf]
      %v1309 = vld [vmem:[%s1299 + $0x24] sm:$0xf]
      %v1310 = vld [vmem:[%s1299 + $0x28] sm:$0xf]
      %v1311 = vld [vmem:[%s1299 + $0x2c] sm:$0xf]
      %v1312 = vld [vmem:[%s1299 + $0x30] sm:$0xf]
      %v1313 = vld [vmem:[%s1299 + $0x34] sm:$0xf]
      %v1314 = vld [vmem:[%s1299 + $0x38] sm:$0xf]
      %v1315 = vld [vmem:[%s1299 + $0x3c] sm:$0xf]
      %v1316 = vunpack.c.l.b16 %v928
      %v1317 = vunpack.c.l.b16 %v938
      %v1318 = vunpack.c.l.b16 %v952
      %v1319 = vunpack.c.l.b16 %v962
      %v1320 = vunpack.c.l.b16 %v976
      %v1321 = vunpack.c.l.b16 %v986
      %v1322 = vunpack.c.l.b16 %v1000
      %v1323 = vunpack.c.l.b16 %v1010
      %v1324 = vunpack.c.l.b16 %v1024
      %v1325 = vunpack.c.l.b16 %v1034
      %v1326 = vunpack.c.l.b16 %v1048
      %v1327 = vunpack.c.l.b16 %v1058
      %v1328 = vunpack.c.l.b16 %v1072
      %v1329 = vunpack.c.l.b16 %v1082
      %v1330 = vunpack.c.l.b16 %v1096
      %v1331 = vunpack.c.l.b16 %v1106
      %v1332 = vunpack.c.l.b16 %v1120
      %v1333 = vunpack.c.l.b16 %v1130
      %v1334 = vunpack.c.l.b16 %v1144
      %v1335 = vunpack.c.l.b16 %v1154
      %v1336 = vunpack.c.l.b16 %v1168
      %v1337 = vunpack.c.l.b16 %v1178
      %v1338 = vunpack.c.l.b16 %v1192
      %v1339 = vunpack.c.l.b16 %v1202
      %v1340 = vunpack.c.l.b16 %v1216
      %v1341 = vunpack.c.l.b16 %v1226
      %v1342 = vunpack.c.l.b16 %v1240
      %v1343 = vunpack.c.l.b16 %v1250
      %v1344 = vunpack.c.l.b16 %v1264
      %v1345 = vunpack.c.l.b16 %v1274
      %v1346 = vunpack.c.l.b16 %v1288
      %v1347 = vunpack.c.l.b16 %v1298
      %v1348 = vpack.c.b16 %v1317, %v1316
      %v1349 = vpack.c.b16 %v1319, %v1318
      %v1350 = vpack.c.b16 %v1321, %v1320
      %v1351 = vpack.c.b16 %v1323, %v1322
      %v1352 = vpack.c.b16 %v1325, %v1324
      %v1353 = vpack.c.b16 %v1327, %v1326
      %v1354 = vpack.c.b16 %v1329, %v1328
      %v1355 = vpack.c.b16 %v1331, %v1330
      %v1356 = vpack.c.b16 %v1333, %v1332
      %v1357 = vpack.c.b16 %v1335, %v1334
      %v1358 = vpack.c.b16 %v1337, %v1336
      %v1359 = vpack.c.b16 %v1339, %v1338
      %v1360 = vpack.c.b16 %v1341, %v1340
      %v1361 = vpack.c.b16 %v1343, %v1342
      %v1362 = vpack.c.b16 %v1345, %v1344
      %v1363 = vpack.c.b16 %v1347, %v1346
      %v1396 = vunpack.c.l.b16 %v1300
      %v1397 = vunpack.c.l.b16 %v1301
      %v1398 = vunpack.c.l.b16 %v1302
      %v1399 = vunpack.c.l.b16 %v1303
      %v1400 = vunpack.c.l.b16 %v1304
      %v1401 = vunpack.c.l.b16 %v1305
      %v1402 = vunpack.c.l.b16 %v1306
      %v1403 = vunpack.c.l.b16 %v1307
      %v1404 = vunpack.c.l.b16 %v1308
      %v1405 = vunpack.c.l.b16 %v1309
      %v1406 = vunpack.c.l.b16 %v1310
      %v1407 = vunpack.c.l.b16 %v1311
      %v1408 = vunpack.c.l.b16 %v1312
      %v1409 = vunpack.c.l.b16 %v1313
      %v1410 = vunpack.c.l.b16 %v1314
      %v1411 = vunpack.c.l.b16 %v1315
      %v1412 = vpack.c.b16 %v1397, %v1396
      %v1413 = vpack.c.b16 %v1399, %v1398
      %v1414 = vpack.c.b16 %v1401, %v1400
      %v1415 = vpack.c.b16 %v1403, %v1402
      %v1416 = vpack.c.b16 %v1405, %v1404
      %v1417 = vpack.c.b16 %v1407, %v1406
      %v1418 = vpack.c.b16 %v1409, %v1408
      %v1419 = vpack.c.b16 %v1411, %v1410
      %1428 = vmatpush.bf16.msra.mxu0 %v1419
      %1429 = vmatpush.bf16.msra.mxu0 %v1418
      %1430 = vmatpush.bf16.msra.mxu0 %v1417
      %1431 = vmatpush.bf16.msra.mxu0 %v1416
      %1432 = vmatpush.bf16.msra.mxu0 %v1415
      %1433 = vmatpush.bf16.msra.mxu0 %v1414
      %1434 = vmatpush.bf16.msra.mxu0 %v1413
      %1435 = vmatpush.bf16.msra.mxu0 %v1412
      %1436 = vmatmul.bf16.gmra.mxu0 %v1348
      %v1437 = vpop.f32.mrf.mxu0
      %v1438 = vadd.f32 0.0, %v1437
      %v1439 = vpop.f32.mrf.mxu0
      %v1440 = vadd.f32 0.0, %v1439
      %1441 = vmatmul.bf16.gmra.mxu0 %v1349
      %v1442 = vpop.f32.mrf.mxu0
      %v1443 = vadd.f32 0.0, %v1442
      %v1444 = vpop.f32.mrf.mxu0
      %v1445 = vadd.f32 0.0, %v1444
      %1446 = vmatmul.bf16.gmra.mxu0 %v1350
      %v1447 = vpop.f32.mrf.mxu0
      %v1448 = vadd.f32 0.0, %v1447
      %v1449 = vpop.f32.mrf.mxu0
      %v1450 = vadd.f32 0.0, %v1449
      %1451 = vmatmul.bf16.gmra.mxu0 %v1351
      %v1452 = vpop.f32.mrf.mxu0
      %v1453 = vadd.f32 0.0, %v1452
      %v1454 = vpop.f32.mrf.mxu0
      %v1455 = vadd.f32 0.0, %v1454
      %1456 = vmatmul.bf16.gmra.mxu0 %v1352
      %v1457 = vpop.f32.mrf.mxu0
      %v1458 = vadd.f32 0.0, %v1457
      %v1459 = vpop.f32.mrf.mxu0
      %v1460 = vadd.f32 0.0, %v1459
      %1461 = vmatmul.bf16.gmra.mxu0 %v1353
      %v1462 = vpop.f32.mrf.mxu0
      %v1463 = vadd.f32 0.0, %v1462
      %v1464 = vpop.f32.mrf.mxu0
      %v1465 = vadd.f32 0.0, %v1464
      %1466 = vmatmul.bf16.gmra.mxu0 %v1354
      %v1467 = vpop.f32.mrf.mxu0
      %v1468 = vadd.f32 0.0, %v1467
      %v1469 = vpop.f32.mrf.mxu0
      %v1470 = vadd.f32 0.0, %v1469
      %1471 = vmatmul.bf16.gmra.mxu0 %v1355
      %v1472 = vpop.f32.mrf.mxu0
      %v1473 = vadd.f32 0.0, %v1472
      %v1474 = vpop.f32.mrf.mxu0
      %v1475 = vadd.f32 0.0, %v1474
      %1476 = vmatmul.bf16.gmra.mxu0 %v1356
      %v1477 = vpop.f32.mrf.mxu0
      %v1478 = vadd.f32 0.0, %v1477
      %v1479 = vpop.f32.mrf.mxu0
      %v1480 = vadd.f32 0.0, %v1479
      %1481 = vmatmul.bf16.gmra.mxu0 %v1357
      %v1482 = vpop.f32.mrf.mxu0
      %v1483 = vadd.f32 0.0, %v1482
      %v1484 = vpop.f32.mrf.mxu0
      %v1485 = vadd.f32 0.0, %v1484
      %1486 = vmatmul.bf16.gmra.mxu0 %v1358
      %v1487 = vpop.f32.mrf.mxu0
      %v1488 = vadd.f32 0.0, %v1487
      %v1489 = vpop.f32.mrf.mxu0
      %v1490 = vadd.f32 0.0, %v1489
      %1491 = vmatmul.bf16.gmra.mxu0 %v1359
      %v1492 = vpop.f32.mrf.mxu0
      %v1493 = vadd.f32 0.0, %v1492
      %v1494 = vpop.f32.mrf.mxu0
      %v1495 = vadd.f32 0.0, %v1494
      %1496 = vmatmul.bf16.gmra.mxu0 %v1360
      %v1497 = vpop.f32.mrf.mxu0
      %v1498 = vadd.f32 0.0, %v1497
      %v1499 = vpop.f32.mrf.mxu0
      %v1500 = vadd.f32 0.0, %v1499
      %1501 = vmatmul.bf16.gmra.mxu0 %v1361
      %v1502 = vpop.f32.mrf.mxu0
      %v1503 = vadd.f32 0.0, %v1502
      %v1504 = vpop.f32.mrf.mxu0
      %v1505 = vadd.f32 0.0, %v1504
      %1506 = vmatmul.bf16.gmra.mxu0 %v1362
      %v1507 = vpop.f32.mrf.mxu0
      %v1508 = vadd.f32 0.0, %v1507
      %v1509 = vpop.f32.mrf.mxu0
      %v1510 = vadd.f32 0.0, %v1509
      %1511 = vmatmul.bf16.gmra.mxu0 %v1363
      %v1512 = vpop.f32.mrf.mxu0
      %v1513 = vadd.f32 0.0, %v1512
      %v1514 = vpop.f32.mrf.mxu0
      %v1515 = vadd.f32 0.0, %v1514
      %1516 = vdwg.mxu0
      %v1549 = vunpack.c.l.b16 %v848
      %v1550 = vunpack.c.l.b16 %v849
      %v1551 = vunpack.c.l.b16 %v850
      %v1552 = vunpack.c.l.b16 %v851
      %v1553 = vunpack.c.l.b16 %v852
      %v1554 = vunpack.c.l.b16 %v853
      %v1555 = vunpack.c.l.b16 %v854
      %v1556 = vunpack.c.l.b16 %v855
      %v1557 = vunpack.c.l.b16 %v856
      %v1558 = vunpack.c.l.b16 %v857
      %v1559 = vunpack.c.l.b16 %v858
      %v1560 = vunpack.c.l.b16 %v859
      %v1561 = vunpack.c.l.b16 %v860
      %v1562 = vunpack.c.l.b16 %v861
      %v1563 = vunpack.c.l.b16 %v862
      %v1564 = vunpack.c.l.b16 %v863
      %v1565 = vunpack.c.l.b16 %v864
      %v1566 = vunpack.c.l.b16 %v865
      %v1567 = vunpack.c.l.b16 %v866
      %v1568 = vunpack.c.l.b16 %v867
      %v1569 = vunpack.c.l.b16 %v868
      %v1570 = vunpack.c.l.b16 %v869
      %v1571 = vunpack.c.l.b16 %v870
      %v1572 = vunpack.c.l.b16 %v871
      %v1573 = vunpack.c.l.b16 %v872
      %v1574 = vunpack.c.l.b16 %v873
      %v1575 = vunpack.c.l.b16 %v874
      %v1576 = vunpack.c.l.b16 %v875
      %v1577 = vunpack.c.l.b16 %v876
      %v1578 = vunpack.c.l.b16 %v877
      %v1579 = vunpack.c.l.b16 %v878
      %v1580 = vunpack.c.l.b16 %v879
      %v1581 = vpack.c.b16 %v1550, %v1549
      %v1582 = vpack.c.b16 %v1552, %v1551
      %v1583 = vpack.c.b16 %v1554, %v1553
      %v1584 = vpack.c.b16 %v1556, %v1555
      %v1585 = vpack.c.b16 %v1558, %v1557
      %v1586 = vpack.c.b16 %v1560, %v1559
      %v1587 = vpack.c.b16 %v1562, %v1561
      %v1588 = vpack.c.b16 %v1564, %v1563
      %v1589 = vpack.c.b16 %v1566, %v1565
      %v1590 = vpack.c.b16 %v1568, %v1567
      %v1591 = vpack.c.b16 %v1570, %v1569
      %v1592 = vpack.c.b16 %v1572, %v1571
      %v1593 = vpack.c.b16 %v1574, %v1573
      %v1594 = vpack.c.b16 %v1576, %v1575
      %v1595 = vpack.c.b16 %v1578, %v1577
      %v1596 = vpack.c.b16 %v1580, %v1579
      %v1629 = vunpack.c.l.b16 %v880
      %v1630 = vunpack.c.l.b16 %v881
      %v1631 = vunpack.c.l.b16 %v882
      %v1632 = vunpack.c.l.b16 %v883
      %v1633 = vunpack.c.l.b16 %v884
      %v1634 = vunpack.c.l.b16 %v885
      %v1635 = vunpack.c.l.b16 %v886
      %v1636 = vunpack.c.l.b16 %v887
      %v1637 = vunpack.c.l.b16 %v888
      %v1638 = vunpack.c.l.b16 %v889
      %v1639 = vunpack.c.l.b16 %v890
      %v1640 = vunpack.c.l.b16 %v891
      %v1641 = vunpack.c.l.b16 %v892
      %v1642 = vunpack.c.l.b16 %v893
      %v1643 = vunpack.c.l.b16 %v894
      %v1644 = vunpack.c.l.b16 %v895
      %v1645 = vpack.c.b16 %v1630, %v1629
      %v1646 = vpack.c.b16 %v1632, %v1631
      %v1647 = vpack.c.b16 %v1634, %v1633
      %v1648 = vpack.c.b16 %v1636, %v1635
      %v1649 = vpack.c.b16 %v1638, %v1637
      %v1650 = vpack.c.b16 %v1640, %v1639
      %v1651 = vpack.c.b16 %v1642, %v1641
      %v1652 = vpack.c.b16 %v1644, %v1643
      %1661 = vmatpush.bf16.msra.mxu0 %v1652
      %1662 = vmatpush.bf16.msra.mxu0 %v1651
      %1663 = vmatpush.bf16.msra.mxu0 %v1650
      %1664 = vmatpush.bf16.msra.mxu0 %v1649
      %1665 = vmatpush.bf16.msra.mxu0 %v1648
      %1666 = vmatpush.bf16.msra.mxu0 %v1647
      %1667 = vmatpush.bf16.msra.mxu0 %v1646
      %1668 = vmatpush.bf16.msra.mxu0 %v1645
      %1669 = vmatmul.bf16.gmra.mxu0 %v1581
      %v1670 = vpop.f32.mrf.mxu0
      %v1671 = vadd.f32 %v1438, %v1670
      %v1672 = vpop.f32.mrf.mxu0
      %v1673 = vadd.f32 %v1440, %v1672
      %1674 = vmatmul.bf16.gmra.mxu0 %v1582
      %v1675 = vpop.f32.mrf.mxu0
      %v1676 = vadd.f32 %v1443, %v1675
      %v1677 = vpop.f32.mrf.mxu0
      %v1678 = vadd.f32 %v1445, %v1677
      %1679 = vmatmul.bf16.gmra.mxu0 %v1583
      %v1680 = vpop.f32.mrf.mxu0
      %v1681 = vadd.f32 %v1448, %v1680
      %v1682 = vpop.f32.mrf.mxu0
      %v1683 = vadd.f32 %v1450, %v1682
      %1684 = vmatmul.bf16.gmra.mxu0 %v1584
      %v1685 = vpop.f32.mrf.mxu0
      %v1686 = vadd.f32 %v1453, %v1685
      %v1687 = vpop.f32.mrf.mxu0
      %v1688 = vadd.f32 %v1455, %v1687
      %1689 = vmatmul.bf16.gmra.mxu0 %v1585
      %v1690 = vpop.f32.mrf.mxu0
      %v1691 = vadd.f32 %v1458, %v1690
      %v1692 = vpop.f32.mrf.mxu0
      %v1693 = vadd.f32 %v1460, %v1692
      %1694 = vmatmul.bf16.gmra.mxu0 %v1586
      %v1695 = vpop.f32.mrf.mxu0
      %v1696 = vadd.f32 %v1463, %v1695
      %v1697 = vpop.f32.mrf.mxu0
      %v1698 = vadd.f32 %v1465, %v1697
      %1699 = vmatmul.bf16.gmra.mxu0 %v1587
      %v1700 = vpop.f32.mrf.mxu0
      %v1701 = vadd.f32 %v1468, %v1700
      %v1702 = vpop.f32.mrf.mxu0
      %v1703 = vadd.f32 %v1470, %v1702
      %1704 = vmatmul.bf16.gmra.mxu0 %v1588
      %v1705 = vpop.f32.mrf.mxu0
      %v1706 = vadd.f32 %v1473, %v1705
      %v1707 = vpop.f32.mrf.mxu0
      %v1708 = vadd.f32 %v1475, %v1707
      %1709 = vmatmul.bf16.gmra.mxu0 %v1589
      %v1710 = vpop.f32.mrf.mxu0
      %v1711 = vadd.f32 %v1478, %v1710
      %v1712 = vpop.f32.mrf.mxu0
      %v1713 = vadd.f32 %v1480, %v1712
      %1714 = vmatmul.bf16.gmra.mxu0 %v1590
      %v1715 = vpop.f32.mrf.mxu0
      %v1716 = vadd.f32 %v1483, %v1715
      %v1717 = vpop.f32.mrf.mxu0
      %v1718 = vadd.f32 %v1485, %v1717
      %1719 = vmatmul.bf16.gmra.mxu0 %v1591
      %v1720 = vpop.f32.mrf.mxu0
      %v1721 = vadd.f32 %v1488, %v1720
      %v1722 = vpop.f32.mrf.mxu0
      %v1723 = vadd.f32 %v1490, %v1722
      %1724 = vmatmul.bf16.gmra.mxu0 %v1592
      %v1725 = vpop.f32.mrf.mxu0
      %v1726 = vadd.f32 %v1493, %v1725
      %v1727 = vpop.f32.mrf.mxu0
      %v1728 = vadd.f32 %v1495, %v1727
      %1729 = vmatmul.bf16.gmra.mxu0 %v1593
      %v1730 = vpop.f32.mrf.mxu0
      %v1731 = vadd.f32 %v1498, %v1730
      %v1732 = vpop.f32.mrf.mxu0
      %v1733 = vadd.f32 %v1500, %v1732
      %1734 = vmatmul.bf16.gmra.mxu0 %v1594
      %v1735 = vpop.f32.mrf.mxu0
      %v1736 = vadd.f32 %v1503, %v1735
      %v1737 = vpop.f32.mrf.mxu0
      %v1738 = vadd.f32 %v1505, %v1737
      %1739 = vmatmul.bf16.gmra.mxu0 %v1595
      %v1740 = vpop.f32.mrf.mxu0
      %v1741 = vadd.f32 %v1508, %v1740
      %v1742 = vpop.f32.mrf.mxu0
      %v1743 = vadd.f32 %v1510, %v1742
      %1744 = vmatmul.bf16.gmra.mxu0 %v1596
      %v1745 = vpop.f32.mrf.mxu0
      %v1746 = vadd.f32 %v1513, %v1745
      %v1747 = vpop.f32.mrf.mxu0
      %v1748 = vadd.f32 %v1515, %v1747
      %1749 = vdwg.mxu0
      %v1750 = vld [vmem:[%s847] sm:$0xe]
      %v1751 = vld [vmem:[%s847 + $0xc] sm:$0xe]
      %v1752 = vld [vmem:[%s847 + $0x18] sm:$0xe]
      %v1753 = vld [vmem:[%s847 + $0x24] sm:$0xe]
      %v1754 = vld [vmem:[%s847 + $0x30] sm:$0xe]
      %v1755 = vld [vmem:[%s847 + $0x3c] sm:$0xe]
      %v1756 = vld [vmem:[%s847 + $0x48] sm:$0xe]
      %v1757 = vld [vmem:[%s847 + $0x54] sm:$0xe]
      %v1758 = vld [vmem:[%s847 + $0x60] sm:$0xe]
      %v1759 = vld [vmem:[%s847 + $0x6c] sm:$0xe]
      %v1760 = vld [vmem:[%s847 + $0x78] sm:$0xe]
      %v1761 = vld [vmem:[%s847 + $0x84] sm:$0xe]
      %v1762 = vld [vmem:[%s847 + $0x90] sm:$0xe]
      %v1763 = vld [vmem:[%s847 + $0x9c] sm:$0xe]
      %v1764 = vld [vmem:[%s847 + $0xa8] sm:$0xe]
      %v1765 = vld [vmem:[%s847 + $0xb4] sm:$0xe]
      %vm1798 = vcmask 1042432
      %vm1799 = vcmask 1046532
      %vm1800 = vmor %vm1798, %vm1799
      %v1801 = vrot.slane %v1750, 5
      %v1802 = vrot.slane %v1801, 4
      %v1803 = vrot.slane %v849, 5
      %v1804 = vsel %vm1800, %v1802, %v1803
      %v1805 = vrot.slane %v1803, 4
      %v1806 = vrot.slane %v896, 5
      %v1807 = vsel %vm1800, %v1805, %v1806
      %v1808 = vrot.slane %v1751, 5
      %v1809 = vrot.slane %v1808, 4
      %v1810 = vrot.slane %v851, 5
      %v1811 = vsel %vm1800, %v1809, %v1810
      %v1812 = vrot.slane %v1810, 4
      %v1813 = vrot.slane %v897, 5
      %v1814 = vsel %vm1800, %v1812, %v1813
      %v1815 = vrot.slane %v1752, 5
      %v1816 = vrot.slane %v1815, 4
      %v1817 = vrot.slane %v853, 5
      %v1818 = vsel %vm1800, %v1816, %v1817
      %v1819 = vrot.slane %v1817, 4
      %v1820 = vrot.slane %v898, 5
      %v1821 = vsel %vm1800, %v1819, %v1820
      %v1822 = vrot.slane %v1753, 5
      %v1823 = vrot.slane %v1822, 4
      %v1824 = vrot.slane %v855, 5
      %v1825 = vsel %vm1800, %v1823, %v1824
      %v1826 = vrot.slane %v1824, 4
      %v1827 = vrot.slane %v899, 5
      %v1828 = vsel %vm1800, %v1826, %v1827
      %v1829 = vrot.slane %v1754, 5
      %v1830 = vrot.slane %v1829, 4
      %v1831 = vrot.slane %v857, 5
      %v1832 = vsel %vm1800, %v1830, %v1831
      %v1833 = vrot.slane %v1831, 4
      %v1834 = vrot.slane %v900, 5
      %v1835 = vsel %vm1800, %v1833, %v1834
      %v1836 = vrot.slane %v1755, 5
      %v1837 = vrot.slane %v1836, 4
      %v1838 = vrot.slane %v859, 5
      %v1839 = vsel %vm1800, %v1837, %v1838
      %v1840 = vrot.slane %v1838, 4
      %v1841 = vrot.slane %v901, 5
      %v1842 = vsel %vm1800, %v1840, %v1841
      %v1843 = vrot.slane %v1756, 5
      %v1844 = vrot.slane %v1843, 4
      %v1845 = vrot.slane %v861, 5
      %v1846 = vsel %vm1800, %v1844, %v1845
      %v1847 = vrot.slane %v1845, 4
      %v1848 = vrot.slane %v902, 5
      %v1849 = vsel %vm1800, %v1847, %v1848
      %v1850 = vrot.slane %v1757, 5
      %v1851 = vrot.slane %v1850, 4
      %v1852 = vrot.slane %v863, 5
      %v1853 = vsel %vm1800, %v1851, %v1852
      %v1854 = vrot.slane %v1852, 4
      %v1855 = vrot.slane %v903, 5
      %v1856 = vsel %vm1800, %v1854, %v1855
      %v1857 = vrot.slane %v1758, 5
      %v1858 = vrot.slane %v1857, 4
      %v1859 = vrot.slane %v865, 5
      %v1860 = vsel %vm1800, %v1858, %v1859
      %v1861 = vrot.slane %v1859, 4
      %v1862 = vrot.slane %v904, 5
      %v1863 = vsel %vm1800, %v1861, %v1862
      %v1864 = vrot.slane %v1759, 5
      %v1865 = vrot.slane %v1864, 4
      %v1866 = vrot.slane %v867, 5
      %v1867 = vsel %vm1800, %v1865, %v1866
      %v1868 = vrot.slane %v1866, 4
      %v1869 = vrot.slane %v905, 5
      %v1870 = vsel %vm1800, %v1868, %v1869
      %v1871 = vrot.slane %v1760, 5
      %v1872 = vrot.slane %v1871, 4
      %v1873 = vrot.slane %v869, 5
      %v1874 = vsel %vm1800, %v1872, %v1873
      %v1875 = vrot.slane %v1873, 4
      %v1876 = vrot.slane %v906, 5
      %v1877 = vsel %vm1800, %v1875, %v1876
      %v1878 = vrot.slane %v1761, 5
      %v1879 = vrot.slane %v1878, 4
      %v1880 = vrot.slane %v871, 5
      %v1881 = vsel %vm1800, %v1879, %v1880
      %v1882 = vrot.slane %v1880, 4
      %v1883 = vrot.slane %v907, 5
      %v1884 = vsel %vm1800, %v1882, %v1883
      %v1885 = vrot.slane %v1762, 5
      %v1886 = vrot.slane %v1885, 4
      %v1887 = vrot.slane %v873, 5
      %v1888 = vsel %vm1800, %v1886, %v1887
      %v1889 = vrot.slane %v1887, 4
      %v1890 = vrot.slane %v908, 5
      %v1891 = vsel %vm1800, %v1889, %v1890
      %v1892 = vrot.slane %v1763, 5
      %v1893 = vrot.slane %v1892, 4
      %v1894 = vrot.slane %v875, 5
      %v1895 = vsel %vm1800, %v1893, %v1894
      %v1896 = vrot.slane %v1894, 4
      %v1897 = vrot.slane %v909, 5
      %v1898 = vsel %vm1800, %v1896, %v1897
      %v1899 = vrot.slane %v1764, 5
      %v1900 = vrot.slane %v1899, 4
      %v1901 = vrot.slane %v877, 5
      %v1902 = vsel %vm1800, %v1900, %v1901
      %v1903 = vrot.slane %v1901, 4
      %v1904 = vrot.slane %v910, 5
      %v1905 = vsel %vm1800, %v1903, %v1904
      %v1906 = vrot.slane %v1765, 5
      %v1907 = vrot.slane %v1906, 4
      %v1908 = vrot.slane %v879, 5
      %v1909 = vsel %vm1800, %v1907, %v1908
      %v1910 = vrot.slane %v1908, 4
      %v1911 = vrot.slane %v911, 5
      %v1912 = vsel %vm1800, %v1910, %v1911
      %s1913 = scalar_lea.vmem %s3, 128
      %v1914 = vld [vmem:[%s1913] sm:$0xf]
      %v1915 = vld [vmem:[%s1913 + $0x4] sm:$0xf]
      %v1916 = vld [vmem:[%s1913 + $0x8] sm:$0xf]
      %v1917 = vld [vmem:[%s1913 + $0xc] sm:$0xf]
      %v1918 = vld [vmem:[%s1913 + $0x10] sm:$0xf]
      %v1919 = vld [vmem:[%s1913 + $0x14] sm:$0xf]
      %v1920 = vld [vmem:[%s1913 + $0x18] sm:$0xf]
      %v1921 = vld [vmem:[%s1913 + $0x1c] sm:$0xf]
      %v1922 = vld [vmem:[%s1913 + $0x20] sm:$0xf]
      %v1923 = vld [vmem:[%s1913 + $0x24] sm:$0xf]
      %v1924 = vld [vmem:[%s1913 + $0x28] sm:$0xf]
      %v1925 = vld [vmem:[%s1913 + $0x2c] sm:$0xf]
      %v1926 = vld [vmem:[%s1913 + $0x30] sm:$0xf]
      %v1927 = vld [vmem:[%s1913 + $0x34] sm:$0xf]
      %v1928 = vld [vmem:[%s1913 + $0x38] sm:$0xf]
      %v1929 = vld [vmem:[%s1913 + $0x3c] sm:$0xf]
      %v1930 = vunpack.c.l.b16 %v1804
      %v1931 = vunpack.c.l.b16 %v1807
      %v1932 = vunpack.c.l.b16 %v1811
      %v1933 = vunpack.c.l.b16 %v1814
      %v1934 = vunpack.c.l.b16 %v1818
      %v1935 = vunpack.c.l.b16 %v1821
      %v1936 = vunpack.c.l.b16 %v1825
      %v1937 = vunpack.c.l.b16 %v1828
      %v1938 = vunpack.c.l.b16 %v1832
      %v1939 = vunpack.c.l.b16 %v1835
      %v1940 = vunpack.c.l.b16 %v1839
      %v1941 = vunpack.c.l.b16 %v1842
      %v1942 = vunpack.c.l.b16 %v1846
      %v1943 = vunpack.c.l.b16 %v1849
      %v1944 = vunpack.c.l.b16 %v1853
      %v1945 = vunpack.c.l.b16 %v1856
      %v1946 = vunpack.c.l.b16 %v1860
      %v1947 = vunpack.c.l.b16 %v1863
      %v1948 = vunpack.c.l.b16 %v1867
      %v1949 = vunpack.c.l.b16 %v1870
      %v1950 = vunpack.c.l.b16 %v1874
      %v1951 = vunpack.c.l.b16 %v1877
      %v1952 = vunpack.c.l.b16 %v1881
      %v1953 = vunpack.c.l.b16 %v1884
      %v1954 = vunpack.c.l.b16 %v1888
      %v1955 = vunpack.c.l.b16 %v1891
      %v1956 = vunpack.c.l.b16 %v1895
      %v1957 = vunpack.c.l.b16 %v1898
      %v1958 = vunpack.c.l.b16 %v1902
      %v1959 = vunpack.c.l.b16 %v1905
      %v1960 = vunpack.c.l.b16 %v1909
      %v1961 = vunpack.c.l.b16 %v1912
      %v1962 = vpack.c.b16 %v1931, %v1930
      %v1963 = vpack.c.b16 %v1933, %v1932
      %v1964 = vpack.c.b16 %v1935, %v1934
      %v1965 = vpack.c.b16 %v1937, %v1936
      %v1966 = vpack.c.b16 %v1939, %v1938
      %v1967 = vpack.c.b16 %v1941, %v1940
      %v1968 = vpack.c.b16 %v1943, %v1942
      %v1969 = vpack.c.b16 %v1945, %v1944
      %v1970 = vpack.c.b16 %v1947, %v1946
      %v1971 = vpack.c.b16 %v1949, %v1948
      %v1972 = vpack.c.b16 %v1951, %v1950
      %v1973 = vpack.c.b16 %v1953, %v1952
      %v1974 = vpack.c.b16 %v1955, %v1954
      %v1975 = vpack.c.b16 %v1957, %v1956
      %v1976 = vpack.c.b16 %v1959, %v1958
      %v1977 = vpack.c.b16 %v1961, %v1960
      %v2010 = vunpack.c.l.b16 %v1914
      %v2011 = vunpack.c.l.b16 %v1915
      %v2012 = vunpack.c.l.b16 %v1916
      %v2013 = vunpack.c.l.b16 %v1917
      %v2014 = vunpack.c.l.b16 %v1918
      %v2015 = vunpack.c.l.b16 %v1919
      %v2016 = vunpack.c.l.b16 %v1920
      %v2017 = vunpack.c.l.b16 %v1921
      %v2018 = vunpack.c.l.b16 %v1922
      %v2019 = vunpack.c.l.b16 %v1923
      %v2020 = vunpack.c.l.b16 %v1924
      %v2021 = vunpack.c.l.b16 %v1925
      %v2022 = vunpack.c.l.b16 %v1926
      %v2023 = vunpack.c.l.b16 %v1927
      %v2024 = vunpack.c.l.b16 %v1928
      %v2025 = vunpack.c.l.b16 %v1929
      %v2026 = vpack.c.b16 %v2011, %v2010
      %v2027 = vpack.c.b16 %v2013, %v2012
      %v2028 = vpack.c.b16 %v2015, %v2014
      %v2029 = vpack.c.b16 %v2017, %v2016
      %v2030 = vpack.c.b16 %v2019, %v2018
      %v2031 = vpack.c.b16 %v2021, %v2020
      %v2032 = vpack.c.b16 %v2023, %v2022
      %v2033 = vpack.c.b16 %v2025, %v2024
      %2042 = vmatpush.bf16.msra.mxu0 %v2033
      %2043 = vmatpush.bf16.msra.mxu0 %v2032
      %2044 = vmatpush.bf16.msra.mxu0 %v2031
      %2045 = vmatpush.bf16.msra.mxu0 %v2030
      %2046 = vmatpush.bf16.msra.mxu0 %v2029
      %2047 = vmatpush.bf16.msra.mxu0 %v2028
      %2048 = vmatpush.bf16.msra.mxu0 %v2027
      %2049 = vmatpush.bf16.msra.mxu0 %v2026
      %2050 = vmatmul.bf16.gmra.mxu0 %v1962
      %v2051 = vpop.f32.mrf.mxu0
      %v2052 = vadd.f32 0.0, %v2051
      %v2053 = vpop.f32.mrf.mxu0
      %v2054 = vadd.f32 0.0, %v2053
      %2055 = vmatmul.bf16.gmra.mxu0 %v1963
      %v2056 = vpop.f32.mrf.mxu0
      %v2057 = vadd.f32 0.0, %v2056
      %v2058 = vpop.f32.mrf.mxu0
      %v2059 = vadd.f32 0.0, %v2058
      %2060 = vmatmul.bf16.gmra.mxu0 %v1964
      %v2061 = vpop.f32.mrf.mxu0
      %v2062 = vadd.f32 0.0, %v2061
      %v2063 = vpop.f32.mrf.mxu0
      %v2064 = vadd.f32 0.0, %v2063
      %2065 = vmatmul.bf16.gmra.mxu0 %v1965
      %v2066 = vpop.f32.mrf.mxu0
      %v2067 = vadd.f32 0.0, %v2066
      %v2068 = vpop.f32.mrf.mxu0
      %v2069 = vadd.f32 0.0, %v2068
      %2070 = vmatmul.bf16.gmra.mxu0 %v1966
      %v2071 = vpop.f32.mrf.mxu0
      %v2072 = vadd.f32 0.0, %v2071
      %v2073 = vpop.f32.mrf.mxu0
      %v2074 = vadd.f32 0.0, %v2073
      %2075 = vmatmul.bf16.gmra.mxu0 %v1967
      %v2076 = vpop.f32.mrf.mxu0
      %v2077 = vadd.f32 0.0, %v2076
      %v2078 = vpop.f32.mrf.mxu0
      %v2079 = vadd.f32 0.0, %v2078
      %2080 = vmatmul.bf16.gmra.mxu0 %v1968
      %v2081 = vpop.f32.mrf.mxu0
      %v2082 = vadd.f32 0.0, %v2081
      %v2083 = vpop.f32.mrf.mxu0
      %v2084 = vadd.f32 0.0, %v2083
      %2085 = vmatmul.bf16.gmra.mxu0 %v1969
      %v2086 = vpop.f32.mrf.mxu0
      %v2087 = vadd.f32 0.0, %v2086
      %v2088 = vpop.f32.mrf.mxu0
      %v2089 = vadd.f32 0.0, %v2088
      %2090 = vmatmul.bf16.gmra.mxu0 %v1970
      %v2091 = vpop.f32.mrf.mxu0
      %v2092 = vadd.f32 0.0, %v2091
      %v2093 = vpop.f32.mrf.mxu0
      %v2094 = vadd.f32 0.0, %v2093
      %2095 = vmatmul.bf16.gmra.mxu0 %v1971
      %v2096 = vpop.f32.mrf.mxu0
      %v2097 = vadd.f32 0.0, %v2096
      %v2098 = vpop.f32.mrf.mxu0
      %v2099 = vadd.f32 0.0, %v2098
      %2100 = vmatmul.bf16.gmra.mxu0 %v1972
      %v2101 = vpop.f32.mrf.mxu0
      %v2102 = vadd.f32 0.0, %v2101
      %v2103 = vpop.f32.mrf.mxu0
      %v2104 = vadd.f32 0.0, %v2103
      %2105 = vmatmul.bf16.gmra.mxu0 %v1973
      %v2106 = vpop.f32.mrf.mxu0
      %v2107 = vadd.f32 0.0, %v2106
      %v2108 = vpop.f32.mrf.mxu0
      %v2109 = vadd.f32 0.0, %v2108
      %2110 = vmatmul.bf16.gmra.mxu0 %v1974
      %v2111 = vpop.f32.mrf.mxu0
      %v2112 = vadd.f32 0.0, %v2111
      %v2113 = vpop.f32.mrf.mxu0
      %v2114 = vadd.f32 0.0, %v2113
      %2115 = vmatmul.bf16.gmra.mxu0 %v1975
      %v2116 = vpop.f32.mrf.mxu0
      %v2117 = vadd.f32 0.0, %v2116
      %v2118 = vpop.f32.mrf.mxu0
      %v2119 = vadd.f32 0.0, %v2118
      %2120 = vmatmul.bf16.gmra.mxu0 %v1976
      %v2121 = vpop.f32.mrf.mxu0
      %v2122 = vadd.f32 0.0, %v2121
      %v2123 = vpop.f32.mrf.mxu0
      %v2124 = vadd.f32 0.0, %v2123
      %2125 = vmatmul.bf16.gmra.mxu0 %v1977
      %v2126 = vpop.f32.mrf.mxu0
      %v2127 = vadd.f32 0.0, %v2126
      %v2128 = vpop.f32.mrf.mxu0
      %v2129 = vadd.f32 0.0, %v2128
      %2130 = vdwg.mxu0
      %v2131 = vadd.f32 %v1671, %v2052
      %v2132 = vadd.f32 %v1673, %v2054
      %v2133 = vadd.f32 %v1676, %v2057
      %v2134 = vadd.f32 %v1678, %v2059
      %v2135 = vadd.f32 %v1681, %v2062
      %v2136 = vadd.f32 %v1683, %v2064
      %v2137 = vadd.f32 %v1686, %v2067
      %v2138 = vadd.f32 %v1688, %v2069
      %v2139 = vadd.f32 %v1691, %v2072
      %v2140 = vadd.f32 %v1693, %v2074
      %v2141 = vadd.f32 %v1696, %v2077
      %v2142 = vadd.f32 %v1698, %v2079
      %v2143 = vadd.f32 %v1701, %v2082
      %v2144 = vadd.f32 %v1703, %v2084
      %v2145 = vadd.f32 %v1706, %v2087
      %v2146 = vadd.f32 %v1708, %v2089
      %v2147 = vadd.f32 %v1711, %v2092
      %v2148 = vadd.f32 %v1713, %v2094
      %v2149 = vadd.f32 %v1716, %v2097
      %v2150 = vadd.f32 %v1718, %v2099
      %v2151 = vadd.f32 %v1721, %v2102
      %v2152 = vadd.f32 %v1723, %v2104
      %v2153 = vadd.f32 %v1726, %v2107
      %v2154 = vadd.f32 %v1728, %v2109
      %v2155 = vadd.f32 %v1731, %v2112
      %v2156 = vadd.f32 %v1733, %v2114
      %v2157 = vadd.f32 %v1736, %v2117
      %v2158 = vadd.f32 %v1738, %v2119
      %v2159 = vadd.f32 %v1741, %v2122
      %v2160 = vadd.f32 %v1743, %v2124
      %v2161 = vadd.f32 %v1746, %v2127
      %v2162 = vadd.f32 %v1748, %v2129
      %s2163 = sadd.s32 %s844, 1
      %s2164 = smul.u32 %s2163, 3
      %s2165 = smul.addr %s2164, 4
      %s2166 = scalar_lea.vmem [#allocation2], %s2165
      %v2167 = vld [vmem:[%s2166] sm:$0xf]
      %v2168 = vld [vmem:[%s2166 + $0x4] sm:$0xf]
      %v2169 = vld [vmem:[%s2166 + $0xc] sm:$0xf]
      %v2170 = vld [vmem:[%s2166 + $0x10] sm:$0xf]
      %v2171 = vld [vmem:[%s2166 + $0x18] sm:$0xf]
      %v2172 = vld [vmem:[%s2166 + $0x1c] sm:$0xf]
      %v2173 = vld [vmem:[%s2166 + $0x24] sm:$0xf]
      %v2174 = vld [vmem:[%s2166 + $0x28] sm:$0xf]
      %v2175 = vld [vmem:[%s2166 + $0x30] sm:$0xf]
      %v2176 = vld [vmem:[%s2166 + $0x34] sm:$0xf]
      %v2177 = vld [vmem:[%s2166 + $0x3c] sm:$0xf]
      %v2178 = vld [vmem:[%s2166 + $0x40] sm:$0xf]
      %v2179 = vld [vmem:[%s2166 + $0x48] sm:$0xf]
      %v2180 = vld [vmem:[%s2166 + $0x4c] sm:$0xf]
      %v2181 = vld [vmem:[%s2166 + $0x54] sm:$0xf]
      %v2182 = vld [vmem:[%s2166 + $0x58] sm:$0xf]
      %v2183 = vld [vmem:[%s2166 + $0x60] sm:$0xf]
      %v2184 = vld [vmem:[%s2166 + $0x64] sm:$0xf]
      %v2185 = vld [vmem:[%s2166 + $0x6c] sm:$0xf]
      %v2186 = vld [vmem:[%s2166 + $0x70] sm:$0xf]
      %v2187 = vld [vmem:[%s2166 + $0x78] sm:$0xf]
      %v2188 = vld [vmem:[%s2166 + $0x7c] sm:$0xf]
      %v2189 = vld [vmem:[%s2166 + $0x84] sm:$0xf]
      %v2190 = vld [vmem:[%s2166 + $0x88] sm:$0xf]
      %v2191 = vld [vmem:[%s2166 + $0x90] sm:$0xf]
      %v2192 = vld [vmem:[%s2166 + $0x94] sm:$0xf]
      %v2193 = vld [vmem:[%s2166 + $0x9c] sm:$0xf]
      %v2194 = vld [vmem:[%s2166 + $0xa0] sm:$0xf]
      %v2195 = vld [vmem:[%s2166 + $0xa8] sm:$0xf]
      %v2196 = vld [vmem:[%s2166 + $0xac] sm:$0xf]
      %v2197 = vld [vmem:[%s2166 + $0xb4] sm:$0xf]
      %v2198 = vld [vmem:[%s2166 + $0xb8] sm:$0xf]
      %s2199 = scalar_lea.vmem %s3, 192
      %v2200 = vld [vmem:[%s2199] sm:$0xf]
      %v2201 = vld [vmem:[%s2199 + $0x4] sm:$0xf]
      %v2202 = vld [vmem:[%s2199 + $0x8] sm:$0xf]
      %v2203 = vld [vmem:[%s2199 + $0xc] sm:$0xf]
      %v2204 = vld [vmem:[%s2199 + $0x10] sm:$0xf]
      %v2205 = vld [vmem:[%s2199 + $0x14] sm:$0xf]
      %v2206 = vld [vmem:[%s2199 + $0x18] sm:$0xf]
      %v2207 = vld [vmem:[%s2199 + $0x1c] sm:$0xf]
      %v2208 = vld [vmem:[%s2199 + $0x20] sm:$0xf]
      %v2209 = vld [vmem:[%s2199 + $0x24] sm:$0xf]
      %v2210 = vld [vmem:[%s2199 + $0x28] sm:$0xf]
      %v2211 = vld [vmem:[%s2199 + $0x2c] sm:$0xf]
      %v2212 = vld [vmem:[%s2199 + $0x30] sm:$0xf]
      %v2213 = vld [vmem:[%s2199 + $0x34] sm:$0xf]
      %v2214 = vld [vmem:[%s2199 + $0x38] sm:$0xf]
      %v2215 = vld [vmem:[%s2199 + $0x3c] sm:$0xf]
      %v2248 = vunpack.c.l.b16 %v2167
      %v2249 = vunpack.c.l.b16 %v2168
      %v2250 = vunpack.c.l.b16 %v2169
      %v2251 = vunpack.c.l.b16 %v2170
      %v2252 = vunpack.c.l.b16 %v2171
      %v2253 = vunpack.c.l.b16 %v2172
      %v2254 = vunpack.c.l.b16 %v2173
      %v2255 = vunpack.c.l.b16 %v2174
      %v2256 = vunpack.c.l.b16 %v2175
      %v2257 = vunpack.c.l.b16 %v2176
      %v2258 = vunpack.c.l.b16 %v2177
      %v2259 = vunpack.c.l.b16 %v2178
      %v2260 = vunpack.c.l.b16 %v2179
      %v2261 = vunpack.c.l.b16 %v2180
      %v2262 = vunpack.c.l.b16 %v2181
      %v2263 = vunpack.c.l.b16 %v2182
      %v2264 = vunpack.c.l.b16 %v2183
      %v2265 = vunpack.c.l.b16 %v2184
      %v2266 = vunpack.c.l.b16 %v2185
      %v2267 = vunpack.c.l.b16 %v2186
      %v2268 = vunpack.c.l.b16 %v2187
      %v2269 = vunpack.c.l.b16 %v2188
      %v2270 = vunpack.c.l.b16 %v2189
      %v2271 = vunpack.c.l.b16 %v2190
      %v2272 = vunpack.c.l.b16 %v2191
      %v2273 = vunpack.c.l.b16 %v2192
      %v2274 = vunpack.c.l.b16 %v2193
      %v2275 = vunpack.c.l.b16 %v2194
      %v2276 = vunpack.c.l.b16 %v2195
      %v2277 = vunpack.c.l.b16 %v2196
      %v2278 = vunpack.c.l.b16 %v2197
      %v2279 = vunpack.c.l.b16 %v2198
      %v2280 = vpack.c.b16 %v2249, %v2248
      %v2281 = vpack.c.b16 %v2251, %v2250
      %v2282 = vpack.c.b16 %v2253, %v2252
      %v2283 = vpack.c.b16 %v2255, %v2254
      %v2284 = vpack.c.b16 %v2257, %v2256
      %v2285 = vpack.c.b16 %v2259, %v2258
      %v2286 = vpack.c.b16 %v2261, %v2260
      %v2287 = vpack.c.b16 %v2263, %v2262
      %v2288 = vpack.c.b16 %v2265, %v2264
      %v2289 = vpack.c.b16 %v2267, %v2266
      %v2290 = vpack.c.b16 %v2269, %v2268
      %v2291 = vpack.c.b16 %v2271, %v2270
      %v2292 = vpack.c.b16 %v2273, %v2272
      %v2293 = vpack.c.b16 %v2275, %v2274
      %v2294 = vpack.c.b16 %v2277, %v2276
      %v2295 = vpack.c.b16 %v2279, %v2278
      %v2328 = vunpack.c.l.b16 %v2200
      %v2329 = vunpack.c.l.b16 %v2201
      %v2330 = vunpack.c.l.b16 %v2202
      %v2331 = vunpack.c.l.b16 %v2203
      %v2332 = vunpack.c.l.b16 %v2204
      %v2333 = vunpack.c.l.b16 %v2205
      %v2334 = vunpack.c.l.b16 %v2206
      %v2335 = vunpack.c.l.b16 %v2207
      %v2336 = vunpack.c.l.b16 %v2208
      %v2337 = vunpack.c.l.b16 %v2209
      %v2338 = vunpack.c.l.b16 %v2210
      %v2339 = vunpack.c.l.b16 %v2211
      %v2340 = vunpack.c.l.b16 %v2212
      %v2341 = vunpack.c.l.b16 %v2213
      %v2342 = vunpack.c.l.b16 %v2214
      %v2343 = vunpack.c.l.b16 %v2215
      %v2344 = vpack.c.b16 %v2329, %v2328
      %v2345 = vpack.c.b16 %v2331, %v2330
      %v2346 = vpack.c.b16 %v2333, %v2332
      %v2347 = vpack.c.b16 %v2335, %v2334
      %v2348 = vpack.c.b16 %v2337, %v2336
      %v2349 = vpack.c.b16 %v2339, %v2338
      %v2350 = vpack.c.b16 %v2341, %v2340
      %v2351 = vpack.c.b16 %v2343, %v2342
      %2360 = vmatpush.bf16.msra.mxu0 %v2351
      %2361 = vmatpush.bf16.msra.mxu0 %v2350
      %2362 = vmatpush.bf16.msra.mxu0 %v2349
      %2363 = vmatpush.bf16.msra.mxu0 %v2348
      %2364 = vmatpush.bf16.msra.mxu0 %v2347
      %2365 = vmatpush.bf16.msra.mxu0 %v2346
      %2366 = vmatpush.bf16.msra.mxu0 %v2345
      %2367 = vmatpush.bf16.msra.mxu0 %v2344
      %2368 = vmatmul.bf16.gmra.mxu0 %v2280
      %v2369 = vpop.f32.mrf.mxu0
      %v2370 = vadd.f32 0.0, %v2369
      %v2371 = vpop.f32.mrf.mxu0
      %v2372 = vadd.f32 0.0, %v2371
      %2373 = vmatmul.bf16.gmra.mxu0 %v2281
      %v2374 = vpop.f32.mrf.mxu0
      %v2375 = vadd.f32 0.0, %v2374
      %v2376 = vpop.f32.mrf.mxu0
      %v2377 = vadd.f32 0.0, %v2376
      %2378 = vmatmul.bf16.gmra.mxu0 %v2282
      %v2379 = vpop.f32.mrf.mxu0
      %v2380 = vadd.f32 0.0, %v2379
      %v2381 = vpop.f32.mrf.mxu0
      %v2382 = vadd.f32 0.0, %v2381
      %2383 = vmatmul.bf16.gmra.mxu0 %v2283
      %v2384 = vpop.f32.mrf.mxu0
      %v2385 = vadd.f32 0.0, %v2384
      %v2386 = vpop.f32.mrf.mxu0
      %v2387 = vadd.f32 0.0, %v2386
      %2388 = vmatmul.bf16.gmra.mxu0 %v2284
      %v2389 = vpop.f32.mrf.mxu0
      %v2390 = vadd.f32 0.0, %v2389
      %v2391 = vpop.f32.mrf.mxu0
      %v2392 = vadd.f32 0.0, %v2391
      %2393 = vmatmul.bf16.gmra.mxu0 %v2285
      %v2394 = vpop.f32.mrf.mxu0
      %v2395 = vadd.f32 0.0, %v2394
      %v2396 = vpop.f32.mrf.mxu0
      %v2397 = vadd.f32 0.0, %v2396
      %2398 = vmatmul.bf16.gmra.mxu0 %v2286
      %v2399 = vpop.f32.mrf.mxu0
      %v2400 = vadd.f32 0.0, %v2399
      %v2401 = vpop.f32.mrf.mxu0
      %v2402 = vadd.f32 0.0, %v2401
      %2403 = vmatmul.bf16.gmra.mxu0 %v2287
      %v2404 = vpop.f32.mrf.mxu0
      %v2405 = vadd.f32 0.0, %v2404
      %v2406 = vpop.f32.mrf.mxu0
      %v2407 = vadd.f32 0.0, %v2406
      %2408 = vmatmul.bf16.gmra.mxu0 %v2288
      %v2409 = vpop.f32.mrf.mxu0
      %v2410 = vadd.f32 0.0, %v2409
      %v2411 = vpop.f32.mrf.mxu0
      %v2412 = vadd.f32 0.0, %v2411
      %2413 = vmatmul.bf16.gmra.mxu0 %v2289
      %v2414 = vpop.f32.mrf.mxu0
      %v2415 = vadd.f32 0.0, %v2414
      %v2416 = vpop.f32.mrf.mxu0
      %v2417 = vadd.f32 0.0, %v2416
      %2418 = vmatmul.bf16.gmra.mxu0 %v2290
      %v2419 = vpop.f32.mrf.mxu0
      %v2420 = vadd.f32 0.0, %v2419
      %v2421 = vpop.f32.mrf.mxu0
      %v2422 = vadd.f32 0.0, %v2421
      %2423 = vmatmul.bf16.gmra.mxu0 %v2291
      %v2424 = vpop.f32.mrf.mxu0
      %v2425 = vadd.f32 0.0, %v2424
      %v2426 = vpop.f32.mrf.mxu0
      %v2427 = vadd.f32 0.0, %v2426
      %2428 = vmatmul.bf16.gmra.mxu0 %v2292
      %v2429 = vpop.f32.mrf.mxu0
      %v2430 = vadd.f32 0.0, %v2429
      %v2431 = vpop.f32.mrf.mxu0
      %v2432 = vadd.f32 0.0, %v2431
      %2433 = vmatmul.bf16.gmra.mxu0 %v2293
      %v2434 = vpop.f32.mrf.mxu0
      %v2435 = vadd.f32 0.0, %v2434
      %v2436 = vpop.f32.mrf.mxu0
      %v2437 = vadd.f32 0.0, %v2436
      %2438 = vmatmul.bf16.gmra.mxu0 %v2294
      %v2439 = vpop.f32.mrf.mxu0
      %v2440 = vadd.f32 0.0, %v2439
      %v2441 = vpop.f32.mrf.mxu0
      %v2442 = vadd.f32 0.0, %v2441
      %2443 = vmatmul.bf16.gmra.mxu0 %v2295
      %v2444 = vpop.f32.mrf.mxu0
      %v2445 = vadd.f32 0.0, %v2444
      %v2446 = vpop.f32.mrf.mxu0
      %v2447 = vadd.f32 0.0, %v2446
      %2448 = vdwg.mxu0
      %v2449 = vadd.f32 %v2131, %v2370
      %v2450 = vadd.f32 %v2132, %v2372
      %v2451 = vadd.f32 %v2133, %v2375
      %v2452 = vadd.f32 %v2134, %v2377
      %v2453 = vadd.f32 %v2135, %v2380
      %v2454 = vadd.f32 %v2136, %v2382
      %v2455 = vadd.f32 %v2137, %v2385
      %v2456 = vadd.f32 %v2138, %v2387
      %v2457 = vadd.f32 %v2139, %v2390
      %v2458 = vadd.f32 %v2140, %v2392
      %v2459 = vadd.f32 %v2141, %v2395
      %v2460 = vadd.f32 %v2142, %v2397
      %v2461 = vadd.f32 %v2143, %v2400
      %v2462 = vadd.f32 %v2144, %v2402
      %v2463 = vadd.f32 %v2145, %v2405
      %v2464 = vadd.f32 %v2146, %v2407
      %v2465 = vadd.f32 %v2147, %v2410
      %v2466 = vadd.f32 %v2148, %v2412
      %v2467 = vadd.f32 %v2149, %v2415
      %v2468 = vadd.f32 %v2150, %v2417
      %v2469 = vadd.f32 %v2151, %v2420
      %v2470 = vadd.f32 %v2152, %v2422
      %v2471 = vadd.f32 %v2153, %v2425
      %v2472 = vadd.f32 %v2154, %v2427
      %v2473 = vadd.f32 %v2155, %v2430
      %v2474 = vadd.f32 %v2156, %v2432
      %v2475 = vadd.f32 %v2157, %v2435
      %v2476 = vadd.f32 %v2158, %v2437
      %v2477 = vadd.f32 %v2159, %v2440
      %v2478 = vadd.f32 %v2160, %v2442
      %v2479 = vadd.f32 %v2161, %v2445
      %v2480 = vadd.f32 %v2162, %v2447
      %v2481 = vld [vmem:[%s2166] sm:$0xf]
      %v2482 = vld [vmem:[%s2166 + $0x4] sm:$0xf]
      %v2483 = vld [vmem:[%s2166 + $0x8] sm:$0x1]
      %v2484 = vld [vmem:[%s2166 + $0xc] sm:$0xf]
      %v2485 = vld [vmem:[%s2166 + $0x10] sm:$0xf]
      %v2486 = vld [vmem:[%s2166 + $0x14] sm:$0x1]
      %v2487 = vld [vmem:[%s2166 + $0x18] sm:$0xf]
      %v2488 = vld [vmem:[%s2166 + $0x1c] sm:$0xf]
      %v2489 = vld [vmem:[%s2166 + $0x20] sm:$0x1]
      %v2490 = vld [vmem:[%s2166 + $0x24] sm:$0xf]
      %v2491 = vld [vmem:[%s2166 + $0x28] sm:$0xf]
      %v2492 = vld [vmem:[%s2166 + $0x2c] sm:$0x1]
      %v2493 = vld [vmem:[%s2166 + $0x30] sm:$0xf]
      %v2494 = vld [vmem:[%s2166 + $0x34] sm:$0xf]
      %v2495 = vld [vmem:[%s2166 + $0x38] sm:$0x1]
      %v2496 = vld [vmem:[%s2166 + $0x3c] sm:$0xf]
      %v2497 = vld [vmem:[%s2166 + $0x40] sm:$0xf]
      %v2498 = vld [vmem:[%s2166 + $0x44] sm:$0x1]
      %v2499 = vld [vmem:[%s2166 + $0x48] sm:$0xf]
      %v2500 = vld [vmem:[%s2166 + $0x4c] sm:$0xf]
      %v2501 = vld [vmem:[%s2166 + $0x50] sm:$0x1]
      %v2502 = vld [vmem:[%s2166 + $0x54] sm:$0xf]
      %v2503 = vld [vmem:[%s2166 + $0x58] sm:$0xf]
      %v2504 = vld [vmem:[%s2166 + $0x5c] sm:$0x1]
      %v2505 = vld [vmem:[%s2166 + $0x60] sm:$0xf]
      %v2506 = vld [vmem:[%s2166 + $0x64] sm:$0xf]
      %v2507 = vld [vmem:[%s2166 + $0x68] sm:$0x1]
      %v2508 = vld [vmem:[%s2166 + $0x6c] sm:$0xf]
      %v2509 = vld [vmem:[%s2166 + $0x70] sm:$0xf]
      %v2510 = vld [vmem:[%s2166 + $0x74] sm:$0x1]
      %v2511 = vld [vmem:[%s2166 + $0x78] sm:$0xf]
      %v2512 = vld [vmem:[%s2166 + $0x7c] sm:$0xf]
      %v2513 = vld [vmem:[%s2166 + $0x80] sm:$0x1]
      %v2514 = vld [vmem:[%s2166 + $0x84] sm:$0xf]
      %v2515 = vld [vmem:[%s2166 + $0x88] sm:$0xf]
      %v2516 = vld [vmem:[%s2166 + $0x8c] sm:$0x1]
      %v2517 = vld [vmem:[%s2166 + $0x90] sm:$0xf]
      %v2518 = vld [vmem:[%s2166 + $0x94] sm:$0xf]
      %v2519 = vld [vmem:[%s2166 + $0x98] sm:$0x1]
      %v2520 = vld [vmem:[%s2166 + $0x9c] sm:$0xf]
      %v2521 = vld [vmem:[%s2166 + $0xa0] sm:$0xf]
      %v2522 = vld [vmem:[%s2166 + $0xa4] sm:$0x1]
      %v2523 = vld [vmem:[%s2166 + $0xa8] sm:$0xf]
      %v2524 = vld [vmem:[%s2166 + $0xac] sm:$0xf]
      %v2525 = vld [vmem:[%s2166 + $0xb0] sm:$0x1]
      %v2526 = vld [vmem:[%s2166 + $0xb4] sm:$0xf]
      %v2527 = vld [vmem:[%s2166 + $0xb8] sm:$0xf]
      %v2528 = vld [vmem:[%s2166 + $0xbc] sm:$0x1]
      %v2530 = vshrl.u32 %v2481, 16
      %v2532 = vrot.slane %v2530, 4
      %v2533 = vshll.u32 %v2481, 16
      %v2535 = vrot.slane %v2533, 5
      %v2536 = vor.u32 %v2532, %v2535
      %v2537 = vrot.slane %v2536, 4
      %v2539 = vshll.u32 %v2482, 16
      %v2541 = vrot.slane %v2539, 5
      %v2542 = vsel %vm914, %v2537, %v2541
      %v2543 = vshrl.u32 %v2482, 16
      %v2545 = vrot.slane %v2543, 4
      %v2546 = vor.u32 %v2545, %v2541
      %v2547 = vrot.slane %v2546, 4
      %v2549 = vshll.u32 %v2483, 16
      %v2551 = vrot.slane %v2549, 5
      %v2552 = vsel %vm914, %v2547, %v2551
      %v2554 = vshrl.u32 %v2484, 16
      %v2556 = vrot.slane %v2554, 4
      %v2557 = vshll.u32 %v2484, 16
      %v2559 = vrot.slane %v2557, 5
      %v2560 = vor.u32 %v2556, %v2559
      %v2561 = vrot.slane %v2560, 4
      %v2563 = vshll.u32 %v2485, 16
      %v2565 = vrot.slane %v2563, 5
      %v2566 = vsel %vm914, %v2561, %v2565
      %v2567 = vshrl.u32 %v2485, 16
      %v2569 = vrot.slane %v2567, 4
      %v2570 = vor.u32 %v2569, %v2565
      %v2571 = vrot.slane %v2570, 4
      %v2573 = vshll.u32 %v2486, 16
      %v2575 = vrot.slane %v2573, 5
      %v2576 = vsel %vm914, %v2571, %v2575
      %v2578 = vshrl.u32 %v2487, 16
      %v2580 = vrot.slane %v2578, 4
      %v2581 = vshll.u32 %v2487, 16
      %v2583 = vrot.slane %v2581, 5
      %v2584 = vor.u32 %v2580, %v2583
      %v2585 = vrot.slane %v2584, 4
      %v2587 = vshll.u32 %v2488, 16
      %v2589 = vrot.slane %v2587, 5
      %v2590 = vsel %vm914, %v2585, %v2589
      %v2591 = vshrl.u32 %v2488, 16
      %v2593 = vrot.slane %v2591, 4
      %v2594 = vor.u32 %v2593, %v2589
      %v2595 = vrot.slane %v2594, 4
      %v2597 = vshll.u32 %v2489, 16
      %v2599 = vrot.slane %v2597, 5
      %v2600 = vsel %vm914, %v2595, %v2599
      %v2602 = vshrl.u32 %v2490, 16
      %v2604 = vrot.slane %v2602, 4
      %v2605 = vshll.u32 %v2490, 16
      %v2607 = vrot.slane %v2605, 5
      %v2608 = vor.u32 %v2604, %v2607
      %v2609 = vrot.slane %v2608, 4
      %v2611 = vshll.u32 %v2491, 16
      %v2613 = vrot.slane %v2611, 5
      %v2614 = vsel %vm914, %v2609, %v2613
      %v2615 = vshrl.u32 %v2491, 16
      %v2617 = vrot.slane %v2615, 4
      %v2618 = vor.u32 %v2617, %v2613
      %v2619 = vrot.slane %v2618, 4
      %v2621 = vshll.u32 %v2492, 16
      %v2623 = vrot.slane %v2621, 5
      %v2624 = vsel %vm914, %v2619, %v2623
      %v2626 = vshrl.u32 %v2493, 16
      %v2628 = vrot.slane %v2626, 4
      %v2629 = vshll.u32 %v2493, 16
      %v2631 = vrot.slane %v2629, 5
      %v2632 = vor.u32 %v2628, %v2631
      %v2633 = vrot.slane %v2632, 4
      %v2635 = vshll.u32 %v2494, 16
      %v2637 = vrot.slane %v2635, 5
      %v2638 = vsel %vm914, %v2633, %v2637
      %v2639 = vshrl.u32 %v2494, 16
      %v2641 = vrot.slane %v2639, 4
      %v2642 = vor.u32 %v2641, %v2637
      %v2643 = vrot.slane %v2642, 4
      %v2645 = vshll.u32 %v2495, 16
      %v2647 = vrot.slane %v2645, 5
      %v2648 = vsel %vm914, %v2643, %v2647
      %v2650 = vshrl.u32 %v2496, 16
      %v2652 = vrot.slane %v2650, 4
      %v2653 = vshll.u32 %v2496, 16
      %v2655 = vrot.slane %v2653, 5
      %v2656 = vor.u32 %v2652, %v2655
      %v2657 = vrot.slane %v2656, 4
      %v2659 = vshll.u32 %v2497, 16
      %v2661 = vrot.slane %v2659, 5
      %v2662 = vsel %vm914, %v2657, %v2661
      %v2663 = vshrl.u32 %v2497, 16
      %v2665 = vrot.slane %v2663, 4
      %v2666 = vor.u32 %v2665, %v2661
      %v2667 = vrot.slane %v2666, 4
      %v2669 = vshll.u32 %v2498, 16
      %v2671 = vrot.slane %v2669, 5
      %v2672 = vsel %vm914, %v2667, %v2671
      %v2674 = vshrl.u32 %v2499, 16
      %v2676 = vrot.slane %v2674, 4
      %v2677 = vshll.u32 %v2499, 16
      %v2679 = vrot.slane %v2677, 5
      %v2680 = vor.u32 %v2676, %v2679
      %v2681 = vrot.slane %v2680, 4
      %v2683 = vshll.u32 %v2500, 16
      %v2685 = vrot.slane %v2683, 5
      %v2686 = vsel %vm914, %v2681, %v2685
      %v2687 = vshrl.u32 %v2500, 16
      %v2689 = vrot.slane %v2687, 4
      %v2690 = vor.u32 %v2689, %v2685
      %v2691 = vrot.slane %v2690, 4
      %v2693 = vshll.u32 %v2501, 16
      %v2695 = vrot.slane %v2693, 5
      %v2696 = vsel %vm914, %v2691, %v2695
      %v2698 = vshrl.u32 %v2502, 16
      %v2700 = vrot.slane %v2698, 4
      %v2701 = vshll.u32 %v2502, 16
      %v2703 = vrot.slane %v2701, 5
      %v2704 = vor.u32 %v2700, %v2703
      %v2705 = vrot.slane %v2704, 4
      %v2707 = vshll.u32 %v2503, 16
      %v2709 = vrot.slane %v2707, 5
      %v2710 = vsel %vm914, %v2705, %v2709
      %v2711 = vshrl.u32 %v2503, 16
      %v2713 = vrot.slane %v2711, 4
      %v2714 = vor.u32 %v2713, %v2709
      %v2715 = vrot.slane %v2714, 4
      %v2717 = vshll.u32 %v2504, 16
      %v2719 = vrot.slane %v2717, 5
      %v2720 = vsel %vm914, %v2715, %v2719
      %v2722 = vshrl.u32 %v2505, 16
      %v2724 = vrot.slane %v2722, 4
      %v2725 = vshll.u32 %v2505, 16
      %v2727 = vrot.slane %v2725, 5
      %v2728 = vor.u32 %v2724, %v2727
      %v2729 = vrot.slane %v2728, 4
      %v2731 = vshll.u32 %v2506, 16
      %v2733 = vrot.slane %v2731, 5
      %v2734 = vsel %vm914, %v2729, %v2733
      %v2735 = vshrl.u32 %v2506, 16
      %v2737 = vrot.slane %v2735, 4
      %v2738 = vor.u32 %v2737, %v2733
      %v2739 = vrot.slane %v2738, 4
      %v2741 = vshll.u32 %v2507, 16
      %v2743 = vrot.slane %v2741, 5
      %v2744 = vsel %vm914, %v2739, %v2743
      %v2746 = vshrl.u32 %v2508, 16
      %v2748 = vrot.slane %v2746, 4
      %v2749 = vshll.u32 %v2508, 16
      %v2751 = vrot.slane %v2749, 5
      %v2752 = vor.u32 %v2748, %v2751
      %v2753 = vrot.slane %v2752, 4
      %v2755 = vshll.u32 %v2509, 16
      %v2757 = vrot.slane %v2755, 5
      %v2758 = vsel %vm914, %v2753, %v2757
      %v2759 = vshrl.u32 %v2509, 16
      %v2761 = vrot.slane %v2759, 4
      %v2762 = vor.u32 %v2761, %v2757
      %v2763 = vrot.slane %v2762, 4
      %v2765 = vshll.u32 %v2510, 16
      %v2767 = vrot.slane %v2765, 5
      %v2768 = vsel %vm914, %v2763, %v2767
      %v2770 = vshrl.u32 %v2511, 16
      %v2772 = vrot.slane %v2770, 4
      %v2773 = vshll.u32 %v2511, 16
      %v2775 = vrot.slane %v2773, 5
      %v2776 = vor.u32 %v2772, %v2775
      %v2777 = vrot.slane %v2776, 4
      %v2779 = vshll.u32 %v2512, 16
      %v2781 = vrot.slane %v2779, 5
      %v2782 = vsel %vm914, %v2777, %v2781
      %v2783 = vshrl.u32 %v2512, 16
      %v2785 = vrot.slane %v2783, 4
      %v2786 = vor.u32 %v2785, %v2781
      %v2787 = vrot.slane %v2786, 4
      %v2789 = vshll.u32 %v2513, 16
      %v2791 = vrot.slane %v2789, 5
      %v2792 = vsel %vm914, %v2787, %v2791
      %v2794 = vshrl.u32 %v2514, 16
      %v2796 = vrot.slane %v2794, 4
      %v2797 = vshll.u32 %v2514, 16
      %v2799 = vrot.slane %v2797, 5
      %v2800 = vor.u32 %v2796, %v2799
      %v2801 = vrot.slane %v2800, 4
      %v2803 = vshll.u32 %v2515, 16
      %v2805 = vrot.slane %v2803, 5
      %v2806 = vsel %vm914, %v2801, %v2805
      %v2807 = vshrl.u32 %v2515, 16
      %v2809 = vrot.slane %v2807, 4
      %v2810 = vor.u32 %v2809, %v2805
      %v2811 = vrot.slane %v2810, 4
      %v2813 = vshll.u32 %v2516, 16
      %v2815 = vrot.slane %v2813, 5
      %v2816 = vsel %vm914, %v2811, %v2815
      %v2818 = vshrl.u32 %v2517, 16
      %v2820 = vrot.slane %v2818, 4
      %v2821 = vshll.u32 %v2517, 16
      %v2823 = vrot.slane %v2821, 5
      %v2824 = vor.u32 %v2820, %v2823
      %v2825 = vrot.slane %v2824, 4
      %v2827 = vshll.u32 %v2518, 16
      %v2829 = vrot.slane %v2827, 5
      %v2830 = vsel %vm914, %v2825, %v2829
      %v2831 = vshrl.u32 %v2518, 16
      %v2833 = vrot.slane %v2831, 4
      %v2834 = vor.u32 %v2833, %v2829
      %v2835 = vrot.slane %v2834, 4
      %v2837 = vshll.u32 %v2519, 16
      %v2839 = vrot.slane %v2837, 5
      %v2840 = vsel %vm914, %v2835, %v2839
      %v2842 = vshrl.u32 %v2520, 16
      %v2844 = vrot.slane %v2842, 4
      %v2845 = vshll.u32 %v2520, 16
      %v2847 = vrot.slane %v2845, 5
      %v2848 = vor.u32 %v2844, %v2847
      %v2849 = vrot.slane %v2848, 4
      %v2851 = vshll.u32 %v2521, 16
      %v2853 = vrot.slane %v2851, 5
      %v2854 = vsel %vm914, %v2849, %v2853
      %v2855 = vshrl.u32 %v2521, 16
      %v2857 = vrot.slane %v2855, 4
      %v2858 = vor.u32 %v2857, %v2853
      %v2859 = vrot.slane %v2858, 4
      %v2861 = vshll.u32 %v2522, 16
      %v2863 = vrot.slane %v2861, 5
      %v2864 = vsel %vm914, %v2859, %v2863
      %v2866 = vshrl.u32 %v2523, 16
      %v2868 = vrot.slane %v2866, 4
      %v2869 = vshll.u32 %v2523, 16
      %v2871 = vrot.slane %v2869, 5
      %v2872 = vor.u32 %v2868, %v2871
      %v2873 = vrot.slane %v2872, 4
      %v2875 = vshll.u32 %v2524, 16
      %v2877 = vrot.slane %v2875, 5
      %v2878 = vsel %vm914, %v2873, %v2877
      %v2879 = vshrl.u32 %v2524, 16
      %v2881 = vrot.slane %v2879, 4
      %v2882 = vor.u32 %v2881, %v2877
      %v2883 = vrot.slane %v2882, 4
      %v2885 = vshll.u32 %v2525, 16
      %v2887 = vrot.slane %v2885, 5
      %v2888 = vsel %vm914, %v2883, %v2887
      %v2890 = vshrl.u32 %v2526, 16
      %v2892 = vrot.slane %v2890, 4
      %v2893 = vshll.u32 %v2526, 16
      %v2895 = vrot.slane %v2893, 5
      %v2896 = vor.u32 %v2892, %v2895
      %v2897 = vrot.slane %v2896, 4
      %v2899 = vshll.u32 %v2527, 16
      %v2901 = vrot.slane %v2899, 5
      %v2902 = vsel %vm914, %v2897, %v2901
      %v2903 = vshrl.u32 %v2527, 16
      %v2905 = vrot.slane %v2903, 4
      %v2906 = vor.u32 %v2905, %v2901
      %v2907 = vrot.slane %v2906, 4
      %v2909 = vshll.u32 %v2528, 16
      %v2911 = vrot.slane %v2909, 5
      %v2912 = vsel %vm914, %v2907, %v2911
      %s2913 = scalar_lea.vmem %s3, 256
      %v2914 = vld [vmem:[%s2913] sm:$0xf]
      %v2915 = vld [vmem:[%s2913 + $0x4] sm:$0xf]
      %v2916 = vld [vmem:[%s2913 + $0x8] sm:$0xf]
      %v2917 = vld [vmem:[%s2913 + $0xc] sm:$0xf]
      %v2918 = vld [vmem:[%s2913 + $0x10] sm:$0xf]
      %v2919 = vld [vmem:[%s2913 + $0x14] sm:$0xf]
      %v2920 = vld [vmem:[%s2913 + $0x18] sm:$0xf]
      %v2921 = vld [vmem:[%s2913 + $0x1c] sm:$0xf]
      %v2922 = vld [vmem:[%s2913 + $0x20] sm:$0xf]
      %v2923 = vld [vmem:[%s2913 + $0x24] sm:$0xf]
      %v2924 = vld [vmem:[%s2913 + $0x28] sm:$0xf]
      %v2925 = vld [vmem:[%s2913 + $0x2c] sm:$0xf]
      %v2926 = vld [vmem:[%s2913 + $0x30] sm:$0xf]
      %v2927 = vld [vmem:[%s2913 + $0x34] sm:$0xf]
      %v2928 = vld [vmem:[%s2913 + $0x38] sm:$0xf]
      %v2929 = vld [vmem:[%s2913 + $0x3c] sm:$0xf]
      %v2930 = vunpack.c.l.b16 %v2542
      %v2931 = vunpack.c.l.b16 %v2552
      %v2932 = vunpack.c.l.b16 %v2566
      %v2933 = vunpack.c.l.b16 %v2576
      %v2934 = vunpack.c.l.b16 %v2590
      %v2935 = vunpack.c.l.b16 %v2600
      %v2936 = vunpack.c.l.b16 %v2614
      %v2937 = vunpack.c.l.b16 %v2624
      %v2938 = vunpack.c.l.b16 %v2638
      %v2939 = vunpack.c.l.b16 %v2648
      %v2940 = vunpack.c.l.b16 %v2662
      %v2941 = vunpack.c.l.b16 %v2672
      %v2942 = vunpack.c.l.b16 %v2686
      %v2943 = vunpack.c.l.b16 %v2696
      %v2944 = vunpack.c.l.b16 %v2710
      %v2945 = vunpack.c.l.b16 %v2720
      %v2946 = vunpack.c.l.b16 %v2734
      %v2947 = vunpack.c.l.b16 %v2744
      %v2948 = vunpack.c.l.b16 %v2758
      %v2949 = vunpack.c.l.b16 %v2768
      %v2950 = vunpack.c.l.b16 %v2782
      %v2951 = vunpack.c.l.b16 %v2792
      %v2952 = vunpack.c.l.b16 %v2806
      %v2953 = vunpack.c.l.b16 %v2816
      %v2954 = vunpack.c.l.b16 %v2830
      %v2955 = vunpack.c.l.b16 %v2840
      %v2956 = vunpack.c.l.b16 %v2854
      %v2957 = vunpack.c.l.b16 %v2864
      %v2958 = vunpack.c.l.b16 %v2878
      %v2959 = vunpack.c.l.b16 %v2888
      %v2960 = vunpack.c.l.b16 %v2902
      %v2961 = vunpack.c.l.b16 %v2912
      %v2962 = vpack.c.b16 %v2931, %v2930
      %v2963 = vpack.c.b16 %v2933, %v2932
      %v2964 = vpack.c.b16 %v2935, %v2934
      %v2965 = vpack.c.b16 %v2937, %v2936
      %v2966 = vpack.c.b16 %v2939, %v2938
      %v2967 = vpack.c.b16 %v2941, %v2940
      %v2968 = vpack.c.b16 %v2943, %v2942
      %v2969 = vpack.c.b16 %v2945, %v2944
      %v2970 = vpack.c.b16 %v2947, %v2946
      %v2971 = vpack.c.b16 %v2949, %v2948
      %v2972 = vpack.c.b16 %v2951, %v2950
      %v2973 = vpack.c.b16 %v2953, %v2952
      %v2974 = vpack.c.b16 %v2955, %v2954
      %v2975 = vpack.c.b16 %v2957, %v2956
      %v2976 = vpack.c.b16 %v2959, %v2958
      %v2977 = vpack.c.b16 %v2961, %v2960
      %v3010 = vunpack.c.l.b16 %v2914
      %v3011 = vunpack.c.l.b16 %v2915
      %v3012 = vunpack.c.l.b16 %v2916
      %v3013 = vunpack.c.l.b16 %v2917
      %v3014 = vunpack.c.l.b16 %v2918
      %v3015 = vunpack.c.l.b16 %v2919
      %v3016 = vunpack.c.l.b16 %v2920
      %v3017 = vunpack.c.l.b16 %v2921
      %v3018 = vunpack.c.l.b16 %v2922
      %v3019 = vunpack.c.l.b16 %v2923
      %v3020 = vunpack.c.l.b16 %v2924
      %v3021 = vunpack.c.l.b16 %v2925
      %v3022 = vunpack.c.l.b16 %v2926
      %v3023 = vunpack.c.l.b16 %v2927
      %v3024 = vunpack.c.l.b16 %v2928
      %v3025 = vunpack.c.l.b16 %v2929
      %v3026 = vpack.c.b16 %v3011, %v3010
      %v3027 = vpack.c.b16 %v3013, %v3012
      %v3028 = vpack.c.b16 %v3015, %v3014
      %v3029 = vpack.c.b16 %v3017, %v3016
      %v3030 = vpack.c.b16 %v3019, %v3018
      %v3031 = vpack.c.b16 %v3021, %v3020
      %v3032 = vpack.c.b16 %v3023, %v3022
      %v3033 = vpack.c.b16 %v3025, %v3024
      %3042 = vmatpush.bf16.msra.mxu0 %v3033
      %3043 = vmatpush.bf16.msra.mxu0 %v3032
      %3044 = vmatpush.bf16.msra.mxu0 %v3031
      %3045 = vmatpush.bf16.msra.mxu0 %v3030
      %3046 = vmatpush.bf16.msra.mxu0 %v3029
      %3047 = vmatpush.bf16.msra.mxu0 %v3028
      %3048 = vmatpush.bf16.msra.mxu0 %v3027
      %3049 = vmatpush.bf16.msra.mxu0 %v3026
      %3050 = vmatmul.bf16.gmra.mxu0 %v2962
      %v3051 = vpop.f32.mrf.mxu0
      %v3052 = vadd.f32 0.0, %v3051
      %v3053 = vpop.f32.mrf.mxu0
      %v3054 = vadd.f32 0.0, %v3053
      %3055 = vmatmul.bf16.gmra.mxu0 %v2963
      %v3056 = vpop.f32.mrf.mxu0
      %v3057 = vadd.f32 0.0, %v3056
      %v3058 = vpop.f32.mrf.mxu0
      %v3059 = vadd.f32 0.0, %v3058
      %3060 = vmatmul.bf16.gmra.mxu0 %v2964
      %v3061 = vpop.f32.mrf.mxu0
      %v3062 = vadd.f32 0.0, %v3061
      %v3063 = vpop.f32.mrf.mxu0
      %v3064 = vadd.f32 0.0, %v3063
      %3065 = vmatmul.bf16.gmra.mxu0 %v2965
      %v3066 = vpop.f32.mrf.mxu0
      %v3067 = vadd.f32 0.0, %v3066
      %v3068 = vpop.f32.mrf.mxu0
      %v3069 = vadd.f32 0.0, %v3068
      %3070 = vmatmul.bf16.gmra.mxu0 %v2966
      %v3071 = vpop.f32.mrf.mxu0
      %v3072 = vadd.f32 0.0, %v3071
      %v3073 = vpop.f32.mrf.mxu0
      %v3074 = vadd.f32 0.0, %v3073
      %3075 = vmatmul.bf16.gmra.mxu0 %v2967
      %v3076 = vpop.f32.mrf.mxu0
      %v3077 = vadd.f32 0.0, %v3076
      %v3078 = vpop.f32.mrf.mxu0
      %v3079 = vadd.f32 0.0, %v3078
      %3080 = vmatmul.bf16.gmra.mxu0 %v2968
      %v3081 = vpop.f32.mrf.mxu0
      %v3082 = vadd.f32 0.0, %v3081
      %v3083 = vpop.f32.mrf.mxu0
      %v3084 = vadd.f32 0.0, %v3083
      %3085 = vmatmul.bf16.gmra.mxu0 %v2969
      %v3086 = vpop.f32.mrf.mxu0
      %v3087 = vadd.f32 0.0, %v3086
      %v3088 = vpop.f32.mrf.mxu0
      %v3089 = vadd.f32 0.0, %v3088
      %3090 = vmatmul.bf16.gmra.mxu0 %v2970
      %v3091 = vpop.f32.mrf.mxu0
      %v3092 = vadd.f32 0.0, %v3091
      %v3093 = vpop.f32.mrf.mxu0
      %v3094 = vadd.f32 0.0, %v3093
      %3095 = vmatmul.bf16.gmra.mxu0 %v2971
      %v3096 = vpop.f32.mrf.mxu0
      %v3097 = vadd.f32 0.0, %v3096
      %v3098 = vpop.f32.mrf.mxu0
      %v3099 = vadd.f32 0.0, %v3098
      %3100 = vmatmul.bf16.gmra.mxu0 %v2972
      %v3101 = vpop.f32.mrf.mxu0
      %v3102 = vadd.f32 0.0, %v3101
      %v3103 = vpop.f32.mrf.mxu0
      %v3104 = vadd.f32 0.0, %v3103
      %3105 = vmatmul.bf16.gmra.mxu0 %v2973
      %v3106 = vpop.f32.mrf.mxu0
      %v3107 = vadd.f32 0.0, %v3106
      %v3108 = vpop.f32.mrf.mxu0
      %v3109 = vadd.f32 0.0, %v3108
      %3110 = vmatmul.bf16.gmra.mxu0 %v2974
      %v3111 = vpop.f32.mrf.mxu0
      %v3112 = vadd.f32 0.0, %v3111
      %v3113 = vpop.f32.mrf.mxu0
      %v3114 = vadd.f32 0.0, %v3113
      %3115 = vmatmul.bf16.gmra.mxu0 %v2975
      %v3116 = vpop.f32.mrf.mxu0
      %v3117 = vadd.f32 0.0, %v3116
      %v3118 = vpop.f32.mrf.mxu0
      %v3119 = vadd.f32 0.0, %v3118
      %3120 = vmatmul.bf16.gmra.mxu0 %v2976
      %v3121 = vpop.f32.mrf.mxu0
      %v3122 = vadd.f32 0.0, %v3121
      %v3123 = vpop.f32.mrf.mxu0
      %v3124 = vadd.f32 0.0, %v3123
      %3125 = vmatmul.bf16.gmra.mxu0 %v2977
      %v3126 = vpop.f32.mrf.mxu0
      %v3127 = vadd.f32 0.0, %v3126
      %v3128 = vpop.f32.mrf.mxu0
      %v3129 = vadd.f32 0.0, %v3128
      %3130 = vdwg.mxu0
      %v3131 = vadd.f32 %v2449, %v3052
      %v3132 = vadd.f32 %v2450, %v3054
      %v3133 = vadd.f32 %v2451, %v3057
      %v3134 = vadd.f32 %v2452, %v3059
      %v3135 = vadd.f32 %v2453, %v3062
      %v3136 = vadd.f32 %v2454, %v3064
      %v3137 = vadd.f32 %v2455, %v3067
      %v3138 = vadd.f32 %v2456, %v3069
      %v3139 = vadd.f32 %v2457, %v3072
      %v3140 = vadd.f32 %v2458, %v3074
      %v3141 = vadd.f32 %v2459, %v3077
      %v3142 = vadd.f32 %v2460, %v3079
      %v3143 = vadd.f32 %v2461, %v3082
      %v3144 = vadd.f32 %v2462, %v3084
      %v3145 = vadd.f32 %v2463, %v3087
      %v3146 = vadd.f32 %v2464, %v3089
      %v3147 = vadd.f32 %v2465, %v3092
      %v3148 = vadd.f32 %v2466, %v3094
      %v3149 = vadd.f32 %v2467, %v3097
      %v3150 = vadd.f32 %v2468, %v3099
      %v3151 = vadd.f32 %v2469, %v3102
      %v3152 = vadd.f32 %v2470, %v3104
      %v3153 = vadd.f32 %v2471, %v3107
      %v3154 = vadd.f32 %v2472, %v3109
      %v3155 = vadd.f32 %v2473, %v3112
      %v3156 = vadd.f32 %v2474, %v3114
      %v3157 = vadd.f32 %v2475, %v3117
      %v3158 = vadd.f32 %v2476, %v3119
      %v3159 = vadd.f32 %v2477, %v3122
      %v3160 = vadd.f32 %v2478, %v3124
      %v3161 = vadd.f32 %v2479, %v3127
      %v3162 = vadd.f32 %v2480, %v3129
      %v3163 = vld [vmem:[%s2166] sm:$0xe]
      %v3164 = vld [vmem:[%s2166 + $0xc] sm:$0xe]
      %v3165 = vld [vmem:[%s2166 + $0x18] sm:$0xe]
      %v3166 = vld [vmem:[%s2166 + $0x24] sm:$0xe]
      %v3167 = vld [vmem:[%s2166 + $0x30] sm:$0xe]
      %v3168 = vld [vmem:[%s2166 + $0x3c] sm:$0xe]
      %v3169 = vld [vmem:[%s2166 + $0x48] sm:$0xe]
      %v3170 = vld [vmem:[%s2166 + $0x54] sm:$0xe]
      %v3171 = vld [vmem:[%s2166 + $0x60] sm:$0xe]
      %v3172 = vld [vmem:[%s2166 + $0x6c] sm:$0xe]
      %v3173 = vld [vmem:[%s2166 + $0x78] sm:$0xe]
      %v3174 = vld [vmem:[%s2166 + $0x84] sm:$0xe]
      %v3175 = vld [vmem:[%s2166 + $0x90] sm:$0xe]
      %v3176 = vld [vmem:[%s2166 + $0x9c] sm:$0xe]
      %v3177 = vld [vmem:[%s2166 + $0xa8] sm:$0xe]
      %v3178 = vld [vmem:[%s2166 + $0xb4] sm:$0xe]
      %v3227 = vrot.slane %v3163, 5
      %v3228 = vrot.slane %v3227, 4
      %v3229 = vrot.slane %v2482, 5
      %v3230 = vsel %vm1800, %v3228, %v3229
      %v3231 = vrot.slane %v3229, 4
      %v3232 = vrot.slane %v2483, 5
      %v3233 = vsel %vm1800, %v3231, %v3232
      %v3234 = vrot.slane %v3164, 5
      %v3235 = vrot.slane %v3234, 4
      %v3236 = vrot.slane %v2485, 5
      %v3237 = vsel %vm1800, %v3235, %v3236
      %v3238 = vrot.slane %v3236, 4
      %v3239 = vrot.slane %v2486, 5
      %v3240 = vsel %vm1800, %v3238, %v3239
      %v3241 = vrot.slane %v3165, 5
      %v3242 = vrot.slane %v3241, 4
      %v3243 = vrot.slane %v2488, 5
      %v3244 = vsel %vm1800, %v3242, %v3243
      %v3245 = vrot.slane %v3243, 4
      %v3246 = vrot.slane %v2489, 5
      %v3247 = vsel %vm1800, %v3245, %v3246
      %v3248 = vrot.slane %v3166, 5
      %v3249 = vrot.slane %v3248, 4
      %v3250 = vrot.slane %v2491, 5
      %v3251 = vsel %vm1800, %v3249, %v3250
      %v3252 = vrot.slane %v3250, 4
      %v3253 = vrot.slane %v2492, 5
      %v3254 = vsel %vm1800, %v3252, %v3253
      %v3255 = vrot.slane %v3167, 5
      %v3256 = vrot.slane %v3255, 4
      %v3257 = vrot.slane %v2494, 5
      %v3258 = vsel %vm1800, %v3256, %v3257
      %v3259 = vrot.slane %v3257, 4
      %v3260 = vrot.slane %v2495, 5
      %v3261 = vsel %vm1800, %v3259, %v3260
      %v3262 = vrot.slane %v3168, 5
      %v3263 = vrot.slane %v3262, 4
      %v3264 = vrot.slane %v2497, 5
      %v3265 = vsel %vm1800, %v3263, %v3264
      %v3266 = vrot.slane %v3264, 4
      %v3267 = vrot.slane %v2498, 5
      %v3268 = vsel %vm1800, %v3266, %v3267
      %v3269 = vrot.slane %v3169, 5
      %v3270 = vrot.slane %v3269, 4
      %v3271 = vrot.slane %v2500, 5
      %v3272 = vsel %vm1800, %v3270, %v3271
      %v3273 = vrot.slane %v3271, 4
      %v3274 = vrot.slane %v2501, 5
      %v3275 = vsel %vm1800, %v3273, %v3274
      %v3276 = vrot.slane %v3170, 5
      %v3277 = vrot.slane %v3276, 4
      %v3278 = vrot.slane %v2503, 5
      %v3279 = vsel %vm1800, %v3277, %v3278
      %v3280 = vrot.slane %v3278, 4
      %v3281 = vrot.slane %v2504, 5
      %v3282 = vsel %vm1800, %v3280, %v3281
      %v3283 = vrot.slane %v3171, 5
      %v3284 = vrot.slane %v3283, 4
      %v3285 = vrot.slane %v2506, 5
      %v3286 = vsel %vm1800, %v3284, %v3285
      %v3287 = vrot.slane %v3285, 4
      %v3288 = vrot.slane %v2507, 5
      %v3289 = vsel %vm1800, %v3287, %v3288
      %v3290 = vrot.slane %v3172, 5
      %v3291 = vrot.slane %v3290, 4
      %v3292 = vrot.slane %v2509, 5
      %v3293 = vsel %vm1800, %v3291, %v3292
      %v3294 = vrot.slane %v3292, 4
      %v3295 = vrot.slane %v2510, 5
      %v3296 = vsel %vm1800, %v3294, %v3295
      %v3297 = vrot.slane %v3173, 5
      %v3298 = vrot.slane %v3297, 4
      %v3299 = vrot.slane %v2512, 5
      %v3300 = vsel %vm1800, %v3298, %v3299
      %v3301 = vrot.slane %v3299, 4
      %v3302 = vrot.slane %v2513, 5
      %v3303 = vsel %vm1800, %v3301, %v3302
      %v3304 = vrot.slane %v3174, 5
      %v3305 = vrot.slane %v3304, 4
      %v3306 = vrot.slane %v2515, 5
      %v3307 = vsel %vm1800, %v3305, %v3306
      %v3308 = vrot.slane %v3306, 4
      %v3309 = vrot.slane %v2516, 5
      %v3310 = vsel %vm1800, %v3308, %v3309
      %v3311 = vrot.slane %v3175, 5
      %v3312 = vrot.slane %v3311, 4
      %v3313 = vrot.slane %v2518, 5
      %v3314 = vsel %vm1800, %v3312, %v3313
      %v3315 = vrot.slane %v3313, 4
      %v3316 = vrot.slane %v2519, 5
      %v3317 = vsel %vm1800, %v3315, %v3316
      %v3318 = vrot.slane %v3176, 5
      %v3319 = vrot.slane %v3318, 4
      %v3320 = vrot.slane %v2521, 5
      %v3321 = vsel %vm1800, %v3319, %v3320
      %v3322 = vrot.slane %v3320, 4
      %v3323 = vrot.slane %v2522, 5
      %v3324 = vsel %vm1800, %v3322, %v3323
      %v3325 = vrot.slane %v3177, 5
      %v3326 = vrot.slane %v3325, 4
      %v3327 = vrot.slane %v2524, 5
      %v3328 = vsel %vm1800, %v3326, %v3327
      %v3329 = vrot.slane %v3327, 4
      %v3330 = vrot.slane %v2525, 5
      %v3331 = vsel %vm1800, %v3329, %v3330
      %v3332 = vrot.slane %v3178, 5
      %v3333 = vrot.slane %v3332, 4
      %v3334 = vrot.slane %v2527, 5
      %v3335 = vsel %vm1800, %v3333, %v3334
      %v3336 = vrot.slane %v3334, 4
      %v3337 = vrot.slane %v2528, 5
      %v3338 = vsel %vm1800, %v3336, %v3337
      %s3339 = scalar_lea.vmem %s3, 320
      %v3340 = vld [vmem:[%s3339] sm:$0xf]
      %v3341 = vld [vmem:[%s3339 + $0x4] sm:$0xf]
      %v3342 = vld [vmem:[%s3339 + $0x8] sm:$0xf]
      %v3343 = vld [vmem:[%s3339 + $0xc] sm:$0xf]
      %v3344 = vld [vmem:[%s3339 + $0x10] sm:$0xf]
      %v3345 = vld [vmem:[%s3339 + $0x14] sm:$0xf]
      %v3346 = vld [vmem:[%s3339 + $0x18] sm:$0xf]
      %v3347 = vld [vmem:[%s3339 + $0x1c] sm:$0xf]
      %v3348 = vld [vmem:[%s3339 + $0x20] sm:$0xf]
      %v3349 = vld [vmem:[%s3339 + $0x24] sm:$0xf]
      %v3350 = vld [vmem:[%s3339 + $0x28] sm:$0xf]
      %v3351 = vld [vmem:[%s3339 + $0x2c] sm:$0xf]
      %v3352 = vld [vmem:[%s3339 + $0x30] sm:$0xf]
      %v3353 = vld [vmem:[%s3339 + $0x34] sm:$0xf]
      %v3354 = vld [vmem:[%s3339 + $0x38] sm:$0xf]
      %v3355 = vld [vmem:[%s3339 + $0x3c] sm:$0xf]
      %v3356 = vunpack.c.l.b16 %v3230
      %v3357 = vunpack.c.l.b16 %v3233
      %v3358 = vunpack.c.l.b16 %v3237
      %v3359 = vunpack.c.l.b16 %v3240
      %v3360 = vunpack.c.l.b16 %v3244
      %v3361 = vunpack.c.l.b16 %v3247
      %v3362 = vunpack.c.l.b16 %v3251
      %v3363 = vunpack.c.l.b16 %v3254
      %v3364 = vunpack.c.l.b16 %v3258
      %v3365 = vunpack.c.l.b16 %v3261
      %v3366 = vunpack.c.l.b16 %v3265
      %v3367 = vunpack.c.l.b16 %v3268
      %v3368 = vunpack.c.l.b16 %v3272
      %v3369 = vunpack.c.l.b16 %v3275
      %v3370 = vunpack.c.l.b16 %v3279
      %v3371 = vunpack.c.l.b16 %v3282
      %v3372 = vunpack.c.l.b16 %v3286
      %v3373 = vunpack.c.l.b16 %v3289
      %v3374 = vunpack.c.l.b16 %v3293
      %v3375 = vunpack.c.l.b16 %v3296
      %v3376 = vunpack.c.l.b16 %v3300
      %v3377 = vunpack.c.l.b16 %v3303
      %v3378 = vunpack.c.l.b16 %v3307
      %v3379 = vunpack.c.l.b16 %v3310
      %v3380 = vunpack.c.l.b16 %v3314
      %v3381 = vunpack.c.l.b16 %v3317
      %v3382 = vunpack.c.l.b16 %v3321
      %v3383 = vunpack.c.l.b16 %v3324
      %v3384 = vunpack.c.l.b16 %v3328
      %v3385 = vunpack.c.l.b16 %v3331
      %v3386 = vunpack.c.l.b16 %v3335
      %v3387 = vunpack.c.l.b16 %v3338
      %v3388 = vpack.c.b16 %v3357, %v3356
      %v3389 = vpack.c.b16 %v3359, %v3358
      %v3390 = vpack.c.b16 %v3361, %v3360
      %v3391 = vpack.c.b16 %v3363, %v3362
      %v3392 = vpack.c.b16 %v3365, %v3364
      %v3393 = vpack.c.b16 %v3367, %v3366
      %v3394 = vpack.c.b16 %v3369, %v3368
      %v3395 = vpack.c.b16 %v3371, %v3370
      %v3396 = vpack.c.b16 %v3373, %v3372
      %v3397 = vpack.c.b16 %v3375, %v3374
      %v3398 = vpack.c.b16 %v3377, %v3376
      %v3399 = vpack.c.b16 %v3379, %v3378
      %v3400 = vpack.c.b16 %v3381, %v3380
      %v3401 = vpack.c.b16 %v3383, %v3382
      %v3402 = vpack.c.b16 %v3385, %v3384
      %v3403 = vpack.c.b16 %v3387, %v3386
      %v3436 = vunpack.c.l.b16 %v3340
      %v3437 = vunpack.c.l.b16 %v3341
      %v3438 = vunpack.c.l.b16 %v3342
      %v3439 = vunpack.c.l.b16 %v3343
      %v3440 = vunpack.c.l.b16 %v3344
      %v3441 = vunpack.c.l.b16 %v3345
      %v3442 = vunpack.c.l.b16 %v3346
      %v3443 = vunpack.c.l.b16 %v3347
      %v3444 = vunpack.c.l.b16 %v3348
      %v3445 = vunpack.c.l.b16 %v3349
      %v3446 = vunpack.c.l.b16 %v3350
      %v3447 = vunpack.c.l.b16 %v3351
      %v3448 = vunpack.c.l.b16 %v3352
      %v3449 = vunpack.c.l.b16 %v3353
      %v3450 = vunpack.c.l.b16 %v3354
      %v3451 = vunpack.c.l.b16 %v3355
      %v3452 = vpack.c.b16 %v3437, %v3436
      %v3453 = vpack.c.b16 %v3439, %v3438
      %v3454 = vpack.c.b16 %v3441, %v3440
      %v3455 = vpack.c.b16 %v3443, %v3442
      %v3456 = vpack.c.b16 %v3445, %v3444
      %v3457 = vpack.c.b16 %v3447, %v3446
      %v3458 = vpack.c.b16 %v3449, %v3448
      %v3459 = vpack.c.b16 %v3451, %v3450
      %3468 = vmatpush.bf16.msra.mxu0 %v3459
      %3469 = vmatpush.bf16.msra.mxu0 %v3458
      %3470 = vmatpush.bf16.msra.mxu0 %v3457
      %3471 = vmatpush.bf16.msra.mxu0 %v3456
      %3472 = vmatpush.bf16.msra.mxu0 %v3455
      %3473 = vmatpush.bf16.msra.mxu0 %v3454
      %3474 = vmatpush.bf16.msra.mxu0 %v3453
      %3475 = vmatpush.bf16.msra.mxu0 %v3452
      %3476 = vmatmul.bf16.gmra.mxu0 %v3388
      %v3477 = vpop.f32.mrf.mxu0
      %v3478 = vadd.f32 0.0, %v3477
      %v3479 = vpop.f32.mrf.mxu0
      %v3480 = vadd.f32 0.0, %v3479
      %3481 = vmatmul.bf16.gmra.mxu0 %v3389
      %v3482 = vpop.f32.mrf.mxu0
      %v3483 = vadd.f32 0.0, %v3482
      %v3484 = vpop.f32.mrf.mxu0
      %v3485 = vadd.f32 0.0, %v3484
      %3486 = vmatmul.bf16.gmra.mxu0 %v3390
      %v3487 = vpop.f32.mrf.mxu0
      %v3488 = vadd.f32 0.0, %v3487
      %v3489 = vpop.f32.mrf.mxu0
      %v3490 = vadd.f32 0.0, %v3489
      %3491 = vmatmul.bf16.gmra.mxu0 %v3391
      %v3492 = vpop.f32.mrf.mxu0
      %v3493 = vadd.f32 0.0, %v3492
      %v3494 = vpop.f32.mrf.mxu0
      %v3495 = vadd.f32 0.0, %v3494
      %3496 = vmatmul.bf16.gmra.mxu0 %v3392
      %v3497 = vpop.f32.mrf.mxu0
      %v3498 = vadd.f32 0.0, %v3497
      %v3499 = vpop.f32.mrf.mxu0
      %v3500 = vadd.f32 0.0, %v3499
      %3501 = vmatmul.bf16.gmra.mxu0 %v3393
      %v3502 = vpop.f32.mrf.mxu0
      %v3503 = vadd.f32 0.0, %v3502
      %v3504 = vpop.f32.mrf.mxu0
      %v3505 = vadd.f32 0.0, %v3504
      %3506 = vmatmul.bf16.gmra.mxu0 %v3394
      %v3507 = vpop.f32.mrf.mxu0
      %v3508 = vadd.f32 0.0, %v3507
      %v3509 = vpop.f32.mrf.mxu0
      %v3510 = vadd.f32 0.0, %v3509
      %3511 = vmatmul.bf16.gmra.mxu0 %v3395
      %v3512 = vpop.f32.mrf.mxu0
      %v3513 = vadd.f32 0.0, %v3512
      %v3514 = vpop.f32.mrf.mxu0
      %v3515 = vadd.f32 0.0, %v3514
      %3516 = vmatmul.bf16.gmra.mxu0 %v3396
      %v3517 = vpop.f32.mrf.mxu0
      %v3518 = vadd.f32 0.0, %v3517
      %v3519 = vpop.f32.mrf.mxu0
      %v3520 = vadd.f32 0.0, %v3519
      %3521 = vmatmul.bf16.gmra.mxu0 %v3397
      %v3522 = vpop.f32.mrf.mxu0
      %v3523 = vadd.f32 0.0, %v3522
      %v3524 = vpop.f32.mrf.mxu0
      %v3525 = vadd.f32 0.0, %v3524
      %3526 = vmatmul.bf16.gmra.mxu0 %v3398
      %v3527 = vpop.f32.mrf.mxu0
      %v3528 = vadd.f32 0.0, %v3527
      %v3529 = vpop.f32.mrf.mxu0
      %v3530 = vadd.f32 0.0, %v3529
      %3531 = vmatmul.bf16.gmra.mxu0 %v3399
      %v3532 = vpop.f32.mrf.mxu0
      %v3533 = vadd.f32 0.0, %v3532
      %v3534 = vpop.f32.mrf.mxu0
      %v3535 = vadd.f32 0.0, %v3534
      %3536 = vmatmul.bf16.gmra.mxu0 %v3400
      %v3537 = vpop.f32.mrf.mxu0
      %v3538 = vadd.f32 0.0, %v3537
      %v3539 = vpop.f32.mrf.mxu0
      %v3540 = vadd.f32 0.0, %v3539
      %3541 = vmatmul.bf16.gmra.mxu0 %v3401
      %v3542 = vpop.f32.mrf.mxu0
      %v3543 = vadd.f32 0.0, %v3542
      %v3544 = vpop.f32.mrf.mxu0
      %v3545 = vadd.f32 0.0, %v3544
      %3546 = vmatmul.bf16.gmra.mxu0 %v3402
      %v3547 = vpop.f32.mrf.mxu0
      %v3548 = vadd.f32 0.0, %v3547
      %v3549 = vpop.f32.mrf.mxu0
      %v3550 = vadd.f32 0.0, %v3549
      %3551 = vmatmul.bf16.gmra.mxu0 %v3403
      %v3552 = vpop.f32.mrf.mxu0
      %v3553 = vadd.f32 0.0, %v3552
      %v3554 = vpop.f32.mrf.mxu0
      %v3555 = vadd.f32 0.0, %v3554
      %3556 = vdwg.mxu0
      %v3557 = vadd.f32 %v3131, %v3478
      %v3558 = vadd.f32 %v3132, %v3480
      %v3559 = vadd.f32 %v3133, %v3483
      %v3560 = vadd.f32 %v3134, %v3485
      %v3561 = vadd.f32 %v3135, %v3488
      %v3562 = vadd.f32 %v3136, %v3490
      %v3563 = vadd.f32 %v3137, %v3493
      %v3564 = vadd.f32 %v3138, %v3495
      %v3565 = vadd.f32 %v3139, %v3498
      %v3566 = vadd.f32 %v3140, %v3500
      %v3567 = vadd.f32 %v3141, %v3503
      %v3568 = vadd.f32 %v3142, %v3505
      %v3569 = vadd.f32 %v3143, %v3508
      %v3570 = vadd.f32 %v3144, %v3510
      %v3571 = vadd.f32 %v3145, %v3513
      %v3572 = vadd.f32 %v3146, %v3515
      %v3573 = vadd.f32 %v3147, %v3518
      %v3574 = vadd.f32 %v3148, %v3520
      %v3575 = vadd.f32 %v3149, %v3523
      %v3576 = vadd.f32 %v3150, %v3525
      %v3577 = vadd.f32 %v3151, %v3528
      %v3578 = vadd.f32 %v3152, %v3530
      %v3579 = vadd.f32 %v3153, %v3533
      %v3580 = vadd.f32 %v3154, %v3535
      %v3581 = vadd.f32 %v3155, %v3538
      %v3582 = vadd.f32 %v3156, %v3540
      %v3583 = vadd.f32 %v3157, %v3543
      %v3584 = vadd.f32 %v3158, %v3545
      %v3585 = vadd.f32 %v3159, %v3548
      %v3586 = vadd.f32 %v3160, %v3550
      %v3587 = vadd.f32 %v3161, %v3553
      %v3588 = vadd.f32 %v3162, %v3555
      %s3589 = sadd.s32 %s844, 2
      %s3590 = smul.u32 %s3589, 3
      %s3591 = smul.addr %s3590, 4
      %s3592 = scalar_lea.vmem [#allocation2], %s3591
      %v3593 = vld [vmem:[%s3592] sm:$0xf]
      %v3594 = vld [vmem:[%s3592 + $0x4] sm:$0xf]
      %v3595 = vld [vmem:[%s3592 + $0xc] sm:$0xf]
      %v3596 = vld [vmem:[%s3592 + $0x10] sm:$0xf]
      %v3597 = vld [vmem:[%s3592 + $0x18] sm:$0xf]
      %v3598 = vld [vmem:[%s3592 + $0x1c] sm:$0xf]
      %v3599 = vld [vmem:[%s3592 + $0x24] sm:$0xf]
      %v3600 = vld [vmem:[%s3592 + $0x28] sm:$0xf]
      %v3601 = vld [vmem:[%s3592 + $0x30] sm:$0xf]
      %v3602 = vld [vmem:[%s3592 + $0x34] sm:$0xf]
      %v3603 = vld [vmem:[%s3592 + $0x3c] sm:$0xf]
      %v3604 = vld [vmem:[%s3592 + $0x40] sm:$0xf]
      %v3605 = vld [vmem:[%s3592 + $0x48] sm:$0xf]
      %v3606 = vld [vmem:[%s3592 + $0x4c] sm:$0xf]
      %v3607 = vld [vmem:[%s3592 + $0x54] sm:$0xf]
      %v3608 = vld [vmem:[%s3592 + $0x58] sm:$0xf]
      %v3609 = vld [vmem:[%s3592 + $0x60] sm:$0xf]
      %v3610 = vld [vmem:[%s3592 + $0x64] sm:$0xf]
      %v3611 = vld [vmem:[%s3592 + $0x6c] sm:$0xf]
      %v3612 = vld [vmem:[%s3592 + $0x70] sm:$0xf]
      %v3613 = vld [vmem:[%s3592 + $0x78] sm:$0xf]
      %v3614 = vld [vmem:[%s3592 + $0x7c] sm:$0xf]
      %v3615 = vld [vmem:[%s3592 + $0x84] sm:$0xf]
      %v3616 = vld [vmem:[%s3592 + $0x88] sm:$0xf]
      %v3617 = vld [vmem:[%s3592 + $0x90] sm:$0xf]
      %v3618 = vld [vmem:[%s3592 + $0x94] sm:$0xf]
      %v3619 = vld [vmem:[%s3592 + $0x9c] sm:$0xf]
      %v3620 = vld [vmem:[%s3592 + $0xa0] sm:$0xf]
      %v3621 = vld [vmem:[%s3592 + $0xa8] sm:$0xf]
      %v3622 = vld [vmem:[%s3592 + $0xac] sm:$0xf]
      %v3623 = vld [vmem:[%s3592 + $0xb4] sm:$0xf]
      %v3624 = vld [vmem:[%s3592 + $0xb8] sm:$0xf]
      %s3625 = scalar_lea.vmem %s3, 384
      %v3626 = vld [vmem:[%s3625] sm:$0xf]
      %v3627 = vld [vmem:[%s3625 + $0x4] sm:$0xf]
      %v3628 = vld [vmem:[%s3625 + $0x8] sm:$0xf]
      %v3629 = vld [vmem:[%s3625 + $0xc] sm:$0xf]
      %v3630 = vld [vmem:[%s3625 + $0x10] sm:$0xf]
      %v3631 = vld [vmem:[%s3625 + $0x14] sm:$0xf]
      %v3632 = vld [vmem:[%s3625 + $0x18] sm:$0xf]
      %v3633 = vld [vmem:[%s3625 + $0x1c] sm:$0xf]
      %v3634 = vld [vmem:[%s3625 + $0x20] sm:$0xf]
      %v3635 = vld [vmem:[%s3625 + $0x24] sm:$0xf]
      %v3636 = vld [vmem:[%s3625 + $0x28] sm:$0xf]
      %v3637 = vld [vmem:[%s3625 + $0x2c] sm:$0xf]
      %v3638 = vld [vmem:[%s3625 + $0x30] sm:$0xf]
      %v3639 = vld [vmem:[%s3625 + $0x34] sm:$0xf]
      %v3640 = vld [vmem:[%s3625 + $0x38] sm:$0xf]
      %v3641 = vld [vmem:[%s3625 + $0x3c] sm:$0xf]
      %v3674 = vunpack.c.l.b16 %v3593
      %v3675 = vunpack.c.l.b16 %v3594
      %v3676 = vunpack.c.l.b16 %v3595
      %v3677 = vunpack.c.l.b16 %v3596
      %v3678 = vunpack.c.l.b16 %v3597
      %v3679 = vunpack.c.l.b16 %v3598
      %v3680 = vunpack.c.l.b16 %v3599
      %v3681 = vunpack.c.l.b16 %v3600
      %v3682 = vunpack.c.l.b16 %v3601
      %v3683 = vunpack.c.l.b16 %v3602
      %v3684 = vunpack.c.l.b16 %v3603
      %v3685 = vunpack.c.l.b16 %v3604
      %v3686 = vunpack.c.l.b16 %v3605
      %v3687 = vunpack.c.l.b16 %v3606
      %v3688 = vunpack.c.l.b16 %v3607
      %v3689 = vunpack.c.l.b16 %v3608
      %v3690 = vunpack.c.l.b16 %v3609
      %v3691 = vunpack.c.l.b16 %v3610
      %v3692 = vunpack.c.l.b16 %v3611
      %v3693 = vunpack.c.l.b16 %v3612
      %v3694 = vunpack.c.l.b16 %v3613
      %v3695 = vunpack.c.l.b16 %v3614
      %v3696 = vunpack.c.l.b16 %v3615
      %v3697 = vunpack.c.l.b16 %v3616
      %v3698 = vunpack.c.l.b16 %v3617
      %v3699 = vunpack.c.l.b16 %v3618
      %v3700 = vunpack.c.l.b16 %v3619
      %v3701 = vunpack.c.l.b16 %v3620
      %v3702 = vunpack.c.l.b16 %v3621
      %v3703 = vunpack.c.l.b16 %v3622
      %v3704 = vunpack.c.l.b16 %v3623
      %v3705 = vunpack.c.l.b16 %v3624
      %v3706 = vpack.c.b16 %v3675, %v3674
      %v3707 = vpack.c.b16 %v3677, %v3676
      %v3708 = vpack.c.b16 %v3679, %v3678
      %v3709 = vpack.c.b16 %v3681, %v3680
      %v3710 = vpack.c.b16 %v3683, %v3682
      %v3711 = vpack.c.b16 %v3685, %v3684
      %v3712 = vpack.c.b16 %v3687, %v3686
      %v3713 = vpack.c.b16 %v3689, %v3688
      %v3714 = vpack.c.b16 %v3691, %v3690
      %v3715 = vpack.c.b16 %v3693, %v3692
      %v3716 = vpack.c.b16 %v3695, %v3694
      %v3717 = vpack.c.b16 %v3697, %v3696
      %v3718 = vpack.c.b16 %v3699, %v3698
      %v3719 = vpack.c.b16 %v3701, %v3700
      %v3720 = vpack.c.b16 %v3703, %v3702
      %v3721 = vpack.c.b16 %v3705, %v3704
      %v3754 = vunpack.c.l.b16 %v3626
      %v3755 = vunpack.c.l.b16 %v3627
      %v3756 = vunpack.c.l.b16 %v3628
      %v3757 = vunpack.c.l.b16 %v3629
      %v3758 = vunpack.c.l.b16 %v3630
      %v3759 = vunpack.c.l.b16 %v3631
      %v3760 = vunpack.c.l.b16 %v3632
      %v3761 = vunpack.c.l.b16 %v3633
      %v3762 = vunpack.c.l.b16 %v3634
      %v3763 = vunpack.c.l.b16 %v3635
      %v3764 = vunpack.c.l.b16 %v3636
      %v3765 = vunpack.c.l.b16 %v3637
      %v3766 = vunpack.c.l.b16 %v3638
      %v3767 = vunpack.c.l.b16 %v3639
      %v3768 = vunpack.c.l.b16 %v3640
      %v3769 = vunpack.c.l.b16 %v3641
      %v3770 = vpack.c.b16 %v3755, %v3754
      %v3771 = vpack.c.b16 %v3757, %v3756
      %v3772 = vpack.c.b16 %v3759, %v3758
      %v3773 = vpack.c.b16 %v3761, %v3760
      %v3774 = vpack.c.b16 %v3763, %v3762
      %v3775 = vpack.c.b16 %v3765, %v3764
      %v3776 = vpack.c.b16 %v3767, %v3766
      %v3777 = vpack.c.b16 %v3769, %v3768
      %3786 = vmatpush.bf16.msra.mxu0 %v3777
      %3787 = vmatpush.bf16.msra.mxu0 %v3776
      %3788 = vmatpush.bf16.msra.mxu0 %v3775
      %3789 = vmatpush.bf16.msra.mxu0 %v3774
      %3790 = vmatpush.bf16.msra.mxu0 %v3773
      %3791 = vmatpush.bf16.msra.mxu0 %v3772
      %3792 = vmatpush.bf16.msra.mxu0 %v3771
      %3793 = vmatpush.bf16.msra.mxu0 %v3770
      %3794 = vmatmul.bf16.gmra.mxu0 %v3706
      %v3795 = vpop.f32.mrf.mxu0
      %v3796 = vadd.f32 0.0, %v3795
      %v3797 = vpop.f32.mrf.mxu0
      %v3798 = vadd.f32 0.0, %v3797
      %3799 = vmatmul.bf16.gmra.mxu0 %v3707
      %v3800 = vpop.f32.mrf.mxu0
      %v3801 = vadd.f32 0.0, %v3800
      %v3802 = vpop.f32.mrf.mxu0
      %v3803 = vadd.f32 0.0, %v3802
      %3804 = vmatmul.bf16.gmra.mxu0 %v3708
      %v3805 = vpop.f32.mrf.mxu0
      %v3806 = vadd.f32 0.0, %v3805
      %v3807 = vpop.f32.mrf.mxu0
      %v3808 = vadd.f32 0.0, %v3807
      %3809 = vmatmul.bf16.gmra.mxu0 %v3709
      %v3810 = vpop.f32.mrf.mxu0
      %v3811 = vadd.f32 0.0, %v3810
      %v3812 = vpop.f32.mrf.mxu0
      %v3813 = vadd.f32 0.0, %v3812
      %3814 = vmatmul.bf16.gmra.mxu0 %v3710
      %v3815 = vpop.f32.mrf.mxu0
      %v3816 = vadd.f32 0.0, %v3815
      %v3817 = vpop.f32.mrf.mxu0
      %v3818 = vadd.f32 0.0, %v3817
      %3819 = vmatmul.bf16.gmra.mxu0 %v3711
      %v3820 = vpop.f32.mrf.mxu0
      %v3821 = vadd.f32 0.0, %v3820
      %v3822 = vpop.f32.mrf.mxu0
      %v3823 = vadd.f32 0.0, %v3822
      %3824 = vmatmul.bf16.gmra.mxu0 %v3712
      %v3825 = vpop.f32.mrf.mxu0
      %v3826 = vadd.f32 0.0, %v3825
      %v3827 = vpop.f32.mrf.mxu0
      %v3828 = vadd.f32 0.0, %v3827
      %3829 = vmatmul.bf16.gmra.mxu0 %v3713
      %v3830 = vpop.f32.mrf.mxu0
      %v3831 = vadd.f32 0.0, %v3830
      %v3832 = vpop.f32.mrf.mxu0
      %v3833 = vadd.f32 0.0, %v3832
      %3834 = vmatmul.bf16.gmra.mxu0 %v3714
      %v3835 = vpop.f32.mrf.mxu0
      %v3836 = vadd.f32 0.0, %v3835
      %v3837 = vpop.f32.mrf.mxu0
      %v3838 = vadd.f32 0.0, %v3837
      %3839 = vmatmul.bf16.gmra.mxu0 %v3715
      %v3840 = vpop.f32.mrf.mxu0
      %v3841 = vadd.f32 0.0, %v3840
      %v3842 = vpop.f32.mrf.mxu0
      %v3843 = vadd.f32 0.0, %v3842
      %3844 = vmatmul.bf16.gmra.mxu0 %v3716
      %v3845 = vpop.f32.mrf.mxu0
      %v3846 = vadd.f32 0.0, %v3845
      %v3847 = vpop.f32.mrf.mxu0
      %v3848 = vadd.f32 0.0, %v3847
      %3849 = vmatmul.bf16.gmra.mxu0 %v3717
      %v3850 = vpop.f32.mrf.mxu0
      %v3851 = vadd.f32 0.0, %v3850
      %v3852 = vpop.f32.mrf.mxu0
      %v3853 = vadd.f32 0.0, %v3852
      %3854 = vmatmul.bf16.gmra.mxu0 %v3718
      %v3855 = vpop.f32.mrf.mxu0
      %v3856 = vadd.f32 0.0, %v3855
      %v3857 = vpop.f32.mrf.mxu0
      %v3858 = vadd.f32 0.0, %v3857
      %3859 = vmatmul.bf16.gmra.mxu0 %v3719
      %v3860 = vpop.f32.mrf.mxu0
      %v3861 = vadd.f32 0.0, %v3860
      %v3862 = vpop.f32.mrf.mxu0
      %v3863 = vadd.f32 0.0, %v3862
      %3864 = vmatmul.bf16.gmra.mxu0 %v3720
      %v3865 = vpop.f32.mrf.mxu0
      %v3866 = vadd.f32 0.0, %v3865
      %v3867 = vpop.f32.mrf.mxu0
      %v3868 = vadd.f32 0.0, %v3867
      %3869 = vmatmul.bf16.gmra.mxu0 %v3721
      %v3870 = vpop.f32.mrf.mxu0
      %v3871 = vadd.f32 0.0, %v3870
      %v3872 = vpop.f32.mrf.mxu0
      %v3873 = vadd.f32 0.0, %v3872
      %3874 = vdwg.mxu0
      %v3875 = vadd.f32 %v3557, %v3796
      %v3876 = vadd.f32 %v3558, %v3798
      %v3877 = vadd.f32 %v3559, %v3801
      %v3878 = vadd.f32 %v3560, %v3803
      %v3879 = vadd.f32 %v3561, %v3806
      %v3880 = vadd.f32 %v3562, %v3808
      %v3881 = vadd.f32 %v3563, %v3811
      %v3882 = vadd.f32 %v3564, %v3813
      %v3883 = vadd.f32 %v3565, %v3816
      %v3884 = vadd.f32 %v3566, %v3818
      %v3885 = vadd.f32 %v3567, %v3821
      %v3886 = vadd.f32 %v3568, %v3823
      %v3887 = vadd.f32 %v3569, %v3826
      %v3888 = vadd.f32 %v3570, %v3828
      %v3889 = vadd.f32 %v3571, %v3831
      %v3890 = vadd.f32 %v3572, %v3833
      %v3891 = vadd.f32 %v3573, %v3836
      %v3892 = vadd.f32 %v3574, %v3838
      %v3893 = vadd.f32 %v3575, %v3841
      %v3894 = vadd.f32 %v3576, %v3843
      %v3895 = vadd.f32 %v3577, %v3846
      %v3896 = vadd.f32 %v3578, %v3848
      %v3897 = vadd.f32 %v3579, %v3851
      %v3898 = vadd.f32 %v3580, %v3853
      %v3899 = vadd.f32 %v3581, %v3856
      %v3900 = vadd.f32 %v3582, %v3858
      %v3901 = vadd.f32 %v3583, %v3861
      %v3902 = vadd.f32 %v3584, %v3863
      %v3903 = vadd.f32 %v3585, %v3866
      %v3904 = vadd.f32 %v3586, %v3868
      %v3905 = vadd.f32 %v3587, %v3871
      %v3906 = vadd.f32 %v3588, %v3873
      %v3907 = vld [vmem:[%s3592] sm:$0xf]
      %v3908 = vld [vmem:[%s3592 + $0x4] sm:$0xf]
      %v3909 = vld [vmem:[%s3592 + $0x8] sm:$0x1]
      %v3910 = vld [vmem:[%s3592 + $0xc] sm:$0xf]
      %v3911 = vld [vmem:[%s3592 + $0x10] sm:$0xf]
      %v3912 = vld [vmem:[%s3592 + $0x14] sm:$0x1]
      %v3913 = vld [vmem:[%s3592 + $0x18] sm:$0xf]
      %v3914 = vld [vmem:[%s3592 + $0x1c] sm:$0xf]
      %v3915 = vld [vmem:[%s3592 + $0x20] sm:$0x1]
      %v3916 = vld [vmem:[%s3592 + $0x24] sm:$0xf]
      %v3917 = vld [vmem:[%s3592 + $0x28] sm:$0xf]
      %v3918 = vld [vmem:[%s3592 + $0x2c] sm:$0x1]
      %v3919 = vld [vmem:[%s3592 + $0x30] sm:$0xf]
      %v3920 = vld [vmem:[%s3592 + $0x34] sm:$0xf]
      %v3921 = vld [vmem:[%s3592 + $0x38] sm:$0x1]
      %v3922 = vld [vmem:[%s3592 + $0x3c] sm:$0xf]
      %v3923 = vld [vmem:[%s3592 + $0x40] sm:$0xf]
      %v3924 = vld [vmem:[%s3592 + $0x44] sm:$0x1]
      %v3925 = vld [vmem:[%s3592 + $0x48] sm:$0xf]
      %v3926 = vld [vmem:[%s3592 + $0x4c] sm:$0xf]
      %v3927 = vld [vmem:[%s3592 + $0x50] sm:$0x1]
      %v3928 = vld [vmem:[%s3592 + $0x54] sm:$0xf]
      %v3929 = vld [vmem:[%s3592 + $0x58] sm:$0xf]
      %v3930 = vld [vmem:[%s3592 + $0x5c] sm:$0x1]
      %v3931 = vld [vmem:[%s3592 + $0x60] sm:$0xf]
      %v3932 = vld [vmem:[%s3592 + $0x64] sm:$0xf]
      %v3933 = vld [vmem:[%s3592 + $0x68] sm:$0x1]
      %v3934 = vld [vmem:[%s3592 + $0x6c] sm:$0xf]
      %v3935 = vld [vmem:[%s3592 + $0x70] sm:$0xf]
      %v3936 = vld [vmem:[%s3592 + $0x74] sm:$0x1]
      %v3937 = vld [vmem:[%s3592 + $0x78] sm:$0xf]
      %v3938 = vld [vmem:[%s3592 + $0x7c] sm:$0xf]
      %v3939 = vld [vmem:[%s3592 + $0x80] sm:$0x1]
      %v3940 = vld [vmem:[%s3592 + $0x84] sm:$0xf]
      %v3941 = vld [vmem:[%s3592 + $0x88] sm:$0xf]
      %v3942 = vld [vmem:[%s3592 + $0x8c] sm:$0x1]
      %v3943 = vld [vmem:[%s3592 + $0x90] sm:$0xf]
      %v3944 = vld [vmem:[%s3592 + $0x94] sm:$0xf]
      %v3945 = vld [vmem:[%s3592 + $0x98] sm:$0x1]
      %v3946 = vld [vmem:[%s3592 + $0x9c] sm:$0xf]
      %v3947 = vld [vmem:[%s3592 + $0xa0] sm:$0xf]
      %v3948 = vld [vmem:[%s3592 + $0xa4] sm:$0x1]
      %v3949 = vld [vmem:[%s3592 + $0xa8] sm:$0xf]
      %v3950 = vld [vmem:[%s3592 + $0xac] sm:$0xf]
      %v3951 = vld [vmem:[%s3592 + $0xb0] sm:$0x1]
      %v3952 = vld [vmem:[%s3592 + $0xb4] sm:$0xf]
      %v3953 = vld [vmem:[%s3592 + $0xb8] sm:$0xf]
      %v3954 = vld [vmem:[%s3592 + $0xbc] sm:$0x1]
      %v3956 = vshrl.u32 %v3907, 16
      %v3958 = vrot.slane %v3956, 4
      %v3959 = vshll.u32 %v3907, 16
      %v3961 = vrot.slane %v3959, 5
      %v3962 = vor.u32 %v3958, %v3961
      %v3963 = vrot.slane %v3962, 4
      %v3965 = vshll.u32 %v3908, 16
      %v3967 = vrot.slane %v3965, 5
      %v3968 = vsel %vm914, %v3963, %v3967
      %v3969 = vshrl.u32 %v3908, 16
      %v3971 = vrot.slane %v3969, 4
      %v3972 = vor.u32 %v3971, %v3967
      %v3973 = vrot.slane %v3972, 4
      %v3975 = vshll.u32 %v3909, 16
      %v3977 = vrot.slane %v3975, 5
      %v3978 = vsel %vm914, %v3973, %v3977
      %v3980 = vshrl.u32 %v3910, 16
      %v3982 = vrot.slane %v3980, 4
      %v3983 = vshll.u32 %v3910, 16
      %v3985 = vrot.slane %v3983, 5
      %v3986 = vor.u32 %v3982, %v3985
      %v3987 = vrot.slane %v3986, 4
      %v3989 = vshll.u32 %v3911, 16
      %v3991 = vrot.slane %v3989, 5
      %v3992 = vsel %vm914, %v3987, %v3991
      %v3993 = vshrl.u32 %v3911, 16
      %v3995 = vrot.slane %v3993, 4
      %v3996 = vor.u32 %v3995, %v3991
      %v3997 = vrot.slane %v3996, 4
      %v3999 = vshll.u32 %v3912, 16
      %v4001 = vrot.slane %v3999, 5
      %v4002 = vsel %vm914, %v3997, %v4001
      %v4004 = vshrl.u32 %v3913, 16
      %v4006 = vrot.slane %v4004, 4
      %v4007 = vshll.u32 %v3913, 16
      %v4009 = vrot.slane %v4007, 5
      %v4010 = vor.u32 %v4006, %v4009
      %v4011 = vrot.slane %v4010, 4
      %v4013 = vshll.u32 %v3914, 16
      %v4015 = vrot.slane %v4013, 5
      %v4016 = vsel %vm914, %v4011, %v4015
      %v4017 = vshrl.u32 %v3914, 16
      %v4019 = vrot.slane %v4017, 4
      %v4020 = vor.u32 %v4019, %v4015
      %v4021 = vrot.slane %v4020, 4
      %v4023 = vshll.u32 %v3915, 16
      %v4025 = vrot.slane %v4023, 5
      %v4026 = vsel %vm914, %v4021, %v4025
      %v4028 = vshrl.u32 %v3916, 16
      %v4030 = vrot.slane %v4028, 4
      %v4031 = vshll.u32 %v3916, 16
      %v4033 = vrot.slane %v4031, 5
      %v4034 = vor.u32 %v4030, %v4033
      %v4035 = vrot.slane %v4034, 4
      %v4037 = vshll.u32 %v3917, 16
      %v4039 = vrot.slane %v4037, 5
      %v4040 = vsel %vm914, %v4035, %v4039
      %v4041 = vshrl.u32 %v3917, 16
      %v4043 = vrot.slane %v4041, 4
      %v4044 = vor.u32 %v4043, %v4039
      %v4045 = vrot.slane %v4044, 4
      %v4047 = vshll.u32 %v3918, 16
      %v4049 = vrot.slane %v4047, 5
      %v4050 = vsel %vm914, %v4045, %v4049
      %v4052 = vshrl.u32 %v3919, 16
      %v4054 = vrot.slane %v4052, 4
      %v4055 = vshll.u32 %v3919, 16
      %v4057 = vrot.slane %v4055, 5
      %v4058 = vor.u32 %v4054, %v4057
      %v4059 = vrot.slane %v4058, 4
      %v4061 = vshll.u32 %v3920, 16
      %v4063 = vrot.slane %v4061, 5
      %v4064 = vsel %vm914, %v4059, %v4063
      %v4065 = vshrl.u32 %v3920, 16
      %v4067 = vrot.slane %v4065, 4
      %v4068 = vor.u32 %v4067, %v4063
      %v4069 = vrot.slane %v4068, 4
      %v4071 = vshll.u32 %v3921, 16
      %v4073 = vrot.slane %v4071, 5
      %v4074 = vsel %vm914, %v4069, %v4073
      %v4076 = vshrl.u32 %v3922, 16
      %v4078 = vrot.slane %v4076, 4
      %v4079 = vshll.u32 %v3922, 16
      %v4081 = vrot.slane %v4079, 5
      %v4082 = vor.u32 %v4078, %v4081
      %v4083 = vrot.slane %v4082, 4
      %v4085 = vshll.u32 %v3923, 16
      %v4087 = vrot.slane %v4085, 5
      %v4088 = vsel %vm914, %v4083, %v4087
      %v4089 = vshrl.u32 %v3923, 16
      %v4091 = vrot.slane %v4089, 4
      %v4092 = vor.u32 %v4091, %v4087
      %v4093 = vrot.slane %v4092, 4
      %v4095 = vshll.u32 %v3924, 16
      %v4097 = vrot.slane %v4095, 5
      %v4098 = vsel %vm914, %v4093, %v4097
      %v4100 = vshrl.u32 %v3925, 16
      %v4102 = vrot.slane %v4100, 4
      %v4103 = vshll.u32 %v3925, 16
      %v4105 = vrot.slane %v4103, 5
      %v4106 = vor.u32 %v4102, %v4105
      %v4107 = vrot.slane %v4106, 4
      %v4109 = vshll.u32 %v3926, 16
      %v4111 = vrot.slane %v4109, 5
      %v4112 = vsel %vm914, %v4107, %v4111
      %v4113 = vshrl.u32 %v3926, 16
      %v4115 = vrot.slane %v4113, 4
      %v4116 = vor.u32 %v4115, %v4111
      %v4117 = vrot.slane %v4116, 4
      %v4119 = vshll.u32 %v3927, 16
      %v4121 = vrot.slane %v4119, 5
      %v4122 = vsel %vm914, %v4117, %v4121
      %v4124 = vshrl.u32 %v3928, 16
      %v4126 = vrot.slane %v4124, 4
      %v4127 = vshll.u32 %v3928, 16
      %v4129 = vrot.slane %v4127, 5
      %v4130 = vor.u32 %v4126, %v4129
      %v4131 = vrot.slane %v4130, 4
      %v4133 = vshll.u32 %v3929, 16
      %v4135 = vrot.slane %v4133, 5
      %v4136 = vsel %vm914, %v4131, %v4135
      %v4137 = vshrl.u32 %v3929, 16
      %v4139 = vrot.slane %v4137, 4
      %v4140 = vor.u32 %v4139, %v4135
      %v4141 = vrot.slane %v4140, 4
      %v4143 = vshll.u32 %v3930, 16
      %v4145 = vrot.slane %v4143, 5
      %v4146 = vsel %vm914, %v4141, %v4145
      %v4148 = vshrl.u32 %v3931, 16
      %v4150 = vrot.slane %v4148, 4
      %v4151 = vshll.u32 %v3931, 16
      %v4153 = vrot.slane %v4151, 5
      %v4154 = vor.u32 %v4150, %v4153
      %v4155 = vrot.slane %v4154, 4
      %v4157 = vshll.u32 %v3932, 16
      %v4159 = vrot.slane %v4157, 5
      %v4160 = vsel %vm914, %v4155, %v4159
      %v4161 = vshrl.u32 %v3932, 16
      %v4163 = vrot.slane %v4161, 4
      %v4164 = vor.u32 %v4163, %v4159
      %v4165 = vrot.slane %v4164, 4
      %v4167 = vshll.u32 %v3933, 16
      %v4169 = vrot.slane %v4167, 5
      %v4170 = vsel %vm914, %v4165, %v4169
      %v4172 = vshrl.u32 %v3934, 16
      %v4174 = vrot.slane %v4172, 4
      %v4175 = vshll.u32 %v3934, 16
      %v4177 = vrot.slane %v4175, 5
      %v4178 = vor.u32 %v4174, %v4177
      %v4179 = vrot.slane %v4178, 4
      %v4181 = vshll.u32 %v3935, 16
      %v4183 = vrot.slane %v4181, 5
      %v4184 = vsel %vm914, %v4179, %v4183
      %v4185 = vshrl.u32 %v3935, 16
      %v4187 = vrot.slane %v4185, 4
      %v4188 = vor.u32 %v4187, %v4183
      %v4189 = vrot.slane %v4188, 4
      %v4191 = vshll.u32 %v3936, 16
      %v4193 = vrot.slane %v4191, 5
      %v4194 = vsel %vm914, %v4189, %v4193
      %v4196 = vshrl.u32 %v3937, 16
      %v4198 = vrot.slane %v4196, 4
      %v4199 = vshll.u32 %v3937, 16
      %v4201 = vrot.slane %v4199, 5
      %v4202 = vor.u32 %v4198, %v4201
      %v4203 = vrot.slane %v4202, 4
      %v4205 = vshll.u32 %v3938, 16
      %v4207 = vrot.slane %v4205, 5
      %v4208 = vsel %vm914, %v4203, %v4207
      %v4209 = vshrl.u32 %v3938, 16
      %v4211 = vrot.slane %v4209, 4
      %v4212 = vor.u32 %v4211, %v4207
      %v4213 = vrot.slane %v4212, 4
      %v4215 = vshll.u32 %v3939, 16
      %v4217 = vrot.slane %v4215, 5
      %v4218 = vsel %vm914, %v4213, %v4217
      %v4220 = vshrl.u32 %v3940, 16
      %v4222 = vrot.slane %v4220, 4
      %v4223 = vshll.u32 %v3940, 16
      %v4225 = vrot.slane %v4223, 5
      %v4226 = vor.u32 %v4222, %v4225
      %v4227 = vrot.slane %v4226, 4
      %v4229 = vshll.u32 %v3941, 16
      %v4231 = vrot.slane %v4229, 5
      %v4232 = vsel %vm914, %v4227, %v4231
      %v4233 = vshrl.u32 %v3941, 16
      %v4235 = vrot.slane %v4233, 4
      %v4236 = vor.u32 %v4235, %v4231
      %v4237 = vrot.slane %v4236, 4
      %v4239 = vshll.u32 %v3942, 16
      %v4241 = vrot.slane %v4239, 5
      %v4242 = vsel %vm914, %v4237, %v4241
      %v4244 = vshrl.u32 %v3943, 16
      %v4246 = vrot.slane %v4244, 4
      %v4247 = vshll.u32 %v3943, 16
      %v4249 = vrot.slane %v4247, 5
      %v4250 = vor.u32 %v4246, %v4249
      %v4251 = vrot.slane %v4250, 4
      %v4253 = vshll.u32 %v3944, 16
      %v4255 = vrot.slane %v4253, 5
      %v4256 = vsel %vm914, %v4251, %v4255
      %v4257 = vshrl.u32 %v3944, 16
      %v4259 = vrot.slane %v4257, 4
      %v4260 = vor.u32 %v4259, %v4255
      %v4261 = vrot.slane %v4260, 4
      %v4263 = vshll.u32 %v3945, 16
      %v4265 = vrot.slane %v4263, 5
      %v4266 = vsel %vm914, %v4261, %v4265
      %v4268 = vshrl.u32 %v3946, 16
      %v4270 = vrot.slane %v4268, 4
      %v4271 = vshll.u32 %v3946, 16
      %v4273 = vrot.slane %v4271, 5
      %v4274 = vor.u32 %v4270, %v4273
      %v4275 = vrot.slane %v4274, 4
      %v4277 = vshll.u32 %v3947, 16
      %v4279 = vrot.slane %v4277, 5
      %v4280 = vsel %vm914, %v4275, %v4279
      %v4281 = vshrl.u32 %v3947, 16
      %v4283 = vrot.slane %v4281, 4
      %v4284 = vor.u32 %v4283, %v4279
      %v4285 = vrot.slane %v4284, 4
      %v4287 = vshll.u32 %v3948, 16
      %v4289 = vrot.slane %v4287, 5
      %v4290 = vsel %vm914, %v4285, %v4289
      %v4292 = vshrl.u32 %v3949, 16
      %v4294 = vrot.slane %v4292, 4
      %v4295 = vshll.u32 %v3949, 16
      %v4297 = vrot.slane %v4295, 5
      %v4298 = vor.u32 %v4294, %v4297
      %v4299 = vrot.slane %v4298, 4
      %v4301 = vshll.u32 %v3950, 16
      %v4303 = vrot.slane %v4301, 5
      %v4304 = vsel %vm914, %v4299, %v4303
      %v4305 = vshrl.u32 %v3950, 16
      %v4307 = vrot.slane %v4305, 4
      %v4308 = vor.u32 %v4307, %v4303
      %v4309 = vrot.slane %v4308, 4
      %v4311 = vshll.u32 %v3951, 16
      %v4313 = vrot.slane %v4311, 5
      %v4314 = vsel %vm914, %v4309, %v4313
      %v4316 = vshrl.u32 %v3952, 16
      %v4318 = vrot.slane %v4316, 4
      %v4319 = vshll.u32 %v3952, 16
      %v4321 = vrot.slane %v4319, 5
      %v4322 = vor.u32 %v4318, %v4321
      %v4323 = vrot.slane %v4322, 4
      %v4325 = vshll.u32 %v3953, 16
      %v4327 = vrot.slane %v4325, 5
      %v4328 = vsel %vm914, %v4323, %v4327
      %v4329 = vshrl.u32 %v3953, 16
      %v4331 = vrot.slane %v4329, 4
      %v4332 = vor.u32 %v4331, %v4327
      %v4333 = vrot.slane %v4332, 4
      %v4335 = vshll.u32 %v3954, 16
      %v4337 = vrot.slane %v4335, 5
      %v4338 = vsel %vm914, %v4333, %v4337
      %s4339 = scalar_lea.vmem %s3, 448
      %v4340 = vld [vmem:[%s4339] sm:$0xf]
      %v4341 = vld [vmem:[%s4339 + $0x4] sm:$0xf]
      %v4342 = vld [vmem:[%s4339 + $0x8] sm:$0xf]
      %v4343 = vld [vmem:[%s4339 + $0xc] sm:$0xf]
      %v4344 = vld [vmem:[%s4339 + $0x10] sm:$0xf]
      %v4345 = vld [vmem:[%s4339 + $0x14] sm:$0xf]
      %v4346 = vld [vmem:[%s4339 + $0x18] sm:$0xf]
      %v4347 = vld [vmem:[%s4339 + $0x1c] sm:$0xf]
      %v4348 = vld [vmem:[%s4339 + $0x20] sm:$0xf]
      %v4349 = vld [vmem:[%s4339 + $0x24] sm:$0xf]
      %v4350 = vld [vmem:[%s4339 + $0x28] sm:$0xf]
      %v4351 = vld [vmem:[%s4339 + $0x2c] sm:$0xf]
      %v4352 = vld [vmem:[%s4339 + $0x30] sm:$0xf]
      %v4353 = vld [vmem:[%s4339 + $0x34] sm:$0xf]
      %v4354 = vld [vmem:[%s4339 + $0x38] sm:$0xf]
      %v4355 = vld [vmem:[%s4339 + $0x3c] sm:$0xf]
      %v4356 = vunpack.c.l.b16 %v3968
      %v4357 = vunpack.c.l.b16 %v3978
      %v4358 = vunpack.c.l.b16 %v3992
      %v4359 = vunpack.c.l.b16 %v4002
      %v4360 = vunpack.c.l.b16 %v4016
      %v4361 = vunpack.c.l.b16 %v4026
      %v4362 = vunpack.c.l.b16 %v4040
      %v4363 = vunpack.c.l.b16 %v4050
      %v4364 = vunpack.c.l.b16 %v4064
      %v4365 = vunpack.c.l.b16 %v4074
      %v4366 = vunpack.c.l.b16 %v4088
      %v4367 = vunpack.c.l.b16 %v4098
      %v4368 = vunpack.c.l.b16 %v4112
      %v4369 = vunpack.c.l.b16 %v4122
      %v4370 = vunpack.c.l.b16 %v4136
      %v4371 = vunpack.c.l.b16 %v4146
      %v4372 = vunpack.c.l.b16 %v4160
      %v4373 = vunpack.c.l.b16 %v4170
      %v4374 = vunpack.c.l.b16 %v4184
      %v4375 = vunpack.c.l.b16 %v4194
      %v4376 = vunpack.c.l.b16 %v4208
      %v4377 = vunpack.c.l.b16 %v4218
      %v4378 = vunpack.c.l.b16 %v4232
      %v4379 = vunpack.c.l.b16 %v4242
      %v4380 = vunpack.c.l.b16 %v4256
      %v4381 = vunpack.c.l.b16 %v4266
      %v4382 = vunpack.c.l.b16 %v4280
      %v4383 = vunpack.c.l.b16 %v4290
      %v4384 = vunpack.c.l.b16 %v4304
      %v4385 = vunpack.c.l.b16 %v4314
      %v4386 = vunpack.c.l.b16 %v4328
      %v4387 = vunpack.c.l.b16 %v4338
      %v4388 = vpack.c.b16 %v4357, %v4356
      %v4389 = vpack.c.b16 %v4359, %v4358
      %v4390 = vpack.c.b16 %v4361, %v4360
      %v4391 = vpack.c.b16 %v4363, %v4362
      %v4392 = vpack.c.b16 %v4365, %v4364
      %v4393 = vpack.c.b16 %v4367, %v4366
      %v4394 = vpack.c.b16 %v4369, %v4368
      %v4395 = vpack.c.b16 %v4371, %v4370
      %v4396 = vpack.c.b16 %v4373, %v4372
      %v4397 = vpack.c.b16 %v4375, %v4374
      %v4398 = vpack.c.b16 %v4377, %v4376
      %v4399 = vpack.c.b16 %v4379, %v4378
      %v4400 = vpack.c.b16 %v4381, %v4380
      %v4401 = vpack.c.b16 %v4383, %v4382
      %v4402 = vpack.c.b16 %v4385, %v4384
      %v4403 = vpack.c.b16 %v4387, %v4386
      %v4436 = vunpack.c.l.b16 %v4340
      %v4437 = vunpack.c.l.b16 %v4341
      %v4438 = vunpack.c.l.b16 %v4342
      %v4439 = vunpack.c.l.b16 %v4343
      %v4440 = vunpack.c.l.b16 %v4344
      %v4441 = vunpack.c.l.b16 %v4345
      %v4442 = vunpack.c.l.b16 %v4346
      %v4443 = vunpack.c.l.b16 %v4347
      %v4444 = vunpack.c.l.b16 %v4348
      %v4445 = vunpack.c.l.b16 %v4349
      %v4446 = vunpack.c.l.b16 %v4350
      %v4447 = vunpack.c.l.b16 %v4351
      %v4448 = vunpack.c.l.b16 %v4352
      %v4449 = vunpack.c.l.b16 %v4353
      %v4450 = vunpack.c.l.b16 %v4354
      %v4451 = vunpack.c.l.b16 %v4355
      %v4452 = vpack.c.b16 %v4437, %v4436
      %v4453 = vpack.c.b16 %v4439, %v4438
      %v4454 = vpack.c.b16 %v4441, %v4440
      %v4455 = vpack.c.b16 %v4443, %v4442
      %v4456 = vpack.c.b16 %v4445, %v4444
      %v4457 = vpack.c.b16 %v4447, %v4446
      %v4458 = vpack.c.b16 %v4449, %v4448
      %v4459 = vpack.c.b16 %v4451, %v4450
      %4468 = vmatpush.bf16.msra.mxu0 %v4459
      %4469 = vmatpush.bf16.msra.mxu0 %v4458
      %4470 = vmatpush.bf16.msra.mxu0 %v4457
      %4471 = vmatpush.bf16.msra.mxu0 %v4456
      %4472 = vmatpush.bf16.msra.mxu0 %v4455
      %4473 = vmatpush.bf16.msra.mxu0 %v4454
      %4474 = vmatpush.bf16.msra.mxu0 %v4453
      %4475 = vmatpush.bf16.msra.mxu0 %v4452
      %4476 = vmatmul.bf16.gmra.mxu0 %v4388
      %v4477 = vpop.f32.mrf.mxu0
      %v4478 = vadd.f32 0.0, %v4477
      %v4479 = vpop.f32.mrf.mxu0
      %v4480 = vadd.f32 0.0, %v4479
      %4481 = vmatmul.bf16.gmra.mxu0 %v4389
      %v4482 = vpop.f32.mrf.mxu0
      %v4483 = vadd.f32 0.0, %v4482
      %v4484 = vpop.f32.mrf.mxu0
      %v4485 = vadd.f32 0.0, %v4484
      %4486 = vmatmul.bf16.gmra.mxu0 %v4390
      %v4487 = vpop.f32.mrf.mxu0
      %v4488 = vadd.f32 0.0, %v4487
      %v4489 = vpop.f32.mrf.mxu0
      %v4490 = vadd.f32 0.0, %v4489
      %4491 = vmatmul.bf16.gmra.mxu0 %v4391
      %v4492 = vpop.f32.mrf.mxu0
      %v4493 = vadd.f32 0.0, %v4492
      %v4494 = vpop.f32.mrf.mxu0
      %v4495 = vadd.f32 0.0, %v4494
      %4496 = vmatmul.bf16.gmra.mxu0 %v4392
      %v4497 = vpop.f32.mrf.mxu0
      %v4498 = vadd.f32 0.0, %v4497
      %v4499 = vpop.f32.mrf.mxu0
      %v4500 = vadd.f32 0.0, %v4499
      %4501 = vmatmul.bf16.gmra.mxu0 %v4393
      %v4502 = vpop.f32.mrf.mxu0
      %v4503 = vadd.f32 0.0, %v4502
      %v4504 = vpop.f32.mrf.mxu0
      %v4505 = vadd.f32 0.0, %v4504
      %4506 = vmatmul.bf16.gmra.mxu0 %v4394
      %v4507 = vpop.f32.mrf.mxu0
      %v4508 = vadd.f32 0.0, %v4507
      %v4509 = vpop.f32.mrf.mxu0
      %v4510 = vadd.f32 0.0, %v4509
      %4511 = vmatmul.bf16.gmra.mxu0 %v4395
      %v4512 = vpop.f32.mrf.mxu0
      %v4513 = vadd.f32 0.0, %v4512
      %v4514 = vpop.f32.mrf.mxu0
      %v4515 = vadd.f32 0.0, %v4514
      %4516 = vmatmul.bf16.gmra.mxu0 %v4396
      %v4517 = vpop.f32.mrf.mxu0
      %v4518 = vadd.f32 0.0, %v4517
      %v4519 = vpop.f32.mrf.mxu0
      %v4520 = vadd.f32 0.0, %v4519
      %4521 = vmatmul.bf16.gmra.mxu0 %v4397
      %v4522 = vpop.f32.mrf.mxu0
      %v4523 = vadd.f32 0.0, %v4522
      %v4524 = vpop.f32.mrf.mxu0
      %v4525 = vadd.f32 0.0, %v4524
      %4526 = vmatmul.bf16.gmra.mxu0 %v4398
      %v4527 = vpop.f32.mrf.mxu0
      %v4528 = vadd.f32 0.0, %v4527
      %v4529 = vpop.f32.mrf.mxu0
      %v4530 = vadd.f32 0.0, %v4529
      %4531 = vmatmul.bf16.gmra.mxu0 %v4399
      %v4532 = vpop.f32.mrf.mxu0
      %v4533 = vadd.f32 0.0, %v4532
      %v4534 = vpop.f32.mrf.mxu0
      %v4535 = vadd.f32 0.0, %v4534
      %4536 = vmatmul.bf16.gmra.mxu0 %v4400
      %v4537 = vpop.f32.mrf.mxu0
      %v4538 = vadd.f32 0.0, %v4537
      %v4539 = vpop.f32.mrf.mxu0
      %v4540 = vadd.f32 0.0, %v4539
      %4541 = vmatmul.bf16.gmra.mxu0 %v4401
      %v4542 = vpop.f32.mrf.mxu0
      %v4543 = vadd.f32 0.0, %v4542
      %v4544 = vpop.f32.mrf.mxu0
      %v4545 = vadd.f32 0.0, %v4544
      %4546 = vmatmul.bf16.gmra.mxu0 %v4402
      %v4547 = vpop.f32.mrf.mxu0
      %v4548 = vadd.f32 0.0, %v4547
      %v4549 = vpop.f32.mrf.mxu0
      %v4550 = vadd.f32 0.0, %v4549
      %4551 = vmatmul.bf16.gmra.mxu0 %v4403
      %v4552 = vpop.f32.mrf.mxu0
      %v4553 = vadd.f32 0.0, %v4552
      %v4554 = vpop.f32.mrf.mxu0
      %v4555 = vadd.f32 0.0, %v4554
      %4556 = vdwg.mxu0
      %v4557 = vadd.f32 %v3875, %v4478
      %v4558 = vadd.f32 %v3876, %v4480
      %v4559 = vadd.f32 %v3877, %v4483
      %v4560 = vadd.f32 %v3878, %v4485
      %v4561 = vadd.f32 %v3879, %v4488
      %v4562 = vadd.f32 %v3880, %v4490
      %v4563 = vadd.f32 %v3881, %v4493
      %v4564 = vadd.f32 %v3882, %v4495
      %v4565 = vadd.f32 %v3883, %v4498
      %v4566 = vadd.f32 %v3884, %v4500
      %v4567 = vadd.f32 %v3885, %v4503
      %v4568 = vadd.f32 %v3886, %v4505
      %v4569 = vadd.f32 %v3887, %v4508
      %v4570 = vadd.f32 %v3888, %v4510
      %v4571 = vadd.f32 %v3889, %v4513
      %v4572 = vadd.f32 %v3890, %v4515
      %v4573 = vadd.f32 %v3891, %v4518
      %v4574 = vadd.f32 %v3892, %v4520
      %v4575 = vadd.f32 %v3893, %v4523
      %v4576 = vadd.f32 %v3894, %v4525
      %v4577 = vadd.f32 %v3895, %v4528
      %v4578 = vadd.f32 %v3896, %v4530
      %v4579 = vadd.f32 %v3897, %v4533
      %v4580 = vadd.f32 %v3898, %v4535
      %v4581 = vadd.f32 %v3899, %v4538
      %v4582 = vadd.f32 %v3900, %v4540
      %v4583 = vadd.f32 %v3901, %v4543
      %v4584 = vadd.f32 %v3902, %v4545
      %v4585 = vadd.f32 %v3903, %v4548
      %v4586 = vadd.f32 %v3904, %v4550
      %v4587 = vadd.f32 %v3905, %v4553
      %v4588 = vadd.f32 %v3906, %v4555
      %v4589 = vld [vmem:[%s3592] sm:$0xe]
      %v4590 = vld [vmem:[%s3592 + $0xc] sm:$0xe]
      %v4591 = vld [vmem:[%s3592 + $0x18] sm:$0xe]
      %v4592 = vld [vmem:[%s3592 + $0x24] sm:$0xe]
      %v4593 = vld [vmem:[%s3592 + $0x30] sm:$0xe]
      %v4594 = vld [vmem:[%s3592 + $0x3c] sm:$0xe]
      %v4595 = vld [vmem:[%s3592 + $0x48] sm:$0xe]
      %v4596 = vld [vmem:[%s3592 + $0x54] sm:$0xe]
      %v4597 = vld [vmem:[%s3592 + $0x60] sm:$0xe]
      %v4598 = vld [vmem:[%s3592 + $0x6c] sm:$0xe]
      %v4599 = vld [vmem:[%s3592 + $0x78] sm:$0xe]
      %v4600 = vld [vmem:[%s3592 + $0x84] sm:$0xe]
      %v4601 = vld [vmem:[%s3592 + $0x90] sm:$0xe]
      %v4602 = vld [vmem:[%s3592 + $0x9c] sm:$0xe]
      %v4603 = vld [vmem:[%s3592 + $0xa8] sm:$0xe]
      %v4604 = vld [vmem:[%s3592 + $0xb4] sm:$0xe]
      %v4653 = vrot.slane %v4589, 5
      %v4654 = vrot.slane %v4653, 4
      %v4655 = vrot.slane %v3908, 5
      %v4656 = vsel %vm1800, %v4654, %v4655
      %v4657 = vrot.slane %v4655, 4
      %v4658 = vrot.slane %v3909, 5
      %v4659 = vsel %vm1800, %v4657, %v4658
      %v4660 = vrot.slane %v4590, 5
      %v4661 = vrot.slane %v4660, 4
      %v4662 = vrot.slane %v3911, 5
      %v4663 = vsel %vm1800, %v4661, %v4662
      %v4664 = vrot.slane %v4662, 4
      %v4665 = vrot.slane %v3912, 5
      %v4666 = vsel %vm1800, %v4664, %v4665
      %v4667 = vrot.slane %v4591, 5
      %v4668 = vrot.slane %v4667, 4
      %v4669 = vrot.slane %v3914, 5
      %v4670 = vsel %vm1800, %v4668, %v4669
      %v4671 = vrot.slane %v4669, 4
      %v4672 = vrot.slane %v3915, 5
      %v4673 = vsel %vm1800, %v4671, %v4672
      %v4674 = vrot.slane %v4592, 5
      %v4675 = vrot.slane %v4674, 4
      %v4676 = vrot.slane %v3917, 5
      %v4677 = vsel %vm1800, %v4675, %v4676
      %v4678 = vrot.slane %v4676, 4
      %v4679 = vrot.slane %v3918, 5
      %v4680 = vsel %vm1800, %v4678, %v4679
      %v4681 = vrot.slane %v4593, 5
      %v4682 = vrot.slane %v4681, 4
      %v4683 = vrot.slane %v3920, 5
      %v4684 = vsel %vm1800, %v4682, %v4683
      %v4685 = vrot.slane %v4683, 4
      %v4686 = vrot.slane %v3921, 5
      %v4687 = vsel %vm1800, %v4685, %v4686
      %v4688 = vrot.slane %v4594, 5
      %v4689 = vrot.slane %v4688, 4
      %v4690 = vrot.slane %v3923, 5
      %v4691 = vsel %vm1800, %v4689, %v4690
      %v4692 = vrot.slane %v4690, 4
      %v4693 = vrot.slane %v3924, 5
      %v4694 = vsel %vm1800, %v4692, %v4693
      %v4695 = vrot.slane %v4595, 5
      %v4696 = vrot.slane %v4695, 4
      %v4697 = vrot.slane %v3926, 5
      %v4698 = vsel %vm1800, %v4696, %v4697
      %v4699 = vrot.slane %v4697, 4
      %v4700 = vrot.slane %v3927, 5
      %v4701 = vsel %vm1800, %v4699, %v4700
      %v4702 = vrot.slane %v4596, 5
      %v4703 = vrot.slane %v4702, 4
      %v4704 = vrot.slane %v3929, 5
      %v4705 = vsel %vm1800, %v4703, %v4704
      %v4706 = vrot.slane %v4704, 4
      %v4707 = vrot.slane %v3930, 5
      %v4708 = vsel %vm1800, %v4706, %v4707
      %v4709 = vrot.slane %v4597, 5
      %v4710 = vrot.slane %v4709, 4
      %v4711 = vrot.slane %v3932, 5
      %v4712 = vsel %vm1800, %v4710, %v4711
      %v4713 = vrot.slane %v4711, 4
      %v4714 = vrot.slane %v3933, 5
      %v4715 = vsel %vm1800, %v4713, %v4714
      %v4716 = vrot.slane %v4598, 5
      %v4717 = vrot.slane %v4716, 4
      %v4718 = vrot.slane %v3935, 5
      %v4719 = vsel %vm1800, %v4717, %v4718
      %v4720 = vrot.slane %v4718, 4
      %v4721 = vrot.slane %v3936, 5
      %v4722 = vsel %vm1800, %v4720, %v4721
      %v4723 = vrot.slane %v4599, 5
      %v4724 = vrot.slane %v4723, 4
      %v4725 = vrot.slane %v3938, 5
      %v4726 = vsel %vm1800, %v4724, %v4725
      %v4727 = vrot.slane %v4725, 4
      %v4728 = vrot.slane %v3939, 5
      %v4729 = vsel %vm1800, %v4727, %v4728
      %v4730 = vrot.slane %v4600, 5
      %v4731 = vrot.slane %v4730, 4
      %v4732 = vrot.slane %v3941, 5
      %v4733 = vsel %vm1800, %v4731, %v4732
      %v4734 = vrot.slane %v4732, 4
      %v4735 = vrot.slane %v3942, 5
      %v4736 = vsel %vm1800, %v4734, %v4735
      %v4737 = vrot.slane %v4601, 5
      %v4738 = vrot.slane %v4737, 4
      %v4739 = vrot.slane %v3944, 5
      %v4740 = vsel %vm1800, %v4738, %v4739
      %v4741 = vrot.slane %v4739, 4
      %v4742 = vrot.slane %v3945, 5
      %v4743 = vsel %vm1800, %v4741, %v4742
      %v4744 = vrot.slane %v4602, 5
      %v4745 = vrot.slane %v4744, 4
      %v4746 = vrot.slane %v3947, 5
      %v4747 = vsel %vm1800, %v4745, %v4746
      %v4748 = vrot.slane %v4746, 4
      %v4749 = vrot.slane %v3948, 5
      %v4750 = vsel %vm1800, %v4748, %v4749
      %v4751 = vrot.slane %v4603, 5
      %v4752 = vrot.slane %v4751, 4
      %v4753 = vrot.slane %v3950, 5
      %v4754 = vsel %vm1800, %v4752, %v4753
      %v4755 = vrot.slane %v4753, 4
      %v4756 = vrot.slane %v3951, 5
      %v4757 = vsel %vm1800, %v4755, %v4756
      %v4758 = vrot.slane %v4604, 5
      %v4759 = vrot.slane %v4758, 4
      %v4760 = vrot.slane %v3953, 5
      %v4761 = vsel %vm1800, %v4759, %v4760
      %v4762 = vrot.slane %v4760, 4
      %v4763 = vrot.slane %v3954, 5
      %v4764 = vsel %vm1800, %v4762, %v4763
      %s4765 = scalar_lea.vmem %s3, 512
      %v4766 = vld [vmem:[%s4765] sm:$0xf]
      %v4767 = vld [vmem:[%s4765 + $0x4] sm:$0xf]
      %v4768 = vld [vmem:[%s4765 + $0x8] sm:$0xf]
      %v4769 = vld [vmem:[%s4765 + $0xc] sm:$0xf]
      %v4770 = vld [vmem:[%s4765 + $0x10] sm:$0xf]
      %v4771 = vld [vmem:[%s4765 + $0x14] sm:$0xf]
      %v4772 = vld [vmem:[%s4765 + $0x18] sm:$0xf]
      %v4773 = vld [vmem:[%s4765 + $0x1c] sm:$0xf]
      %v4774 = vld [vmem:[%s4765 + $0x20] sm:$0xf]
      %v4775 = vld [vmem:[%s4765 + $0x24] sm:$0xf]
      %v4776 = vld [vmem:[%s4765 + $0x28] sm:$0xf]
      %v4777 = vld [vmem:[%s4765 + $0x2c] sm:$0xf]
      %v4778 = vld [vmem:[%s4765 + $0x30] sm:$0xf]
      %v4779 = vld [vmem:[%s4765 + $0x34] sm:$0xf]
      %v4780 = vld [vmem:[%s4765 + $0x38] sm:$0xf]
      %v4781 = vld [vmem:[%s4765 + $0x3c] sm:$0xf]
      %v4782 = vunpack.c.l.b16 %v4656
      %v4783 = vunpack.c.l.b16 %v4659
      %v4784 = vunpack.c.l.b16 %v4663
      %v4785 = vunpack.c.l.b16 %v4666
      %v4786 = vunpack.c.l.b16 %v4670
      %v4787 = vunpack.c.l.b16 %v4673
      %v4788 = vunpack.c.l.b16 %v4677
      %v4789 = vunpack.c.l.b16 %v4680
      %v4790 = vunpack.c.l.b16 %v4684
      %v4791 = vunpack.c.l.b16 %v4687
      %v4792 = vunpack.c.l.b16 %v4691
      %v4793 = vunpack.c.l.b16 %v4694
      %v4794 = vunpack.c.l.b16 %v4698
      %v4795 = vunpack.c.l.b16 %v4701
      %v4796 = vunpack.c.l.b16 %v4705
      %v4797 = vunpack.c.l.b16 %v4708
      %v4798 = vunpack.c.l.b16 %v4712
      %v4799 = vunpack.c.l.b16 %v4715
      %v4800 = vunpack.c.l.b16 %v4719
      %v4801 = vunpack.c.l.b16 %v4722
      %v4802 = vunpack.c.l.b16 %v4726
      %v4803 = vunpack.c.l.b16 %v4729
      %v4804 = vunpack.c.l.b16 %v4733
      %v4805 = vunpack.c.l.b16 %v4736
      %v4806 = vunpack.c.l.b16 %v4740
      %v4807 = vunpack.c.l.b16 %v4743
      %v4808 = vunpack.c.l.b16 %v4747
      %v4809 = vunpack.c.l.b16 %v4750
      %v4810 = vunpack.c.l.b16 %v4754
      %v4811 = vunpack.c.l.b16 %v4757
      %v4812 = vunpack.c.l.b16 %v4761
      %v4813 = vunpack.c.l.b16 %v4764
      %v4814 = vpack.c.b16 %v4783, %v4782
      %v4815 = vpack.c.b16 %v4785, %v4784
      %v4816 = vpack.c.b16 %v4787, %v4786
      %v4817 = vpack.c.b16 %v4789, %v4788
      %v4818 = vpack.c.b16 %v4791, %v4790
      %v4819 = vpack.c.b16 %v4793, %v4792
      %v4820 = vpack.c.b16 %v4795, %v4794
      %v4821 = vpack.c.b16 %v4797, %v4796
      %v4822 = vpack.c.b16 %v4799, %v4798
      %v4823 = vpack.c.b16 %v4801, %v4800
      %v4824 = vpack.c.b16 %v4803, %v4802
      %v4825 = vpack.c.b16 %v4805, %v4804
      %v4826 = vpack.c.b16 %v4807, %v4806
      %v4827 = vpack.c.b16 %v4809, %v4808
      %v4828 = vpack.c.b16 %v4811, %v4810
      %v4829 = vpack.c.b16 %v4813, %v4812
      %v4862 = vunpack.c.l.b16 %v4766
      %v4863 = vunpack.c.l.b16 %v4767
      %v4864 = vunpack.c.l.b16 %v4768
      %v4865 = vunpack.c.l.b16 %v4769
      %v4866 = vunpack.c.l.b16 %v4770
      %v4867 = vunpack.c.l.b16 %v4771
      %v4868 = vunpack.c.l.b16 %v4772
      %v4869 = vunpack.c.l.b16 %v4773
      %v4870 = vunpack.c.l.b16 %v4774
      %v4871 = vunpack.c.l.b16 %v4775
      %v4872 = vunpack.c.l.b16 %v4776
      %v4873 = vunpack.c.l.b16 %v4777
      %v4874 = vunpack.c.l.b16 %v4778
      %v4875 = vunpack.c.l.b16 %v4779
      %v4876 = vunpack.c.l.b16 %v4780
      %v4877 = vunpack.c.l.b16 %v4781
      %v4878 = vpack.c.b16 %v4863, %v4862
      %v4879 = vpack.c.b16 %v4865, %v4864
      %v4880 = vpack.c.b16 %v4867, %v4866
      %v4881 = vpack.c.b16 %v4869, %v4868
      %v4882 = vpack.c.b16 %v4871, %v4870
      %v4883 = vpack.c.b16 %v4873, %v4872
      %v4884 = vpack.c.b16 %v4875, %v4874
      %v4885 = vpack.c.b16 %v4877, %v4876
      %4894 = vmatpush.bf16.msra.mxu0 %v4885
      %4895 = vmatpush.bf16.msra.mxu0 %v4884
      %4896 = vmatpush.bf16.msra.mxu0 %v4883
      %4897 = vmatpush.bf16.msra.mxu0 %v4882
      %4898 = vmatpush.bf16.msra.mxu0 %v4881
      %4899 = vmatpush.bf16.msra.mxu0 %v4880
      %4900 = vmatpush.bf16.msra.mxu0 %v4879
      %4901 = vmatpush.bf16.msra.mxu0 %v4878
      %4902 = vmatmul.bf16.gmra.mxu0 %v4814
      %v4903 = vpop.f32.mrf.mxu0
      %v4904 = vadd.f32 0.0, %v4903
      %v4905 = vpop.f32.mrf.mxu0
      %v4906 = vadd.f32 0.0, %v4905
      %4907 = vmatmul.bf16.gmra.mxu0 %v4815
      %v4908 = vpop.f32.mrf.mxu0
      %v4909 = vadd.f32 0.0, %v4908
      %v4910 = vpop.f32.mrf.mxu0
      %v4911 = vadd.f32 0.0, %v4910
      %4912 = vmatmul.bf16.gmra.mxu0 %v4816
      %v4913 = vpop.f32.mrf.mxu0
      %v4914 = vadd.f32 0.0, %v4913
      %v4915 = vpop.f32.mrf.mxu0
      %v4916 = vadd.f32 0.0, %v4915
      %4917 = vmatmul.bf16.gmra.mxu0 %v4817
      %v4918 = vpop.f32.mrf.mxu0
      %v4919 = vadd.f32 0.0, %v4918
      %v4920 = vpop.f32.mrf.mxu0
      %v4921 = vadd.f32 0.0, %v4920
      %4922 = vmatmul.bf16.gmra.mxu0 %v4818
      %v4923 = vpop.f32.mrf.mxu0
      %v4924 = vadd.f32 0.0, %v4923
      %v4925 = vpop.f32.mrf.mxu0
      %v4926 = vadd.f32 0.0, %v4925
      %4927 = vmatmul.bf16.gmra.mxu0 %v4819
      %v4928 = vpop.f32.mrf.mxu0
      %v4929 = vadd.f32 0.0, %v4928
      %v4930 = vpop.f32.mrf.mxu0
      %v4931 = vadd.f32 0.0, %v4930
      %4932 = vmatmul.bf16.gmra.mxu0 %v4820
      %v4933 = vpop.f32.mrf.mxu0
      %v4934 = vadd.f32 0.0, %v4933
      %v4935 = vpop.f32.mrf.mxu0
      %v4936 = vadd.f32 0.0, %v4935
      %4937 = vmatmul.bf16.gmra.mxu0 %v4821
      %v4938 = vpop.f32.mrf.mxu0
      %v4939 = vadd.f32 0.0, %v4938
      %v4940 = vpop.f32.mrf.mxu0
      %v4941 = vadd.f32 0.0, %v4940
      %4942 = vmatmul.bf16.gmra.mxu0 %v4822
      %v4943 = vpop.f32.mrf.mxu0
      %v4944 = vadd.f32 0.0, %v4943
      %v4945 = vpop.f32.mrf.mxu0
      %v4946 = vadd.f32 0.0, %v4945
      %4947 = vmatmul.bf16.gmra.mxu0 %v4823
      %v4948 = vpop.f32.mrf.mxu0
      %v4949 = vadd.f32 0.0, %v4948
      %v4950 = vpop.f32.mrf.mxu0
      %v4951 = vadd.f32 0.0, %v4950
      %4952 = vmatmul.bf16.gmra.mxu0 %v4824
      %v4953 = vpop.f32.mrf.mxu0
      %v4954 = vadd.f32 0.0, %v4953
      %v4955 = vpop.f32.mrf.mxu0
      %v4956 = vadd.f32 0.0, %v4955
      %4957 = vmatmul.bf16.gmra.mxu0 %v4825
      %v4958 = vpop.f32.mrf.mxu0
      %v4959 = vadd.f32 0.0, %v4958
      %v4960 = vpop.f32.mrf.mxu0
      %v4961 = vadd.f32 0.0, %v4960
      %4962 = vmatmul.bf16.gmra.mxu0 %v4826
      %v4963 = vpop.f32.mrf.mxu0
      %v4964 = vadd.f32 0.0, %v4963
      %v4965 = vpop.f32.mrf.mxu0
      %v4966 = vadd.f32 0.0, %v4965
      %4967 = vmatmul.bf16.gmra.mxu0 %v4827
      %v4968 = vpop.f32.mrf.mxu0
      %v4969 = vadd.f32 0.0, %v4968
      %v4970 = vpop.f32.mrf.mxu0
      %v4971 = vadd.f32 0.0, %v4970
      %4972 = vmatmul.bf16.gmra.mxu0 %v4828
      %v4973 = vpop.f32.mrf.mxu0
      %v4974 = vadd.f32 0.0, %v4973
      %v4975 = vpop.f32.mrf.mxu0
      %v4976 = vadd.f32 0.0, %v4975
      %4977 = vmatmul.bf16.gmra.mxu0 %v4829
      %v4978 = vpop.f32.mrf.mxu0
      %v4979 = vadd.f32 0.0, %v4978
      %v4980 = vpop.f32.mrf.mxu0
      %v4981 = vadd.f32 0.0, %v4980
      %4982 = vdwg.mxu0
      %v4983 = vadd.f32 %v4557, %v4904
      %v4984 = vadd.f32 %v4558, %v4906
      %v4985 = vadd.f32 %v4559, %v4909
      %v4986 = vadd.f32 %v4560, %v4911
      %v4987 = vadd.f32 %v4561, %v4914
      %v4988 = vadd.f32 %v4562, %v4916
      %v4989 = vadd.f32 %v4563, %v4919
      %v4990 = vadd.f32 %v4564, %v4921
      %v4991 = vadd.f32 %v4565, %v4924
      %v4992 = vadd.f32 %v4566, %v4926
      %v4993 = vadd.f32 %v4567, %v4929
      %v4994 = vadd.f32 %v4568, %v4931
      %v4995 = vadd.f32 %v4569, %v4934
      %v4996 = vadd.f32 %v4570, %v4936
      %v4997 = vadd.f32 %v4571, %v4939
      %v4998 = vadd.f32 %v4572, %v4941
      %v4999 = vadd.f32 %v4573, %v4944
      %v5000 = vadd.f32 %v4574, %v4946
      %v5001 = vadd.f32 %v4575, %v4949
      %v5002 = vadd.f32 %v4576, %v4951
      %v5003 = vadd.f32 %v4577, %v4954
      %v5004 = vadd.f32 %v4578, %v4956
      %v5005 = vadd.f32 %v4579, %v4959
      %v5006 = vadd.f32 %v4580, %v4961
      %v5007 = vadd.f32 %v4581, %v4964
      %v5008 = vadd.f32 %v4582, %v4966
      %v5009 = vadd.f32 %v4583, %v4969
      %v5010 = vadd.f32 %v4584, %v4971
      %v5011 = vadd.f32 %v4585, %v4974
      %v5012 = vadd.f32 %v4586, %v4976
      %v5013 = vadd.f32 %v4587, %v4979
      %v5014 = vadd.f32 %v4588, %v4981
      %v5015 = vpack.c.bf16 %v4983, %v4983
      %v5016 = vpack.c.bf16 %v4984, %v4984
      %v5017 = vpack.c.bf16 %v4985, %v4985
      %v5018 = vpack.c.bf16 %v4986, %v4986
      %v5019 = vpack.c.bf16 %v4987, %v4987
      %v5020 = vpack.c.bf16 %v4988, %v4988
      %v5021 = vpack.c.bf16 %v4989, %v4989
      %v5022 = vpack.c.bf16 %v4990, %v4990
      %v5023 = vpack.c.bf16 %v4991, %v4991
      %v5024 = vpack.c.bf16 %v4992, %v4992
      %v5025 = vpack.c.bf16 %v4993, %v4993
      %v5026 = vpack.c.bf16 %v4994, %v4994
      %v5027 = vpack.c.bf16 %v4995, %v4995
      %v5028 = vpack.c.bf16 %v4996, %v4996
      %v5029 = vpack.c.bf16 %v4997, %v4997
      %v5030 = vpack.c.bf16 %v4998, %v4998
      %v5031 = vpack.c.bf16 %v4999, %v4999
      %v5032 = vpack.c.bf16 %v5000, %v5000
      %v5033 = vpack.c.bf16 %v5001, %v5001
      %v5034 = vpack.c.bf16 %v5002, %v5002
      %v5035 = vpack.c.bf16 %v5003, %v5003
      %v5036 = vpack.c.bf16 %v5004, %v5004
      %v5037 = vpack.c.bf16 %v5005, %v5005
      %v5038 = vpack.c.bf16 %v5006, %v5006
      %v5039 = vpack.c.bf16 %v5007, %v5007
      %v5040 = vpack.c.bf16 %v5008, %v5008
      %v5041 = vpack.c.bf16 %v5009, %v5009
      %v5042 = vpack.c.bf16 %v5010, %v5010
      %v5043 = vpack.c.bf16 %v5011, %v5011
      %v5044 = vpack.c.bf16 %v5012, %v5012
      %v5045 = vpack.c.bf16 %v5013, %v5013
      %v5046 = vpack.c.bf16 %v5014, %v5014
      %5047 = vst [vmem:[%s255] sm:$0xf] %v5015
      %5048 = vst [vmem:[%s255 + $0x4] sm:$0xf] %v5016
      %5049 = vst [vmem:[%s255 + $0x8] sm:$0xf] %v5017
      %5050 = vst [vmem:[%s255 + $0xc] sm:$0xf] %v5018
      %5051 = vst [vmem:[%s255 + $0x10] sm:$0xf] %v5019
      %5052 = vst [vmem:[%s255 + $0x14] sm:$0xf] %v5020
      %5053 = vst [vmem:[%s255 + $0x18] sm:$0xf] %v5021
      %5054 = vst [vmem:[%s255 + $0x1c] sm:$0xf] %v5022
      %5055 = vst [vmem:[%s255 + $0x20] sm:$0xf] %v5023
      %5056 = vst [vmem:[%s255 + $0x24] sm:$0xf] %v5024
      %5057 = vst [vmem:[%s255 + $0x28] sm:$0xf] %v5025
      %5058 = vst [vmem:[%s255 + $0x2c] sm:$0xf] %v5026
      %5059 = vst [vmem:[%s255 + $0x30] sm:$0xf] %v5027
      %5060 = vst [vmem:[%s255 + $0x34] sm:$0xf] %v5028
      %5061 = vst [vmem:[%s255 + $0x38] sm:$0xf] %v5029
      %5062 = vst [vmem:[%s255 + $0x3c] sm:$0xf] %v5030
      %5063 = vst [vmem:[%s255 + $0x40] sm:$0xf] %v5031
      %5064 = vst [vmem:[%s255 + $0x44] sm:$0xf] %v5032
      %5065 = vst [vmem:[%s255 + $0x48] sm:$0xf] %v5033
      %5066 = vst [vmem:[%s255 + $0x4c] sm:$0xf] %v5034
      %5067 = vst [vmem:[%s255 + $0x50] sm:$0xf] %v5035
      %5068 = vst [vmem:[%s255 + $0x54] sm:$0xf] %v5036
      %5069 = vst [vmem:[%s255 + $0x58] sm:$0xf] %v5037
      %5070 = vst [vmem:[%s255 + $0x5c] sm:$0xf] %v5038
      %5071 = vst [vmem:[%s255 + $0x60] sm:$0xf] %v5039
      %5072 = vst [vmem:[%s255 + $0x64] sm:$0xf] %v5040
      %5073 = vst [vmem:[%s255 + $0x68] sm:$0xf] %v5041
      %5074 = vst [vmem:[%s255 + $0x6c] sm:$0xf] %v5042
      %5075 = vst [vmem:[%s255 + $0x70] sm:$0xf] %v5043
      %5076 = vst [vmem:[%s255 + $0x74] sm:$0xf] %v5044
      %5077 = vst [vmem:[%s255 + $0x78] sm:$0xf] %v5045
      %5078 = vst [vmem:[%s255 + $0x7c] sm:$0xf] %v5046
      %v5079 = vld [vmem:[%s260] sm:$0x1]
      %v5080 = vadd.f32 %v4983, %v4984
      %v5081 = vadd.f32 %v5080, %v4985
      %v5082 = vadd.f32 %v5081, %v4986
      %v5083 = vadd.f32 %v5082, %v4987
      %v5084 = vadd.f32 %v5083, %v4988
      %v5085 = vadd.f32 %v5084, %v4989
      %v5086 = vadd.f32 %v5085, %v4990
      %v5087 = vadd.f32 %v5086, %v4991
      %v5088 = vadd.f32 %v5087, %v4992
      %v5089 = vadd.f32 %v5088, %v4993
      %v5090 = vadd.f32 %v5089, %v4994
      %v5091 = vadd.f32 %v5090, %v4995
      %v5092 = vadd.f32 %v5091, %v4996
      %v5093 = vadd.f32 %v5092, %v4997
      %v5094 = vadd.f32 %v5093, %v4998
      %v5095 = vadd.f32 %v5094, %v4999
      %v5096 = vadd.f32 %v5095, %v5000
      %v5097 = vadd.f32 %v5096, %v5001
      %v5098 = vadd.f32 %v5097, %v5002
      %v5099 = vadd.f32 %v5098, %v5003
      %v5100 = vadd.f32 %v5099, %v5004
      %v5101 = vadd.f32 %v5100, %v5005
      %v5102 = vadd.f32 %v5101, %v5006
      %v5103 = vadd.f32 %v5102, %v5007
      %v5104 = vadd.f32 %v5103, %v5008
      %v5105 = vadd.f32 %v5104, %v5009
      %v5106 = vadd.f32 %v5105, %v5010
      %v5107 = vadd.f32 %v5106, %v5011
      %v5108 = vadd.f32 %v5107, %v5012
      %v5109 = vadd.f32 %v5108, %v5013
      %v5110 = vadd.f32 %v5109, %v5014
      %v5111 = vrot.slane %v5110, 4
      %v5112 = vadd.f32 %v5110, %v5111
      %v5113 = vrot.slane %v5112, 2
      %v5114 = vadd.f32 %v5112, %v5113
      %v5115 = vrot.slane %v5114, 1
      %v5116 = vadd.f32 %v5114, %v5115
      %v5117 = vadd.f32 %v5079, %v5116
      %5118 = vst [vmem:[%s260] sm:$0x1] %v5117
      %v5119 = vld [vmem:[%s260 + $0x1] sm:$0x1]
      %v5120 = vmul.f32 %v4983, %v4983
      %v5121 = vmul.f32 %v4984, %v4984
      %v5122 = vmul.f32 %v4985, %v4985
      %v5123 = vmul.f32 %v4986, %v4986
      %v5124 = vmul.f32 %v4987, %v4987
      %v5125 = vmul.f32 %v4988, %v4988
      %v5126 = vmul.f32 %v4989, %v4989
      %v5127 = vmul.f32 %v4990, %v4990
      %v5128 = vmul.f32 %v4991, %v4991
      %v5129 = vmul.f32 %v4992, %v4992
      %v5130 = vmul.f32 %v4993, %v4993
      %v5131 = vmul.f32 %v4994, %v4994
      %v5132 = vmul.f32 %v4995, %v4995
      %v5133 = vmul.f32 %v4996, %v4996
      %v5134 = vmul.f32 %v4997, %v4997
      %v5135 = vmul.f32 %v4998, %v4998
      %v5136 = vmul.f32 %v4999, %v4999
      %v5137 = vmul.f32 %v5000, %v5000
      %v5138 = vmul.f32 %v5001, %v5001
      %v5139 = vmul.f32 %v5002, %v5002
      %v5140 = vmul.f32 %v5003, %v5003
      %v5141 = vmul.f32 %v5004, %v5004
      %v5142 = vmul.f32 %v5005, %v5005
      %v5143 = vmul.f32 %v5006, %v5006
      %v5144 = vmul.f32 %v5007, %v5007
      %v5145 = vmul.f32 %v5008, %v5008
      %v5146 = vmul.f32 %v5009, %v5009
      %v5147 = vmul.f32 %v5010, %v5010
      %v5148 = vmul.f32 %v5011, %v5011
      %v5149 = vmul.f32 %v5012, %v5012
      %v5150 = vmul.f32 %v5013, %v5013
      %v5151 = vmul.f32 %v5014, %v5014
      %v5152 = vadd.f32 %v5120, %v5121
      %v5153 = vadd.f32 %v5152, %v5122
      %v5154 = vadd.f32 %v5153, %v5123
      %v5155 = vadd.f32 %v5154, %v5124
      %v5156 = vadd.f32 %v5155, %v5125
      %v5157 = vadd.f32 %v5156, %v5126
      %v5158 = vadd.f32 %v5157, %v5127
      %v5159 = vadd.f32 %v5158, %v5128
      %v5160 = vadd.f32 %v5159, %v5129
      %v5161 = vadd.f32 %v5160, %v5130
      %v5162 = vadd.f32 %v5161, %v5131
      %v5163 = vadd.f32 %v5162, %v5132
      %v5164 = vadd.f32 %v5163, %v5133
      %v5165 = vadd.f32 %v5164, %v5134
      %v5166 = vadd.f32 %v5165, %v5135
      %v5167 = vadd.f32 %v5166, %v5136
      %v5168 = vadd.f32 %v5167, %v5137
      %v5169 = vadd.f32 %v5168, %v5138
      %v5170 = vadd.f32 %v5169, %v5139
      %v5171 = vadd.f32 %v5170, %v5140
      %v5172 = vadd.f32 %v5171, %v5141
      %v5173 = vadd.f32 %v5172, %v5142
      %v5174 = vadd.f32 %v5173, %v5143
      %v5175 = vadd.f32 %v5174, %v5144
      %v5176 = vadd.f32 %v5175, %v5145
      %v5177 = vadd.f32 %v5176, %v5146
      %v5178 = vadd.f32 %v5177, %v5147
      %v5179 = vadd.f32 %v5178, %v5148
      %v5180 = vadd.f32 %v5179, %v5149
      %v5181 = vadd.f32 %v5180, %v5150
      %v5182 = vadd.f32 %v5181, %v5151
      %v5183 = vrot.slane %v5182, 4
      %v5184 = vadd.f32 %v5182, %v5183
      %v5185 = vrot.slane %v5184, 2
      %v5186 = vadd.f32 %v5184, %v5185
      %v5187 = vrot.slane %v5186, 1
      %v5188 = vadd.f32 %v5186, %v5187
      %v5189 = vadd.f32 %v5119, %v5188
      %5190 = vst [vmem:[%s260 + $0x1] sm:$0x1] %v5189
      %s5191 = smul.u32 16, %s22
      %p5192 = scmp.lt.s32.totalorder %s21, 1
      %s5193 = scalar_select %p5192, %s21, 1
      %p5194 = scmp.lt.s32.totalorder %s5191, 15
      %s5195 = scalar_select %p5194, %s5191, 15
      %s5196 = smul.addr %s5195, 2
      %s5197 = smul.addr %s5193, 32
      %s5198 = sadd.s32 %s5196, %s5197
      %s5199 = smul.addr %s5198, 4
      %s5200 = scalar_lea.vmem %s4, %s5199
      %p5201 = scmp.lt.s32.totalorder %s21, 1
      %s5202 = scalar_select %p5201, %s21, 1
      %s5203 = smul.addr %s5202, 2
      %s5204 = scalar_lea.vmem %s5, %s5203
      // Predicated region
      $region41: #{tripple_conv.4} parent=35 // pred_check
        %p5205 = pneg %p138
      $region42: #{tripple_conv.4} parent=35 // pred_check_branch
        %5207 = sbr.rel (%p5205) target = $region44
      $region43: #{tripple_conv.4} parent=35 // pred_region
        %s5208 = smul.u32 16, %s22
      $region44: #{tripple_conv.4} parent=35 // pred_fallthru
        _
      // Predicated region
      $region45: #{tripple_conv.4} parent=35 // pred_check
        %p5209 = pneg %p164
      $region46: #{tripple_conv.4} parent=35 // pred_check_branch
        %5211 = sbr.rel (%p5209) target = $region48
      $region47: #{tripple_conv.4} parent=35 // pred_region
        _
      $region48: #{tripple_conv.4} parent=35 // pred_fallthru
        _
    $region36: #{tripple_conv.4} parent=5 // pred_fallthru
      _
    %p5212 = scmp.le.s32.totalorder 2, %s12
    // Predicated region
    $region49: #{tripple_conv.4} parent=5 // pred_check
      %p5213 = pneg %p5212
    $region50: #{tripple_conv.4} parent=5 // pred_check_branch
      %5215 = sbr.rel (%p5213) target = $region52
    $region51: #{tripple_conv.4} parent=5 // pred_region
      %s5216 = ssub.s32 %s12, 2
      // Predicated region
      $region53: #{tripple_conv.4} parent=51 // pred_check
        %p5217 = pneg %p144
      $region54: #{tripple_conv.4} parent=51 // pred_check_branch
        %5219 = sbr.rel (%p5217) target = $region56
      $region55: #{tripple_conv.4} parent=51 // pred_region
        %s5220 = smul.u32 16, %s24
        %p5221 = scmp.lt.s32.totalorder %s23, 1
        %s5222 = scalar_select %p5221, %s23, 1
        %p5223 = scmp.lt.s32.totalorder %s5220, 15
        %s5224 = scalar_select %p5223, %s5220, 15
        %s5225 = smul.addr %s5224, 2
        %s5226 = smul.addr %s5222, 32
        %s5227 = sadd.s32 %s5225, %s5226
        %s5228 = smul.addr %s5227, 4
        %s5229 = scalar_lea.vmem %s4, %s5228
      $region56: #{tripple_conv.4} parent=51 // pred_fallthru
        _
      // Predicated region
      $region57: #{tripple_conv.4} parent=51 // pred_check
        %p5230 = pneg %p170
      $region58: #{tripple_conv.4} parent=51 // pred_check_branch
        %5232 = sbr.rel (%p5230) target = $region60
      $region59: #{tripple_conv.4} parent=51 // pred_region
        %p5233 = scmp.lt.s32.totalorder %s23, 1
        %s5234 = scalar_select %p5233, %s23, 1
        %s5235 = smul.addr %s5234, 2
        %s5236 = scalar_lea.vmem %s5, %s5235
      $region60: #{tripple_conv.4} parent=51 // pred_fallthru
        _
    $region52: #{tripple_conv.4} parent=5 // pred_fallthru
      _
  $region6: #{tripple_conv.4} parent=0 // loop_footer
    %s16 = sadd.s32 1, %s12
  $region7: #{tripple_conv.4} parent=0 // loop_footer_branch
    %11 = sbr.rel target = $region3
  $region8: #{tripple_conv.4} parent=0 // loop_exit
    _

// kernel: tripple_conv.5
$region0: #{tripple_conv.5}
  #allocation0 [shape = 'u32[]', space=smem, size = 0x4, offset = 0x4, fixed_abs, tag = 'smem constant byte address 0x4 - core index']
  #allocation1 [shape = 'u32[72,128]{1,0:T(1,128)}', space=vmem, size = 0x9000, scoped, tag = 'internal scratch']
  #allocation2 [shape = 'bf16[18,18,128]{2,1,0:T(8,128)(2,1)}', space=vmem, size = 0x1b000, scoped, tag = 'scratch operand']
  %s0 = inlined_call_operand.vmem [shape: bf16[2,16,16,128], index: 0, kind: input, shape index: {}]
  %s1 = inlined_call_operand.vmem [shape: f32[1,128], index: 1, kind: input, shape index: {}]
  %s2 = inlined_call_operand.vmem [shape: f32[1,128], index: 2, kind: input, shape index: {}]
  %s3 = inlined_call_operand.vmem [shape: bf16[9,128,128], index: 3, kind: input, shape index: {}]
  %s4 = inlined_call_operand.vmem [shape: bf16[2,16,16,128], index: 4, kind: output, shape index: {0}]
  %s5 = inlined_call_operand.vmem [shape: f32[2,2,128], index: 5, kind: output, shape index: {1}]
  %6 = xla_tuple %s4, %s5
  %s7 = sld [smem:[#allocation0]]
  $region61: #{tripple_conv.5} parent=0
    _
  %s9 = ssub.s32 1, %s7
  %s10 = scalar_select 0, %s9, %s7
  loop: start=0, step=1, limit=4
  $region2: #{tripple_conv.5} parent=0 // loop_pre_header
    _
  $region3: #{tripple_conv.5} parent=0 // loop_header
    %s12 = sphi 0, %s16
    %p13 = scmp.ge.s32.totalorder %s12, 4
    %s19 = sphi 0, %s31
    %s20 = sphi 0, %s27
    %s21 = sphi 0, %s19
    %s22 = sphi 0, %s20
    %s23 = sphi 0, %s21
    %s24 = sphi 0, %s22
    %s34 = sphi 0, %s36
    %s37 = sphi 0, %s34
    %s38 = sphi 0, %s37
    %s54 = sphi 0, %s38
    %s58 = sphi 0, %s58
    %s60 = sphi 0, %s58
    %s61 = sphi 0, %s60
    %s75 = sphi 0, %s61
    %s79 = sphi 0, %s79
    %s81 = sphi 0, %s79
    %s82 = sphi 0, %s81
    %s96 = sphi 0, %s82
    %s100 = sphi 0, %s100
    %s102 = sphi 0, %s100
    %s103 = sphi 0, %s102
    %s117 = sphi 0, %s103
    %s125 = sphi 0, %s127
    %s128 = sphi 0, %s125
    %s129 = sphi 0, %s128
    %s145 = sphi 0, %s129
    %s151 = sphi 0, %s153
    %s154 = sphi 0, %s151
    %s155 = sphi 0, %s154
    %s171 = sphi 0, %s155
  $region4: #{tripple_conv.5} parent=0 // loop_header_branch
    %15 = sbr.rel (%p13) target = $region8
  $region5: #{tripple_conv.5} parent=0 // loop_body
    %s17 = ssub.s32 %s12, 1
    %s18 = ssub.s32 %s12, 2
    %s25 = sadd.s32 1, %s20
    %p26 = scmp.ge.s32.totalorder %s25, 1
    %s27 = scalar_select %p26, 0, %s25
    %s28 = sadd.s32 1, %s19
    %s29 = scalar_select %p26, %s28, %s19
    %p30 = scmp.ge.s32.totalorder %s29, 2
    %s31 = scalar_select %p30, 0, %s29
    %s32 = ssub.s32 %s19, %s31
    %p33 = scmp.eq.s32.totalorder %s32, 0
    %s35 = sadd.s32 %s34, 1
    %s36 = scalar_select %p33, %s34, %s35
    %p39 = pneg %p33
    %p40 = scmp.eq.s32.totalorder %s12, 1
    %p41 = por %p39, %p40
    %p42 = scmp.ne.s32.totalorder %s34, %s37
    %p43 = scmp.eq.s32.totalorder %s12, 0
    %p44 = por %p42, %p43
    %p45 = scmp.ne.s32.totalorder %s34, %s37
    %p46 = scmp.eq.s32.totalorder %s17, 1
    %p47 = por %p45, %p46
    %p48 = scmp.ne.s32.totalorder %s37, %s38
    %p49 = scmp.eq.s32.totalorder %s17, 0
    %p50 = por %p48, %p49
    %p51 = scmp.ne.s32.totalorder %s37, %s38
    %p52 = scmp.eq.s32.totalorder %s18, 1
    %p53 = por %p51, %p52
    %p55 = scmp.ne.s32.totalorder %s38, %s54
    %p56 = scmp.eq.s32.totalorder %s18, 0
    %p57 = por %p55, %p56
    %s59 = sadd.s32 %s58, 1
    %p62 = scmp.eq.s32.totalorder %s12, 1
    %p63 = scmp.ne.s32.totalorder %s58, %s60
    %p64 = scmp.eq.s32.totalorder %s12, 0
    %p65 = por %p63, %p64
    %p66 = scmp.ne.s32.totalorder %s58, %s60
    %p67 = scmp.eq.s32.totalorder %s17, 1
    %p68 = por %p66, %p67
    %p69 = scmp.ne.s32.totalorder %s60, %s61
    %p70 = scmp.eq.s32.totalorder %s17, 0
    %p71 = por %p69, %p70
    %p72 = scmp.ne.s32.totalorder %s60, %s61
    %p73 = scmp.eq.s32.totalorder %s18, 1
    %p74 = por %p72, %p73
    %p76 = scmp.ne.s32.totalorder %s61, %s75
    %p77 = scmp.eq.s32.totalorder %s18, 0
    %p78 = por %p76, %p77
    %s80 = sadd.s32 %s79, 1
    %p83 = scmp.eq.s32.totalorder %s12, 1
    %p84 = scmp.ne.s32.totalorder %s79, %s81
    %p85 = scmp.eq.s32.totalorder %s12, 0
    %p86 = por %p84, %p85
    %p87 = scmp.ne.s32.totalorder %s79, %s81
    %p88 = scmp.eq.s32.totalorder %s17, 1
    %p89 = por %p87, %p88
    %p90 = scmp.ne.s32.totalorder %s81, %s82
    %p91 = scmp.eq.s32.totalorder %s17, 0
    %p92 = por %p90, %p91
    %p93 = scmp.ne.s32.totalorder %s81, %s82
    %p94 = scmp.eq.s32.totalorder %s18, 1
    %p95 = por %p93, %p94
    %p97 = scmp.ne.s32.totalorder %s82, %s96
    %p98 = scmp.eq.s32.totalorder %s18, 0
    %p99 = por %p97, %p98
    %s101 = sadd.s32 %s100, 1
    %p104 = scmp.eq.s32.totalorder %s12, 1
    %p105 = scmp.ne.s32.totalorder %s100, %s102
    %p106 = scmp.eq.s32.totalorder %s12, 0
    %p107 = por %p105, %p106
    %p108 = scmp.ne.s32.totalorder %s100, %s102
    %p109 = scmp.eq.s32.totalorder %s17, 1
    %p110 = por %p108, %p109
    %p111 = scmp.ne.s32.totalorder %s102, %s103
    %p112 = scmp.eq.s32.totalorder %s17, 0
    %p113 = por %p111, %p112
    %p114 = scmp.ne.s32.totalorder %s102, %s103
    %p115 = scmp.eq.s32.totalorder %s18, 1
    %p116 = por %p114, %p115
    %p118 = scmp.ne.s32.totalorder %s103, %s117
    %p119 = scmp.eq.s32.totalorder %s18, 0
    %p120 = por %p118, %p119
    %s121 = ssub.s32 %s19, %s31
    %s122 = ssub.s32 %s20, %s27
    %s123 = sor.u32 %s121, %s122
    %p124 = scmp.eq.s32.totalorder %s123, 0
    %s126 = sadd.s32 %s125, 1
    %s127 = scalar_select %p124, %s125, %s126
    %p130 = pneg %p124
    %p131 = scmp.eq.s32.totalorder %s12, 1
    %p132 = por %p130, %p131
    %p133 = scmp.ne.s32.totalorder %s125, %s128
    %p134 = scmp.eq.s32.totalorder %s12, 0
    %p135 = por %p133, %p134
    %p136 = scmp.ne.s32.totalorder %s125, %s128
    %p137 = scmp.eq.s32.totalorder %s17, 1
    %p138 = por %p136, %p137
    %p139 = scmp.ne.s32.totalorder %s128, %s129
    %p140 = scmp.eq.s32.totalorder %s17, 0
    %p141 = por %p139, %p140
    %p142 = scmp.ne.s32.totalorder %s128, %s129
    %p143 = scmp.eq.s32.totalorder %s18, 1
    %p144 = por %p142, %p143
    %p146 = scmp.ne.s32.totalorder %s129, %s145
    %p147 = scmp.eq.s32.totalorder %s18, 0
    %p148 = por %p146, %p147
    %s149 = ssub.s32 %s19, %s31
    %p150 = scmp.eq.s32.totalorder %s149, 0
    %s152 = sadd.s32 %s151, 1
    %s153 = scalar_select %p150, %s151, %s152
    %p156 = pneg %p150
    %p157 = scmp.eq.s32.totalorder %s12, 1
    %p158 = por %p156, %p157
    %p159 = scmp.ne.s32.totalorder %s151, %s154
    %p160 = scmp.eq.s32.totalorder %s12, 0
    %p161 = por %p159, %p160
    %p162 = scmp.ne.s32.totalorder %s151, %s154
    %p163 = scmp.eq.s32.totalorder %s17, 1
    %p164 = por %p162, %p163
    %p165 = scmp.ne.s32.totalorder %s154, %s155
    %p166 = scmp.eq.s32.totalorder %s17, 0
    %p167 = por %p165, %p166
    %p168 = scmp.ne.s32.totalorder %s154, %s155
    %p169 = scmp.eq.s32.totalorder %s18, 1
    %p170 = por %p168, %p169
    %p172 = scmp.ne.s32.totalorder %s155, %s171
    %p173 = scmp.eq.s32.totalorder %s18, 0
    %p174 = por %p172, %p173
    %p175 = scmp.le.s32.totalorder 1, %s12
    %p176 = scmp.lt.s32.totalorder %s12, 3
    %p177 = pnand %p175, %p176
    %p178 = pneg %p177
    // Predicated region
    $region9: #{tripple_conv.5} parent=5 // pred_check
      _
    $region10: #{tripple_conv.5} parent=5 // pred_check_branch
      %180 = sbr.rel (%p177) target = $region12
    $region11: #{tripple_conv.5} parent=5 // pred_region
      %s181 = ssub.s32 %s12, 1
      // Predicated region
      $region13: #{tripple_conv.5} parent=11 // pred_check
        %p182 = pneg %p71
      $region14: #{tripple_conv.5} parent=11 // pred_check_branch
        %184 = sbr.rel (%p182) target = $region16
      $region15: #{tripple_conv.5} parent=11 // pred_region
        _
      $region16: #{tripple_conv.5} parent=11 // pred_fallthru
        _
      // Predicated region
      $region17: #{tripple_conv.5} parent=11 // pred_check
        %p185 = pneg %p92
      $region18: #{tripple_conv.5} parent=11 // pred_check_branch
        %187 = sbr.rel (%p185) target = $region20
      $region19: #{tripple_conv.5} parent=11 // pred_region
        _
      $region20: #{tripple_conv.5} parent=11 // pred_fallthru
        _
      // Predicated region
      $region21: #{tripple_conv.5} parent=11 // pred_check
        %p188 = pneg %p113
      $region22: #{tripple_conv.5} parent=11 // pred_check_branch
        %190 = sbr.rel (%p188) target = $region24
      $region23: #{tripple_conv.5} parent=11 // pred_region
        _
      $region24: #{tripple_conv.5} parent=11 // pred_fallthru
        _
    $region12: #{tripple_conv.5} parent=5 // pred_fallthru
      _
    %p191 = scmp.lt.s32.totalorder %s12, 2
    // Predicated region
    $region25: #{tripple_conv.5} parent=5 // pred_check
      %p192 = pneg %p191
    $region26: #{tripple_conv.5} parent=5 // pred_check_branch
      %194 = sbr.rel (%p192) target = $region28
    $region27: #{tripple_conv.5} parent=5 // pred_region
      // Predicated region
      $region29: #{tripple_conv.5} parent=27 // pred_check
        %p195 = pneg %p44
      $region30: #{tripple_conv.5} parent=27 // pred_check_branch
        %197 = sbr.rel (%p195) target = $region32
      $region31: #{tripple_conv.5} parent=27 // pred_region
        %p198 = scmp.lt.s32.totalorder %s19, 1
        %s199 = scalar_select %p198, %s19, 1
        %s200 = smul.addr %s199, 32
        %s201 = smul.addr %s200, 4
        %s202 = scalar_lea.vmem %s0, %s201
      $region32: #{tripple_conv.5} parent=27 // pred_fallthru
        _
    $region28: #{tripple_conv.5} parent=5 // pred_fallthru
      _
    %p203 = scmp.le.s32.totalorder 1, %s12
    %p204 = scmp.lt.s32.totalorder %s12, 3
    %p205 = pnand %p203, %p204
    %p206 = pneg %p205
    // Predicated region
    $region33: #{tripple_conv.5} parent=5 // pred_check
      _
    $region34: #{tripple_conv.5} parent=5 // pred_check_branch
      %208 = sbr.rel (%p205) target = $region36
    $region35: #{tripple_conv.5} parent=5 // pred_region
      %s209 = ssub.s32 %s12, 1
      %p210 = scmp.lt.s32.totalorder %s21, 1
      %s211 = scalar_select %p210, %s21, 1
      %s212 = smul.addr %s211, 32
      %s213 = smul.addr %s212, 4
      %s214 = scalar_lea.vmem %s0, %s213
      %p215 = pneg %p50
      %p216 = pneg %p47
      %p217 = pneg %p71
      %p218 = pneg %p68
      %p219 = pneg %p92
      %p220 = pneg %p89
      %p221 = pneg %p113
      %p222 = pneg %p110
      %p223 = pneg %p141
      %p224 = pneg %p138
      %s225 = smul.u32 16, %s22
      %p226 = scmp.lt.s32.totalorder %s21, 1
      %s227 = scalar_select %p226, %s21, 1
      %p228 = scmp.lt.s32.totalorder %s225, 15
      %s229 = scalar_select %p228, %s225, 15
      %s230 = smul.addr %s229, 2
      %s231 = smul.addr %s227, 32
      %s232 = sadd.s32 %s230, %s231
      %s233 = smul.addr %s232, 4
      %s234 = scalar_lea.vmem %s4, %s233
      %p235 = pneg %p167
      %p236 = pneg %p164
      %p237 = scmp.lt.s32.totalorder %s21, 1
      %s238 = scalar_select %p237, %s21, 1
      %s239 = smul.addr %s238, 2
      %s240 = scalar_lea.vmem %s5, %s239
      %p241 = scmp.lt.s32.totalorder %s21, 1
      %s242 = scalar_select %p241, %s21, 1
      %s243 = smul.addr %s242, 32
      %s244 = smul.addr %s243, 4
      %s245 = scalar_lea.vmem %s0, %s244
      %s246 = smul.u32 16, %s22
      %p247 = scmp.lt.s32.totalorder %s21, 1
      %s248 = scalar_select %p247, %s21, 1
      %p249 = scmp.lt.s32.totalorder %s246, 15
      %s250 = scalar_select %p249, %s246, 15
      %s251 = smul.addr %s250, 2
      %s252 = smul.addr %s248, 32
      %s253 = sadd.s32 %s251, %s252
      %s254 = smul.addr %s253, 4
      %s255 = scalar_lea.vmem %s4, %s254
      %s256 = smul.u32 16, %s22
      %p257 = scmp.lt.s32.totalorder %s21, 1
      %s258 = scalar_select %p257, %s21, 1
      %s259 = smul.addr %s258, 2
      %s260 = scalar_lea.vmem %s5, %s259
      %p262 = scmp.eq.s32.totalorder %s22, 0
      // Predicated region
      $region37: #{tripple_conv.5} parent=35 // pred_check
        %p263 = pneg %p262
      $region38: #{tripple_conv.5} parent=35 // pred_check_branch
        %265 = sbr.rel (%p263) target = $region40
      $region39: #{tripple_conv.5} parent=35 // pred_region
        %266 = vst [vmem:[#allocation2] sm:$0xf] 0
        %267 = vst [vmem:[#allocation2 + $0x4] sm:$0xf] 0
        %268 = vst [vmem:[#allocation2 + $0x8] sm:$0x1] 0
        %s269 = scalar_lea.vmem [#allocation2], 204
        %270 = vst [vmem:[%s269] sm:$0xf] 0
        %271 = vst [vmem:[%s269 + $0x4] sm:$0xf] 0
        %272 = vst [vmem:[%s269 + $0x8] sm:$0x1] 0
        %s273 = scalar_lea.vmem [#allocation2], 12
        %vm274 = vcmask 1040384
        %vm275 = vsmask.f32 256
        %vm276 = vmand %vm274, %vm275
        %v277 = vld [vmem:[%s273] sm:$0x1]
        %v278 = vsel %vm276, 0, %v277
        %279 = vst [vmem:[%s273] sm:$0x1] %v278
        %v280 = vld [vmem:[%s273 + $0xc] sm:$0x1]
        %v281 = vsel %vm276, 0, %v280
        %282 = vst [vmem:[%s273 + $0xc] sm:$0x1] %v281
        %v283 = vld [vmem:[%s273 + $0x18] sm:$0x1]
        %v284 = vsel %vm276, 0, %v283
        %285 = vst [vmem:[%s273 + $0x18] sm:$0x1] %v284
        %v286 = vld [vmem:[%s273 + $0x24] sm:$0x1]
        %v287 = vsel %vm276, 0, %v286
        %288 = vst [vmem:[%s273 + $0x24] sm:$0x1] %v287
        %v289 = vld [vmem:[%s273 + $0x30] sm:$0x1]
        %v290 = vsel %vm276, 0, %v289
        %291 = vst [vmem:[%s273 + $0x30] sm:$0x1] %v290
        %v292 = vld [vmem:[%s273 + $0x3c] sm:$0x1]
        %v293 = vsel %vm276, 0, %v292
        %294 = vst [vmem:[%s273 + $0x3c] sm:$0x1] %v293
        %v295 = vld [vmem:[%s273 + $0x48] sm:$0x1]
        %v296 = vsel %vm276, 0, %v295
        %297 = vst [vmem:[%s273 + $0x48] sm:$0x1] %v296
        %v298 = vld [vmem:[%s273 + $0x54] sm:$0x1]
        %v299 = vsel %vm276, 0, %v298
        %300 = vst [vmem:[%s273 + $0x54] sm:$0x1] %v299
        %v301 = vld [vmem:[%s273 + $0x60] sm:$0x1]
        %v302 = vsel %vm276, 0, %v301
        %303 = vst [vmem:[%s273 + $0x60] sm:$0x1] %v302
        %v304 = vld [vmem:[%s273 + $0x6c] sm:$0x1]
        %v305 = vsel %vm276, 0, %v304
        %306 = vst [vmem:[%s273 + $0x6c] sm:$0x1] %v305
        %v307 = vld [vmem:[%s273 + $0x78] sm:$0x1]
        %v308 = vsel %vm276, 0, %v307
        %309 = vst [vmem:[%s273 + $0x78] sm:$0x1] %v308
        %v310 = vld [vmem:[%s273 + $0x84] sm:$0x1]
        %v311 = vsel %vm276, 0, %v310
        %312 = vst [vmem:[%s273 + $0x84] sm:$0x1] %v311
        %v313 = vld [vmem:[%s273 + $0x90] sm:$0x1]
        %v314 = vsel %vm276, 0, %v313
        %315 = vst [vmem:[%s273 + $0x90] sm:$0x1] %v314
        %v316 = vld [vmem:[%s273 + $0x9c] sm:$0x1]
        %v317 = vsel %vm276, 0, %v316
        %318 = vst [vmem:[%s273 + $0x9c] sm:$0x1] %v317
        %v319 = vld [vmem:[%s273 + $0xa8] sm:$0x1]
        %v320 = vsel %vm276, 0, %v319
        %321 = vst [vmem:[%s273 + $0xa8] sm:$0x1] %v320
        %v322 = vld [vmem:[%s273 + $0xb4] sm:$0x1]
        %v323 = vsel %vm276, 0, %v322
        %324 = vst [vmem:[%s273 + $0xb4] sm:$0x1] %v323
        %vm325 = vsmask.f32 7938
        %vm326 = vmand %vm274, %vm325
        %v327 = vld [vmem:[%s273 + $0x8] sm:$0x1]
        %v328 = vsel %vm326, 0, %v327
        %329 = vst [vmem:[%s273 + $0x8] sm:$0x1] %v328
        %v330 = vld [vmem:[%s273 + $0x14] sm:$0x1]
        %v331 = vsel %vm326, 0, %v330
        %332 = vst [vmem:[%s273 + $0x14] sm:$0x1] %v331
        %v333 = vld [vmem:[%s273 + $0x20] sm:$0x1]
        %v334 = vsel %vm326, 0, %v333
        %335 = vst [vmem:[%s273 + $0x20] sm:$0x1] %v334
        %v336 = vld [vmem:[%s273 + $0x2c] sm:$0x1]
        %v337 = vsel %vm326, 0, %v336
        %338 = vst [vmem:[%s273 + $0x2c] sm:$0x1] %v337
        %v339 = vld [vmem:[%s273 + $0x38] sm:$0x1]
        %v340 = vsel %vm326, 0, %v339
        %341 = vst [vmem:[%s273 + $0x38] sm:$0x1] %v340
        %v342 = vld [vmem:[%s273 + $0x44] sm:$0x1]
        %v343 = vsel %vm326, 0, %v342
        %344 = vst [vmem:[%s273 + $0x44] sm:$0x1] %v343
        %v345 = vld [vmem:[%s273 + $0x50] sm:$0x1]
        %v346 = vsel %vm326, 0, %v345
        %347 = vst [vmem:[%s273 + $0x50] sm:$0x1] %v346
        %v348 = vld [vmem:[%s273 + $0x5c] sm:$0x1]
        %v349 = vsel %vm326, 0, %v348
        %350 = vst [vmem:[%s273 + $0x5c] sm:$0x1] %v349
        %v351 = vld [vmem:[%s273 + $0x68] sm:$0x1]
        %v352 = vsel %vm326, 0, %v351
        %353 = vst [vmem:[%s273 + $0x68] sm:$0x1] %v352
        %v354 = vld [vmem:[%s273 + $0x74] sm:$0x1]
        %v355 = vsel %vm326, 0, %v354
        %356 = vst [vmem:[%s273 + $0x74] sm:$0x1] %v355
        %v357 = vld [vmem:[%s273 + $0x80] sm:$0x1]
        %v358 = vsel %vm326, 0, %v357
        %359 = vst [vmem:[%s273 + $0x80] sm:$0x1] %v358
        %v360 = vld [vmem:[%s273 + $0x8c] sm:$0x1]
        %v361 = vsel %vm326, 0, %v360
        %362 = vst [vmem:[%s273 + $0x8c] sm:$0x1] %v361
        %v363 = vld [vmem:[%s273 + $0x98] sm:$0x1]
        %v364 = vsel %vm326, 0, %v363
        %365 = vst [vmem:[%s273 + $0x98] sm:$0x1] %v364
        %v366 = vld [vmem:[%s273 + $0xa4] sm:$0x1]
        %v367 = vsel %vm326, 0, %v366
        %368 = vst [vmem:[%s273 + $0xa4] sm:$0x1] %v367
        %v369 = vld [vmem:[%s273 + $0xb0] sm:$0x1]
        %v370 = vsel %vm326, 0, %v369
        %371 = vst [vmem:[%s273 + $0xb0] sm:$0x1] %v370
        %v372 = vld [vmem:[%s273 + $0xbc] sm:$0x1]
        %v373 = vsel %vm326, 0, %v372
        %374 = vst [vmem:[%s273 + $0xbc] sm:$0x1] %v373
        %v375 = vld [vmem:[%s245] sm:$0xf]
        %v376 = vld [vmem:[%s245 + $0x4] sm:$0xf]
        %v377 = vld [vmem:[%s245 + $0x8] sm:$0xf]
        %v378 = vld [vmem:[%s245 + $0xc] sm:$0xf]
        %v379 = vld [vmem:[%s245 + $0x10] sm:$0xf]
        %v380 = vld [vmem:[%s245 + $0x14] sm:$0xf]
        %v381 = vld [vmem:[%s245 + $0x18] sm:$0xf]
        %v382 = vld [vmem:[%s245 + $0x1c] sm:$0xf]
        %v383 = vld [vmem:[%s245 + $0x20] sm:$0xf]
        %v384 = vld [vmem:[%s245 + $0x24] sm:$0xf]
        %v385 = vld [vmem:[%s245 + $0x28] sm:$0xf]
        %v386 = vld [vmem:[%s245 + $0x2c] sm:$0xf]
        %v387 = vld [vmem:[%s245 + $0x30] sm:$0xf]
        %v388 = vld [vmem:[%s245 + $0x34] sm:$0xf]
        %v389 = vld [vmem:[%s245 + $0x38] sm:$0xf]
        %v390 = vld [vmem:[%s245 + $0x3c] sm:$0xf]
        %v391 = vld [vmem:[%s245 + $0x40] sm:$0xf]
        %v392 = vld [vmem:[%s245 + $0x44] sm:$0xf]
        %v393 = vld [vmem:[%s245 + $0x48] sm:$0xf]
        %v394 = vld [vmem:[%s245 + $0x4c] sm:$0xf]
        %v395 = vld [vmem:[%s245 + $0x50] sm:$0xf]
        %v396 = vld [vmem:[%s245 + $0x54] sm:$0xf]
        %v397 = vld [vmem:[%s245 + $0x58] sm:$0xf]
        %v398 = vld [vmem:[%s245 + $0x5c] sm:$0xf]
        %v399 = vld [vmem:[%s245 + $0x60] sm:$0xf]
        %v400 = vld [vmem:[%s245 + $0x64] sm:$0xf]
        %v401 = vld [vmem:[%s245 + $0x68] sm:$0xf]
        %v402 = vld [vmem:[%s245 + $0x6c] sm:$0xf]
        %v403 = vld [vmem:[%s245 + $0x70] sm:$0xf]
        %v404 = vld [vmem:[%s245 + $0x74] sm:$0xf]
        %v405 = vld [vmem:[%s245 + $0x78] sm:$0xf]
        %v406 = vld [vmem:[%s245 + $0x7c] sm:$0xf]
        %v407 = vunpack.c.l.bf16 %v375
        %v408 = vunpack.c.l.bf16 %v376
        %v409 = vunpack.c.l.bf16 %v377
        %v410 = vunpack.c.l.bf16 %v378
        %v411 = vunpack.c.l.bf16 %v379
        %v412 = vunpack.c.l.bf16 %v380
        %v413 = vunpack.c.l.bf16 %v381
        %v414 = vunpack.c.l.bf16 %v382
        %v415 = vunpack.c.l.bf16 %v383
        %v416 = vunpack.c.l.bf16 %v384
        %v417 = vunpack.c.l.bf16 %v385
        %v418 = vunpack.c.l.bf16 %v386
        %v419 = vunpack.c.l.bf16 %v387
        %v420 = vunpack.c.l.bf16 %v388
        %v421 = vunpack.c.l.bf16 %v389
        %v422 = vunpack.c.l.bf16 %v390
        %v423 = vunpack.c.l.bf16 %v391
        %v424 = vunpack.c.l.bf16 %v392
        %v425 = vunpack.c.l.bf16 %v393
        %v426 = vunpack.c.l.bf16 %v394
        %v427 = vunpack.c.l.bf16 %v395
        %v428 = vunpack.c.l.bf16 %v396
        %v429 = vunpack.c.l.bf16 %v397
        %v430 = vunpack.c.l.bf16 %v398
        %v431 = vunpack.c.l.bf16 %v399
        %v432 = vunpack.c.l.bf16 %v400
        %v433 = vunpack.c.l.bf16 %v401
        %v434 = vunpack.c.l.bf16 %v402
        %v435 = vunpack.c.l.bf16 %v403
        %v436 = vunpack.c.l.bf16 %v404
        %v437 = vunpack.c.l.bf16 %v405
        %v438 = vunpack.c.l.bf16 %v406
        %v439 = vld [vmem:[%s1] sm:$0x1]
        %v441 = vperm.slane %v439, 0
        %v443 = vmul.f32 %v407, %v441
        %v444 = vmul.f32 %v408, %v441
        %v445 = vmul.f32 %v409, %v441
        %v446 = vmul.f32 %v410, %v441
        %v447 = vmul.f32 %v411, %v441
        %v448 = vmul.f32 %v412, %v441
        %v449 = vmul.f32 %v413, %v441
        %v450 = vmul.f32 %v414, %v441
        %v451 = vmul.f32 %v415, %v441
        %v452 = vmul.f32 %v416, %v441
        %v453 = vmul.f32 %v417, %v441
        %v454 = vmul.f32 %v418, %v441
        %v455 = vmul.f32 %v419, %v441
        %v456 = vmul.f32 %v420, %v441
        %v457 = vmul.f32 %v421, %v441
        %v458 = vmul.f32 %v422, %v441
        %v459 = vmul.f32 %v423, %v441
        %v460 = vmul.f32 %v424, %v441
        %v461 = vmul.f32 %v425, %v441
        %v462 = vmul.f32 %v426, %v441
        %v463 = vmul.f32 %v427, %v441
        %v464 = vmul.f32 %v428, %v441
        %v465 = vmul.f32 %v429, %v441
        %v466 = vmul.f32 %v430, %v441
        %v467 = vmul.f32 %v431, %v441
        %v468 = vmul.f32 %v432, %v441
        %v469 = vmul.f32 %v433, %v441
        %v470 = vmul.f32 %v434, %v441
        %v471 = vmul.f32 %v435, %v441
        %v472 = vmul.f32 %v436, %v441
        %v473 = vmul.f32 %v437, %v441
        %v474 = vmul.f32 %v438, %v441
        %v475 = vld [vmem:[%s2] sm:$0x1]
        %v477 = vperm.slane %v475, 0
        %v479 = vadd.f32 %v443, %v477
        %v480 = vadd.f32 %v444, %v477
        %v481 = vadd.f32 %v445, %v477
        %v482 = vadd.f32 %v446, %v477
        %v483 = vadd.f32 %v447, %v477
        %v484 = vadd.f32 %v448, %v477
        %v485 = vadd.f32 %v449, %v477
        %v486 = vadd.f32 %v450, %v477
        %v487 = vadd.f32 %v451, %v477
        %v488 = vadd.f32 %v452, %v477
        %v489 = vadd.f32 %v453, %v477
        %v490 = vadd.f32 %v454, %v477
        %v491 = vadd.f32 %v455, %v477
        %v492 = vadd.f32 %v456, %v477
        %v493 = vadd.f32 %v457, %v477
        %v494 = vadd.f32 %v458, %v477
        %v495 = vadd.f32 %v459, %v477
        %v496 = vadd.f32 %v460, %v477
        %v497 = vadd.f32 %v461, %v477
        %v498 = vadd.f32 %v462, %v477
        %v499 = vadd.f32 %v463, %v477
        %v500 = vadd.f32 %v464, %v477
        %v501 = vadd.f32 %v465, %v477
        %v502 = vadd.f32 %v466, %v477
        %v503 = vadd.f32 %v467, %v477
        %v504 = vadd.f32 %v468, %v477
        %v505 = vadd.f32 %v469, %v477
        %v506 = vadd.f32 %v470, %v477
        %v507 = vadd.f32 %v471, %v477
        %v508 = vadd.f32 %v472, %v477
        %v509 = vadd.f32 %v473, %v477
        %v510 = vadd.f32 %v474, %v477
        %v511 = vmax.f32 %v479, 0.0
        %v512 = vmax.f32 %v480, 0.0
        %v513 = vmax.f32 %v481, 0.0
        %v514 = vmax.f32 %v482, 0.0
        %v515 = vmax.f32 %v483, 0.0
        %v516 = vmax.f32 %v484, 0.0
        %v517 = vmax.f32 %v485, 0.0
        %v518 = vmax.f32 %v486, 0.0
        %v519 = vmax.f32 %v487, 0.0
        %v520 = vmax.f32 %v488, 0.0
        %v521 = vmax.f32 %v489, 0.0
        %v522 = vmax.f32 %v490, 0.0
        %v523 = vmax.f32 %v491, 0.0
        %v524 = vmax.f32 %v492, 0.0
        %v525 = vmax.f32 %v493, 0.0
        %v526 = vmax.f32 %v494, 0.0
        %v527 = vmax.f32 %v495, 0.0
        %v528 = vmax.f32 %v496, 0.0
        %v529 = vmax.f32 %v497, 0.0
        %v530 = vmax.f32 %v498, 0.0
        %v531 = vmax.f32 %v499, 0.0
        %v532 = vmax.f32 %v500, 0.0
        %v533 = vmax.f32 %v501, 0.0
        %v534 = vmax.f32 %v502, 0.0
        %v535 = vmax.f32 %v503, 0.0
        %v536 = vmax.f32 %v504, 0.0
        %v537 = vmax.f32 %v505, 0.0
        %v538 = vmax.f32 %v506, 0.0
        %v539 = vmax.f32 %v507, 0.0
        %v540 = vmax.f32 %v508, 0.0
        %v541 = vmax.f32 %v509, 0.0
        %v542 = vmax.f32 %v510, 0.0
        %v543 = vpack.c.bf16 %v511, %v511
        %v544 = vpack.c.bf16 %v512, %v512
        %v545 = vpack.c.bf16 %v513, %v513
        %v546 = vpack.c.bf16 %v514, %v514
        %v547 = vpack.c.bf16 %v515, %v515
        %v548 = vpack.c.bf16 %v516, %v516
        %v549 = vpack.c.bf16 %v517, %v517
        %v550 = vpack.c.bf16 %v518, %v518
        %v551 = vpack.c.bf16 %v519, %v519
        %v552 = vpack.c.bf16 %v520, %v520
        %v553 = vpack.c.bf16 %v521, %v521
        %v554 = vpack.c.bf16 %v522, %v522
        %v555 = vpack.c.bf16 %v523, %v523
        %v556 = vpack.c.bf16 %v524, %v524
        %v557 = vpack.c.bf16 %v525, %v525
        %v558 = vpack.c.bf16 %v526, %v526
        %v559 = vpack.c.bf16 %v527, %v527
        %v560 = vpack.c.bf16 %v528, %v528
        %v561 = vpack.c.bf16 %v529, %v529
        %v562 = vpack.c.bf16 %v530, %v530
        %v563 = vpack.c.bf16 %v531, %v531
        %v564 = vpack.c.bf16 %v532, %v532
        %v565 = vpack.c.bf16 %v533, %v533
        %v566 = vpack.c.bf16 %v534, %v534
        %v567 = vpack.c.bf16 %v535, %v535
        %v568 = vpack.c.bf16 %v536, %v536
        %v569 = vpack.c.bf16 %v537, %v537
        %v570 = vpack.c.bf16 %v538, %v538
        %v571 = vpack.c.bf16 %v539, %v539
        %v572 = vpack.c.bf16 %v540, %v540
        %v573 = vpack.c.bf16 %v541, %v541
        %v574 = vpack.c.bf16 %v542, %v542
        %vm575 = vsmask.f32 4368
        %vm576 = vmor %vm275, %vm575
        %v578 = vshrl.u32 %v543, 16
        %v580 = vrot.slane %v578, 7
        %v581 = vshll.u32 %v543, 16
        %v583 = vor.u32 %v580, %v581
        %v584 = vrot.slane %v580, 4
        %v586 = vshrl.u32 %v544, 16
        %v588 = vrot.slane %v586, 7
        %v589 = vshll.u32 %v544, 16
        %v591 = vor.u32 %v588, %v589
        %v592 = vsel %vm576, %v584, %v591
        %v593 = vrot.slane %v588, 4
        %v595 = vshrl.u32 %v545, 16
        %v597 = vrot.slane %v595, 7
        %v598 = vshll.u32 %v545, 16
        %v600 = vor.u32 %v597, %v598
        %v601 = vrot.slane %v597, 4
        %v603 = vshrl.u32 %v546, 16
        %v605 = vrot.slane %v603, 7
        %v606 = vshll.u32 %v546, 16
        %v608 = vor.u32 %v605, %v606
        %v609 = vsel %vm576, %v601, %v608
        %v610 = vrot.slane %v605, 4
        %v612 = vshrl.u32 %v547, 16
        %v614 = vrot.slane %v612, 7
        %v615 = vshll.u32 %v547, 16
        %v617 = vor.u32 %v614, %v615
        %v618 = vrot.slane %v614, 4
        %v620 = vshrl.u32 %v548, 16
        %v622 = vrot.slane %v620, 7
        %v623 = vshll.u32 %v548, 16
        %v625 = vor.u32 %v622, %v623
        %v626 = vsel %vm576, %v618, %v625
        %v627 = vrot.slane %v622, 4
        %v629 = vshrl.u32 %v549, 16
        %v631 = vrot.slane %v629, 7
        %v632 = vshll.u32 %v549, 16
        %v634 = vor.u32 %v631, %v632
        %v635 = vrot.slane %v631, 4
        %v637 = vshrl.u32 %v550, 16
        %v639 = vrot.slane %v637, 7
        %v640 = vshll.u32 %v550, 16
        %v642 = vor.u32 %v639, %v640
        %v643 = vsel %vm576, %v635, %v642
        %v644 = vrot.slane %v639, 4
        %v646 = vshrl.u32 %v551, 16
        %v648 = vrot.slane %v646, 7
        %v649 = vshll.u32 %v551, 16
        %v651 = vor.u32 %v648, %v649
        %v652 = vrot.slane %v648, 4
        %v654 = vshrl.u32 %v552, 16
        %v656 = vrot.slane %v654, 7
        %v657 = vshll.u32 %v552, 16
        %v659 = vor.u32 %v656, %v657
        %v660 = vsel %vm576, %v652, %v659
        %v661 = vrot.slane %v656, 4
        %v663 = vshrl.u32 %v553, 16
        %v665 = vrot.slane %v663, 7
        %v666 = vshll.u32 %v553, 16
        %v668 = vor.u32 %v665, %v666
        %v669 = vrot.slane %v665, 4
        %v671 = vshrl.u32 %v554, 16
        %v673 = vrot.slane %v671, 7
        %v674 = vshll.u32 %v554, 16
        %v676 = vor.u32 %v673, %v674
        %v677 = vsel %vm576, %v669, %v676
        %v678 = vrot.slane %v673, 4
        %v680 = vshrl.u32 %v555, 16
        %v682 = vrot.slane %v680, 7
        %v683 = vshll.u32 %v555, 16
        %v685 = vor.u32 %v682, %v683
        %v686 = vrot.slane %v682, 4
        %v688 = vshrl.u32 %v556, 16
        %v690 = vrot.slane %v688, 7
        %v691 = vshll.u32 %v556, 16
        %v693 = vor.u32 %v690, %v691
        %v694 = vsel %vm576, %v686, %v693
        %v695 = vrot.slane %v690, 4
        %v697 = vshrl.u32 %v557, 16
        %v699 = vrot.slane %v697, 7
        %v700 = vshll.u32 %v557, 16
        %v702 = vor.u32 %v699, %v700
        %v703 = vrot.slane %v699, 4
        %v705 = vshrl.u32 %v558, 16
        %v707 = vrot.slane %v705, 7
        %v708 = vshll.u32 %v558, 16
        %v710 = vor.u32 %v707, %v708
        %v711 = vsel %vm576, %v703, %v710
        %v712 = vrot.slane %v707, 4
        %v714 = vshrl.u32 %v559, 16
        %v716 = vrot.slane %v714, 7
        %v717 = vshll.u32 %v559, 16
        %v719 = vor.u32 %v716, %v717
        %v720 = vrot.slane %v716, 4
        %v722 = vshrl.u32 %v560, 16
        %v724 = vrot.slane %v722, 7
        %v725 = vshll.u32 %v560, 16
        %v727 = vor.u32 %v724, %v725
        %v728 = vsel %vm576, %v720, %v727
        %v729 = vrot.slane %v724, 4
        %v731 = vshrl.u32 %v561, 16
        %v733 = vrot.slane %v731, 7
        %v734 = vshll.u32 %v561, 16
        %v736 = vor.u32 %v733, %v734
        %v737 = vrot.slane %v733, 4
        %v739 = vshrl.u32 %v562, 16
        %v741 = vrot.slane %v739, 7
        %v742 = vshll.u32 %v562, 16
        %v744 = vor.u32 %v741, %v742
        %v745 = vsel %vm576, %v737, %v744
        %v746 = vrot.slane %v741, 4
        %v748 = vshrl.u32 %v563, 16
        %v750 = vrot.slane %v748, 7
        %v751 = vshll.u32 %v563, 16
        %v753 = vor.u32 %v750, %v751
        %v754 = vrot.slane %v750, 4
        %v756 = vshrl.u32 %v564, 16
        %v758 = vrot.slane %v756, 7
        %v759 = vshll.u32 %v564, 16
        %v761 = vor.u32 %v758, %v759
        %v762 = vsel %vm576, %v754, %v761
        %v763 = vrot.slane %v758, 4
        %v765 = vshrl.u32 %v565, 16
        %v767 = vrot.slane %v765, 7
        %v768 = vshll.u32 %v565, 16
        %v770 = vor.u32 %v767, %v768
        %v771 = vrot.slane %v767, 4
        %v773 = vshrl.u32 %v566, 16
        %v775 = vrot.slane %v773, 7
        %v776 = vshll.u32 %v566, 16
        %v778 = vor.u32 %v775, %v776
        %v779 = vsel %vm576, %v771, %v778
        %v780 = vrot.slane %v775, 4
        %v782 = vshrl.u32 %v567, 16
        %v784 = vrot.slane %v782, 7
        %v785 = vshll.u32 %v567, 16
        %v787 = vor.u32 %v784, %v785
        %v788 = vrot.slane %v784, 4
        %v790 = vshrl.u32 %v568, 16
        %v792 = vrot.slane %v790, 7
        %v793 = vshll.u32 %v568, 16
        %v795 = vor.u32 %v792, %v793
        %v796 = vsel %vm576, %v788, %v795
        %v797 = vrot.slane %v792, 4
        %v799 = vshrl.u32 %v569, 16
        %v801 = vrot.slane %v799, 7
        %v802 = vshll.u32 %v569, 16
        %v804 = vor.u32 %v801, %v802
        %v805 = vrot.slane %v801, 4
        %v807 = vshrl.u32 %v570, 16
        %v809 = vrot.slane %v807, 7
        %v810 = vshll.u32 %v570, 16
        %v812 = vor.u32 %v809, %v810
        %v813 = vsel %vm576, %v805, %v812
        %v814 = vrot.slane %v809, 4
        %v816 = vshrl.u32 %v571, 16
        %v818 = vrot.slane %v816, 7
        %v819 = vshll.u32 %v571, 16
        %v821 = vor.u32 %v818, %v819
        %v822 = vrot.slane %v818, 4
        %v824 = vshrl.u32 %v572, 16
        %v826 = vrot.slane %v824, 7
        %v827 = vshll.u32 %v572, 16
        %v829 = vor.u32 %v826, %v827
        %v830 = vsel %vm576, %v822, %v829
        %v831 = vrot.slane %v826, 4
        %v833 = vshrl.u32 %v573, 16
        %v835 = vrot.slane %v833, 7
        %v836 = vshll.u32 %v573, 16
        %v838 = vor.u32 %v835, %v836
        %v839 = vrot.slane %v835, 4
        %v841 = vshrl.u32 %v574, 16
        %v843 = vrot.slane %v841, 7
        %v844 = vshll.u32 %v574, 16
        %v846 = vor.u32 %v843, %v844
        %v847 = vsel %vm576, %v839, %v846
        %v848 = vrot.slane %v843, 4
        %vm897 = vcmask 1043456
        %vm898 = vmand %vm897, %vm325
        %v899 = vld [vmem:[%s273] sm:$0xf]
        %v900 = vsel %vm898, %v583, %v899
        %901 = vst [vmem:[%s273] sm:$0xf] %v900
        %902 = vst [vmem:[%s273 + $0x4] sm:$0xf] %v592
        %v903 = vld [vmem:[%s273 + $0x8] sm:$0x1]
        %v904 = vsel %vm276, %v593, %v903
        %905 = vst [vmem:[%s273 + $0x8] sm:$0x1] %v904
        %v906 = vld [vmem:[%s273 + $0xc] sm:$0xf]
        %v907 = vsel %vm898, %v600, %v906
        %908 = vst [vmem:[%s273 + $0xc] sm:$0xf] %v907
        %909 = vst [vmem:[%s273 + $0x10] sm:$0xf] %v609
        %v910 = vld [vmem:[%s273 + $0x14] sm:$0x1]
        %v911 = vsel %vm276, %v610, %v910
        %912 = vst [vmem:[%s273 + $0x14] sm:$0x1] %v911
        %v913 = vld [vmem:[%s273 + $0x18] sm:$0xf]
        %v914 = vsel %vm898, %v617, %v913
        %915 = vst [vmem:[%s273 + $0x18] sm:$0xf] %v914
        %916 = vst [vmem:[%s273 + $0x1c] sm:$0xf] %v626
        %v917 = vld [vmem:[%s273 + $0x20] sm:$0x1]
        %v918 = vsel %vm276, %v627, %v917
        %919 = vst [vmem:[%s273 + $0x20] sm:$0x1] %v918
        %v920 = vld [vmem:[%s273 + $0x24] sm:$0xf]
        %v921 = vsel %vm898, %v634, %v920
        %922 = vst [vmem:[%s273 + $0x24] sm:$0xf] %v921
        %923 = vst [vmem:[%s273 + $0x28] sm:$0xf] %v643
        %v924 = vld [vmem:[%s273 + $0x2c] sm:$0x1]
        %v925 = vsel %vm276, %v644, %v924
        %926 = vst [vmem:[%s273 + $0x2c] sm:$0x1] %v925
        %v927 = vld [vmem:[%s273 + $0x30] sm:$0xf]
        %v928 = vsel %vm898, %v651, %v927
        %929 = vst [vmem:[%s273 + $0x30] sm:$0xf] %v928
        %930 = vst [vmem:[%s273 + $0x34] sm:$0xf] %v660
        %v931 = vld [vmem:[%s273 + $0x38] sm:$0x1]
        %v932 = vsel %vm276, %v661, %v931
        %933 = vst [vmem:[%s273 + $0x38] sm:$0x1] %v932
        %v934 = vld [vmem:[%s273 + $0x3c] sm:$0xf]
        %v935 = vsel %vm898, %v668, %v934
        %936 = vst [vmem:[%s273 + $0x3c] sm:$0xf] %v935
        %937 = vst [vmem:[%s273 + $0x40] sm:$0xf] %v677
        %v938 = vld [vmem:[%s273 + $0x44] sm:$0x1]
        %v939 = vsel %vm276, %v678, %v938
        %940 = vst [vmem:[%s273 + $0x44] sm:$0x1] %v939
        %v941 = vld [vmem:[%s273 + $0x48] sm:$0xf]
        %v942 = vsel %vm898, %v685, %v941
        %943 = vst [vmem:[%s273 + $0x48] sm:$0xf] %v942
        %944 = vst [vmem:[%s273 + $0x4c] sm:$0xf] %v694
        %v945 = vld [vmem:[%s273 + $0x50] sm:$0x1]
        %v946 = vsel %vm276, %v695, %v945
        %947 = vst [vmem:[%s273 + $0x50] sm:$0x1] %v946
        %v948 = vld [vmem:[%s273 + $0x54] sm:$0xf]
        %v949 = vsel %vm898, %v702, %v948
        %950 = vst [vmem:[%s273 + $0x54] sm:$0xf] %v949
        %951 = vst [vmem:[%s273 + $0x58] sm:$0xf] %v711
        %v952 = vld [vmem:[%s273 + $0x5c] sm:$0x1]
        %v953 = vsel %vm276, %v712, %v952
        %954 = vst [vmem:[%s273 + $0x5c] sm:$0x1] %v953
        %v955 = vld [vmem:[%s273 + $0x60] sm:$0xf]
        %v956 = vsel %vm898, %v719, %v955
        %957 = vst [vmem:[%s273 + $0x60] sm:$0xf] %v956
        %958 = vst [vmem:[%s273 + $0x64] sm:$0xf] %v728
        %v959 = vld [vmem:[%s273 + $0x68] sm:$0x1]
        %v960 = vsel %vm276, %v729, %v959
        %961 = vst [vmem:[%s273 + $0x68] sm:$0x1] %v960
        %v962 = vld [vmem:[%s273 + $0x6c] sm:$0xf]
        %v963 = vsel %vm898, %v736, %v962
        %964 = vst [vmem:[%s273 + $0x6c] sm:$0xf] %v963
        %965 = vst [vmem:[%s273 + $0x70] sm:$0xf] %v745
        %v966 = vld [vmem:[%s273 + $0x74] sm:$0x1]
        %v967 = vsel %vm276, %v746, %v966
        %968 = vst [vmem:[%s273 + $0x74] sm:$0x1] %v967
        %v969 = vld [vmem:[%s273 + $0x78] sm:$0xf]
        %v970 = vsel %vm898, %v753, %v969
        %971 = vst [vmem:[%s273 + $0x78] sm:$0xf] %v970
        %972 = vst [vmem:[%s273 + $0x7c] sm:$0xf] %v762
        %v973 = vld [vmem:[%s273 + $0x80] sm:$0x1]
        %v974 = vsel %vm276, %v763, %v973
        %975 = vst [vmem:[%s273 + $0x80] sm:$0x1] %v974
        %v976 = vld [vmem:[%s273 + $0x84] sm:$0xf]
        %v977 = vsel %vm898, %v770, %v976
        %978 = vst [vmem:[%s273 + $0x84] sm:$0xf] %v977
        %979 = vst [vmem:[%s273 + $0x88] sm:$0xf] %v779
        %v980 = vld [vmem:[%s273 + $0x8c] sm:$0x1]
        %v981 = vsel %vm276, %v780, %v980
        %982 = vst [vmem:[%s273 + $0x8c] sm:$0x1] %v981
        %v983 = vld [vmem:[%s273 + $0x90] sm:$0xf]
        %v984 = vsel %vm898, %v787, %v983
        %985 = vst [vmem:[%s273 + $0x90] sm:$0xf] %v984
        %986 = vst [vmem:[%s273 + $0x94] sm:$0xf] %v796
        %v987 = vld [vmem:[%s273 + $0x98] sm:$0x1]
        %v988 = vsel %vm276, %v797, %v987
        %989 = vst [vmem:[%s273 + $0x98] sm:$0x1] %v988
        %v990 = vld [vmem:[%s273 + $0x9c] sm:$0xf]
        %v991 = vsel %vm898, %v804, %v990
        %992 = vst [vmem:[%s273 + $0x9c] sm:$0xf] %v991
        %993 = vst [vmem:[%s273 + $0xa0] sm:$0xf] %v813
        %v994 = vld [vmem:[%s273 + $0xa4] sm:$0x1]
        %v995 = vsel %vm276, %v814, %v994
        %996 = vst [vmem:[%s273 + $0xa4] sm:$0x1] %v995
        %v997 = vld [vmem:[%s273 + $0xa8] sm:$0xf]
        %v998 = vsel %vm898, %v821, %v997
        %999 = vst [vmem:[%s273 + $0xa8] sm:$0xf] %v998
        %1000 = vst [vmem:[%s273 + $0xac] sm:$0xf] %v830
        %v1001 = vld [vmem:[%s273 + $0xb0] sm:$0x1]
        %v1002 = vsel %vm276, %v831, %v1001
        %1003 = vst [vmem:[%s273 + $0xb0] sm:$0x1] %v1002
        %v1004 = vld [vmem:[%s273 + $0xb4] sm:$0xf]
        %v1005 = vsel %vm898, %v838, %v1004
        %1006 = vst [vmem:[%s273 + $0xb4] sm:$0xf] %v1005
        %1007 = vst [vmem:[%s273 + $0xb8] sm:$0xf] %v847
        %v1008 = vld [vmem:[%s273 + $0xbc] sm:$0x1]
        %v1009 = vsel %vm276, %v848, %v1008
        %1010 = vst [vmem:[%s273 + $0xbc] sm:$0x1] %v1009
        %1011 = vst [vmem:[%s260] sm:$0x3] 0.0
      $region40: #{tripple_conv.5} parent=35 // pred_fallthru
        _
      %s1012 = smul.u32 %s22, 16
      %s1013 = smul.u32 %s1012, 3
      %s1014 = smul.addr %s1013, 4
      %s1015 = scalar_lea.vmem [#allocation2], %s1014
      %v1016 = vld [vmem:[%s1015] sm:$0xf]
      %v1017 = vld [vmem:[%s1015 + $0x4] sm:$0xf]
      %v1018 = vld [vmem:[%s1015 + $0xc] sm:$0xf]
      %v1019 = vld [vmem:[%s1015 + $0x10] sm:$0xf]
      %v1020 = vld [vmem:[%s1015 + $0x18] sm:$0xf]
      %v1021 = vld [vmem:[%s1015 + $0x1c] sm:$0xf]
      %v1022 = vld [vmem:[%s1015 + $0x24] sm:$0xf]
      %v1023 = vld [vmem:[%s1015 + $0x28] sm:$0xf]
      %v1024 = vld [vmem:[%s1015 + $0x30] sm:$0xf]
      %v1025 = vld [vmem:[%s1015 + $0x34] sm:$0xf]
      %v1026 = vld [vmem:[%s1015 + $0x3c] sm:$0xf]
      %v1027 = vld [vmem:[%s1015 + $0x40] sm:$0xf]
      %v1028 = vld [vmem:[%s1015 + $0x48] sm:$0xf]
      %v1029 = vld [vmem:[%s1015 + $0x4c] sm:$0xf]
      %v1030 = vld [vmem:[%s1015 + $0x54] sm:$0xf]
      %v1031 = vld [vmem:[%s1015 + $0x58] sm:$0xf]
      %v1032 = vld [vmem:[%s1015 + $0x60] sm:$0xf]
      %v1033 = vld [vmem:[%s1015 + $0x64] sm:$0xf]
      %v1034 = vld [vmem:[%s1015 + $0x6c] sm:$0xf]
      %v1035 = vld [vmem:[%s1015 + $0x70] sm:$0xf]
      %v1036 = vld [vmem:[%s1015 + $0x78] sm:$0xf]
      %v1037 = vld [vmem:[%s1015 + $0x7c] sm:$0xf]
      %v1038 = vld [vmem:[%s1015 + $0x84] sm:$0xf]
      %v1039 = vld [vmem:[%s1015 + $0x88] sm:$0xf]
      %v1040 = vld [vmem:[%s1015 + $0x90] sm:$0xf]
      %v1041 = vld [vmem:[%s1015 + $0x94] sm:$0xf]
      %v1042 = vld [vmem:[%s1015 + $0x9c] sm:$0xf]
      %v1043 = vld [vmem:[%s1015 + $0xa0] sm:$0xf]
      %v1044 = vld [vmem:[%s1015 + $0xa8] sm:$0xf]
      %v1045 = vld [vmem:[%s1015 + $0xac] sm:$0xf]
      %v1046 = vld [vmem:[%s1015 + $0xb4] sm:$0xf]
      %v1047 = vld [vmem:[%s1015 + $0xb8] sm:$0xf]
      %v1048 = vld [vmem:[%s3] sm:$0xf]
      %v1049 = vld [vmem:[%s3 + $0x4] sm:$0xf]
      %v1050 = vld [vmem:[%s3 + $0x8] sm:$0xf]
      %v1051 = vld [vmem:[%s3 + $0xc] sm:$0xf]
      %v1052 = vld [vmem:[%s3 + $0x10] sm:$0xf]
      %v1053 = vld [vmem:[%s3 + $0x14] sm:$0xf]
      %v1054 = vld [vmem:[%s3 + $0x18] sm:$0xf]
      %v1055 = vld [vmem:[%s3 + $0x1c] sm:$0xf]
      %v1056 = vld [vmem:[%s3 + $0x20] sm:$0xf]
      %v1057 = vld [vmem:[%s3 + $0x24] sm:$0xf]
      %v1058 = vld [vmem:[%s3 + $0x28] sm:$0xf]
      %v1059 = vld [vmem:[%s3 + $0x2c] sm:$0xf]
      %v1060 = vld [vmem:[%s3 + $0x30] sm:$0xf]
      %v1061 = vld [vmem:[%s3 + $0x34] sm:$0xf]
      %v1062 = vld [vmem:[%s3 + $0x38] sm:$0xf]
      %v1063 = vld [vmem:[%s3 + $0x3c] sm:$0xf]
      %v1064 = vld [vmem:[%s1015 + $0x8] sm:$0x1]
      %v1065 = vld [vmem:[%s1015 + $0x14] sm:$0x1]
      %v1066 = vld [vmem:[%s1015 + $0x20] sm:$0x1]
      %v1067 = vld [vmem:[%s1015 + $0x2c] sm:$0x1]
      %v1068 = vld [vmem:[%s1015 + $0x38] sm:$0x1]
      %v1069 = vld [vmem:[%s1015 + $0x44] sm:$0x1]
      %v1070 = vld [vmem:[%s1015 + $0x50] sm:$0x1]
      %v1071 = vld [vmem:[%s1015 + $0x5c] sm:$0x1]
      %v1072 = vld [vmem:[%s1015 + $0x68] sm:$0x1]
      %v1073 = vld [vmem:[%s1015 + $0x74] sm:$0x1]
      %v1074 = vld [vmem:[%s1015 + $0x80] sm:$0x1]
      %v1075 = vld [vmem:[%s1015 + $0x8c] sm:$0x1]
      %v1076 = vld [vmem:[%s1015 + $0x98] sm:$0x1]
      %v1077 = vld [vmem:[%s1015 + $0xa4] sm:$0x1]
      %v1078 = vld [vmem:[%s1015 + $0xb0] sm:$0x1]
      %v1079 = vld [vmem:[%s1015 + $0xbc] sm:$0x1]
      %vm1080 = vsmask.f32 3328
      %vm1081 = vsmask.f32 7440
      %vm1082 = vmor %vm1080, %vm1081
      %v1084 = vshrl.u32 %v1016, 16
      %v1086 = vrot.slane %v1084, 4
      %v1087 = vshll.u32 %v1016, 16
      %v1089 = vrot.slane %v1087, 5
      %v1090 = vor.u32 %v1086, %v1089
      %v1091 = vrot.slane %v1090, 4
      %v1093 = vshll.u32 %v1017, 16
      %v1095 = vrot.slane %v1093, 5
      %v1096 = vsel %vm1082, %v1091, %v1095
      %v1097 = vshrl.u32 %v1017, 16
      %v1099 = vrot.slane %v1097, 4
      %v1100 = vor.u32 %v1099, %v1095
      %v1101 = vrot.slane %v1100, 4
      %v1103 = vshll.u32 %v1064, 16
      %v1105 = vrot.slane %v1103, 5
      %v1106 = vsel %vm1082, %v1101, %v1105
      %v1108 = vshrl.u32 %v1018, 16
      %v1110 = vrot.slane %v1108, 4
      %v1111 = vshll.u32 %v1018, 16
      %v1113 = vrot.slane %v1111, 5
      %v1114 = vor.u32 %v1110, %v1113
      %v1115 = vrot.slane %v1114, 4
      %v1117 = vshll.u32 %v1019, 16
      %v1119 = vrot.slane %v1117, 5
      %v1120 = vsel %vm1082, %v1115, %v1119
      %v1121 = vshrl.u32 %v1019, 16
      %v1123 = vrot.slane %v1121, 4
      %v1124 = vor.u32 %v1123, %v1119
      %v1125 = vrot.slane %v1124, 4
      %v1127 = vshll.u32 %v1065, 16
      %v1129 = vrot.slane %v1127, 5
      %v1130 = vsel %vm1082, %v1125, %v1129
      %v1132 = vshrl.u32 %v1020, 16
      %v1134 = vrot.slane %v1132, 4
      %v1135 = vshll.u32 %v1020, 16
      %v1137 = vrot.slane %v1135, 5
      %v1138 = vor.u32 %v1134, %v1137
      %v1139 = vrot.slane %v1138, 4
      %v1141 = vshll.u32 %v1021, 16
      %v1143 = vrot.slane %v1141, 5
      %v1144 = vsel %vm1082, %v1139, %v1143
      %v1145 = vshrl.u32 %v1021, 16
      %v1147 = vrot.slane %v1145, 4
      %v1148 = vor.u32 %v1147, %v1143
      %v1149 = vrot.slane %v1148, 4
      %v1151 = vshll.u32 %v1066, 16
      %v1153 = vrot.slane %v1151, 5
      %v1154 = vsel %vm1082, %v1149, %v1153
      %v1156 = vshrl.u32 %v1022, 16
      %v1158 = vrot.slane %v1156, 4
      %v1159 = vshll.u32 %v1022, 16
      %v1161 = vrot.slane %v1159, 5
      %v1162 = vor.u32 %v1158, %v1161
      %v1163 = vrot.slane %v1162, 4
      %v1165 = vshll.u32 %v1023, 16
      %v1167 = vrot.slane %v1165, 5
      %v1168 = vsel %vm1082, %v1163, %v1167
      %v1169 = vshrl.u32 %v1023, 16
      %v1171 = vrot.slane %v1169, 4
      %v1172 = vor.u32 %v1171, %v1167
      %v1173 = vrot.slane %v1172, 4
      %v1175 = vshll.u32 %v1067, 16
      %v1177 = vrot.slane %v1175, 5
      %v1178 = vsel %vm1082, %v1173, %v1177
      %v1180 = vshrl.u32 %v1024, 16
      %v1182 = vrot.slane %v1180, 4
      %v1183 = vshll.u32 %v1024, 16
      %v1185 = vrot.slane %v1183, 5
      %v1186 = vor.u32 %v1182, %v1185
      %v1187 = vrot.slane %v1186, 4
      %v1189 = vshll.u32 %v1025, 16
      %v1191 = vrot.slane %v1189, 5
      %v1192 = vsel %vm1082, %v1187, %v1191
      %v1193 = vshrl.u32 %v1025, 16
      %v1195 = vrot.slane %v1193, 4
      %v1196 = vor.u32 %v1195, %v1191
      %v1197 = vrot.slane %v1196, 4
      %v1199 = vshll.u32 %v1068, 16
      %v1201 = vrot.slane %v1199, 5
      %v1202 = vsel %vm1082, %v1197, %v1201
      %v1204 = vshrl.u32 %v1026, 16
      %v1206 = vrot.slane %v1204, 4
      %v1207 = vshll.u32 %v1026, 16
      %v1209 = vrot.slane %v1207, 5
      %v1210 = vor.u32 %v1206, %v1209
      %v1211 = vrot.slane %v1210, 4
      %v1213 = vshll.u32 %v1027, 16
      %v1215 = vrot.slane %v1213, 5
      %v1216 = vsel %vm1082, %v1211, %v1215
      %v1217 = vshrl.u32 %v1027, 16
      %v1219 = vrot.slane %v1217, 4
      %v1220 = vor.u32 %v1219, %v1215
      %v1221 = vrot.slane %v1220, 4
      %v1223 = vshll.u32 %v1069, 16
      %v1225 = vrot.slane %v1223, 5
      %v1226 = vsel %vm1082, %v1221, %v1225
      %v1228 = vshrl.u32 %v1028, 16
      %v1230 = vrot.slane %v1228, 4
      %v1231 = vshll.u32 %v1028, 16
      %v1233 = vrot.slane %v1231, 5
      %v1234 = vor.u32 %v1230, %v1233
      %v1235 = vrot.slane %v1234, 4
      %v1237 = vshll.u32 %v1029, 16
      %v1239 = vrot.slane %v1237, 5
      %v1240 = vsel %vm1082, %v1235, %v1239
      %v1241 = vshrl.u32 %v1029, 16
      %v1243 = vrot.slane %v1241, 4
      %v1244 = vor.u32 %v1243, %v1239
      %v1245 = vrot.slane %v1244, 4
      %v1247 = vshll.u32 %v1070, 16
      %v1249 = vrot.slane %v1247, 5
      %v1250 = vsel %vm1082, %v1245, %v1249
      %v1252 = vshrl.u32 %v1030, 16
      %v1254 = vrot.slane %v1252, 4
      %v1255 = vshll.u32 %v1030, 16
      %v1257 = vrot.slane %v1255, 5
      %v1258 = vor.u32 %v1254, %v1257
      %v1259 = vrot.slane %v1258, 4
      %v1261 = vshll.u32 %v1031, 16
      %v1263 = vrot.slane %v1261, 5
      %v1264 = vsel %vm1082, %v1259, %v1263
      %v1265 = vshrl.u32 %v1031, 16
      %v1267 = vrot.slane %v1265, 4
      %v1268 = vor.u32 %v1267, %v1263
      %v1269 = vrot.slane %v1268, 4
      %v1271 = vshll.u32 %v1071, 16
      %v1273 = vrot.slane %v1271, 5
      %v1274 = vsel %vm1082, %v1269, %v1273
      %v1276 = vshrl.u32 %v1032, 16
      %v1278 = vrot.slane %v1276, 4
      %v1279 = vshll.u32 %v1032, 16
      %v1281 = vrot.slane %v1279, 5
      %v1282 = vor.u32 %v1278, %v1281
      %v1283 = vrot.slane %v1282, 4
      %v1285 = vshll.u32 %v1033, 16
      %v1287 = vrot.slane %v1285, 5
      %v1288 = vsel %vm1082, %v1283, %v1287
      %v1289 = vshrl.u32 %v1033, 16
      %v1291 = vrot.slane %v1289, 4
      %v1292 = vor.u32 %v1291, %v1287
      %v1293 = vrot.slane %v1292, 4
      %v1295 = vshll.u32 %v1072, 16
      %v1297 = vrot.slane %v1295, 5
      %v1298 = vsel %vm1082, %v1293, %v1297
      %v1300 = vshrl.u32 %v1034, 16
      %v1302 = vrot.slane %v1300, 4
      %v1303 = vshll.u32 %v1034, 16
      %v1305 = vrot.slane %v1303, 5
      %v1306 = vor.u32 %v1302, %v1305
      %v1307 = vrot.slane %v1306, 4
      %v1309 = vshll.u32 %v1035, 16
      %v1311 = vrot.slane %v1309, 5
      %v1312 = vsel %vm1082, %v1307, %v1311
      %v1313 = vshrl.u32 %v1035, 16
      %v1315 = vrot.slane %v1313, 4
      %v1316 = vor.u32 %v1315, %v1311
      %v1317 = vrot.slane %v1316, 4
      %v1319 = vshll.u32 %v1073, 16
      %v1321 = vrot.slane %v1319, 5
      %v1322 = vsel %vm1082, %v1317, %v1321
      %v1324 = vshrl.u32 %v1036, 16
      %v1326 = vrot.slane %v1324, 4
      %v1327 = vshll.u32 %v1036, 16
      %v1329 = vrot.slane %v1327, 5
      %v1330 = vor.u32 %v1326, %v1329
      %v1331 = vrot.slane %v1330, 4
      %v1333 = vshll.u32 %v1037, 16
      %v1335 = vrot.slane %v1333, 5
      %v1336 = vsel %vm1082, %v1331, %v1335
      %v1337 = vshrl.u32 %v1037, 16
      %v1339 = vrot.slane %v1337, 4
      %v1340 = vor.u32 %v1339, %v1335
      %v1341 = vrot.slane %v1340, 4
      %v1343 = vshll.u32 %v1074, 16
      %v1345 = vrot.slane %v1343, 5
      %v1346 = vsel %vm1082, %v1341, %v1345
      %v1348 = vshrl.u32 %v1038, 16
      %v1350 = vrot.slane %v1348, 4
      %v1351 = vshll.u32 %v1038, 16
      %v1353 = vrot.slane %v1351, 5
      %v1354 = vor.u32 %v1350, %v1353
      %v1355 = vrot.slane %v1354, 4
      %v1357 = vshll.u32 %v1039, 16
      %v1359 = vrot.slane %v1357, 5
      %v1360 = vsel %vm1082, %v1355, %v1359
      %v1361 = vshrl.u32 %v1039, 16
      %v1363 = vrot.slane %v1361, 4
      %v1364 = vor.u32 %v1363, %v1359
      %v1365 = vrot.slane %v1364, 4
      %v1367 = vshll.u32 %v1075, 16
      %v1369 = vrot.slane %v1367, 5
      %v1370 = vsel %vm1082, %v1365, %v1369
      %v1372 = vshrl.u32 %v1040, 16
      %v1374 = vrot.slane %v1372, 4
      %v1375 = vshll.u32 %v1040, 16
      %v1377 = vrot.slane %v1375, 5
      %v1378 = vor.u32 %v1374, %v1377
      %v1379 = vrot.slane %v1378, 4
      %v1381 = vshll.u32 %v1041, 16
      %v1383 = vrot.slane %v1381, 5
      %v1384 = vsel %vm1082, %v1379, %v1383
      %v1385 = vshrl.u32 %v1041, 16
      %v1387 = vrot.slane %v1385, 4
      %v1388 = vor.u32 %v1387, %v1383
      %v1389 = vrot.slane %v1388, 4
      %v1391 = vshll.u32 %v1076, 16
      %v1393 = vrot.slane %v1391, 5
      %v1394 = vsel %vm1082, %v1389, %v1393
      %v1396 = vshrl.u32 %v1042, 16
      %v1398 = vrot.slane %v1396, 4
      %v1399 = vshll.u32 %v1042, 16
      %v1401 = vrot.slane %v1399, 5
      %v1402 = vor.u32 %v1398, %v1401
      %v1403 = vrot.slane %v1402, 4
      %v1405 = vshll.u32 %v1043, 16
      %v1407 = vrot.slane %v1405, 5
      %v1408 = vsel %vm1082, %v1403, %v1407
      %v1409 = vshrl.u32 %v1043, 16
      %v1411 = vrot.slane %v1409, 4
      %v1412 = vor.u32 %v1411, %v1407
      %v1413 = vrot.slane %v1412, 4
      %v1415 = vshll.u32 %v1077, 16
      %v1417 = vrot.slane %v1415, 5
      %v1418 = vsel %vm1082, %v1413, %v1417
      %v1420 = vshrl.u32 %v1044, 16
      %v1422 = vrot.slane %v1420, 4
      %v1423 = vshll.u32 %v1044, 16
      %v1425 = vrot.slane %v1423, 5
      %v1426 = vor.u32 %v1422, %v1425
      %v1427 = vrot.slane %v1426, 4
      %v1429 = vshll.u32 %v1045, 16
      %v1431 = vrot.slane %v1429, 5
      %v1432 = vsel %vm1082, %v1427, %v1431
      %v1433 = vshrl.u32 %v1045, 16
      %v1435 = vrot.slane %v1433, 4
      %v1436 = vor.u32 %v1435, %v1431
      %v1437 = vrot.slane %v1436, 4
      %v1439 = vshll.u32 %v1078, 16
      %v1441 = vrot.slane %v1439, 5
      %v1442 = vsel %vm1082, %v1437, %v1441
      %v1444 = vshrl.u32 %v1046, 16
      %v1446 = vrot.slane %v1444, 4
      %v1447 = vshll.u32 %v1046, 16
      %v1449 = vrot.slane %v1447, 5
      %v1450 = vor.u32 %v1446, %v1449
      %v1451 = vrot.slane %v1450, 4
      %v1453 = vshll.u32 %v1047, 16
      %v1455 = vrot.slane %v1453, 5
      %v1456 = vsel %vm1082, %v1451, %v1455
      %v1457 = vshrl.u32 %v1047, 16
      %v1459 = vrot.slane %v1457, 4
      %v1460 = vor.u32 %v1459, %v1455
      %v1461 = vrot.slane %v1460, 4
      %v1463 = vshll.u32 %v1079, 16
      %v1465 = vrot.slane %v1463, 5
      %v1466 = vsel %vm1082, %v1461, %v1465
      %s1467 = scalar_lea.vmem %s3, 64
      %v1468 = vld [vmem:[%s1467] sm:$0xf]
      %v1469 = vld [vmem:[%s1467 + $0x4] sm:$0xf]
      %v1470 = vld [vmem:[%s1467 + $0x8] sm:$0xf]
      %v1471 = vld [vmem:[%s1467 + $0xc] sm:$0xf]
      %v1472 = vld [vmem:[%s1467 + $0x10] sm:$0xf]
      %v1473 = vld [vmem:[%s1467 + $0x14] sm:$0xf]
      %v1474 = vld [vmem:[%s1467 + $0x18] sm:$0xf]
      %v1475 = vld [vmem:[%s1467 + $0x1c] sm:$0xf]
      %v1476 = vld [vmem:[%s1467 + $0x20] sm:$0xf]
      %v1477 = vld [vmem:[%s1467 + $0x24] sm:$0xf]
      %v1478 = vld [vmem:[%s1467 + $0x28] sm:$0xf]
      %v1479 = vld [vmem:[%s1467 + $0x2c] sm:$0xf]
      %v1480 = vld [vmem:[%s1467 + $0x30] sm:$0xf]
      %v1481 = vld [vmem:[%s1467 + $0x34] sm:$0xf]
      %v1482 = vld [vmem:[%s1467 + $0x38] sm:$0xf]
      %v1483 = vld [vmem:[%s1467 + $0x3c] sm:$0xf]
      %v1484 = vunpack.c.l.b16 %v1096
      %v1485 = vunpack.c.l.b16 %v1106
      %v1486 = vunpack.c.l.b16 %v1120
      %v1487 = vunpack.c.l.b16 %v1130
      %v1488 = vunpack.c.l.b16 %v1144
      %v1489 = vunpack.c.l.b16 %v1154
      %v1490 = vunpack.c.l.b16 %v1168
      %v1491 = vunpack.c.l.b16 %v1178
      %v1492 = vunpack.c.l.b16 %v1192
      %v1493 = vunpack.c.l.b16 %v1202
      %v1494 = vunpack.c.l.b16 %v1216
      %v1495 = vunpack.c.l.b16 %v1226
      %v1496 = vunpack.c.l.b16 %v1240
      %v1497 = vunpack.c.l.b16 %v1250
      %v1498 = vunpack.c.l.b16 %v1264
      %v1499 = vunpack.c.l.b16 %v1274
      %v1500 = vunpack.c.l.b16 %v1288
      %v1501 = vunpack.c.l.b16 %v1298
      %v1502 = vunpack.c.l.b16 %v1312
      %v1503 = vunpack.c.l.b16 %v1322
      %v1504 = vunpack.c.l.b16 %v1336
      %v1505 = vunpack.c.l.b16 %v1346
      %v1506 = vunpack.c.l.b16 %v1360
      %v1507 = vunpack.c.l.b16 %v1370
      %v1508 = vunpack.c.l.b16 %v1384
      %v1509 = vunpack.c.l.b16 %v1394
      %v1510 = vunpack.c.l.b16 %v1408
      %v1511 = vunpack.c.l.b16 %v1418
      %v1512 = vunpack.c.l.b16 %v1432
      %v1513 = vunpack.c.l.b16 %v1442
      %v1514 = vunpack.c.l.b16 %v1456
      %v1515 = vunpack.c.l.b16 %v1466
      %v1516 = vpack.c.b16 %v1485, %v1484
      %v1517 = vpack.c.b16 %v1487, %v1486
      %v1518 = vpack.c.b16 %v1489, %v1488
      %v1519 = vpack.c.b16 %v1491, %v1490
      %v1520 = vpack.c.b16 %v1493, %v1492
      %v1521 = vpack.c.b16 %v1495, %v1494
      %v1522 = vpack.c.b16 %v1497, %v1496
      %v1523 = vpack.c.b16 %v1499, %v1498
      %v1524 = vpack.c.b16 %v1501, %v1500
      %v1525 = vpack.c.b16 %v1503, %v1502
      %v1526 = vpack.c.b16 %v1505, %v1504
      %v1527 = vpack.c.b16 %v1507, %v1506
      %v1528 = vpack.c.b16 %v1509, %v1508
      %v1529 = vpack.c.b16 %v1511, %v1510
      %v1530 = vpack.c.b16 %v1513, %v1512
      %v1531 = vpack.c.b16 %v1515, %v1514
      %v1564 = vunpack.c.l.b16 %v1468
      %v1565 = vunpack.c.l.b16 %v1469
      %v1566 = vunpack.c.l.b16 %v1470
      %v1567 = vunpack.c.l.b16 %v1471
      %v1568 = vunpack.c.l.b16 %v1472
      %v1569 = vunpack.c.l.b16 %v1473
      %v1570 = vunpack.c.l.b16 %v1474
      %v1571 = vunpack.c.l.b16 %v1475
      %v1572 = vunpack.c.l.b16 %v1476
      %v1573 = vunpack.c.l.b16 %v1477
      %v1574 = vunpack.c.l.b16 %v1478
      %v1575 = vunpack.c.l.b16 %v1479
      %v1576 = vunpack.c.l.b16 %v1480
      %v1577 = vunpack.c.l.b16 %v1481
      %v1578 = vunpack.c.l.b16 %v1482
      %v1579 = vunpack.c.l.b16 %v1483
      %v1580 = vpack.c.b16 %v1565, %v1564
      %v1581 = vpack.c.b16 %v1567, %v1566
      %v1582 = vpack.c.b16 %v1569, %v1568
      %v1583 = vpack.c.b16 %v1571, %v1570
      %v1584 = vpack.c.b16 %v1573, %v1572
      %v1585 = vpack.c.b16 %v1575, %v1574
      %v1586 = vpack.c.b16 %v1577, %v1576
      %v1587 = vpack.c.b16 %v1579, %v1578
      %1596 = vmatpush.bf16.msra.mxu0 %v1587
      %1597 = vmatpush.bf16.msra.mxu0 %v1586
      %1598 = vmatpush.bf16.msra.mxu0 %v1585
      %1599 = vmatpush.bf16.msra.mxu0 %v1584
      %1600 = vmatpush.bf16.msra.mxu0 %v1583
      %1601 = vmatpush.bf16.msra.mxu0 %v1582
      %1602 = vmatpush.bf16.msra.mxu0 %v1581
      %1603 = vmatpush.bf16.msra.mxu0 %v1580
      %1604 = vmatmul.bf16.gmra.mxu0 %v1516
      %v1605 = vpop.f32.mrf.mxu0
      %v1606 = vadd.f32 0.0, %v1605
      %v1607 = vpop.f32.mrf.mxu0
      %v1608 = vadd.f32 0.0, %v1607
      %1609 = vmatmul.bf16.gmra.mxu0 %v1517
      %v1610 = vpop.f32.mrf.mxu0
      %v1611 = vadd.f32 0.0, %v1610
      %v1612 = vpop.f32.mrf.mxu0
      %v1613 = vadd.f32 0.0, %v1612
      %1614 = vmatmul.bf16.gmra.mxu0 %v1518
      %v1615 = vpop.f32.mrf.mxu0
      %v1616 = vadd.f32 0.0, %v1615
      %v1617 = vpop.f32.mrf.mxu0
      %v1618 = vadd.f32 0.0, %v1617
      %1619 = vmatmul.bf16.gmra.mxu0 %v1519
      %v1620 = vpop.f32.mrf.mxu0
      %v1621 = vadd.f32 0.0, %v1620
      %v1622 = vpop.f32.mrf.mxu0
      %v1623 = vadd.f32 0.0, %v1622
      %1624 = vmatmul.bf16.gmra.mxu0 %v1520
      %v1625 = vpop.f32.mrf.mxu0
      %v1626 = vadd.f32 0.0, %v1625
      %v1627 = vpop.f32.mrf.mxu0
      %v1628 = vadd.f32 0.0, %v1627
      %1629 = vmatmul.bf16.gmra.mxu0 %v1521
      %v1630 = vpop.f32.mrf.mxu0
      %v1631 = vadd.f32 0.0, %v1630
      %v1632 = vpop.f32.mrf.mxu0
      %v1633 = vadd.f32 0.0, %v1632
      %1634 = vmatmul.bf16.gmra.mxu0 %v1522
      %v1635 = vpop.f32.mrf.mxu0
      %v1636 = vadd.f32 0.0, %v1635
      %v1637 = vpop.f32.mrf.mxu0
      %v1638 = vadd.f32 0.0, %v1637
      %1639 = vmatmul.bf16.gmra.mxu0 %v1523
      %v1640 = vpop.f32.mrf.mxu0
      %v1641 = vadd.f32 0.0, %v1640
      %v1642 = vpop.f32.mrf.mxu0
      %v1643 = vadd.f32 0.0, %v1642
      %1644 = vmatmul.bf16.gmra.mxu0 %v1524
      %v1645 = vpop.f32.mrf.mxu0
      %v1646 = vadd.f32 0.0, %v1645
      %v1647 = vpop.f32.mrf.mxu0
      %v1648 = vadd.f32 0.0, %v1647
      %1649 = vmatmul.bf16.gmra.mxu0 %v1525
      %v1650 = vpop.f32.mrf.mxu0
      %v1651 = vadd.f32 0.0, %v1650
      %v1652 = vpop.f32.mrf.mxu0
      %v1653 = vadd.f32 0.0, %v1652
      %1654 = vmatmul.bf16.gmra.mxu0 %v1526
      %v1655 = vpop.f32.mrf.mxu0
      %v1656 = vadd.f32 0.0, %v1655
      %v1657 = vpop.f32.mrf.mxu0
      %v1658 = vadd.f32 0.0, %v1657
      %1659 = vmatmul.bf16.gmra.mxu0 %v1527
      %v1660 = vpop.f32.mrf.mxu0
      %v1661 = vadd.f32 0.0, %v1660
      %v1662 = vpop.f32.mrf.mxu0
      %v1663 = vadd.f32 0.0, %v1662
      %1664 = vmatmul.bf16.gmra.mxu0 %v1528
      %v1665 = vpop.f32.mrf.mxu0
      %v1666 = vadd.f32 0.0, %v1665
      %v1667 = vpop.f32.mrf.mxu0
      %v1668 = vadd.f32 0.0, %v1667
      %1669 = vmatmul.bf16.gmra.mxu0 %v1529
      %v1670 = vpop.f32.mrf.mxu0
      %v1671 = vadd.f32 0.0, %v1670
      %v1672 = vpop.f32.mrf.mxu0
      %v1673 = vadd.f32 0.0, %v1672
      %1674 = vmatmul.bf16.gmra.mxu0 %v1530
      %v1675 = vpop.f32.mrf.mxu0
      %v1676 = vadd.f32 0.0, %v1675
      %v1677 = vpop.f32.mrf.mxu0
      %v1678 = vadd.f32 0.0, %v1677
      %1679 = vmatmul.bf16.gmra.mxu0 %v1531
      %v1680 = vpop.f32.mrf.mxu0
      %v1681 = vadd.f32 0.0, %v1680
      %v1682 = vpop.f32.mrf.mxu0
      %v1683 = vadd.f32 0.0, %v1682
      %1684 = vdwg.mxu0
      %v1717 = vunpack.c.l.b16 %v1016
      %v1718 = vunpack.c.l.b16 %v1017
      %v1719 = vunpack.c.l.b16 %v1018
      %v1720 = vunpack.c.l.b16 %v1019
      %v1721 = vunpack.c.l.b16 %v1020
      %v1722 = vunpack.c.l.b16 %v1021
      %v1723 = vunpack.c.l.b16 %v1022
      %v1724 = vunpack.c.l.b16 %v1023
      %v1725 = vunpack.c.l.b16 %v1024
      %v1726 = vunpack.c.l.b16 %v1025
      %v1727 = vunpack.c.l.b16 %v1026
      %v1728 = vunpack.c.l.b16 %v1027
      %v1729 = vunpack.c.l.b16 %v1028
      %v1730 = vunpack.c.l.b16 %v1029
      %v1731 = vunpack.c.l.b16 %v1030
      %v1732 = vunpack.c.l.b16 %v1031
      %v1733 = vunpack.c.l.b16 %v1032
      %v1734 = vunpack.c.l.b16 %v1033
      %v1735 = vunpack.c.l.b16 %v1034
      %v1736 = vunpack.c.l.b16 %v1035
      %v1737 = vunpack.c.l.b16 %v1036
      %v1738 = vunpack.c.l.b16 %v1037
      %v1739 = vunpack.c.l.b16 %v1038
      %v1740 = vunpack.c.l.b16 %v1039
      %v1741 = vunpack.c.l.b16 %v1040
      %v1742 = vunpack.c.l.b16 %v1041
      %v1743 = vunpack.c.l.b16 %v1042
      %v1744 = vunpack.c.l.b16 %v1043
      %v1745 = vunpack.c.l.b16 %v1044
      %v1746 = vunpack.c.l.b16 %v1045
      %v1747 = vunpack.c.l.b16 %v1046
      %v1748 = vunpack.c.l.b16 %v1047
      %v1749 = vpack.c.b16 %v1718, %v1717
      %v1750 = vpack.c.b16 %v1720, %v1719
      %v1751 = vpack.c.b16 %v1722, %v1721
      %v1752 = vpack.c.b16 %v1724, %v1723
      %v1753 = vpack.c.b16 %v1726, %v1725
      %v1754 = vpack.c.b16 %v1728, %v1727
      %v1755 = vpack.c.b16 %v1730, %v1729
      %v1756 = vpack.c.b16 %v1732, %v1731
      %v1757 = vpack.c.b16 %v1734, %v1733
      %v1758 = vpack.c.b16 %v1736, %v1735
      %v1759 = vpack.c.b16 %v1738, %v1737
      %v1760 = vpack.c.b16 %v1740, %v1739
      %v1761 = vpack.c.b16 %v1742, %v1741
      %v1762 = vpack.c.b16 %v1744, %v1743
      %v1763 = vpack.c.b16 %v1746, %v1745
      %v1764 = vpack.c.b16 %v1748, %v1747
      %v1797 = vunpack.c.l.b16 %v1048
      %v1798 = vunpack.c.l.b16 %v1049
      %v1799 = vunpack.c.l.b16 %v1050
      %v1800 = vunpack.c.l.b16 %v1051
      %v1801 = vunpack.c.l.b16 %v1052
      %v1802 = vunpack.c.l.b16 %v1053
      %v1803 = vunpack.c.l.b16 %v1054
      %v1804 = vunpack.c.l.b16 %v1055
      %v1805 = vunpack.c.l.b16 %v1056
      %v1806 = vunpack.c.l.b16 %v1057
      %v1807 = vunpack.c.l.b16 %v1058
      %v1808 = vunpack.c.l.b16 %v1059
      %v1809 = vunpack.c.l.b16 %v1060
      %v1810 = vunpack.c.l.b16 %v1061
      %v1811 = vunpack.c.l.b16 %v1062
      %v1812 = vunpack.c.l.b16 %v1063
      %v1813 = vpack.c.b16 %v1798, %v1797
      %v1814 = vpack.c.b16 %v1800, %v1799
      %v1815 = vpack.c.b16 %v1802, %v1801
      %v1816 = vpack.c.b16 %v1804, %v1803
      %v1817 = vpack.c.b16 %v1806, %v1805
      %v1818 = vpack.c.b16 %v1808, %v1807
      %v1819 = vpack.c.b16 %v1810, %v1809
      %v1820 = vpack.c.b16 %v1812, %v1811
      %1829 = vmatpush.bf16.msra.mxu0 %v1820
      %1830 = vmatpush.bf16.msra.mxu0 %v1819
      %1831 = vmatpush.bf16.msra.mxu0 %v1818
      %1832 = vmatpush.bf16.msra.mxu0 %v1817
      %1833 = vmatpush.bf16.msra.mxu0 %v1816
      %1834 = vmatpush.bf16.msra.mxu0 %v1815
      %1835 = vmatpush.bf16.msra.mxu0 %v1814
      %1836 = vmatpush.bf16.msra.mxu0 %v1813
      %1837 = vmatmul.bf16.gmra.mxu0 %v1749
      %v1838 = vpop.f32.mrf.mxu0
      %v1839 = vadd.f32 %v1606, %v1838
      %v1840 = vpop.f32.mrf.mxu0
      %v1841 = vadd.f32 %v1608, %v1840
      %1842 = vmatmul.bf16.gmra.mxu0 %v1750
      %v1843 = vpop.f32.mrf.mxu0
      %v1844 = vadd.f32 %v1611, %v1843
      %v1845 = vpop.f32.mrf.mxu0
      %v1846 = vadd.f32 %v1613, %v1845
      %1847 = vmatmul.bf16.gmra.mxu0 %v1751
      %v1848 = vpop.f32.mrf.mxu0
      %v1849 = vadd.f32 %v1616, %v1848
      %v1850 = vpop.f32.mrf.mxu0
      %v1851 = vadd.f32 %v1618, %v1850
      %1852 = vmatmul.bf16.gmra.mxu0 %v1752
      %v1853 = vpop.f32.mrf.mxu0
      %v1854 = vadd.f32 %v1621, %v1853
      %v1855 = vpop.f32.mrf.mxu0
      %v1856 = vadd.f32 %v1623, %v1855
      %1857 = vmatmul.bf16.gmra.mxu0 %v1753
      %v1858 = vpop.f32.mrf.mxu0
      %v1859 = vadd.f32 %v1626, %v1858
      %v1860 = vpop.f32.mrf.mxu0
      %v1861 = vadd.f32 %v1628, %v1860
      %1862 = vmatmul.bf16.gmra.mxu0 %v1754
      %v1863 = vpop.f32.mrf.mxu0
      %v1864 = vadd.f32 %v1631, %v1863
      %v1865 = vpop.f32.mrf.mxu0
      %v1866 = vadd.f32 %v1633, %v1865
      %1867 = vmatmul.bf16.gmra.mxu0 %v1755
      %v1868 = vpop.f32.mrf.mxu0
      %v1869 = vadd.f32 %v1636, %v1868
      %v1870 = vpop.f32.mrf.mxu0
      %v1871 = vadd.f32 %v1638, %v1870
      %1872 = vmatmul.bf16.gmra.mxu0 %v1756
      %v1873 = vpop.f32.mrf.mxu0
      %v1874 = vadd.f32 %v1641, %v1873
      %v1875 = vpop.f32.mrf.mxu0
      %v1876 = vadd.f32 %v1643, %v1875
      %1877 = vmatmul.bf16.gmra.mxu0 %v1757
      %v1878 = vpop.f32.mrf.mxu0
      %v1879 = vadd.f32 %v1646, %v1878
      %v1880 = vpop.f32.mrf.mxu0
      %v1881 = vadd.f32 %v1648, %v1880
      %1882 = vmatmul.bf16.gmra.mxu0 %v1758
      %v1883 = vpop.f32.mrf.mxu0
      %v1884 = vadd.f32 %v1651, %v1883
      %v1885 = vpop.f32.mrf.mxu0
      %v1886 = vadd.f32 %v1653, %v1885
      %1887 = vmatmul.bf16.gmra.mxu0 %v1759
      %v1888 = vpop.f32.mrf.mxu0
      %v1889 = vadd.f32 %v1656, %v1888
      %v1890 = vpop.f32.mrf.mxu0
      %v1891 = vadd.f32 %v1658, %v1890
      %1892 = vmatmul.bf16.gmra.mxu0 %v1760
      %v1893 = vpop.f32.mrf.mxu0
      %v1894 = vadd.f32 %v1661, %v1893
      %v1895 = vpop.f32.mrf.mxu0
      %v1896 = vadd.f32 %v1663, %v1895
      %1897 = vmatmul.bf16.gmra.mxu0 %v1761
      %v1898 = vpop.f32.mrf.mxu0
      %v1899 = vadd.f32 %v1666, %v1898
      %v1900 = vpop.f32.mrf.mxu0
      %v1901 = vadd.f32 %v1668, %v1900
      %1902 = vmatmul.bf16.gmra.mxu0 %v1762
      %v1903 = vpop.f32.mrf.mxu0
      %v1904 = vadd.f32 %v1671, %v1903
      %v1905 = vpop.f32.mrf.mxu0
      %v1906 = vadd.f32 %v1673, %v1905
      %1907 = vmatmul.bf16.gmra.mxu0 %v1763
      %v1908 = vpop.f32.mrf.mxu0
      %v1909 = vadd.f32 %v1676, %v1908
      %v1910 = vpop.f32.mrf.mxu0
      %v1911 = vadd.f32 %v1678, %v1910
      %1912 = vmatmul.bf16.gmra.mxu0 %v1764
      %v1913 = vpop.f32.mrf.mxu0
      %v1914 = vadd.f32 %v1681, %v1913
      %v1915 = vpop.f32.mrf.mxu0
      %v1916 = vadd.f32 %v1683, %v1915
      %1917 = vdwg.mxu0
      %v1918 = vld [vmem:[%s1015] sm:$0xe]
      %v1919 = vld [vmem:[%s1015 + $0xc] sm:$0xe]
      %v1920 = vld [vmem:[%s1015 + $0x18] sm:$0xe]
      %v1921 = vld [vmem:[%s1015 + $0x24] sm:$0xe]
      %v1922 = vld [vmem:[%s1015 + $0x30] sm:$0xe]
      %v1923 = vld [vmem:[%s1015 + $0x3c] sm:$0xe]
      %v1924 = vld [vmem:[%s1015 + $0x48] sm:$0xe]
      %v1925 = vld [vmem:[%s1015 + $0x54] sm:$0xe]
      %v1926 = vld [vmem:[%s1015 + $0x60] sm:$0xe]
      %v1927 = vld [vmem:[%s1015 + $0x6c] sm:$0xe]
      %v1928 = vld [vmem:[%s1015 + $0x78] sm:$0xe]
      %v1929 = vld [vmem:[%s1015 + $0x84] sm:$0xe]
      %v1930 = vld [vmem:[%s1015 + $0x90] sm:$0xe]
      %v1931 = vld [vmem:[%s1015 + $0x9c] sm:$0xe]
      %v1932 = vld [vmem:[%s1015 + $0xa8] sm:$0xe]
      %v1933 = vld [vmem:[%s1015 + $0xb4] sm:$0xe]
      %vm1966 = vcmask 1042432
      %vm1967 = vcmask 1046532
      %vm1968 = vmor %vm1966, %vm1967
      %v1969 = vrot.slane %v1918, 5
      %v1970 = vrot.slane %v1969, 4
      %v1971 = vrot.slane %v1017, 5
      %v1972 = vsel %vm1968, %v1970, %v1971
      %v1973 = vrot.slane %v1971, 4
      %v1974 = vrot.slane %v1064, 5
      %v1975 = vsel %vm1968, %v1973, %v1974
      %v1976 = vrot.slane %v1919, 5
      %v1977 = vrot.slane %v1976, 4
      %v1978 = vrot.slane %v1019, 5
      %v1979 = vsel %vm1968, %v1977, %v1978
      %v1980 = vrot.slane %v1978, 4
      %v1981 = vrot.slane %v1065, 5
      %v1982 = vsel %vm1968, %v1980, %v1981
      %v1983 = vrot.slane %v1920, 5
      %v1984 = vrot.slane %v1983, 4
      %v1985 = vrot.slane %v1021, 5
      %v1986 = vsel %vm1968, %v1984, %v1985
      %v1987 = vrot.slane %v1985, 4
      %v1988 = vrot.slane %v1066, 5
      %v1989 = vsel %vm1968, %v1987, %v1988
      %v1990 = vrot.slane %v1921, 5
      %v1991 = vrot.slane %v1990, 4
      %v1992 = vrot.slane %v1023, 5
      %v1993 = vsel %vm1968, %v1991, %v1992
      %v1994 = vrot.slane %v1992, 4
      %v1995 = vrot.slane %v1067, 5
      %v1996 = vsel %vm1968, %v1994, %v1995
      %v1997 = vrot.slane %v1922, 5
      %v1998 = vrot.slane %v1997, 4
      %v1999 = vrot.slane %v1025, 5
      %v2000 = vsel %vm1968, %v1998, %v1999
      %v2001 = vrot.slane %v1999, 4
      %v2002 = vrot.slane %v1068, 5
      %v2003 = vsel %vm1968, %v2001, %v2002
      %v2004 = vrot.slane %v1923, 5
      %v2005 = vrot.slane %v2004, 4
      %v2006 = vrot.slane %v1027, 5
      %v2007 = vsel %vm1968, %v2005, %v2006
      %v2008 = vrot.slane %v2006, 4
      %v2009 = vrot.slane %v1069, 5
      %v2010 = vsel %vm1968, %v2008, %v2009
      %v2011 = vrot.slane %v1924, 5
      %v2012 = vrot.slane %v2011, 4
      %v2013 = vrot.slane %v1029, 5
      %v2014 = vsel %vm1968, %v2012, %v2013
      %v2015 = vrot.slane %v2013, 4
      %v2016 = vrot.slane %v1070, 5
      %v2017 = vsel %vm1968, %v2015, %v2016
      %v2018 = vrot.slane %v1925, 5
      %v2019 = vrot.slane %v2018, 4
      %v2020 = vrot.slane %v1031, 5
      %v2021 = vsel %vm1968, %v2019, %v2020
      %v2022 = vrot.slane %v2020, 4
      %v2023 = vrot.slane %v1071, 5
      %v2024 = vsel %vm1968, %v2022, %v2023
      %v2025 = vrot.slane %v1926, 5
      %v2026 = vrot.slane %v2025, 4
      %v2027 = vrot.slane %v1033, 5
      %v2028 = vsel %vm1968, %v2026, %v2027
      %v2029 = vrot.slane %v2027, 4
      %v2030 = vrot.slane %v1072, 5
      %v2031 = vsel %vm1968, %v2029, %v2030
      %v2032 = vrot.slane %v1927, 5
      %v2033 = vrot.slane %v2032, 4
      %v2034 = vrot.slane %v1035, 5
      %v2035 = vsel %vm1968, %v2033, %v2034
      %v2036 = vrot.slane %v2034, 4
      %v2037 = vrot.slane %v1073, 5
      %v2038 = vsel %vm1968, %v2036, %v2037
      %v2039 = vrot.slane %v1928, 5
      %v2040 = vrot.slane %v2039, 4
      %v2041 = vrot.slane %v1037, 5
      %v2042 = vsel %vm1968, %v2040, %v2041
      %v2043 = vrot.slane %v2041, 4
      %v2044 = vrot.slane %v1074, 5
      %v2045 = vsel %vm1968, %v2043, %v2044
      %v2046 = vrot.slane %v1929, 5
      %v2047 = vrot.slane %v2046, 4
      %v2048 = vrot.slane %v1039, 5
      %v2049 = vsel %vm1968, %v2047, %v2048
      %v2050 = vrot.slane %v2048, 4
      %v2051 = vrot.slane %v1075, 5
      %v2052 = vsel %vm1968, %v2050, %v2051
      %v2053 = vrot.slane %v1930, 5
      %v2054 = vrot.slane %v2053, 4
      %v2055 = vrot.slane %v1041, 5
      %v2056 = vsel %vm1968, %v2054, %v2055
      %v2057 = vrot.slane %v2055, 4
      %v2058 = vrot.slane %v1076, 5
      %v2059 = vsel %vm1968, %v2057, %v2058
      %v2060 = vrot.slane %v1931, 5
      %v2061 = vrot.slane %v2060, 4
      %v2062 = vrot.slane %v1043, 5
      %v2063 = vsel %vm1968, %v2061, %v2062
      %v2064 = vrot.slane %v2062, 4
      %v2065 = vrot.slane %v1077, 5
      %v2066 = vsel %vm1968, %v2064, %v2065
      %v2067 = vrot.slane %v1932, 5
      %v2068 = vrot.slane %v2067, 4
      %v2069 = vrot.slane %v1045, 5
      %v2070 = vsel %vm1968, %v2068, %v2069
      %v2071 = vrot.slane %v2069, 4
      %v2072 = vrot.slane %v1078, 5
      %v2073 = vsel %vm1968, %v2071, %v2072
      %v2074 = vrot.slane %v1933, 5
      %v2075 = vrot.slane %v2074, 4
      %v2076 = vrot.slane %v1047, 5
      %v2077 = vsel %vm1968, %v2075, %v2076
      %v2078 = vrot.slane %v2076, 4
      %v2079 = vrot.slane %v1079, 5
      %v2080 = vsel %vm1968, %v2078, %v2079
      %s2081 = scalar_lea.vmem %s3, 128
      %v2082 = vld [vmem:[%s2081] sm:$0xf]
      %v2083 = vld [vmem:[%s2081 + $0x4] sm:$0xf]
      %v2084 = vld [vmem:[%s2081 + $0x8] sm:$0xf]
      %v2085 = vld [vmem:[%s2081 + $0xc] sm:$0xf]
      %v2086 = vld [vmem:[%s2081 + $0x10] sm:$0xf]
      %v2087 = vld [vmem:[%s2081 + $0x14] sm:$0xf]
      %v2088 = vld [vmem:[%s2081 + $0x18] sm:$0xf]
      %v2089 = vld [vmem:[%s2081 + $0x1c] sm:$0xf]
      %v2090 = vld [vmem:[%s2081 + $0x20] sm:$0xf]
      %v2091 = vld [vmem:[%s2081 + $0x24] sm:$0xf]
      %v2092 = vld [vmem:[%s2081 + $0x28] sm:$0xf]
      %v2093 = vld [vmem:[%s2081 + $0x2c] sm:$0xf]
      %v2094 = vld [vmem:[%s2081 + $0x30] sm:$0xf]
      %v2095 = vld [vmem:[%s2081 + $0x34] sm:$0xf]
      %v2096 = vld [vmem:[%s2081 + $0x38] sm:$0xf]
      %v2097 = vld [vmem:[%s2081 + $0x3c] sm:$0xf]
      %v2098 = vunpack.c.l.b16 %v1972
      %v2099 = vunpack.c.l.b16 %v1975
      %v2100 = vunpack.c.l.b16 %v1979
      %v2101 = vunpack.c.l.b16 %v1982
      %v2102 = vunpack.c.l.b16 %v1986
      %v2103 = vunpack.c.l.b16 %v1989
      %v2104 = vunpack.c.l.b16 %v1993
      %v2105 = vunpack.c.l.b16 %v1996
      %v2106 = vunpack.c.l.b16 %v2000
      %v2107 = vunpack.c.l.b16 %v2003
      %v2108 = vunpack.c.l.b16 %v2007
      %v2109 = vunpack.c.l.b16 %v2010
      %v2110 = vunpack.c.l.b16 %v2014
      %v2111 = vunpack.c.l.b16 %v2017
      %v2112 = vunpack.c.l.b16 %v2021
      %v2113 = vunpack.c.l.b16 %v2024
      %v2114 = vunpack.c.l.b16 %v2028
      %v2115 = vunpack.c.l.b16 %v2031
      %v2116 = vunpack.c.l.b16 %v2035
      %v2117 = vunpack.c.l.b16 %v2038
      %v2118 = vunpack.c.l.b16 %v2042
      %v2119 = vunpack.c.l.b16 %v2045
      %v2120 = vunpack.c.l.b16 %v2049
      %v2121 = vunpack.c.l.b16 %v2052
      %v2122 = vunpack.c.l.b16 %v2056
      %v2123 = vunpack.c.l.b16 %v2059
      %v2124 = vunpack.c.l.b16 %v2063
      %v2125 = vunpack.c.l.b16 %v2066
      %v2126 = vunpack.c.l.b16 %v2070
      %v2127 = vunpack.c.l.b16 %v2073
      %v2128 = vunpack.c.l.b16 %v2077
      %v2129 = vunpack.c.l.b16 %v2080
      %v2130 = vpack.c.b16 %v2099, %v2098
      %v2131 = vpack.c.b16 %v2101, %v2100
      %v2132 = vpack.c.b16 %v2103, %v2102
      %v2133 = vpack.c.b16 %v2105, %v2104
      %v2134 = vpack.c.b16 %v2107, %v2106
      %v2135 = vpack.c.b16 %v2109, %v2108
      %v2136 = vpack.c.b16 %v2111, %v2110
      %v2137 = vpack.c.b16 %v2113, %v2112
      %v2138 = vpack.c.b16 %v2115, %v2114
      %v2139 = vpack.c.b16 %v2117, %v2116
      %v2140 = vpack.c.b16 %v2119, %v2118
      %v2141 = vpack.c.b16 %v2121, %v2120
      %v2142 = vpack.c.b16 %v2123, %v2122
      %v2143 = vpack.c.b16 %v2125, %v2124
      %v2144 = vpack.c.b16 %v2127, %v2126
      %v2145 = vpack.c.b16 %v2129, %v2128
      %v2178 = vunpack.c.l.b16 %v2082
      %v2179 = vunpack.c.l.b16 %v2083
      %v2180 = vunpack.c.l.b16 %v2084
      %v2181 = vunpack.c.l.b16 %v2085
      %v2182 = vunpack.c.l.b16 %v2086
      %v2183 = vunpack.c.l.b16 %v2087
      %v2184 = vunpack.c.l.b16 %v2088
      %v2185 = vunpack.c.l.b16 %v2089
      %v2186 = vunpack.c.l.b16 %v2090
      %v2187 = vunpack.c.l.b16 %v2091
      %v2188 = vunpack.c.l.b16 %v2092
      %v2189 = vunpack.c.l.b16 %v2093
      %v2190 = vunpack.c.l.b16 %v2094
      %v2191 = vunpack.c.l.b16 %v2095
      %v2192 = vunpack.c.l.b16 %v2096
      %v2193 = vunpack.c.l.b16 %v2097
      %v2194 = vpack.c.b16 %v2179, %v2178
      %v2195 = vpack.c.b16 %v2181, %v2180
      %v2196 = vpack.c.b16 %v2183, %v2182
      %v2197 = vpack.c.b16 %v2185, %v2184
      %v2198 = vpack.c.b16 %v2187, %v2186
      %v2199 = vpack.c.b16 %v2189, %v2188
      %v2200 = vpack.c.b16 %v2191, %v2190
      %v2201 = vpack.c.b16 %v2193, %v2192
      %2210 = vmatpush.bf16.msra.mxu0 %v2201
      %2211 = vmatpush.bf16.msra.mxu0 %v2200
      %2212 = vmatpush.bf16.msra.mxu0 %v2199
      %2213 = vmatpush.bf16.msra.mxu0 %v2198
      %2214 = vmatpush.bf16.msra.mxu0 %v2197
      %2215 = vmatpush.bf16.msra.mxu0 %v2196
      %2216 = vmatpush.bf16.msra.mxu0 %v2195
      %2217 = vmatpush.bf16.msra.mxu0 %v2194
      %2218 = vmatmul.bf16.gmra.mxu0 %v2130
      %v2219 = vpop.f32.mrf.mxu0
      %v2220 = vadd.f32 0.0, %v2219
      %v2221 = vpop.f32.mrf.mxu0
      %v2222 = vadd.f32 0.0, %v2221
      %2223 = vmatmul.bf16.gmra.mxu0 %v2131
      %v2224 = vpop.f32.mrf.mxu0
      %v2225 = vadd.f32 0.0, %v2224
      %v2226 = vpop.f32.mrf.mxu0
      %v2227 = vadd.f32 0.0, %v2226
      %2228 = vmatmul.bf16.gmra.mxu0 %v2132
      %v2229 = vpop.f32.mrf.mxu0
      %v2230 = vadd.f32 0.0, %v2229
      %v2231 = vpop.f32.mrf.mxu0
      %v2232 = vadd.f32 0.0, %v2231
      %2233 = vmatmul.bf16.gmra.mxu0 %v2133
      %v2234 = vpop.f32.mrf.mxu0
      %v2235 = vadd.f32 0.0, %v2234
      %v2236 = vpop.f32.mrf.mxu0
      %v2237 = vadd.f32 0.0, %v2236
      %2238 = vmatmul.bf16.gmra.mxu0 %v2134
      %v2239 = vpop.f32.mrf.mxu0
      %v2240 = vadd.f32 0.0, %v2239
      %v2241 = vpop.f32.mrf.mxu0
      %v2242 = vadd.f32 0.0, %v2241
      %2243 = vmatmul.bf16.gmra.mxu0 %v2135
      %v2244 = vpop.f32.mrf.mxu0
      %v2245 = vadd.f32 0.0, %v2244
      %v2246 = vpop.f32.mrf.mxu0
      %v2247 = vadd.f32 0.0, %v2246
      %2248 = vmatmul.bf16.gmra.mxu0 %v2136
      %v2249 = vpop.f32.mrf.mxu0
      %v2250 = vadd.f32 0.0, %v2249
      %v2251 = vpop.f32.mrf.mxu0
      %v2252 = vadd.f32 0.0, %v2251
      %2253 = vmatmul.bf16.gmra.mxu0 %v2137
      %v2254 = vpop.f32.mrf.mxu0
      %v2255 = vadd.f32 0.0, %v2254
      %v2256 = vpop.f32.mrf.mxu0
      %v2257 = vadd.f32 0.0, %v2256
      %2258 = vmatmul.bf16.gmra.mxu0 %v2138
      %v2259 = vpop.f32.mrf.mxu0
      %v2260 = vadd.f32 0.0, %v2259
      %v2261 = vpop.f32.mrf.mxu0
      %v2262 = vadd.f32 0.0, %v2261
      %2263 = vmatmul.bf16.gmra.mxu0 %v2139
      %v2264 = vpop.f32.mrf.mxu0
      %v2265 = vadd.f32 0.0, %v2264
      %v2266 = vpop.f32.mrf.mxu0
      %v2267 = vadd.f32 0.0, %v2266
      %2268 = vmatmul.bf16.gmra.mxu0 %v2140
      %v2269 = vpop.f32.mrf.mxu0
      %v2270 = vadd.f32 0.0, %v2269
      %v2271 = vpop.f32.mrf.mxu0
      %v2272 = vadd.f32 0.0, %v2271
      %2273 = vmatmul.bf16.gmra.mxu0 %v2141
      %v2274 = vpop.f32.mrf.mxu0
      %v2275 = vadd.f32 0.0, %v2274
      %v2276 = vpop.f32.mrf.mxu0
      %v2277 = vadd.f32 0.0, %v2276
      %2278 = vmatmul.bf16.gmra.mxu0 %v2142
      %v2279 = vpop.f32.mrf.mxu0
      %v2280 = vadd.f32 0.0, %v2279
      %v2281 = vpop.f32.mrf.mxu0
      %v2282 = vadd.f32 0.0, %v2281
      %2283 = vmatmul.bf16.gmra.mxu0 %v2143
      %v2284 = vpop.f32.mrf.mxu0
      %v2285 = vadd.f32 0.0, %v2284
      %v2286 = vpop.f32.mrf.mxu0
      %v2287 = vadd.f32 0.0, %v2286
      %2288 = vmatmul.bf16.gmra.mxu0 %v2144
      %v2289 = vpop.f32.mrf.mxu0
      %v2290 = vadd.f32 0.0, %v2289
      %v2291 = vpop.f32.mrf.mxu0
      %v2292 = vadd.f32 0.0, %v2291
      %2293 = vmatmul.bf16.gmra.mxu0 %v2145
      %v2294 = vpop.f32.mrf.mxu0
      %v2295 = vadd.f32 0.0, %v2294
      %v2296 = vpop.f32.mrf.mxu0
      %v2297 = vadd.f32 0.0, %v2296
      %2298 = vdwg.mxu0
      %v2299 = vadd.f32 %v1839, %v2220
      %v2300 = vadd.f32 %v1841, %v2222
      %v2301 = vadd.f32 %v1844, %v2225
      %v2302 = vadd.f32 %v1846, %v2227
      %v2303 = vadd.f32 %v1849, %v2230
      %v2304 = vadd.f32 %v1851, %v2232
      %v2305 = vadd.f32 %v1854, %v2235
      %v2306 = vadd.f32 %v1856, %v2237
      %v2307 = vadd.f32 %v1859, %v2240
      %v2308 = vadd.f32 %v1861, %v2242
      %v2309 = vadd.f32 %v1864, %v2245
      %v2310 = vadd.f32 %v1866, %v2247
      %v2311 = vadd.f32 %v1869, %v2250
      %v2312 = vadd.f32 %v1871, %v2252
      %v2313 = vadd.f32 %v1874, %v2255
      %v2314 = vadd.f32 %v1876, %v2257
      %v2315 = vadd.f32 %v1879, %v2260
      %v2316 = vadd.f32 %v1881, %v2262
      %v2317 = vadd.f32 %v1884, %v2265
      %v2318 = vadd.f32 %v1886, %v2267
      %v2319 = vadd.f32 %v1889, %v2270
      %v2320 = vadd.f32 %v1891, %v2272
      %v2321 = vadd.f32 %v1894, %v2275
      %v2322 = vadd.f32 %v1896, %v2277
      %v2323 = vadd.f32 %v1899, %v2280
      %v2324 = vadd.f32 %v1901, %v2282
      %v2325 = vadd.f32 %v1904, %v2285
      %v2326 = vadd.f32 %v1906, %v2287
      %v2327 = vadd.f32 %v1909, %v2290
      %v2328 = vadd.f32 %v1911, %v2292
      %v2329 = vadd.f32 %v1914, %v2295
      %v2330 = vadd.f32 %v1916, %v2297
      %s2331 = sadd.s32 %s1012, 1
      %s2332 = smul.u32 %s2331, 3
      %s2333 = smul.addr %s2332, 4
      %s2334 = scalar_lea.vmem [#allocation2], %s2333
      %v2335 = vld [vmem:[%s2334] sm:$0xf]
      %v2336 = vld [vmem:[%s2334 + $0x4] sm:$0xf]
      %v2337 = vld [vmem:[%s2334 + $0xc] sm:$0xf]
      %v2338 = vld [vmem:[%s2334 + $0x10] sm:$0xf]
      %v2339 = vld [vmem:[%s2334 + $0x18] sm:$0xf]
      %v2340 = vld [vmem:[%s2334 + $0x1c] sm:$0xf]
      %v2341 = vld [vmem:[%s2334 + $0x24] sm:$0xf]
      %v2342 = vld [vmem:[%s2334 + $0x28] sm:$0xf]
      %v2343 = vld [vmem:[%s2334 + $0x30] sm:$0xf]
      %v2344 = vld [vmem:[%s2334 + $0x34] sm:$0xf]
      %v2345 = vld [vmem:[%s2334 + $0x3c] sm:$0xf]
      %v2346 = vld [vmem:[%s2334 + $0x40] sm:$0xf]
      %v2347 = vld [vmem:[%s2334 + $0x48] sm:$0xf]
      %v2348 = vld [vmem:[%s2334 + $0x4c] sm:$0xf]
      %v2349 = vld [vmem:[%s2334 + $0x54] sm:$0xf]
      %v2350 = vld [vmem:[%s2334 + $0x58] sm:$0xf]
      %v2351 = vld [vmem:[%s2334 + $0x60] sm:$0xf]
      %v2352 = vld [vmem:[%s2334 + $0x64] sm:$0xf]
      %v2353 = vld [vmem:[%s2334 + $0x6c] sm:$0xf]
      %v2354 = vld [vmem:[%s2334 + $0x70] sm:$0xf]
      %v2355 = vld [vmem:[%s2334 + $0x78] sm:$0xf]
      %v2356 = vld [vmem:[%s2334 + $0x7c] sm:$0xf]
      %v2357 = vld [vmem:[%s2334 + $0x84] sm:$0xf]
      %v2358 = vld [vmem:[%s2334 + $0x88] sm:$0xf]
      %v2359 = vld [vmem:[%s2334 + $0x90] sm:$0xf]
      %v2360 = vld [vmem:[%s2334 + $0x94] sm:$0xf]
      %v2361 = vld [vmem:[%s2334 + $0x9c] sm:$0xf]
      %v2362 = vld [vmem:[%s2334 + $0xa0] sm:$0xf]
      %v2363 = vld [vmem:[%s2334 + $0xa8] sm:$0xf]
      %v2364 = vld [vmem:[%s2334 + $0xac] sm:$0xf]
      %v2365 = vld [vmem:[%s2334 + $0xb4] sm:$0xf]
      %v2366 = vld [vmem:[%s2334 + $0xb8] sm:$0xf]
      %s2367 = scalar_lea.vmem %s3, 192
      %v2368 = vld [vmem:[%s2367] sm:$0xf]
      %v2369 = vld [vmem:[%s2367 + $0x4] sm:$0xf]
      %v2370 = vld [vmem:[%s2367 + $0x8] sm:$0xf]
      %v2371 = vld [vmem:[%s2367 + $0xc] sm:$0xf]
      %v2372 = vld [vmem:[%s2367 + $0x10] sm:$0xf]
      %v2373 = vld [vmem:[%s2367 + $0x14] sm:$0xf]
      %v2374 = vld [vmem:[%s2367 + $0x18] sm:$0xf]
      %v2375 = vld [vmem:[%s2367 + $0x1c] sm:$0xf]
      %v2376 = vld [vmem:[%s2367 + $0x20] sm:$0xf]
      %v2377 = vld [vmem:[%s2367 + $0x24] sm:$0xf]
      %v2378 = vld [vmem:[%s2367 + $0x28] sm:$0xf]
      %v2379 = vld [vmem:[%s2367 + $0x2c] sm:$0xf]
      %v2380 = vld [vmem:[%s2367 + $0x30] sm:$0xf]
      %v2381 = vld [vmem:[%s2367 + $0x34] sm:$0xf]
      %v2382 = vld [vmem:[%s2367 + $0x38] sm:$0xf]
      %v2383 = vld [vmem:[%s2367 + $0x3c] sm:$0xf]
      %v2416 = vunpack.c.l.b16 %v2335
      %v2417 = vunpack.c.l.b16 %v2336
      %v2418 = vunpack.c.l.b16 %v2337
      %v2419 = vunpack.c.l.b16 %v2338
      %v2420 = vunpack.c.l.b16 %v2339
      %v2421 = vunpack.c.l.b16 %v2340
      %v2422 = vunpack.c.l.b16 %v2341
      %v2423 = vunpack.c.l.b16 %v2342
      %v2424 = vunpack.c.l.b16 %v2343
      %v2425 = vunpack.c.l.b16 %v2344
      %v2426 = vunpack.c.l.b16 %v2345
      %v2427 = vunpack.c.l.b16 %v2346
      %v2428 = vunpack.c.l.b16 %v2347
      %v2429 = vunpack.c.l.b16 %v2348
      %v2430 = vunpack.c.l.b16 %v2349
      %v2431 = vunpack.c.l.b16 %v2350
      %v2432 = vunpack.c.l.b16 %v2351
      %v2433 = vunpack.c.l.b16 %v2352
      %v2434 = vunpack.c.l.b16 %v2353
      %v2435 = vunpack.c.l.b16 %v2354
      %v2436 = vunpack.c.l.b16 %v2355
      %v2437 = vunpack.c.l.b16 %v2356
      %v2438 = vunpack.c.l.b16 %v2357
      %v2439 = vunpack.c.l.b16 %v2358
      %v2440 = vunpack.c.l.b16 %v2359
      %v2441 = vunpack.c.l.b16 %v2360
      %v2442 = vunpack.c.l.b16 %v2361
      %v2443 = vunpack.c.l.b16 %v2362
      %v2444 = vunpack.c.l.b16 %v2363
      %v2445 = vunpack.c.l.b16 %v2364
      %v2446 = vunpack.c.l.b16 %v2365
      %v2447 = vunpack.c.l.b16 %v2366
      %v2448 = vpack.c.b16 %v2417, %v2416
      %v2449 = vpack.c.b16 %v2419, %v2418
      %v2450 = vpack.c.b16 %v2421, %v2420
      %v2451 = vpack.c.b16 %v2423, %v2422
      %v2452 = vpack.c.b16 %v2425, %v2424
      %v2453 = vpack.c.b16 %v2427, %v2426
      %v2454 = vpack.c.b16 %v2429, %v2428
      %v2455 = vpack.c.b16 %v2431, %v2430
      %v2456 = vpack.c.b16 %v2433, %v2432
      %v2457 = vpack.c.b16 %v2435, %v2434
      %v2458 = vpack.c.b16 %v2437, %v2436
      %v2459 = vpack.c.b16 %v2439, %v2438
      %v2460 = vpack.c.b16 %v2441, %v2440
      %v2461 = vpack.c.b16 %v2443, %v2442
      %v2462 = vpack.c.b16 %v2445, %v2444
      %v2463 = vpack.c.b16 %v2447, %v2446
      %v2496 = vunpack.c.l.b16 %v2368
      %v2497 = vunpack.c.l.b16 %v2369
      %v2498 = vunpack.c.l.b16 %v2370
      %v2499 = vunpack.c.l.b16 %v2371
      %v2500 = vunpack.c.l.b16 %v2372
      %v2501 = vunpack.c.l.b16 %v2373
      %v2502 = vunpack.c.l.b16 %v2374
      %v2503 = vunpack.c.l.b16 %v2375
      %v2504 = vunpack.c.l.b16 %v2376
      %v2505 = vunpack.c.l.b16 %v2377
      %v2506 = vunpack.c.l.b16 %v2378
      %v2507 = vunpack.c.l.b16 %v2379
      %v2508 = vunpack.c.l.b16 %v2380
      %v2509 = vunpack.c.l.b16 %v2381
      %v2510 = vunpack.c.l.b16 %v2382
      %v2511 = vunpack.c.l.b16 %v2383
      %v2512 = vpack.c.b16 %v2497, %v2496
      %v2513 = vpack.c.b16 %v2499, %v2498
      %v2514 = vpack.c.b16 %v2501, %v2500
      %v2515 = vpack.c.b16 %v2503, %v2502
      %v2516 = vpack.c.b16 %v2505, %v2504
      %v2517 = vpack.c.b16 %v2507, %v2506
      %v2518 = vpack.c.b16 %v2509, %v2508
      %v2519 = vpack.c.b16 %v2511, %v2510
      %2528 = vmatpush.bf16.msra.mxu0 %v2519
      %2529 = vmatpush.bf16.msra.mxu0 %v2518
      %2530 = vmatpush.bf16.msra.mxu0 %v2517
      %2531 = vmatpush.bf16.msra.mxu0 %v2516
      %2532 = vmatpush.bf16.msra.mxu0 %v2515
      %2533 = vmatpush.bf16.msra.mxu0 %v2514
      %2534 = vmatpush.bf16.msra.mxu0 %v2513
      %2535 = vmatpush.bf16.msra.mxu0 %v2512
      %2536 = vmatmul.bf16.gmra.mxu0 %v2448
      %v2537 = vpop.f32.mrf.mxu0
      %v2538 = vadd.f32 0.0, %v2537
      %v2539 = vpop.f32.mrf.mxu0
      %v2540 = vadd.f32 0.0, %v2539
      %2541 = vmatmul.bf16.gmra.mxu0 %v2449
      %v2542 = vpop.f32.mrf.mxu0
      %v2543 = vadd.f32 0.0, %v2542
      %v2544 = vpop.f32.mrf.mxu0
      %v2545 = vadd.f32 0.0, %v2544
      %2546 = vmatmul.bf16.gmra.mxu0 %v2450
      %v2547 = vpop.f32.mrf.mxu0
      %v2548 = vadd.f32 0.0, %v2547
      %v2549 = vpop.f32.mrf.mxu0
      %v2550 = vadd.f32 0.0, %v2549
      %2551 = vmatmul.bf16.gmra.mxu0 %v2451
      %v2552 = vpop.f32.mrf.mxu0
      %v2553 = vadd.f32 0.0, %v2552
      %v2554 = vpop.f32.mrf.mxu0
      %v2555 = vadd.f32 0.0, %v2554
      %2556 = vmatmul.bf16.gmra.mxu0 %v2452
      %v2557 = vpop.f32.mrf.mxu0
      %v2558 = vadd.f32 0.0, %v2557
      %v2559 = vpop.f32.mrf.mxu0
      %v2560 = vadd.f32 0.0, %v2559
      %2561 = vmatmul.bf16.gmra.mxu0 %v2453
      %v2562 = vpop.f32.mrf.mxu0
      %v2563 = vadd.f32 0.0, %v2562
      %v2564 = vpop.f32.mrf.mxu0
      %v2565 = vadd.f32 0.0, %v2564
      %2566 = vmatmul.bf16.gmra.mxu0 %v2454
      %v2567 = vpop.f32.mrf.mxu0
      %v2568 = vadd.f32 0.0, %v2567
      %v2569 = vpop.f32.mrf.mxu0
      %v2570 = vadd.f32 0.0, %v2569
      %2571 = vmatmul.bf16.gmra.mxu0 %v2455
      %v2572 = vpop.f32.mrf.mxu0
      %v2573 = vadd.f32 0.0, %v2572
      %v2574 = vpop.f32.mrf.mxu0
      %v2575 = vadd.f32 0.0, %v2574
      %2576 = vmatmul.bf16.gmra.mxu0 %v2456
      %v2577 = vpop.f32.mrf.mxu0
      %v2578 = vadd.f32 0.0, %v2577
      %v2579 = vpop.f32.mrf.mxu0
      %v2580 = vadd.f32 0.0, %v2579
      %2581 = vmatmul.bf16.gmra.mxu0 %v2457
      %v2582 = vpop.f32.mrf.mxu0
      %v2583 = vadd.f32 0.0, %v2582
      %v2584 = vpop.f32.mrf.mxu0
      %v2585 = vadd.f32 0.0, %v2584
      %2586 = vmatmul.bf16.gmra.mxu0 %v2458
      %v2587 = vpop.f32.mrf.mxu0
      %v2588 = vadd.f32 0.0, %v2587
      %v2589 = vpop.f32.mrf.mxu0
      %v2590 = vadd.f32 0.0, %v2589
      %2591 = vmatmul.bf16.gmra.mxu0 %v2459
      %v2592 = vpop.f32.mrf.mxu0
      %v2593 = vadd.f32 0.0, %v2592
      %v2594 = vpop.f32.mrf.mxu0
      %v2595 = vadd.f32 0.0, %v2594
      %2596 = vmatmul.bf16.gmra.mxu0 %v2460
      %v2597 = vpop.f32.mrf.mxu0
      %v2598 = vadd.f32 0.0, %v2597
      %v2599 = vpop.f32.mrf.mxu0
      %v2600 = vadd.f32 0.0, %v2599
      %2601 = vmatmul.bf16.gmra.mxu0 %v2461
      %v2602 = vpop.f32.mrf.mxu0
      %v2603 = vadd.f32 0.0, %v2602
      %v2604 = vpop.f32.mrf.mxu0
      %v2605 = vadd.f32 0.0, %v2604
      %2606 = vmatmul.bf16.gmra.mxu0 %v2462
      %v2607 = vpop.f32.mrf.mxu0
      %v2608 = vadd.f32 0.0, %v2607
      %v2609 = vpop.f32.mrf.mxu0
      %v2610 = vadd.f32 0.0, %v2609
      %2611 = vmatmul.bf16.gmra.mxu0 %v2463
      %v2612 = vpop.f32.mrf.mxu0
      %v2613 = vadd.f32 0.0, %v2612
      %v2614 = vpop.f32.mrf.mxu0
      %v2615 = vadd.f32 0.0, %v2614
      %2616 = vdwg.mxu0
      %v2617 = vadd.f32 %v2299, %v2538
      %v2618 = vadd.f32 %v2300, %v2540
      %v2619 = vadd.f32 %v2301, %v2543
      %v2620 = vadd.f32 %v2302, %v2545
      %v2621 = vadd.f32 %v2303, %v2548
      %v2622 = vadd.f32 %v2304, %v2550
      %v2623 = vadd.f32 %v2305, %v2553
      %v2624 = vadd.f32 %v2306, %v2555
      %v2625 = vadd.f32 %v2307, %v2558
      %v2626 = vadd.f32 %v2308, %v2560
      %v2627 = vadd.f32 %v2309, %v2563
      %v2628 = vadd.f32 %v2310, %v2565
      %v2629 = vadd.f32 %v2311, %v2568
      %v2630 = vadd.f32 %v2312, %v2570
      %v2631 = vadd.f32 %v2313, %v2573
      %v2632 = vadd.f32 %v2314, %v2575
      %v2633 = vadd.f32 %v2315, %v2578
      %v2634 = vadd.f32 %v2316, %v2580
      %v2635 = vadd.f32 %v2317, %v2583
      %v2636 = vadd.f32 %v2318, %v2585
      %v2637 = vadd.f32 %v2319, %v2588
      %v2638 = vadd.f32 %v2320, %v2590
      %v2639 = vadd.f32 %v2321, %v2593
      %v2640 = vadd.f32 %v2322, %v2595
      %v2641 = vadd.f32 %v2323, %v2598
      %v2642 = vadd.f32 %v2324, %v2600
      %v2643 = vadd.f32 %v2325, %v2603
      %v2644 = vadd.f32 %v2326, %v2605
      %v2645 = vadd.f32 %v2327, %v2608
      %v2646 = vadd.f32 %v2328, %v2610
      %v2647 = vadd.f32 %v2329, %v2613
      %v2648 = vadd.f32 %v2330, %v2615
      %v2649 = vld [vmem:[%s2334] sm:$0xf]
      %v2650 = vld [vmem:[%s2334 + $0x4] sm:$0xf]
      %v2651 = vld [vmem:[%s2334 + $0x8] sm:$0x1]
      %v2652 = vld [vmem:[%s2334 + $0xc] sm:$0xf]
      %v2653 = vld [vmem:[%s2334 + $0x10] sm:$0xf]
      %v2654 = vld [vmem:[%s2334 + $0x14] sm:$0x1]
      %v2655 = vld [vmem:[%s2334 + $0x18] sm:$0xf]
      %v2656 = vld [vmem:[%s2334 + $0x1c] sm:$0xf]
      %v2657 = vld [vmem:[%s2334 + $0x20] sm:$0x1]
      %v2658 = vld [vmem:[%s2334 + $0x24] sm:$0xf]
      %v2659 = vld [vmem:[%s2334 + $0x28] sm:$0xf]
      %v2660 = vld [vmem:[%s2334 + $0x2c] sm:$0x1]
      %v2661 = vld [vmem:[%s2334 + $0x30] sm:$0xf]
      %v2662 = vld [vmem:[%s2334 + $0x34] sm:$0xf]
      %v2663 = vld [vmem:[%s2334 + $0x38] sm:$0x1]
      %v2664 = vld [vmem:[%s2334 + $0x3c] sm:$0xf]
      %v2665 = vld [vmem:[%s2334 + $0x40] sm:$0xf]
      %v2666 = vld [vmem:[%s2334 + $0x44] sm:$0x1]
      %v2667 = vld [vmem:[%s2334 + $0x48] sm:$0xf]
      %v2668 = vld [vmem:[%s2334 + $0x4c] sm:$0xf]
      %v2669 = vld [vmem:[%s2334 + $0x50] sm:$0x1]
      %v2670 = vld [vmem:[%s2334 + $0x54] sm:$0xf]
      %v2671 = vld [vmem:[%s2334 + $0x58] sm:$0xf]
      %v2672 = vld [vmem:[%s2334 + $0x5c] sm:$0x1]
      %v2673 = vld [vmem:[%s2334 + $0x60] sm:$0xf]
      %v2674 = vld [vmem:[%s2334 + $0x64] sm:$0xf]
      %v2675 = vld [vmem:[%s2334 + $0x68] sm:$0x1]
      %v2676 = vld [vmem:[%s2334 + $0x6c] sm:$0xf]
      %v2677 = vld [vmem:[%s2334 + $0x70] sm:$0xf]
      %v2678 = vld [vmem:[%s2334 + $0x74] sm:$0x1]
      %v2679 = vld [vmem:[%s2334 + $0x78] sm:$0xf]
      %v2680 = vld [vmem:[%s2334 + $0x7c] sm:$0xf]
      %v2681 = vld [vmem:[%s2334 + $0x80] sm:$0x1]
      %v2682 = vld [vmem:[%s2334 + $0x84] sm:$0xf]
      %v2683 = vld [vmem:[%s2334 + $0x88] sm:$0xf]
      %v2684 = vld [vmem:[%s2334 + $0x8c] sm:$0x1]
      %v2685 = vld [vmem:[%s2334 + $0x90] sm:$0xf]
      %v2686 = vld [vmem:[%s2334 + $0x94] sm:$0xf]
      %v2687 = vld [vmem:[%s2334 + $0x98] sm:$0x1]
      %v2688 = vld [vmem:[%s2334 + $0x9c] sm:$0xf]
      %v2689 = vld [vmem:[%s2334 + $0xa0] sm:$0xf]
      %v2690 = vld [vmem:[%s2334 + $0xa4] sm:$0x1]
      %v2691 = vld [vmem:[%s2334 + $0xa8] sm:$0xf]
      %v2692 = vld [vmem:[%s2334 + $0xac] sm:$0xf]
      %v2693 = vld [vmem:[%s2334 + $0xb0] sm:$0x1]
      %v2694 = vld [vmem:[%s2334 + $0xb4] sm:$0xf]
      %v2695 = vld [vmem:[%s2334 + $0xb8] sm:$0xf]
      %v2696 = vld [vmem:[%s2334 + $0xbc] sm:$0x1]
      %v2698 = vshrl.u32 %v2649, 16
      %v2700 = vrot.slane %v2698, 4
      %v2701 = vshll.u32 %v2649, 16
      %v2703 = vrot.slane %v2701, 5
      %v2704 = vor.u32 %v2700, %v2703
      %v2705 = vrot.slane %v2704, 4
      %v2707 = vshll.u32 %v2650, 16
      %v2709 = vrot.slane %v2707, 5
      %v2710 = vsel %vm1082, %v2705, %v2709
      %v2711 = vshrl.u32 %v2650, 16
      %v2713 = vrot.slane %v2711, 4
      %v2714 = vor.u32 %v2713, %v2709
      %v2715 = vrot.slane %v2714, 4
      %v2717 = vshll.u32 %v2651, 16
      %v2719 = vrot.slane %v2717, 5
      %v2720 = vsel %vm1082, %v2715, %v2719
      %v2722 = vshrl.u32 %v2652, 16
      %v2724 = vrot.slane %v2722, 4
      %v2725 = vshll.u32 %v2652, 16
      %v2727 = vrot.slane %v2725, 5
      %v2728 = vor.u32 %v2724, %v2727
      %v2729 = vrot.slane %v2728, 4
      %v2731 = vshll.u32 %v2653, 16
      %v2733 = vrot.slane %v2731, 5
      %v2734 = vsel %vm1082, %v2729, %v2733
      %v2735 = vshrl.u32 %v2653, 16
      %v2737 = vrot.slane %v2735, 4
      %v2738 = vor.u32 %v2737, %v2733
      %v2739 = vrot.slane %v2738, 4
      %v2741 = vshll.u32 %v2654, 16
      %v2743 = vrot.slane %v2741, 5
      %v2744 = vsel %vm1082, %v2739, %v2743
      %v2746 = vshrl.u32 %v2655, 16
      %v2748 = vrot.slane %v2746, 4
      %v2749 = vshll.u32 %v2655, 16
      %v2751 = vrot.slane %v2749, 5
      %v2752 = vor.u32 %v2748, %v2751
      %v2753 = vrot.slane %v2752, 4
      %v2755 = vshll.u32 %v2656, 16
      %v2757 = vrot.slane %v2755, 5
      %v2758 = vsel %vm1082, %v2753, %v2757
      %v2759 = vshrl.u32 %v2656, 16
      %v2761 = vrot.slane %v2759, 4
      %v2762 = vor.u32 %v2761, %v2757
      %v2763 = vrot.slane %v2762, 4
      %v2765 = vshll.u32 %v2657, 16
      %v2767 = vrot.slane %v2765, 5
      %v2768 = vsel %vm1082, %v2763, %v2767
      %v2770 = vshrl.u32 %v2658, 16
      %v2772 = vrot.slane %v2770, 4
      %v2773 = vshll.u32 %v2658, 16
      %v2775 = vrot.slane %v2773, 5
      %v2776 = vor.u32 %v2772, %v2775
      %v2777 = vrot.slane %v2776, 4
      %v2779 = vshll.u32 %v2659, 16
      %v2781 = vrot.slane %v2779, 5
      %v2782 = vsel %vm1082, %v2777, %v2781
      %v2783 = vshrl.u32 %v2659, 16
      %v2785 = vrot.slane %v2783, 4
      %v2786 = vor.u32 %v2785, %v2781
      %v2787 = vrot.slane %v2786, 4
      %v2789 = vshll.u32 %v2660, 16
      %v2791 = vrot.slane %v2789, 5
      %v2792 = vsel %vm1082, %v2787, %v2791
      %v2794 = vshrl.u32 %v2661, 16
      %v2796 = vrot.slane %v2794, 4
      %v2797 = vshll.u32 %v2661, 16
      %v2799 = vrot.slane %v2797, 5
      %v2800 = vor.u32 %v2796, %v2799
      %v2801 = vrot.slane %v2800, 4
      %v2803 = vshll.u32 %v2662, 16
      %v2805 = vrot.slane %v2803, 5
      %v2806 = vsel %vm1082, %v2801, %v2805
      %v2807 = vshrl.u32 %v2662, 16
      %v2809 = vrot.slane %v2807, 4
      %v2810 = vor.u32 %v2809, %v2805
      %v2811 = vrot.slane %v2810, 4
      %v2813 = vshll.u32 %v2663, 16
      %v2815 = vrot.slane %v2813, 5
      %v2816 = vsel %vm1082, %v2811, %v2815
      %v2818 = vshrl.u32 %v2664, 16
      %v2820 = vrot.slane %v2818, 4
      %v2821 = vshll.u32 %v2664, 16
      %v2823 = vrot.slane %v2821, 5
      %v2824 = vor.u32 %v2820, %v2823
      %v2825 = vrot.slane %v2824, 4
      %v2827 = vshll.u32 %v2665, 16
      %v2829 = vrot.slane %v2827, 5
      %v2830 = vsel %vm1082, %v2825, %v2829
      %v2831 = vshrl.u32 %v2665, 16
      %v2833 = vrot.slane %v2831, 4
      %v2834 = vor.u32 %v2833, %v2829
      %v2835 = vrot.slane %v2834, 4
      %v2837 = vshll.u32 %v2666, 16
      %v2839 = vrot.slane %v2837, 5
      %v2840 = vsel %vm1082, %v2835, %v2839
      %v2842 = vshrl.u32 %v2667, 16
      %v2844 = vrot.slane %v2842, 4
      %v2845 = vshll.u32 %v2667, 16
      %v2847 = vrot.slane %v2845, 5
      %v2848 = vor.u32 %v2844, %v2847
      %v2849 = vrot.slane %v2848, 4
      %v2851 = vshll.u32 %v2668, 16
      %v2853 = vrot.slane %v2851, 5
      %v2854 = vsel %vm1082, %v2849, %v2853
      %v2855 = vshrl.u32 %v2668, 16
      %v2857 = vrot.slane %v2855, 4
      %v2858 = vor.u32 %v2857, %v2853
      %v2859 = vrot.slane %v2858, 4
      %v2861 = vshll.u32 %v2669, 16
      %v2863 = vrot.slane %v2861, 5
      %v2864 = vsel %vm1082, %v2859, %v2863
      %v2866 = vshrl.u32 %v2670, 16
      %v2868 = vrot.slane %v2866, 4
      %v2869 = vshll.u32 %v2670, 16
      %v2871 = vrot.slane %v2869, 5
      %v2872 = vor.u32 %v2868, %v2871
      %v2873 = vrot.slane %v2872, 4
      %v2875 = vshll.u32 %v2671, 16
      %v2877 = vrot.slane %v2875, 5
      %v2878 = vsel %vm1082, %v2873, %v2877
      %v2879 = vshrl.u32 %v2671, 16
      %v2881 = vrot.slane %v2879, 4
      %v2882 = vor.u32 %v2881, %v2877
      %v2883 = vrot.slane %v2882, 4
      %v2885 = vshll.u32 %v2672, 16
      %v2887 = vrot.slane %v2885, 5
      %v2888 = vsel %vm1082, %v2883, %v2887
      %v2890 = vshrl.u32 %v2673, 16
      %v2892 = vrot.slane %v2890, 4
      %v2893 = vshll.u32 %v2673, 16
      %v2895 = vrot.slane %v2893, 5
      %v2896 = vor.u32 %v2892, %v2895
      %v2897 = vrot.slane %v2896, 4
      %v2899 = vshll.u32 %v2674, 16
      %v2901 = vrot.slane %v2899, 5
      %v2902 = vsel %vm1082, %v2897, %v2901
      %v2903 = vshrl.u32 %v2674, 16
      %v2905 = vrot.slane %v2903, 4
      %v2906 = vor.u32 %v2905, %v2901
      %v2907 = vrot.slane %v2906, 4
      %v2909 = vshll.u32 %v2675, 16
      %v2911 = vrot.slane %v2909, 5
      %v2912 = vsel %vm1082, %v2907, %v2911
      %v2914 = vshrl.u32 %v2676, 16
      %v2916 = vrot.slane %v2914, 4
      %v2917 = vshll.u32 %v2676, 16
      %v2919 = vrot.slane %v2917, 5
      %v2920 = vor.u32 %v2916, %v2919
      %v2921 = vrot.slane %v2920, 4
      %v2923 = vshll.u32 %v2677, 16
      %v2925 = vrot.slane %v2923, 5
      %v2926 = vsel %vm1082, %v2921, %v2925
      %v2927 = vshrl.u32 %v2677, 16
      %v2929 = vrot.slane %v2927, 4
      %v2930 = vor.u32 %v2929, %v2925
      %v2931 = vrot.slane %v2930, 4
      %v2933 = vshll.u32 %v2678, 16
      %v2935 = vrot.slane %v2933, 5
      %v2936 = vsel %vm1082, %v2931, %v2935
      %v2938 = vshrl.u32 %v2679, 16
      %v2940 = vrot.slane %v2938, 4
      %v2941 = vshll.u32 %v2679, 16
      %v2943 = vrot.slane %v2941, 5
      %v2944 = vor.u32 %v2940, %v2943
      %v2945 = vrot.slane %v2944, 4
      %v2947 = vshll.u32 %v2680, 16
      %v2949 = vrot.slane %v2947, 5
      %v2950 = vsel %vm1082, %v2945, %v2949
      %v2951 = vshrl.u32 %v2680, 16
      %v2953 = vrot.slane %v2951, 4
      %v2954 = vor.u32 %v2953, %v2949
      %v2955 = vrot.slane %v2954, 4
      %v2957 = vshll.u32 %v2681, 16
      %v2959 = vrot.slane %v2957, 5
      %v2960 = vsel %vm1082, %v2955, %v2959
      %v2962 = vshrl.u32 %v2682, 16
      %v2964 = vrot.slane %v2962, 4
      %v2965 = vshll.u32 %v2682, 16
      %v2967 = vrot.slane %v2965, 5
      %v2968 = vor.u32 %v2964, %v2967
      %v2969 = vrot.slane %v2968, 4
      %v2971 = vshll.u32 %v2683, 16
      %v2973 = vrot.slane %v2971, 5
      %v2974 = vsel %vm1082, %v2969, %v2973
      %v2975 = vshrl.u32 %v2683, 16
      %v2977 = vrot.slane %v2975, 4
      %v2978 = vor.u32 %v2977, %v2973
      %v2979 = vrot.slane %v2978, 4
      %v2981 = vshll.u32 %v2684, 16
      %v2983 = vrot.slane %v2981, 5
      %v2984 = vsel %vm1082, %v2979, %v2983
      %v2986 = vshrl.u32 %v2685, 16
      %v2988 = vrot.slane %v2986, 4
      %v2989 = vshll.u32 %v2685, 16
      %v2991 = vrot.slane %v2989, 5
      %v2992 = vor.u32 %v2988, %v2991
      %v2993 = vrot.slane %v2992, 4
      %v2995 = vshll.u32 %v2686, 16
      %v2997 = vrot.slane %v2995, 5
      %v2998 = vsel %vm1082, %v2993, %v2997
      %v2999 = vshrl.u32 %v2686, 16
      %v3001 = vrot.slane %v2999, 4
      %v3002 = vor.u32 %v3001, %v2997
      %v3003 = vrot.slane %v3002, 4
      %v3005 = vshll.u32 %v2687, 16
      %v3007 = vrot.slane %v3005, 5
      %v3008 = vsel %vm1082, %v3003, %v3007
      %v3010 = vshrl.u32 %v2688, 16
      %v3012 = vrot.slane %v3010, 4
      %v3013 = vshll.u32 %v2688, 16
      %v3015 = vrot.slane %v3013, 5
      %v3016 = vor.u32 %v3012, %v3015
      %v3017 = vrot.slane %v3016, 4
      %v3019 = vshll.u32 %v2689, 16
      %v3021 = vrot.slane %v3019, 5
      %v3022 = vsel %vm1082, %v3017, %v3021
      %v3023 = vshrl.u32 %v2689, 16
      %v3025 = vrot.slane %v3023, 4
      %v3026 = vor.u32 %v3025, %v3021
      %v3027 = vrot.slane %v3026, 4
      %v3029 = vshll.u32 %v2690, 16
      %v3031 = vrot.slane %v3029, 5
      %v3032 = vsel %vm1082, %v3027, %v3031
      %v3034 = vshrl.u32 %v2691, 16
      %v3036 = vrot.slane %v3034, 4
      %v3037 = vshll.u32 %v2691, 16
      %v3039 = vrot.slane %v3037, 5
      %v3040 = vor.u32 %v3036, %v3039
      %v3041 = vrot.slane %v3040, 4
      %v3043 = vshll.u32 %v2692, 16
      %v3045 = vrot.slane %v3043, 5
      %v3046 = vsel %vm1082, %v3041, %v3045
      %v3047 = vshrl.u32 %v2692, 16
      %v3049 = vrot.slane %v3047, 4
      %v3050 = vor.u32 %v3049, %v3045
      %v3051 = vrot.slane %v3050, 4
      %v3053 = vshll.u32 %v2693, 16
      %v3055 = vrot.slane %v3053, 5
      %v3056 = vsel %vm1082, %v3051, %v3055
      %v3058 = vshrl.u32 %v2694, 16
      %v3060 = vrot.slane %v3058, 4
      %v3061 = vshll.u32 %v2694, 16
      %v3063 = vrot.slane %v3061, 5
      %v3064 = vor.u32 %v3060, %v3063
      %v3065 = vrot.slane %v3064, 4
      %v3067 = vshll.u32 %v2695, 16
      %v3069 = vrot.slane %v3067, 5
      %v3070 = vsel %vm1082, %v3065, %v3069
      %v3071 = vshrl.u32 %v2695, 16
      %v3073 = vrot.slane %v3071, 4
      %v3074 = vor.u32 %v3073, %v3069
      %v3075 = vrot.slane %v3074, 4
      %v3077 = vshll.u32 %v2696, 16
      %v3079 = vrot.slane %v3077, 5
      %v3080 = vsel %vm1082, %v3075, %v3079
      %s3081 = scalar_lea.vmem %s3, 256
      %v3082 = vld [vmem:[%s3081] sm:$0xf]
      %v3083 = vld [vmem:[%s3081 + $0x4] sm:$0xf]
      %v3084 = vld [vmem:[%s3081 + $0x8] sm:$0xf]
      %v3085 = vld [vmem:[%s3081 + $0xc] sm:$0xf]
      %v3086 = vld [vmem:[%s3081 + $0x10] sm:$0xf]
      %v3087 = vld [vmem:[%s3081 + $0x14] sm:$0xf]
      %v3088 = vld [vmem:[%s3081 + $0x18] sm:$0xf]
      %v3089 = vld [vmem:[%s3081 + $0x1c] sm:$0xf]
      %v3090 = vld [vmem:[%s3081 + $0x20] sm:$0xf]
      %v3091 = vld [vmem:[%s3081 + $0x24] sm:$0xf]
      %v3092 = vld [vmem:[%s3081 + $0x28] sm:$0xf]
      %v3093 = vld [vmem:[%s3081 + $0x2c] sm:$0xf]
      %v3094 = vld [vmem:[%s3081 + $0x30] sm:$0xf]
      %v3095 = vld [vmem:[%s3081 + $0x34] sm:$0xf]
      %v3096 = vld [vmem:[%s3081 + $0x38] sm:$0xf]
      %v3097 = vld [vmem:[%s3081 + $0x3c] sm:$0xf]
      %v3098 = vunpack.c.l.b16 %v2710
      %v3099 = vunpack.c.l.b16 %v2720
      %v3100 = vunpack.c.l.b16 %v2734
      %v3101 = vunpack.c.l.b16 %v2744
      %v3102 = vunpack.c.l.b16 %v2758
      %v3103 = vunpack.c.l.b16 %v2768
      %v3104 = vunpack.c.l.b16 %v2782
      %v3105 = vunpack.c.l.b16 %v2792
      %v3106 = vunpack.c.l.b16 %v2806
      %v3107 = vunpack.c.l.b16 %v2816
      %v3108 = vunpack.c.l.b16 %v2830
      %v3109 = vunpack.c.l.b16 %v2840
      %v3110 = vunpack.c.l.b16 %v2854
      %v3111 = vunpack.c.l.b16 %v2864
      %v3112 = vunpack.c.l.b16 %v2878
      %v3113 = vunpack.c.l.b16 %v2888
      %v3114 = vunpack.c.l.b16 %v2902
      %v3115 = vunpack.c.l.b16 %v2912
      %v3116 = vunpack.c.l.b16 %v2926
      %v3117 = vunpack.c.l.b16 %v2936
      %v3118 = vunpack.c.l.b16 %v2950
      %v3119 = vunpack.c.l.b16 %v2960
      %v3120 = vunpack.c.l.b16 %v2974
      %v3121 = vunpack.c.l.b16 %v2984
      %v3122 = vunpack.c.l.b16 %v2998
      %v3123 = vunpack.c.l.b16 %v3008
      %v3124 = vunpack.c.l.b16 %v3022
      %v3125 = vunpack.c.l.b16 %v3032
      %v3126 = vunpack.c.l.b16 %v3046
      %v3127 = vunpack.c.l.b16 %v3056
      %v3128 = vunpack.c.l.b16 %v3070
      %v3129 = vunpack.c.l.b16 %v3080
      %v3130 = vpack.c.b16 %v3099, %v3098
      %v3131 = vpack.c.b16 %v3101, %v3100
      %v3132 = vpack.c.b16 %v3103, %v3102
      %v3133 = vpack.c.b16 %v3105, %v3104
      %v3134 = vpack.c.b16 %v3107, %v3106
      %v3135 = vpack.c.b16 %v3109, %v3108
      %v3136 = vpack.c.b16 %v3111, %v3110
      %v3137 = vpack.c.b16 %v3113, %v3112
      %v3138 = vpack.c.b16 %v3115, %v3114
      %v3139 = vpack.c.b16 %v3117, %v3116
      %v3140 = vpack.c.b16 %v3119, %v3118
      %v3141 = vpack.c.b16 %v3121, %v3120
      %v3142 = vpack.c.b16 %v3123, %v3122
      %v3143 = vpack.c.b16 %v3125, %v3124
      %v3144 = vpack.c.b16 %v3127, %v3126
      %v3145 = vpack.c.b16 %v3129, %v3128
      %v3178 = vunpack.c.l.b16 %v3082
      %v3179 = vunpack.c.l.b16 %v3083
      %v3180 = vunpack.c.l.b16 %v3084
      %v3181 = vunpack.c.l.b16 %v3085
      %v3182 = vunpack.c.l.b16 %v3086
      %v3183 = vunpack.c.l.b16 %v3087
      %v3184 = vunpack.c.l.b16 %v3088
      %v3185 = vunpack.c.l.b16 %v3089
      %v3186 = vunpack.c.l.b16 %v3090
      %v3187 = vunpack.c.l.b16 %v3091
      %v3188 = vunpack.c.l.b16 %v3092
      %v3189 = vunpack.c.l.b16 %v3093
      %v3190 = vunpack.c.l.b16 %v3094
      %v3191 = vunpack.c.l.b16 %v3095
      %v3192 = vunpack.c.l.b16 %v3096
      %v3193 = vunpack.c.l.b16 %v3097
      %v3194 = vpack.c.b16 %v3179, %v3178
      %v3195 = vpack.c.b16 %v3181, %v3180
      %v3196 = vpack.c.b16 %v3183, %v3182
      %v3197 = vpack.c.b16 %v3185, %v3184
      %v3198 = vpack.c.b16 %v3187, %v3186
      %v3199 = vpack.c.b16 %v3189, %v3188
      %v3200 = vpack.c.b16 %v3191, %v3190
      %v3201 = vpack.c.b16 %v3193, %v3192
      %3210 = vmatpush.bf16.msra.mxu0 %v3201
      %3211 = vmatpush.bf16.msra.mxu0 %v3200
      %3212 = vmatpush.bf16.msra.mxu0 %v3199
      %3213 = vmatpush.bf16.msra.mxu0 %v3198
      %3214 = vmatpush.bf16.msra.mxu0 %v3197
      %3215 = vmatpush.bf16.msra.mxu0 %v3196
      %3216 = vmatpush.bf16.msra.mxu0 %v3195
      %3217 = vmatpush.bf16.msra.mxu0 %v3194
      %3218 = vmatmul.bf16.gmra.mxu0 %v3130
      %v3219 = vpop.f32.mrf.mxu0
      %v3220 = vadd.f32 0.0, %v3219
      %v3221 = vpop.f32.mrf.mxu0
      %v3222 = vadd.f32 0.0, %v3221
      %3223 = vmatmul.bf16.gmra.mxu0 %v3131
      %v3224 = vpop.f32.mrf.mxu0
      %v3225 = vadd.f32 0.0, %v3224
      %v3226 = vpop.f32.mrf.mxu0
      %v3227 = vadd.f32 0.0, %v3226
      %3228 = vmatmul.bf16.gmra.mxu0 %v3132
      %v3229 = vpop.f32.mrf.mxu0
      %v3230 = vadd.f32 0.0, %v3229
      %v3231 = vpop.f32.mrf.mxu0
      %v3232 = vadd.f32 0.0, %v3231
      %3233 = vmatmul.bf16.gmra.mxu0 %v3133
      %v3234 = vpop.f32.mrf.mxu0
      %v3235 = vadd.f32 0.0, %v3234
      %v3236 = vpop.f32.mrf.mxu0
      %v3237 = vadd.f32 0.0, %v3236
      %3238 = vmatmul.bf16.gmra.mxu0 %v3134
      %v3239 = vpop.f32.mrf.mxu0
      %v3240 = vadd.f32 0.0, %v3239
      %v3241 = vpop.f32.mrf.mxu0
      %v3242 = vadd.f32 0.0, %v3241
      %3243 = vmatmul.bf16.gmra.mxu0 %v3135
      %v3244 = vpop.f32.mrf.mxu0
      %v3245 = vadd.f32 0.0, %v3244
      %v3246 = vpop.f32.mrf.mxu0
      %v3247 = vadd.f32 0.0, %v3246
      %3248 = vmatmul.bf16.gmra.mxu0 %v3136
      %v3249 = vpop.f32.mrf.mxu0
      %v3250 = vadd.f32 0.0, %v3249
      %v3251 = vpop.f32.mrf.mxu0
      %v3252 = vadd.f32 0.0, %v3251
      %3253 = vmatmul.bf16.gmra.mxu0 %v3137
      %v3254 = vpop.f32.mrf.mxu0
      %v3255 = vadd.f32 0.0, %v3254
      %v3256 = vpop.f32.mrf.mxu0
      %v3257 = vadd.f32 0.0, %v3256
      %3258 = vmatmul.bf16.gmra.mxu0 %v3138
      %v3259 = vpop.f32.mrf.mxu0
      %v3260 = vadd.f32 0.0, %v3259
      %v3261 = vpop.f32.mrf.mxu0
      %v3262 = vadd.f32 0.0, %v3261
      %3263 = vmatmul.bf16.gmra.mxu0 %v3139
      %v3264 = vpop.f32.mrf.mxu0
      %v3265 = vadd.f32 0.0, %v3264
      %v3266 = vpop.f32.mrf.mxu0
      %v3267 = vadd.f32 0.0, %v3266
      %3268 = vmatmul.bf16.gmra.mxu0 %v3140
      %v3269 = vpop.f32.mrf.mxu0
      %v3270 = vadd.f32 0.0, %v3269
      %v3271 = vpop.f32.mrf.mxu0
      %v3272 = vadd.f32 0.0, %v3271
      %3273 = vmatmul.bf16.gmra.mxu0 %v3141
      %v3274 = vpop.f32.mrf.mxu0
      %v3275 = vadd.f32 0.0, %v3274
      %v3276 = vpop.f32.mrf.mxu0
      %v3277 = vadd.f32 0.0, %v3276
      %3278 = vmatmul.bf16.gmra.mxu0 %v3142
      %v3279 = vpop.f32.mrf.mxu0
      %v3280 = vadd.f32 0.0, %v3279
      %v3281 = vpop.f32.mrf.mxu0
      %v3282 = vadd.f32 0.0, %v3281
      %3283 = vmatmul.bf16.gmra.mxu0 %v3143
      %v3284 = vpop.f32.mrf.mxu0
      %v3285 = vadd.f32 0.0, %v3284
      %v3286 = vpop.f32.mrf.mxu0
      %v3287 = vadd.f32 0.0, %v3286
      %3288 = vmatmul.bf16.gmra.mxu0 %v3144
      %v3289 = vpop.f32.mrf.mxu0
      %v3290 = vadd.f32 0.0, %v3289
      %v3291 = vpop.f32.mrf.mxu0
      %v3292 = vadd.f32 0.0, %v3291
      %3293 = vmatmul.bf16.gmra.mxu0 %v3145
      %v3294 = vpop.f32.mrf.mxu0
      %v3295 = vadd.f32 0.0, %v3294
      %v3296 = vpop.f32.mrf.mxu0
      %v3297 = vadd.f32 0.0, %v3296
      %3298 = vdwg.mxu0
      %v3299 = vadd.f32 %v2617, %v3220
      %v3300 = vadd.f32 %v2618, %v3222
      %v3301 = vadd.f32 %v2619, %v3225
      %v3302 = vadd.f32 %v2620, %v3227
      %v3303 = vadd.f32 %v2621, %v3230
      %v3304 = vadd.f32 %v2622, %v3232
      %v3305 = vadd.f32 %v2623, %v3235
      %v3306 = vadd.f32 %v2624, %v3237
      %v3307 = vadd.f32 %v2625, %v3240
      %v3308 = vadd.f32 %v2626, %v3242
      %v3309 = vadd.f32 %v2627, %v3245
      %v3310 = vadd.f32 %v2628, %v3247
      %v3311 = vadd.f32 %v2629, %v3250
      %v3312 = vadd.f32 %v2630, %v3252
      %v3313 = vadd.f32 %v2631, %v3255
      %v3314 = vadd.f32 %v2632, %v3257
      %v3315 = vadd.f32 %v2633, %v3260
      %v3316 = vadd.f32 %v2634, %v3262
      %v3317 = vadd.f32 %v2635, %v3265
      %v3318 = vadd.f32 %v2636, %v3267
      %v3319 = vadd.f32 %v2637, %v3270
      %v3320 = vadd.f32 %v2638, %v3272
      %v3321 = vadd.f32 %v2639, %v3275
      %v3322 = vadd.f32 %v2640, %v3277
      %v3323 = vadd.f32 %v2641, %v3280
      %v3324 = vadd.f32 %v2642, %v3282
      %v3325 = vadd.f32 %v2643, %v3285
      %v3326 = vadd.f32 %v2644, %v3287
      %v3327 = vadd.f32 %v2645, %v3290
      %v3328 = vadd.f32 %v2646, %v3292
      %v3329 = vadd.f32 %v2647, %v3295
      %v3330 = vadd.f32 %v2648, %v3297
      %v3331 = vld [vmem:[%s2334] sm:$0xe]
      %v3332 = vld [vmem:[%s2334 + $0xc] sm:$0xe]
      %v3333 = vld [vmem:[%s2334 + $0x18] sm:$0xe]
      %v3334 = vld [vmem:[%s2334 + $0x24] sm:$0xe]
      %v3335 = vld [vmem:[%s2334 + $0x30] sm:$0xe]
      %v3336 = vld [vmem:[%s2334 + $0x3c] sm:$0xe]
      %v3337 = vld [vmem:[%s2334 + $0x48] sm:$0xe]
      %v3338 = vld [vmem:[%s2334 + $0x54] sm:$0xe]
      %v3339 = vld [vmem:[%s2334 + $0x60] sm:$0xe]
      %v3340 = vld [vmem:[%s2334 + $0x6c] sm:$0xe]
      %v3341 = vld [vmem:[%s2334 + $0x78] sm:$0xe]
      %v3342 = vld [vmem:[%s2334 + $0x84] sm:$0xe]
      %v3343 = vld [vmem:[%s2334 + $0x90] sm:$0xe]
      %v3344 = vld [vmem:[%s2334 + $0x9c] sm:$0xe]
      %v3345 = vld [vmem:[%s2334 + $0xa8] sm:$0xe]
      %v3346 = vld [vmem:[%s2334 + $0xb4] sm:$0xe]
      %v3395 = vrot.slane %v3331, 5
      %v3396 = vrot.slane %v3395, 4
      %v3397 = vrot.slane %v2650, 5
      %v3398 = vsel %vm1968, %v3396, %v3397
      %v3399 = vrot.slane %v3397, 4
      %v3400 = vrot.slane %v2651, 5
      %v3401 = vsel %vm1968, %v3399, %v3400
      %v3402 = vrot.slane %v3332, 5
      %v3403 = vrot.slane %v3402, 4
      %v3404 = vrot.slane %v2653, 5
      %v3405 = vsel %vm1968, %v3403, %v3404
      %v3406 = vrot.slane %v3404, 4
      %v3407 = vrot.slane %v2654, 5
      %v3408 = vsel %vm1968, %v3406, %v3407
      %v3409 = vrot.slane %v3333, 5
      %v3410 = vrot.slane %v3409, 4
      %v3411 = vrot.slane %v2656, 5
      %v3412 = vsel %vm1968, %v3410, %v3411
      %v3413 = vrot.slane %v3411, 4
      %v3414 = vrot.slane %v2657, 5
      %v3415 = vsel %vm1968, %v3413, %v3414
      %v3416 = vrot.slane %v3334, 5
      %v3417 = vrot.slane %v3416, 4
      %v3418 = vrot.slane %v2659, 5
      %v3419 = vsel %vm1968, %v3417, %v3418
      %v3420 = vrot.slane %v3418, 4
      %v3421 = vrot.slane %v2660, 5
      %v3422 = vsel %vm1968, %v3420, %v3421
      %v3423 = vrot.slane %v3335, 5
      %v3424 = vrot.slane %v3423, 4
      %v3425 = vrot.slane %v2662, 5
      %v3426 = vsel %vm1968, %v3424, %v3425
      %v3427 = vrot.slane %v3425, 4
      %v3428 = vrot.slane %v2663, 5
      %v3429 = vsel %vm1968, %v3427, %v3428
      %v3430 = vrot.slane %v3336, 5
      %v3431 = vrot.slane %v3430, 4
      %v3432 = vrot.slane %v2665, 5
      %v3433 = vsel %vm1968, %v3431, %v3432
      %v3434 = vrot.slane %v3432, 4
      %v3435 = vrot.slane %v2666, 5
      %v3436 = vsel %vm1968, %v3434, %v3435
      %v3437 = vrot.slane %v3337, 5
      %v3438 = vrot.slane %v3437, 4
      %v3439 = vrot.slane %v2668, 5
      %v3440 = vsel %vm1968, %v3438, %v3439
      %v3441 = vrot.slane %v3439, 4
      %v3442 = vrot.slane %v2669, 5
      %v3443 = vsel %vm1968, %v3441, %v3442
      %v3444 = vrot.slane %v3338, 5
      %v3445 = vrot.slane %v3444, 4
      %v3446 = vrot.slane %v2671, 5
      %v3447 = vsel %vm1968, %v3445, %v3446
      %v3448 = vrot.slane %v3446, 4
      %v3449 = vrot.slane %v2672, 5
      %v3450 = vsel %vm1968, %v3448, %v3449
      %v3451 = vrot.slane %v3339, 5
      %v3452 = vrot.slane %v3451, 4
      %v3453 = vrot.slane %v2674, 5
      %v3454 = vsel %vm1968, %v3452, %v3453
      %v3455 = vrot.slane %v3453, 4
      %v3456 = vrot.slane %v2675, 5
      %v3457 = vsel %vm1968, %v3455, %v3456
      %v3458 = vrot.slane %v3340, 5
      %v3459 = vrot.slane %v3458, 4
      %v3460 = vrot.slane %v2677, 5
      %v3461 = vsel %vm1968, %v3459, %v3460
      %v3462 = vrot.slane %v3460, 4
      %v3463 = vrot.slane %v2678, 5
      %v3464 = vsel %vm1968, %v3462, %v3463
      %v3465 = vrot.slane %v3341, 5
      %v3466 = vrot.slane %v3465, 4
      %v3467 = vrot.slane %v2680, 5
      %v3468 = vsel %vm1968, %v3466, %v3467
      %v3469 = vrot.slane %v3467, 4
      %v3470 = vrot.slane %v2681, 5
      %v3471 = vsel %vm1968, %v3469, %v3470
      %v3472 = vrot.slane %v3342, 5
      %v3473 = vrot.slane %v3472, 4
      %v3474 = vrot.slane %v2683, 5
      %v3475 = vsel %vm1968, %v3473, %v3474
      %v3476 = vrot.slane %v3474, 4
      %v3477 = vrot.slane %v2684, 5
      %v3478 = vsel %vm1968, %v3476, %v3477
      %v3479 = vrot.slane %v3343, 5
      %v3480 = vrot.slane %v3479, 4
      %v3481 = vrot.slane %v2686, 5
      %v3482 = vsel %vm1968, %v3480, %v3481
      %v3483 = vrot.slane %v3481, 4
      %v3484 = vrot.slane %v2687, 5
      %v3485 = vsel %vm1968, %v3483, %v3484
      %v3486 = vrot.slane %v3344, 5
      %v3487 = vrot.slane %v3486, 4
      %v3488 = vrot.slane %v2689, 5
      %v3489 = vsel %vm1968, %v3487, %v3488
      %v3490 = vrot.slane %v3488, 4
      %v3491 = vrot.slane %v2690, 5
      %v3492 = vsel %vm1968, %v3490, %v3491
      %v3493 = vrot.slane %v3345, 5
      %v3494 = vrot.slane %v3493, 4
      %v3495 = vrot.slane %v2692, 5
      %v3496 = vsel %vm1968, %v3494, %v3495
      %v3497 = vrot.slane %v3495, 4
      %v3498 = vrot.slane %v2693, 5
      %v3499 = vsel %vm1968, %v3497, %v3498
      %v3500 = vrot.slane %v3346, 5
      %v3501 = vrot.slane %v3500, 4
      %v3502 = vrot.slane %v2695, 5
      %v3503 = vsel %vm1968, %v3501, %v3502
      %v3504 = vrot.slane %v3502, 4
      %v3505 = vrot.slane %v2696, 5
      %v3506 = vsel %vm1968, %v3504, %v3505
      %s3507 = scalar_lea.vmem %s3, 320
      %v3508 = vld [vmem:[%s3507] sm:$0xf]
      %v3509 = vld [vmem:[%s3507 + $0x4] sm:$0xf]
      %v3510 = vld [vmem:[%s3507 + $0x8] sm:$0xf]
      %v3511 = vld [vmem:[%s3507 + $0xc] sm:$0xf]
      %v3512 = vld [vmem:[%s3507 + $0x10] sm:$0xf]
      %v3513 = vld [vmem:[%s3507 + $0x14] sm:$0xf]
      %v3514 = vld [vmem:[%s3507 + $0x18] sm:$0xf]
      %v3515 = vld [vmem:[%s3507 + $0x1c] sm:$0xf]
      %v3516 = vld [vmem:[%s3507 + $0x20] sm:$0xf]
      %v3517 = vld [vmem:[%s3507 + $0x24] sm:$0xf]
      %v3518 = vld [vmem:[%s3507 + $0x28] sm:$0xf]
      %v3519 = vld [vmem:[%s3507 + $0x2c] sm:$0xf]
      %v3520 = vld [vmem:[%s3507 + $0x30] sm:$0xf]
      %v3521 = vld [vmem:[%s3507 + $0x34] sm:$0xf]
      %v3522 = vld [vmem:[%s3507 + $0x38] sm:$0xf]
      %v3523 = vld [vmem:[%s3507 + $0x3c] sm:$0xf]
      %v3524 = vunpack.c.l.b16 %v3398
      %v3525 = vunpack.c.l.b16 %v3401
      %v3526 = vunpack.c.l.b16 %v3405
      %v3527 = vunpack.c.l.b16 %v3408
      %v3528 = vunpack.c.l.b16 %v3412
      %v3529 = vunpack.c.l.b16 %v3415
      %v3530 = vunpack.c.l.b16 %v3419
      %v3531 = vunpack.c.l.b16 %v3422
      %v3532 = vunpack.c.l.b16 %v3426
      %v3533 = vunpack.c.l.b16 %v3429
      %v3534 = vunpack.c.l.b16 %v3433
      %v3535 = vunpack.c.l.b16 %v3436
      %v3536 = vunpack.c.l.b16 %v3440
      %v3537 = vunpack.c.l.b16 %v3443
      %v3538 = vunpack.c.l.b16 %v3447
      %v3539 = vunpack.c.l.b16 %v3450
      %v3540 = vunpack.c.l.b16 %v3454
      %v3541 = vunpack.c.l.b16 %v3457
      %v3542 = vunpack.c.l.b16 %v3461
      %v3543 = vunpack.c.l.b16 %v3464
      %v3544 = vunpack.c.l.b16 %v3468
      %v3545 = vunpack.c.l.b16 %v3471
      %v3546 = vunpack.c.l.b16 %v3475
      %v3547 = vunpack.c.l.b16 %v3478
      %v3548 = vunpack.c.l.b16 %v3482
      %v3549 = vunpack.c.l.b16 %v3485
      %v3550 = vunpack.c.l.b16 %v3489
      %v3551 = vunpack.c.l.b16 %v3492
      %v3552 = vunpack.c.l.b16 %v3496
      %v3553 = vunpack.c.l.b16 %v3499
      %v3554 = vunpack.c.l.b16 %v3503
      %v3555 = vunpack.c.l.b16 %v3506
      %v3556 = vpack.c.b16 %v3525, %v3524
      %v3557 = vpack.c.b16 %v3527, %v3526
      %v3558 = vpack.c.b16 %v3529, %v3528
      %v3559 = vpack.c.b16 %v3531, %v3530
      %v3560 = vpack.c.b16 %v3533, %v3532
      %v3561 = vpack.c.b16 %v3535, %v3534
      %v3562 = vpack.c.b16 %v3537, %v3536
      %v3563 = vpack.c.b16 %v3539, %v3538
      %v3564 = vpack.c.b16 %v3541, %v3540
      %v3565 = vpack.c.b16 %v3543, %v3542
      %v3566 = vpack.c.b16 %v3545, %v3544
      %v3567 = vpack.c.b16 %v3547, %v3546
      %v3568 = vpack.c.b16 %v3549, %v3548
      %v3569 = vpack.c.b16 %v3551, %v3550
      %v3570 = vpack.c.b16 %v3553, %v3552
      %v3571 = vpack.c.b16 %v3555, %v3554
      %v3604 = vunpack.c.l.b16 %v3508
      %v3605 = vunpack.c.l.b16 %v3509
      %v3606 = vunpack.c.l.b16 %v3510
      %v3607 = vunpack.c.l.b16 %v3511
      %v3608 = vunpack.c.l.b16 %v3512
      %v3609 = vunpack.c.l.b16 %v3513
      %v3610 = vunpack.c.l.b16 %v3514
      %v3611 = vunpack.c.l.b16 %v3515
      %v3612 = vunpack.c.l.b16 %v3516
      %v3613 = vunpack.c.l.b16 %v3517
      %v3614 = vunpack.c.l.b16 %v3518
      %v3615 = vunpack.c.l.b16 %v3519
      %v3616 = vunpack.c.l.b16 %v3520
      %v3617 = vunpack.c.l.b16 %v3521
      %v3618 = vunpack.c.l.b16 %v3522
      %v3619 = vunpack.c.l.b16 %v3523
      %v3620 = vpack.c.b16 %v3605, %v3604
      %v3621 = vpack.c.b16 %v3607, %v3606
      %v3622 = vpack.c.b16 %v3609, %v3608
      %v3623 = vpack.c.b16 %v3611, %v3610
      %v3624 = vpack.c.b16 %v3613, %v3612
      %v3625 = vpack.c.b16 %v3615, %v3614
      %v3626 = vpack.c.b16 %v3617, %v3616
      %v3627 = vpack.c.b16 %v3619, %v3618
      %3636 = vmatpush.bf16.msra.mxu0 %v3627
      %3637 = vmatpush.bf16.msra.mxu0 %v3626
      %3638 = vmatpush.bf16.msra.mxu0 %v3625
      %3639 = vmatpush.bf16.msra.mxu0 %v3624
      %3640 = vmatpush.bf16.msra.mxu0 %v3623
      %3641 = vmatpush.bf16.msra.mxu0 %v3622
      %3642 = vmatpush.bf16.msra.mxu0 %v3621
      %3643 = vmatpush.bf16.msra.mxu0 %v3620
      %3644 = vmatmul.bf16.gmra.mxu0 %v3556
      %v3645 = vpop.f32.mrf.mxu0
      %v3646 = vadd.f32 0.0, %v3645
      %v3647 = vpop.f32.mrf.mxu0
      %v3648 = vadd.f32 0.0, %v3647
      %3649 = vmatmul.bf16.gmra.mxu0 %v3557
      %v3650 = vpop.f32.mrf.mxu0
      %v3651 = vadd.f32 0.0, %v3650
      %v3652 = vpop.f32.mrf.mxu0
      %v3653 = vadd.f32 0.0, %v3652
      %3654 = vmatmul.bf16.gmra.mxu0 %v3558
      %v3655 = vpop.f32.mrf.mxu0
      %v3656 = vadd.f32 0.0, %v3655
      %v3657 = vpop.f32.mrf.mxu0
      %v3658 = vadd.f32 0.0, %v3657
      %3659 = vmatmul.bf16.gmra.mxu0 %v3559
      %v3660 = vpop.f32.mrf.mxu0
      %v3661 = vadd.f32 0.0, %v3660
      %v3662 = vpop.f32.mrf.mxu0
      %v3663 = vadd.f32 0.0, %v3662
      %3664 = vmatmul.bf16.gmra.mxu0 %v3560
      %v3665 = vpop.f32.mrf.mxu0
      %v3666 = vadd.f32 0.0, %v3665
      %v3667 = vpop.f32.mrf.mxu0
      %v3668 = vadd.f32 0.0, %v3667
      %3669 = vmatmul.bf16.gmra.mxu0 %v3561
      %v3670 = vpop.f32.mrf.mxu0
      %v3671 = vadd.f32 0.0, %v3670
      %v3672 = vpop.f32.mrf.mxu0
      %v3673 = vadd.f32 0.0, %v3672
      %3674 = vmatmul.bf16.gmra.mxu0 %v3562
      %v3675 = vpop.f32.mrf.mxu0
      %v3676 = vadd.f32 0.0, %v3675
      %v3677 = vpop.f32.mrf.mxu0
      %v3678 = vadd.f32 0.0, %v3677
      %3679 = vmatmul.bf16.gmra.mxu0 %v3563
      %v3680 = vpop.f32.mrf.mxu0
      %v3681 = vadd.f32 0.0, %v3680
      %v3682 = vpop.f32.mrf.mxu0
      %v3683 = vadd.f32 0.0, %v3682
      %3684 = vmatmul.bf16.gmra.mxu0 %v3564
      %v3685 = vpop.f32.mrf.mxu0
      %v3686 = vadd.f32 0.0, %v3685
      %v3687 = vpop.f32.mrf.mxu0
      %v3688 = vadd.f32 0.0, %v3687
      %3689 = vmatmul.bf16.gmra.mxu0 %v3565
      %v3690 = vpop.f32.mrf.mxu0
      %v3691 = vadd.f32 0.0, %v3690
      %v3692 = vpop.f32.mrf.mxu0
      %v3693 = vadd.f32 0.0, %v3692
      %3694 = vmatmul.bf16.gmra.mxu0 %v3566
      %v3695 = vpop.f32.mrf.mxu0
      %v3696 = vadd.f32 0.0, %v3695
      %v3697 = vpop.f32.mrf.mxu0
      %v3698 = vadd.f32 0.0, %v3697
      %3699 = vmatmul.bf16.gmra.mxu0 %v3567
      %v3700 = vpop.f32.mrf.mxu0
      %v3701 = vadd.f32 0.0, %v3700
      %v3702 = vpop.f32.mrf.mxu0
      %v3703 = vadd.f32 0.0, %v3702
      %3704 = vmatmul.bf16.gmra.mxu0 %v3568
      %v3705 = vpop.f32.mrf.mxu0
      %v3706 = vadd.f32 0.0, %v3705
      %v3707 = vpop.f32.mrf.mxu0
      %v3708 = vadd.f32 0.0, %v3707
      %3709 = vmatmul.bf16.gmra.mxu0 %v3569
      %v3710 = vpop.f32.mrf.mxu0
      %v3711 = vadd.f32 0.0, %v3710
      %v3712 = vpop.f32.mrf.mxu0
      %v3713 = vadd.f32 0.0, %v3712
      %3714 = vmatmul.bf16.gmra.mxu0 %v3570
      %v3715 = vpop.f32.mrf.mxu0
      %v3716 = vadd.f32 0.0, %v3715
      %v3717 = vpop.f32.mrf.mxu0
      %v3718 = vadd.f32 0.0, %v3717
      %3719 = vmatmul.bf16.gmra.mxu0 %v3571
      %v3720 = vpop.f32.mrf.mxu0
      %v3721 = vadd.f32 0.0, %v3720
      %v3722 = vpop.f32.mrf.mxu0
      %v3723 = vadd.f32 0.0, %v3722
      %3724 = vdwg.mxu0
      %v3725 = vadd.f32 %v3299, %v3646
      %v3726 = vadd.f32 %v3300, %v3648
      %v3727 = vadd.f32 %v3301, %v3651
      %v3728 = vadd.f32 %v3302, %v3653
      %v3729 = vadd.f32 %v3303, %v3656
      %v3730 = vadd.f32 %v3304, %v3658
      %v3731 = vadd.f32 %v3305, %v3661
      %v3732 = vadd.f32 %v3306, %v3663
      %v3733 = vadd.f32 %v3307, %v3666
      %v3734 = vadd.f32 %v3308, %v3668
      %v3735 = vadd.f32 %v3309, %v3671
      %v3736 = vadd.f32 %v3310, %v3673
      %v3737 = vadd.f32 %v3311, %v3676
      %v3738 = vadd.f32 %v3312, %v3678
      %v3739 = vadd.f32 %v3313, %v3681
      %v3740 = vadd.f32 %v3314, %v3683
      %v3741 = vadd.f32 %v3315, %v3686
      %v3742 = vadd.f32 %v3316, %v3688
      %v3743 = vadd.f32 %v3317, %v3691
      %v3744 = vadd.f32 %v3318, %v3693
      %v3745 = vadd.f32 %v3319, %v3696
      %v3746 = vadd.f32 %v3320, %v3698
      %v3747 = vadd.f32 %v3321, %v3701
      %v3748 = vadd.f32 %v3322, %v3703
      %v3749 = vadd.f32 %v3323, %v3706
      %v3750 = vadd.f32 %v3324, %v3708
      %v3751 = vadd.f32 %v3325, %v3711
      %v3752 = vadd.f32 %v3326, %v3713
      %v3753 = vadd.f32 %v3327, %v3716
      %v3754 = vadd.f32 %v3328, %v3718
      %v3755 = vadd.f32 %v3329, %v3721
      %v3756 = vadd.f32 %v3330, %v3723
      %s3757 = sadd.s32 %s1012, 2
      %s3758 = smul.u32 %s3757, 3
      %s3759 = smul.addr %s3758, 4
      %s3760 = scalar_lea.vmem [#allocation2], %s3759
      %v3761 = vld [vmem:[%s3760] sm:$0xf]
      %v3762 = vld [vmem:[%s3760 + $0x4] sm:$0xf]
      %v3763 = vld [vmem:[%s3760 + $0xc] sm:$0xf]
      %v3764 = vld [vmem:[%s3760 + $0x10] sm:$0xf]
      %v3765 = vld [vmem:[%s3760 + $0x18] sm:$0xf]
      %v3766 = vld [vmem:[%s3760 + $0x1c] sm:$0xf]
      %v3767 = vld [vmem:[%s3760 + $0x24] sm:$0xf]
      %v3768 = vld [vmem:[%s3760 + $0x28] sm:$0xf]
      %v3769 = vld [vmem:[%s3760 + $0x30] sm:$0xf]
      %v3770 = vld [vmem:[%s3760 + $0x34] sm:$0xf]
      %v3771 = vld [vmem:[%s3760 + $0x3c] sm:$0xf]
      %v3772 = vld [vmem:[%s3760 + $0x40] sm:$0xf]
      %v3773 = vld [vmem:[%s3760 + $0x48] sm:$0xf]
      %v3774 = vld [vmem:[%s3760 + $0x4c] sm:$0xf]
      %v3775 = vld [vmem:[%s3760 + $0x54] sm:$0xf]
      %v3776 = vld [vmem:[%s3760 + $0x58] sm:$0xf]
      %v3777 = vld [vmem:[%s3760 + $0x60] sm:$0xf]
      %v3778 = vld [vmem:[%s3760 + $0x64] sm:$0xf]
      %v3779 = vld [vmem:[%s3760 + $0x6c] sm:$0xf]
      %v3780 = vld [vmem:[%s3760 + $0x70] sm:$0xf]
      %v3781 = vld [vmem:[%s3760 + $0x78] sm:$0xf]
      %v3782 = vld [vmem:[%s3760 + $0x7c] sm:$0xf]
      %v3783 = vld [vmem:[%s3760 + $0x84] sm:$0xf]
      %v3784 = vld [vmem:[%s3760 + $0x88] sm:$0xf]
      %v3785 = vld [vmem:[%s3760 + $0x90] sm:$0xf]
      %v3786 = vld [vmem:[%s3760 + $0x94] sm:$0xf]
      %v3787 = vld [vmem:[%s3760 + $0x9c] sm:$0xf]
      %v3788 = vld [vmem:[%s3760 + $0xa0] sm:$0xf]
      %v3789 = vld [vmem:[%s3760 + $0xa8] sm:$0xf]
      %v3790 = vld [vmem:[%s3760 + $0xac] sm:$0xf]
      %v3791 = vld [vmem:[%s3760 + $0xb4] sm:$0xf]
      %v3792 = vld [vmem:[%s3760 + $0xb8] sm:$0xf]
      %s3793 = scalar_lea.vmem %s3, 384
      %v3794 = vld [vmem:[%s3793] sm:$0xf]
      %v3795 = vld [vmem:[%s3793 + $0x4] sm:$0xf]
      %v3796 = vld [vmem:[%s3793 + $0x8] sm:$0xf]
      %v3797 = vld [vmem:[%s3793 + $0xc] sm:$0xf]
      %v3798 = vld [vmem:[%s3793 + $0x10] sm:$0xf]
      %v3799 = vld [vmem:[%s3793 + $0x14] sm:$0xf]
      %v3800 = vld [vmem:[%s3793 + $0x18] sm:$0xf]
      %v3801 = vld [vmem:[%s3793 + $0x1c] sm:$0xf]
      %v3802 = vld [vmem:[%s3793 + $0x20] sm:$0xf]
      %v3803 = vld [vmem:[%s3793 + $0x24] sm:$0xf]
      %v3804 = vld [vmem:[%s3793 + $0x28] sm:$0xf]
      %v3805 = vld [vmem:[%s3793 + $0x2c] sm:$0xf]
      %v3806 = vld [vmem:[%s3793 + $0x30] sm:$0xf]
      %v3807 = vld [vmem:[%s3793 + $0x34] sm:$0xf]
      %v3808 = vld [vmem:[%s3793 + $0x38] sm:$0xf]
      %v3809 = vld [vmem:[%s3793 + $0x3c] sm:$0xf]
      %v3842 = vunpack.c.l.b16 %v3761
      %v3843 = vunpack.c.l.b16 %v3762
      %v3844 = vunpack.c.l.b16 %v3763
      %v3845 = vunpack.c.l.b16 %v3764
      %v3846 = vunpack.c.l.b16 %v3765
      %v3847 = vunpack.c.l.b16 %v3766
      %v3848 = vunpack.c.l.b16 %v3767
      %v3849 = vunpack.c.l.b16 %v3768
      %v3850 = vunpack.c.l.b16 %v3769
      %v3851 = vunpack.c.l.b16 %v3770
      %v3852 = vunpack.c.l.b16 %v3771
      %v3853 = vunpack.c.l.b16 %v3772
      %v3854 = vunpack.c.l.b16 %v3773
      %v3855 = vunpack.c.l.b16 %v3774
      %v3856 = vunpack.c.l.b16 %v3775
      %v3857 = vunpack.c.l.b16 %v3776
      %v3858 = vunpack.c.l.b16 %v3777
      %v3859 = vunpack.c.l.b16 %v3778
      %v3860 = vunpack.c.l.b16 %v3779
      %v3861 = vunpack.c.l.b16 %v3780
      %v3862 = vunpack.c.l.b16 %v3781
      %v3863 = vunpack.c.l.b16 %v3782
      %v3864 = vunpack.c.l.b16 %v3783
      %v3865 = vunpack.c.l.b16 %v3784
      %v3866 = vunpack.c.l.b16 %v3785
      %v3867 = vunpack.c.l.b16 %v3786
      %v3868 = vunpack.c.l.b16 %v3787
      %v3869 = vunpack.c.l.b16 %v3788
      %v3870 = vunpack.c.l.b16 %v3789
      %v3871 = vunpack.c.l.b16 %v3790
      %v3872 = vunpack.c.l.b16 %v3791
      %v3873 = vunpack.c.l.b16 %v3792
      %v3874 = vpack.c.b16 %v3843, %v3842
      %v3875 = vpack.c.b16 %v3845, %v3844
      %v3876 = vpack.c.b16 %v3847, %v3846
      %v3877 = vpack.c.b16 %v3849, %v3848
      %v3878 = vpack.c.b16 %v3851, %v3850
      %v3879 = vpack.c.b16 %v3853, %v3852
      %v3880 = vpack.c.b16 %v3855, %v3854
      %v3881 = vpack.c.b16 %v3857, %v3856
      %v3882 = vpack.c.b16 %v3859, %v3858
      %v3883 = vpack.c.b16 %v3861, %v3860
      %v3884 = vpack.c.b16 %v3863, %v3862
      %v3885 = vpack.c.b16 %v3865, %v3864
      %v3886 = vpack.c.b16 %v3867, %v3866
      %v3887 = vpack.c.b16 %v3869, %v3868
      %v3888 = vpack.c.b16 %v3871, %v3870
      %v3889 = vpack.c.b16 %v3873, %v3872
      %v3922 = vunpack.c.l.b16 %v3794
      %v3923 = vunpack.c.l.b16 %v3795
      %v3924 = vunpack.c.l.b16 %v3796
      %v3925 = vunpack.c.l.b16 %v3797
      %v3926 = vunpack.c.l.b16 %v3798
      %v3927 = vunpack.c.l.b16 %v3799
      %v3928 = vunpack.c.l.b16 %v3800
      %v3929 = vunpack.c.l.b16 %v3801
      %v3930 = vunpack.c.l.b16 %v3802
      %v3931 = vunpack.c.l.b16 %v3803
      %v3932 = vunpack.c.l.b16 %v3804
      %v3933 = vunpack.c.l.b16 %v3805
      %v3934 = vunpack.c.l.b16 %v3806
      %v3935 = vunpack.c.l.b16 %v3807
      %v3936 = vunpack.c.l.b16 %v3808
      %v3937 = vunpack.c.l.b16 %v3809
      %v3938 = vpack.c.b16 %v3923, %v3922
      %v3939 = vpack.c.b16 %v3925, %v3924
      %v3940 = vpack.c.b16 %v3927, %v3926
      %v3941 = vpack.c.b16 %v3929, %v3928
      %v3942 = vpack.c.b16 %v3931, %v3930
      %v3943 = vpack.c.b16 %v3933, %v3932
      %v3944 = vpack.c.b16 %v3935, %v3934
      %v3945 = vpack.c.b16 %v3937, %v3936
      %3954 = vmatpush.bf16.msra.mxu0 %v3945
      %3955 = vmatpush.bf16.msra.mxu0 %v3944
      %3956 = vmatpush.bf16.msra.mxu0 %v3943
      %3957 = vmatpush.bf16.msra.mxu0 %v3942
      %3958 = vmatpush.bf16.msra.mxu0 %v3941
      %3959 = vmatpush.bf16.msra.mxu0 %v3940
      %3960 = vmatpush.bf16.msra.mxu0 %v3939
      %3961 = vmatpush.bf16.msra.mxu0 %v3938
      %3962 = vmatmul.bf16.gmra.mxu0 %v3874
      %v3963 = vpop.f32.mrf.mxu0
      %v3964 = vadd.f32 0.0, %v3963
      %v3965 = vpop.f32.mrf.mxu0
      %v3966 = vadd.f32 0.0, %v3965
      %3967 = vmatmul.bf16.gmra.mxu0 %v3875
      %v3968 = vpop.f32.mrf.mxu0
      %v3969 = vadd.f32 0.0, %v3968
      %v3970 = vpop.f32.mrf.mxu0
      %v3971 = vadd.f32 0.0, %v3970
      %3972 = vmatmul.bf16.gmra.mxu0 %v3876
      %v3973 = vpop.f32.mrf.mxu0
      %v3974 = vadd.f32 0.0, %v3973
      %v3975 = vpop.f32.mrf.mxu0
      %v3976 = vadd.f32 0.0, %v3975
      %3977 = vmatmul.bf16.gmra.mxu0 %v3877
      %v3978 = vpop.f32.mrf.mxu0
      %v3979 = vadd.f32 0.0, %v3978
      %v3980 = vpop.f32.mrf.mxu0
      %v3981 = vadd.f32 0.0, %v3980
      %3982 = vmatmul.bf16.gmra.mxu0 %v3878
      %v3983 = vpop.f32.mrf.mxu0
      %v3984 = vadd.f32 0.0, %v3983
      %v3985 = vpop.f32.mrf.mxu0
      %v3986 = vadd.f32 0.0, %v3985
      %3987 = vmatmul.bf16.gmra.mxu0 %v3879
      %v3988 = vpop.f32.mrf.mxu0
      %v3989 = vadd.f32 0.0, %v3988
      %v3990 = vpop.f32.mrf.mxu0
      %v3991 = vadd.f32 0.0, %v3990
      %3992 = vmatmul.bf16.gmra.mxu0 %v3880
      %v3993 = vpop.f32.mrf.mxu0
      %v3994 = vadd.f32 0.0, %v3993
      %v3995 = vpop.f32.mrf.mxu0
      %v3996 = vadd.f32 0.0, %v3995
      %3997 = vmatmul.bf16.gmra.mxu0 %v3881
      %v3998 = vpop.f32.mrf.mxu0
      %v3999 = vadd.f32 0.0, %v3998
      %v4000 = vpop.f32.mrf.mxu0
      %v4001 = vadd.f32 0.0, %v4000
      %4002 = vmatmul.bf16.gmra.mxu0 %v3882
      %v4003 = vpop.f32.mrf.mxu0
      %v4004 = vadd.f32 0.0, %v4003
      %v4005 = vpop.f32.mrf.mxu0
      %v4006 = vadd.f32 0.0, %v4005
      %4007 = vmatmul.bf16.gmra.mxu0 %v3883
      %v4008 = vpop.f32.mrf.mxu0
      %v4009 = vadd.f32 0.0, %v4008
      %v4010 = vpop.f32.mrf.mxu0
      %v4011 = vadd.f32 0.0, %v4010
      %4012 = vmatmul.bf16.gmra.mxu0 %v3884
      %v4013 = vpop.f32.mrf.mxu0
      %v4014 = vadd.f32 0.0, %v4013
      %v4015 = vpop.f32.mrf.mxu0
      %v4016 = vadd.f32 0.0, %v4015
      %4017 = vmatmul.bf16.gmra.mxu0 %v3885
      %v4018 = vpop.f32.mrf.mxu0
      %v4019 = vadd.f32 0.0, %v4018
      %v4020 = vpop.f32.mrf.mxu0
      %v4021 = vadd.f32 0.0, %v4020
      %4022 = vmatmul.bf16.gmra.mxu0 %v3886
      %v4023 = vpop.f32.mrf.mxu0
      %v4024 = vadd.f32 0.0, %v4023
      %v4025 = vpop.f32.mrf.mxu0
      %v4026 = vadd.f32 0.0, %v4025
      %4027 = vmatmul.bf16.gmra.mxu0 %v3887
      %v4028 = vpop.f32.mrf.mxu0
      %v4029 = vadd.f32 0.0, %v4028
      %v4030 = vpop.f32.mrf.mxu0
      %v4031 = vadd.f32 0.0, %v4030
      %4032 = vmatmul.bf16.gmra.mxu0 %v3888
      %v4033 = vpop.f32.mrf.mxu0
      %v4034 = vadd.f32 0.0, %v4033
      %v4035 = vpop.f32.mrf.mxu0
      %v4036 = vadd.f32 0.0, %v4035
      %4037 = vmatmul.bf16.gmra.mxu0 %v3889
      %v4038 = vpop.f32.mrf.mxu0
      %v4039 = vadd.f32 0.0, %v4038
      %v4040 = vpop.f32.mrf.mxu0
      %v4041 = vadd.f32 0.0, %v4040
      %4042 = vdwg.mxu0
      %v4043 = vadd.f32 %v3725, %v3964
      %v4044 = vadd.f32 %v3726, %v3966
      %v4045 = vadd.f32 %v3727, %v3969
      %v4046 = vadd.f32 %v3728, %v3971
      %v4047 = vadd.f32 %v3729, %v3974
      %v4048 = vadd.f32 %v3730, %v3976
      %v4049 = vadd.f32 %v3731, %v3979
      %v4050 = vadd.f32 %v3732, %v3981
      %v4051 = vadd.f32 %v3733, %v3984
      %v4052 = vadd.f32 %v3734, %v3986
      %v4053 = vadd.f32 %v3735, %v3989
      %v4054 = vadd.f32 %v3736, %v3991
      %v4055 = vadd.f32 %v3737, %v3994
      %v4056 = vadd.f32 %v3738, %v3996
      %v4057 = vadd.f32 %v3739, %v3999
      %v4058 = vadd.f32 %v3740, %v4001
      %v4059 = vadd.f32 %v3741, %v4004
      %v4060 = vadd.f32 %v3742, %v4006
      %v4061 = vadd.f32 %v3743, %v4009
      %v4062 = vadd.f32 %v3744, %v4011
      %v4063 = vadd.f32 %v3745, %v4014
      %v4064 = vadd.f32 %v3746, %v4016
      %v4065 = vadd.f32 %v3747, %v4019
      %v4066 = vadd.f32 %v3748, %v4021
      %v4067 = vadd.f32 %v3749, %v4024
      %v4068 = vadd.f32 %v3750, %v4026
      %v4069 = vadd.f32 %v3751, %v4029
      %v4070 = vadd.f32 %v3752, %v4031
      %v4071 = vadd.f32 %v3753, %v4034
      %v4072 = vadd.f32 %v3754, %v4036
      %v4073 = vadd.f32 %v3755, %v4039
      %v4074 = vadd.f32 %v3756, %v4041
      %v4075 = vld [vmem:[%s3760] sm:$0xf]
      %v4076 = vld [vmem:[%s3760 + $0x4] sm:$0xf]
      %v4077 = vld [vmem:[%s3760 + $0x8] sm:$0x1]
      %v4078 = vld [vmem:[%s3760 + $0xc] sm:$0xf]
      %v4079 = vld [vmem:[%s3760 + $0x10] sm:$0xf]
      %v4080 = vld [vmem:[%s3760 + $0x14] sm:$0x1]
      %v4081 = vld [vmem:[%s3760 + $0x18] sm:$0xf]
      %v4082 = vld [vmem:[%s3760 + $0x1c] sm:$0xf]
      %v4083 = vld [vmem:[%s3760 + $0x20] sm:$0x1]
      %v4084 = vld [vmem:[%s3760 + $0x24] sm:$0xf]
      %v4085 = vld [vmem:[%s3760 + $0x28] sm:$0xf]
      %v4086 = vld [vmem:[%s3760 + $0x2c] sm:$0x1]
      %v4087 = vld [vmem:[%s3760 + $0x30] sm:$0xf]
      %v4088 = vld [vmem:[%s3760 + $0x34] sm:$0xf]
      %v4089 = vld [vmem:[%s3760 + $0x38] sm:$0x1]
      %v4090 = vld [vmem:[%s3760 + $0x3c] sm:$0xf]
      %v4091 = vld [vmem:[%s3760 + $0x40] sm:$0xf]
      %v4092 = vld [vmem:[%s3760 + $0x44] sm:$0x1]
      %v4093 = vld [vmem:[%s3760 + $0x48] sm:$0xf]
      %v4094 = vld [vmem:[%s3760 + $0x4c] sm:$0xf]
      %v4095 = vld [vmem:[%s3760 + $0x50] sm:$0x1]
      %v4096 = vld [vmem:[%s3760 + $0x54] sm:$0xf]
      %v4097 = vld [vmem:[%s3760 + $0x58] sm:$0xf]
      %v4098 = vld [vmem:[%s3760 + $0x5c] sm:$0x1]
      %v4099 = vld [vmem:[%s3760 + $0x60] sm:$0xf]
      %v4100 = vld [vmem:[%s3760 + $0x64] sm:$0xf]
      %v4101 = vld [vmem:[%s3760 + $0x68] sm:$0x1]
      %v4102 = vld [vmem:[%s3760 + $0x6c] sm:$0xf]
      %v4103 = vld [vmem:[%s3760 + $0x70] sm:$0xf]
      %v4104 = vld [vmem:[%s3760 + $0x74] sm:$0x1]
      %v4105 = vld [vmem:[%s3760 + $0x78] sm:$0xf]
      %v4106 = vld [vmem:[%s3760 + $0x7c] sm:$0xf]
      %v4107 = vld [vmem:[%s3760 + $0x80] sm:$0x1]
      %v4108 = vld [vmem:[%s3760 + $0x84] sm:$0xf]
      %v4109 = vld [vmem:[%s3760 + $0x88] sm:$0xf]
      %v4110 = vld [vmem:[%s3760 + $0x8c] sm:$0x1]
      %v4111 = vld [vmem:[%s3760 + $0x90] sm:$0xf]
      %v4112 = vld [vmem:[%s3760 + $0x94] sm:$0xf]
      %v4113 = vld [vmem:[%s3760 + $0x98] sm:$0x1]
      %v4114 = vld [vmem:[%s3760 + $0x9c] sm:$0xf]
      %v4115 = vld [vmem:[%s3760 + $0xa0] sm:$0xf]
      %v4116 = vld [vmem:[%s3760 + $0xa4] sm:$0x1]
      %v4117 = vld [vmem:[%s3760 + $0xa8] sm:$0xf]
      %v4118 = vld [vmem:[%s3760 + $0xac] sm:$0xf]
      %v4119 = vld [vmem:[%s3760 + $0xb0] sm:$0x1]
      %v4120 = vld [vmem:[%s3760 + $0xb4] sm:$0xf]
      %v4121 = vld [vmem:[%s3760 + $0xb8] sm:$0xf]
      %v4122 = vld [vmem:[%s3760 + $0xbc] sm:$0x1]
      %v4124 = vshrl.u32 %v4075, 16
      %v4126 = vrot.slane %v4124, 4
      %v4127 = vshll.u32 %v4075, 16
      %v4129 = vrot.slane %v4127, 5
      %v4130 = vor.u32 %v4126, %v4129
      %v4131 = vrot.slane %v4130, 4
      %v4133 = vshll.u32 %v4076, 16
      %v4135 = vrot.slane %v4133, 5
      %v4136 = vsel %vm1082, %v4131, %v4135
      %v4137 = vshrl.u32 %v4076, 16
      %v4139 = vrot.slane %v4137, 4
      %v4140 = vor.u32 %v4139, %v4135
      %v4141 = vrot.slane %v4140, 4
      %v4143 = vshll.u32 %v4077, 16
      %v4145 = vrot.slane %v4143, 5
      %v4146 = vsel %vm1082, %v4141, %v4145
      %v4148 = vshrl.u32 %v4078, 16
      %v4150 = vrot.slane %v4148, 4
      %v4151 = vshll.u32 %v4078, 16
      %v4153 = vrot.slane %v4151, 5
      %v4154 = vor.u32 %v4150, %v4153
      %v4155 = vrot.slane %v4154, 4
      %v4157 = vshll.u32 %v4079, 16
      %v4159 = vrot.slane %v4157, 5
      %v4160 = vsel %vm1082, %v4155, %v4159
      %v4161 = vshrl.u32 %v4079, 16
      %v4163 = vrot.slane %v4161, 4
      %v4164 = vor.u32 %v4163, %v4159
      %v4165 = vrot.slane %v4164, 4
      %v4167 = vshll.u32 %v4080, 16
      %v4169 = vrot.slane %v4167, 5
      %v4170 = vsel %vm1082, %v4165, %v4169
      %v4172 = vshrl.u32 %v4081, 16
      %v4174 = vrot.slane %v4172, 4
      %v4175 = vshll.u32 %v4081, 16
      %v4177 = vrot.slane %v4175, 5
      %v4178 = vor.u32 %v4174, %v4177
      %v4179 = vrot.slane %v4178, 4
      %v4181 = vshll.u32 %v4082, 16
      %v4183 = vrot.slane %v4181, 5
      %v4184 = vsel %vm1082, %v4179, %v4183
      %v4185 = vshrl.u32 %v4082, 16
      %v4187 = vrot.slane %v4185, 4
      %v4188 = vor.u32 %v4187, %v4183
      %v4189 = vrot.slane %v4188, 4
      %v4191 = vshll.u32 %v4083, 16
      %v4193 = vrot.slane %v4191, 5
      %v4194 = vsel %vm1082, %v4189, %v4193
      %v4196 = vshrl.u32 %v4084, 16
      %v4198 = vrot.slane %v4196, 4
      %v4199 = vshll.u32 %v4084, 16
      %v4201 = vrot.slane %v4199, 5
      %v4202 = vor.u32 %v4198, %v4201
      %v4203 = vrot.slane %v4202, 4
      %v4205 = vshll.u32 %v4085, 16
      %v4207 = vrot.slane %v4205, 5
      %v4208 = vsel %vm1082, %v4203, %v4207
      %v4209 = vshrl.u32 %v4085, 16
      %v4211 = vrot.slane %v4209, 4
      %v4212 = vor.u32 %v4211, %v4207
      %v4213 = vrot.slane %v4212, 4
      %v4215 = vshll.u32 %v4086, 16
      %v4217 = vrot.slane %v4215, 5
      %v4218 = vsel %vm1082, %v4213, %v4217
      %v4220 = vshrl.u32 %v4087, 16
      %v4222 = vrot.slane %v4220, 4
      %v4223 = vshll.u32 %v4087, 16
      %v4225 = vrot.slane %v4223, 5
      %v4226 = vor.u32 %v4222, %v4225
      %v4227 = vrot.slane %v4226, 4
      %v4229 = vshll.u32 %v4088, 16
      %v4231 = vrot.slane %v4229, 5
      %v4232 = vsel %vm1082, %v4227, %v4231
      %v4233 = vshrl.u32 %v4088, 16
      %v4235 = vrot.slane %v4233, 4
      %v4236 = vor.u32 %v4235, %v4231
      %v4237 = vrot.slane %v4236, 4
      %v4239 = vshll.u32 %v4089, 16
      %v4241 = vrot.slane %v4239, 5
      %v4242 = vsel %vm1082, %v4237, %v4241
      %v4244 = vshrl.u32 %v4090, 16
      %v4246 = vrot.slane %v4244, 4
      %v4247 = vshll.u32 %v4090, 16
      %v4249 = vrot.slane %v4247, 5
      %v4250 = vor.u32 %v4246, %v4249
      %v4251 = vrot.slane %v4250, 4
      %v4253 = vshll.u32 %v4091, 16
      %v4255 = vrot.slane %v4253, 5
      %v4256 = vsel %vm1082, %v4251, %v4255
      %v4257 = vshrl.u32 %v4091, 16
      %v4259 = vrot.slane %v4257, 4
      %v4260 = vor.u32 %v4259, %v4255
      %v4261 = vrot.slane %v4260, 4
      %v4263 = vshll.u32 %v4092, 16
      %v4265 = vrot.slane %v4263, 5
      %v4266 = vsel %vm1082, %v4261, %v4265
      %v4268 = vshrl.u32 %v4093, 16
      %v4270 = vrot.slane %v4268, 4
      %v4271 = vshll.u32 %v4093, 16
      %v4273 = vrot.slane %v4271, 5
      %v4274 = vor.u32 %v4270, %v4273
      %v4275 = vrot.slane %v4274, 4
      %v4277 = vshll.u32 %v4094, 16
      %v4279 = vrot.slane %v4277, 5
      %v4280 = vsel %vm1082, %v4275, %v4279
      %v4281 = vshrl.u32 %v4094, 16
      %v4283 = vrot.slane %v4281, 4
      %v4284 = vor.u32 %v4283, %v4279
      %v4285 = vrot.slane %v4284, 4
      %v4287 = vshll.u32 %v4095, 16
      %v4289 = vrot.slane %v4287, 5
      %v4290 = vsel %vm1082, %v4285, %v4289
      %v4292 = vshrl.u32 %v4096, 16
      %v4294 = vrot.slane %v4292, 4
      %v4295 = vshll.u32 %v4096, 16
      %v4297 = vrot.slane %v4295, 5
      %v4298 = vor.u32 %v4294, %v4297
      %v4299 = vrot.slane %v4298, 4
      %v4301 = vshll.u32 %v4097, 16
      %v4303 = vrot.slane %v4301, 5
      %v4304 = vsel %vm1082, %v4299, %v4303
      %v4305 = vshrl.u32 %v4097, 16
      %v4307 = vrot.slane %v4305, 4
      %v4308 = vor.u32 %v4307, %v4303
      %v4309 = vrot.slane %v4308, 4
      %v4311 = vshll.u32 %v4098, 16
      %v4313 = vrot.slane %v4311, 5
      %v4314 = vsel %vm1082, %v4309, %v4313
      %v4316 = vshrl.u32 %v4099, 16
      %v4318 = vrot.slane %v4316, 4
      %v4319 = vshll.u32 %v4099, 16
      %v4321 = vrot.slane %v4319, 5
      %v4322 = vor.u32 %v4318, %v4321
      %v4323 = vrot.slane %v4322, 4
      %v4325 = vshll.u32 %v4100, 16
      %v4327 = vrot.slane %v4325, 5
      %v4328 = vsel %vm1082, %v4323, %v4327
      %v4329 = vshrl.u32 %v4100, 16
      %v4331 = vrot.slane %v4329, 4
      %v4332 = vor.u32 %v4331, %v4327
      %v4333 = vrot.slane %v4332, 4
      %v4335 = vshll.u32 %v4101, 16
      %v4337 = vrot.slane %v4335, 5
      %v4338 = vsel %vm1082, %v4333, %v4337
      %v4340 = vshrl.u32 %v4102, 16
      %v4342 = vrot.slane %v4340, 4
      %v4343 = vshll.u32 %v4102, 16
      %v4345 = vrot.slane %v4343, 5
      %v4346 = vor.u32 %v4342, %v4345
      %v4347 = vrot.slane %v4346, 4
      %v4349 = vshll.u32 %v4103, 16
      %v4351 = vrot.slane %v4349, 5
      %v4352 = vsel %vm1082, %v4347, %v4351
      %v4353 = vshrl.u32 %v4103, 16
      %v4355 = vrot.slane %v4353, 4
      %v4356 = vor.u32 %v4355, %v4351
      %v4357 = vrot.slane %v4356, 4
      %v4359 = vshll.u32 %v4104, 16
      %v4361 = vrot.slane %v4359, 5
      %v4362 = vsel %vm1082, %v4357, %v4361
      %v4364 = vshrl.u32 %v4105, 16
      %v4366 = vrot.slane %v4364, 4
      %v4367 = vshll.u32 %v4105, 16
      %v4369 = vrot.slane %v4367, 5
      %v4370 = vor.u32 %v4366, %v4369
      %v4371 = vrot.slane %v4370, 4
      %v4373 = vshll.u32 %v4106, 16
      %v4375 = vrot.slane %v4373, 5
      %v4376 = vsel %vm1082, %v4371, %v4375
      %v4377 = vshrl.u32 %v4106, 16
      %v4379 = vrot.slane %v4377, 4
      %v4380 = vor.u32 %v4379, %v4375
      %v4381 = vrot.slane %v4380, 4
      %v4383 = vshll.u32 %v4107, 16
      %v4385 = vrot.slane %v4383, 5
      %v4386 = vsel %vm1082, %v4381, %v4385
      %v4388 = vshrl.u32 %v4108, 16
      %v4390 = vrot.slane %v4388, 4
      %v4391 = vshll.u32 %v4108, 16
      %v4393 = vrot.slane %v4391, 5
      %v4394 = vor.u32 %v4390, %v4393
      %v4395 = vrot.slane %v4394, 4
      %v4397 = vshll.u32 %v4109, 16
      %v4399 = vrot.slane %v4397, 5
      %v4400 = vsel %vm1082, %v4395, %v4399
      %v4401 = vshrl.u32 %v4109, 16
      %v4403 = vrot.slane %v4401, 4
      %v4404 = vor.u32 %v4403, %v4399
      %v4405 = vrot.slane %v4404, 4
      %v4407 = vshll.u32 %v4110, 16
      %v4409 = vrot.slane %v4407, 5
      %v4410 = vsel %vm1082, %v4405, %v4409
      %v4412 = vshrl.u32 %v4111, 16
      %v4414 = vrot.slane %v4412, 4
      %v4415 = vshll.u32 %v4111, 16
      %v4417 = vrot.slane %v4415, 5
      %v4418 = vor.u32 %v4414, %v4417
      %v4419 = vrot.slane %v4418, 4
      %v4421 = vshll.u32 %v4112, 16
      %v4423 = vrot.slane %v4421, 5
      %v4424 = vsel %vm1082, %v4419, %v4423
      %v4425 = vshrl.u32 %v4112, 16
      %v4427 = vrot.slane %v4425, 4
      %v4428 = vor.u32 %v4427, %v4423
      %v4429 = vrot.slane %v4428, 4
      %v4431 = vshll.u32 %v4113, 16
      %v4433 = vrot.slane %v4431, 5
      %v4434 = vsel %vm1082, %v4429, %v4433
      %v4436 = vshrl.u32 %v4114, 16
      %v4438 = vrot.slane %v4436, 4
      %v4439 = vshll.u32 %v4114, 16
      %v4441 = vrot.slane %v4439, 5
      %v4442 = vor.u32 %v4438, %v4441
      %v4443 = vrot.slane %v4442, 4
      %v4445 = vshll.u32 %v4115, 16
      %v4447 = vrot.slane %v4445, 5
      %v4448 = vsel %vm1082, %v4443, %v4447
      %v4449 = vshrl.u32 %v4115, 16
      %v4451 = vrot.slane %v4449, 4
      %v4452 = vor.u32 %v4451, %v4447
      %v4453 = vrot.slane %v4452, 4
      %v4455 = vshll.u32 %v4116, 16
      %v4457 = vrot.slane %v4455, 5
      %v4458 = vsel %vm1082, %v4453, %v4457
      %v4460 = vshrl.u32 %v4117, 16
      %v4462 = vrot.slane %v4460, 4
      %v4463 = vshll.u32 %v4117, 16
      %v4465 = vrot.slane %v4463, 5
      %v4466 = vor.u32 %v4462, %v4465
      %v4467 = vrot.slane %v4466, 4
      %v4469 = vshll.u32 %v4118, 16
      %v4471 = vrot.slane %v4469, 5
      %v4472 = vsel %vm1082, %v4467, %v4471
      %v4473 = vshrl.u32 %v4118, 16
      %v4475 = vrot.slane %v4473, 4
      %v4476 = vor.u32 %v4475, %v4471
      %v4477 = vrot.slane %v4476, 4
      %v4479 = vshll.u32 %v4119, 16
      %v4481 = vrot.slane %v4479, 5
      %v4482 = vsel %vm1082, %v4477, %v4481
      %v4484 = vshrl.u32 %v4120, 16
      %v4486 = vrot.slane %v4484, 4
      %v4487 = vshll.u32 %v4120, 16
      %v4489 = vrot.slane %v4487, 5
      %v4490 = vor.u32 %v4486, %v4489
      %v4491 = vrot.slane %v4490, 4
      %v4493 = vshll.u32 %v4121, 16
      %v4495 = vrot.slane %v4493, 5
      %v4496 = vsel %vm1082, %v4491, %v4495
      %v4497 = vshrl.u32 %v4121, 16
      %v4499 = vrot.slane %v4497, 4
      %v4500 = vor.u32 %v4499, %v4495
      %v4501 = vrot.slane %v4500, 4
      %v4503 = vshll.u32 %v4122, 16
      %v4505 = vrot.slane %v4503, 5
      %v4506 = vsel %vm1082, %v4501, %v4505
      %s4507 = scalar_lea.vmem %s3, 448
      %v4508 = vld [vmem:[%s4507] sm:$0xf]
      %v4509 = vld [vmem:[%s4507 + $0x4] sm:$0xf]
      %v4510 = vld [vmem:[%s4507 + $0x8] sm:$0xf]
      %v4511 = vld [vmem:[%s4507 + $0xc] sm:$0xf]
      %v4512 = vld [vmem:[%s4507 + $0x10] sm:$0xf]
      %v4513 = vld [vmem:[%s4507 + $0x14] sm:$0xf]
      %v4514 = vld [vmem:[%s4507 + $0x18] sm:$0xf]
      %v4515 = vld [vmem:[%s4507 + $0x1c] sm:$0xf]
      %v4516 = vld [vmem:[%s4507 + $0x20] sm:$0xf]
      %v4517 = vld [vmem:[%s4507 + $0x24] sm:$0xf]
      %v4518 = vld [vmem:[%s4507 + $0x28] sm:$0xf]
      %v4519 = vld [vmem:[%s4507 + $0x2c] sm:$0xf]
      %v4520 = vld [vmem:[%s4507 + $0x30] sm:$0xf]
      %v4521 = vld [vmem:[%s4507 + $0x34] sm:$0xf]
      %v4522 = vld [vmem:[%s4507 + $0x38] sm:$0xf]
      %v4523 = vld [vmem:[%s4507 + $0x3c] sm:$0xf]
      %v4524 = vunpack.c.l.b16 %v4136
      %v4525 = vunpack.c.l.b16 %v4146
      %v4526 = vunpack.c.l.b16 %v4160
      %v4527 = vunpack.c.l.b16 %v4170
      %v4528 = vunpack.c.l.b16 %v4184
      %v4529 = vunpack.c.l.b16 %v4194
      %v4530 = vunpack.c.l.b16 %v4208
      %v4531 = vunpack.c.l.b16 %v4218
      %v4532 = vunpack.c.l.b16 %v4232
      %v4533 = vunpack.c.l.b16 %v4242
      %v4534 = vunpack.c.l.b16 %v4256
      %v4535 = vunpack.c.l.b16 %v4266
      %v4536 = vunpack.c.l.b16 %v4280
      %v4537 = vunpack.c.l.b16 %v4290
      %v4538 = vunpack.c.l.b16 %v4304
      %v4539 = vunpack.c.l.b16 %v4314
      %v4540 = vunpack.c.l.b16 %v4328
      %v4541 = vunpack.c.l.b16 %v4338
      %v4542 = vunpack.c.l.b16 %v4352
      %v4543 = vunpack.c.l.b16 %v4362
      %v4544 = vunpack.c.l.b16 %v4376
      %v4545 = vunpack.c.l.b16 %v4386
      %v4546 = vunpack.c.l.b16 %v4400
      %v4547 = vunpack.c.l.b16 %v4410
      %v4548 = vunpack.c.l.b16 %v4424
      %v4549 = vunpack.c.l.b16 %v4434
      %v4550 = vunpack.c.l.b16 %v4448
      %v4551 = vunpack.c.l.b16 %v4458
      %v4552 = vunpack.c.l.b16 %v4472
      %v4553 = vunpack.c.l.b16 %v4482
      %v4554 = vunpack.c.l.b16 %v4496
      %v4555 = vunpack.c.l.b16 %v4506
      %v4556 = vpack.c.b16 %v4525, %v4524
      %v4557 = vpack.c.b16 %v4527, %v4526
      %v4558 = vpack.c.b16 %v4529, %v4528
      %v4559 = vpack.c.b16 %v4531, %v4530
      %v4560 = vpack.c.b16 %v4533, %v4532
      %v4561 = vpack.c.b16 %v4535, %v4534
      %v4562 = vpack.c.b16 %v4537, %v4536
      %v4563 = vpack.c.b16 %v4539, %v4538
      %v4564 = vpack.c.b16 %v4541, %v4540
      %v4565 = vpack.c.b16 %v4543, %v4542
      %v4566 = vpack.c.b16 %v4545, %v4544
      %v4567 = vpack.c.b16 %v4547, %v4546
      %v4568 = vpack.c.b16 %v4549, %v4548
      %v4569 = vpack.c.b16 %v4551, %v4550
      %v4570 = vpack.c.b16 %v4553, %v4552
      %v4571 = vpack.c.b16 %v4555, %v4554
      %v4604 = vunpack.c.l.b16 %v4508
      %v4605 = vunpack.c.l.b16 %v4509
      %v4606 = vunpack.c.l.b16 %v4510
      %v4607 = vunpack.c.l.b16 %v4511
      %v4608 = vunpack.c.l.b16 %v4512
      %v4609 = vunpack.c.l.b16 %v4513
      %v4610 = vunpack.c.l.b16 %v4514
      %v4611 = vunpack.c.l.b16 %v4515
      %v4612 = vunpack.c.l.b16 %v4516
      %v4613 = vunpack.c.l.b16 %v4517
      %v4614 = vunpack.c.l.b16 %v4518
      %v4615 = vunpack.c.l.b16 %v4519
      %v4616 = vunpack.c.l.b16 %v4520
      %v4617 = vunpack.c.l.b16 %v4521
      %v4618 = vunpack.c.l.b16 %v4522
      %v4619 = vunpack.c.l.b16 %v4523
      %v4620 = vpack.c.b16 %v4605, %v4604
      %v4621 = vpack.c.b16 %v4607, %v4606
      %v4622 = vpack.c.b16 %v4609, %v4608
      %v4623 = vpack.c.b16 %v4611, %v4610
      %v4624 = vpack.c.b16 %v4613, %v4612
      %v4625 = vpack.c.b16 %v4615, %v4614
      %v4626 = vpack.c.b16 %v4617, %v4616
      %v4627 = vpack.c.b16 %v4619, %v4618
      %4636 = vmatpush.bf16.msra.mxu0 %v4627
      %4637 = vmatpush.bf16.msra.mxu0 %v4626
      %4638 = vmatpush.bf16.msra.mxu0 %v4625
      %4639 = vmatpush.bf16.msra.mxu0 %v4624
      %4640 = vmatpush.bf16.msra.mxu0 %v4623
      %4641 = vmatpush.bf16.msra.mxu0 %v4622
      %4642 = vmatpush.bf16.msra.mxu0 %v4621
      %4643 = vmatpush.bf16.msra.mxu0 %v4620
      %4644 = vmatmul.bf16.gmra.mxu0 %v4556
      %v4645 = vpop.f32.mrf.mxu0
      %v4646 = vadd.f32 0.0, %v4645
      %v4647 = vpop.f32.mrf.mxu0
      %v4648 = vadd.f32 0.0, %v4647
      %4649 = vmatmul.bf16.gmra.mxu0 %v4557
      %v4650 = vpop.f32.mrf.mxu0
      %v4651 = vadd.f32 0.0, %v4650
      %v4652 = vpop.f32.mrf.mxu0
      %v4653 = vadd.f32 0.0, %v4652
      %4654 = vmatmul.bf16.gmra.mxu0 %v4558
      %v4655 = vpop.f32.mrf.mxu0
      %v4656 = vadd.f32 0.0, %v4655
      %v4657 = vpop.f32.mrf.mxu0
      %v4658 = vadd.f32 0.0, %v4657
      %4659 = vmatmul.bf16.gmra.mxu0 %v4559
      %v4660 = vpop.f32.mrf.mxu0
      %v4661 = vadd.f32 0.0, %v4660
      %v4662 = vpop.f32.mrf.mxu0
      %v4663 = vadd.f32 0.0, %v4662
      %4664 = vmatmul.bf16.gmra.mxu0 %v4560
      %v4665 = vpop.f32.mrf.mxu0
      %v4666 = vadd.f32 0.0, %v4665
      %v4667 = vpop.f32.mrf.mxu0
      %v4668 = vadd.f32 0.0, %v4667
      %4669 = vmatmul.bf16.gmra.mxu0 %v4561
      %v4670 = vpop.f32.mrf.mxu0
      %v4671 = vadd.f32 0.0, %v4670
      %v4672 = vpop.f32.mrf.mxu0
      %v4673 = vadd.f32 0.0, %v4672
      %4674 = vmatmul.bf16.gmra.mxu0 %v4562
      %v4675 = vpop.f32.mrf.mxu0
      %v4676 = vadd.f32 0.0, %v4675
      %v4677 = vpop.f32.mrf.mxu0
      %v4678 = vadd.f32 0.0, %v4677
      %4679 = vmatmul.bf16.gmra.mxu0 %v4563
      %v4680 = vpop.f32.mrf.mxu0
      %v4681 = vadd.f32 0.0, %v4680
      %v4682 = vpop.f32.mrf.mxu0
      %v4683 = vadd.f32 0.0, %v4682
      %4684 = vmatmul.bf16.gmra.mxu0 %v4564
      %v4685 = vpop.f32.mrf.mxu0
      %v4686 = vadd.f32 0.0, %v4685
      %v4687 = vpop.f32.mrf.mxu0
      %v4688 = vadd.f32 0.0, %v4687
      %4689 = vmatmul.bf16.gmra.mxu0 %v4565
      %v4690 = vpop.f32.mrf.mxu0
      %v4691 = vadd.f32 0.0, %v4690
      %v4692 = vpop.f32.mrf.mxu0
      %v4693 = vadd.f32 0.0, %v4692
      %4694 = vmatmul.bf16.gmra.mxu0 %v4566
      %v4695 = vpop.f32.mrf.mxu0
      %v4696 = vadd.f32 0.0, %v4695
      %v4697 = vpop.f32.mrf.mxu0
      %v4698 = vadd.f32 0.0, %v4697
      %4699 = vmatmul.bf16.gmra.mxu0 %v4567
      %v4700 = vpop.f32.mrf.mxu0
      %v4701 = vadd.f32 0.0, %v4700
      %v4702 = vpop.f32.mrf.mxu0
      %v4703 = vadd.f32 0.0, %v4702
      %4704 = vmatmul.bf16.gmra.mxu0 %v4568
      %v4705 = vpop.f32.mrf.mxu0
      %v4706 = vadd.f32 0.0, %v4705
      %v4707 = vpop.f32.mrf.mxu0
      %v4708 = vadd.f32 0.0, %v4707
      %4709 = vmatmul.bf16.gmra.mxu0 %v4569
      %v4710 = vpop.f32.mrf.mxu0
      %v4711 = vadd.f32 0.0, %v4710
      %v4712 = vpop.f32.mrf.mxu0
      %v4713 = vadd.f32 0.0, %v4712
      %4714 = vmatmul.bf16.gmra.mxu0 %v4570
      %v4715 = vpop.f32.mrf.mxu0
      %v4716 = vadd.f32 0.0, %v4715
      %v4717 = vpop.f32.mrf.mxu0
      %v4718 = vadd.f32 0.0, %v4717
      %4719 = vmatmul.bf16.gmra.mxu0 %v4571
      %v4720 = vpop.f32.mrf.mxu0
      %v4721 = vadd.f32 0.0, %v4720
      %v4722 = vpop.f32.mrf.mxu0
      %v4723 = vadd.f32 0.0, %v4722
      %4724 = vdwg.mxu0
      %v4725 = vadd.f32 %v4043, %v4646
      %v4726 = vadd.f32 %v4044, %v4648
      %v4727 = vadd.f32 %v4045, %v4651
      %v4728 = vadd.f32 %v4046, %v4653
      %v4729 = vadd.f32 %v4047, %v4656
      %v4730 = vadd.f32 %v4048, %v4658
      %v4731 = vadd.f32 %v4049, %v4661
      %v4732 = vadd.f32 %v4050, %v4663
      %v4733 = vadd.f32 %v4051, %v4666
      %v4734 = vadd.f32 %v4052, %v4668
      %v4735 = vadd.f32 %v4053, %v4671
      %v4736 = vadd.f32 %v4054, %v4673
      %v4737 = vadd.f32 %v4055, %v4676
      %v4738 = vadd.f32 %v4056, %v4678
      %v4739 = vadd.f32 %v4057, %v4681
      %v4740 = vadd.f32 %v4058, %v4683
      %v4741 = vadd.f32 %v4059, %v4686
      %v4742 = vadd.f32 %v4060, %v4688
      %v4743 = vadd.f32 %v4061, %v4691
      %v4744 = vadd.f32 %v4062, %v4693
      %v4745 = vadd.f32 %v4063, %v4696
      %v4746 = vadd.f32 %v4064, %v4698
      %v4747 = vadd.f32 %v4065, %v4701
      %v4748 = vadd.f32 %v4066, %v4703
      %v4749 = vadd.f32 %v4067, %v4706
      %v4750 = vadd.f32 %v4068, %v4708
      %v4751 = vadd.f32 %v4069, %v4711
      %v4752 = vadd.f32 %v4070, %v4713
      %v4753 = vadd.f32 %v4071, %v4716
      %v4754 = vadd.f32 %v4072, %v4718
      %v4755 = vadd.f32 %v4073, %v4721
      %v4756 = vadd.f32 %v4074, %v4723
      %v4757 = vld [vmem:[%s3760] sm:$0xe]
      %v4758 = vld [vmem:[%s3760 + $0xc] sm:$0xe]
      %v4759 = vld [vmem:[%s3760 + $0x18] sm:$0xe]
      %v4760 = vld [vmem:[%s3760 + $0x24] sm:$0xe]
      %v4761 = vld [vmem:[%s3760 + $0x30] sm:$0xe]
      %v4762 = vld [vmem:[%s3760 + $0x3c] sm:$0xe]
      %v4763 = vld [vmem:[%s3760 + $0x48] sm:$0xe]
      %v4764 = vld [vmem:[%s3760 + $0x54] sm:$0xe]
      %v4765 = vld [vmem:[%s3760 + $0x60] sm:$0xe]
      %v4766 = vld [vmem:[%s3760 + $0x6c] sm:$0xe]
      %v4767 = vld [vmem:[%s3760 + $0x78] sm:$0xe]
      %v4768 = vld [vmem:[%s3760 + $0x84] sm:$0xe]
      %v4769 = vld [vmem:[%s3760 + $0x90] sm:$0xe]
      %v4770 = vld [vmem:[%s3760 + $0x9c] sm:$0xe]
      %v4771 = vld [vmem:[%s3760 + $0xa8] sm:$0xe]
      %v4772 = vld [vmem:[%s3760 + $0xb4] sm:$0xe]
      %v4821 = vrot.slane %v4757, 5
      %v4822 = vrot.slane %v4821, 4
      %v4823 = vrot.slane %v4076, 5
      %v4824 = vsel %vm1968, %v4822, %v4823
      %v4825 = vrot.slane %v4823, 4
      %v4826 = vrot.slane %v4077, 5
      %v4827 = vsel %vm1968, %v4825, %v4826
      %v4828 = vrot.slane %v4758, 5
      %v4829 = vrot.slane %v4828, 4
      %v4830 = vrot.slane %v4079, 5
      %v4831 = vsel %vm1968, %v4829, %v4830
      %v4832 = vrot.slane %v4830, 4
      %v4833 = vrot.slane %v4080, 5
      %v4834 = vsel %vm1968, %v4832, %v4833
      %v4835 = vrot.slane %v4759, 5
      %v4836 = vrot.slane %v4835, 4
      %v4837 = vrot.slane %v4082, 5
      %v4838 = vsel %vm1968, %v4836, %v4837
      %v4839 = vrot.slane %v4837, 4
      %v4840 = vrot.slane %v4083, 5
      %v4841 = vsel %vm1968, %v4839, %v4840
      %v4842 = vrot.slane %v4760, 5
      %v4843 = vrot.slane %v4842, 4
      %v4844 = vrot.slane %v4085, 5
      %v4845 = vsel %vm1968, %v4843, %v4844
      %v4846 = vrot.slane %v4844, 4
      %v4847 = vrot.slane %v4086, 5
      %v4848 = vsel %vm1968, %v4846, %v4847
      %v4849 = vrot.slane %v4761, 5
      %v4850 = vrot.slane %v4849, 4
      %v4851 = vrot.slane %v4088, 5
      %v4852 = vsel %vm1968, %v4850, %v4851
      %v4853 = vrot.slane %v4851, 4
      %v4854 = vrot.slane %v4089, 5
      %v4855 = vsel %vm1968, %v4853, %v4854
      %v4856 = vrot.slane %v4762, 5
      %v4857 = vrot.slane %v4856, 4
      %v4858 = vrot.slane %v4091, 5
      %v4859 = vsel %vm1968, %v4857, %v4858
      %v4860 = vrot.slane %v4858, 4
      %v4861 = vrot.slane %v4092, 5
      %v4862 = vsel %vm1968, %v4860, %v4861
      %v4863 = vrot.slane %v4763, 5
      %v4864 = vrot.slane %v4863, 4
      %v4865 = vrot.slane %v4094, 5
      %v4866 = vsel %vm1968, %v4864, %v4865
      %v4867 = vrot.slane %v4865, 4
      %v4868 = vrot.slane %v4095, 5
      %v4869 = vsel %vm1968, %v4867, %v4868
      %v4870 = vrot.slane %v4764, 5
      %v4871 = vrot.slane %v4870, 4
      %v4872 = vrot.slane %v4097, 5
      %v4873 = vsel %vm1968, %v4871, %v4872
      %v4874 = vrot.slane %v4872, 4
      %v4875 = vrot.slane %v4098, 5
      %v4876 = vsel %vm1968, %v4874, %v4875
      %v4877 = vrot.slane %v4765, 5
      %v4878 = vrot.slane %v4877, 4
      %v4879 = vrot.slane %v4100, 5
      %v4880 = vsel %vm1968, %v4878, %v4879
      %v4881 = vrot.slane %v4879, 4
      %v4882 = vrot.slane %v4101, 5
      %v4883 = vsel %vm1968, %v4881, %v4882
      %v4884 = vrot.slane %v4766, 5
      %v4885 = vrot.slane %v4884, 4
      %v4886 = vrot.slane %v4103, 5
      %v4887 = vsel %vm1968, %v4885, %v4886
      %v4888 = vrot.slane %v4886, 4
      %v4889 = vrot.slane %v4104, 5
      %v4890 = vsel %vm1968, %v4888, %v4889
      %v4891 = vrot.slane %v4767, 5
      %v4892 = vrot.slane %v4891, 4
      %v4893 = vrot.slane %v4106, 5
      %v4894 = vsel %vm1968, %v4892, %v4893
      %v4895 = vrot.slane %v4893, 4
      %v4896 = vrot.slane %v4107, 5
      %v4897 = vsel %vm1968, %v4895, %v4896
      %v4898 = vrot.slane %v4768, 5
      %v4899 = vrot.slane %v4898, 4
      %v4900 = vrot.slane %v4109, 5
      %v4901 = vsel %vm1968, %v4899, %v4900
      %v4902 = vrot.slane %v4900, 4
      %v4903 = vrot.slane %v4110, 5
      %v4904 = vsel %vm1968, %v4902, %v4903
      %v4905 = vrot.slane %v4769, 5
      %v4906 = vrot.slane %v4905, 4
      %v4907 = vrot.slane %v4112, 5
      %v4908 = vsel %vm1968, %v4906, %v4907
      %v4909 = vrot.slane %v4907, 4
      %v4910 = vrot.slane %v4113, 5
      %v4911 = vsel %vm1968, %v4909, %v4910
      %v4912 = vrot.slane %v4770, 5
      %v4913 = vrot.slane %v4912, 4
      %v4914 = vrot.slane %v4115, 5
      %v4915 = vsel %vm1968, %v4913, %v4914
      %v4916 = vrot.slane %v4914, 4
      %v4917 = vrot.slane %v4116, 5
      %v4918 = vsel %vm1968, %v4916, %v4917
      %v4919 = vrot.slane %v4771, 5
      %v4920 = vrot.slane %v4919, 4
      %v4921 = vrot.slane %v4118, 5
      %v4922 = vsel %vm1968, %v4920, %v4921
      %v4923 = vrot.slane %v4921, 4
      %v4924 = vrot.slane %v4119, 5
      %v4925 = vsel %vm1968, %v4923, %v4924
      %v4926 = vrot.slane %v4772, 5
      %v4927 = vrot.slane %v4926, 4
      %v4928 = vrot.slane %v4121, 5
      %v4929 = vsel %vm1968, %v4927, %v4928
      %v4930 = vrot.slane %v4928, 4
      %v4931 = vrot.slane %v4122, 5
      %v4932 = vsel %vm1968, %v4930, %v4931
      %s4933 = scalar_lea.vmem %s3, 512
      %v4934 = vld [vmem:[%s4933] sm:$0xf]
      %v4935 = vld [vmem:[%s4933 + $0x4] sm:$0xf]
      %v4936 = vld [vmem:[%s4933 + $0x8] sm:$0xf]
      %v4937 = vld [vmem:[%s4933 + $0xc] sm:$0xf]
      %v4938 = vld [vmem:[%s4933 + $0x10] sm:$0xf]
      %v4939 = vld [vmem:[%s4933 + $0x14] sm:$0xf]
      %v4940 = vld [vmem:[%s4933 + $0x18] sm:$0xf]
      %v4941 = vld [vmem:[%s4933 + $0x1c] sm:$0xf]
      %v4942 = vld [vmem:[%s4933 + $0x20] sm:$0xf]
      %v4943 = vld [vmem:[%s4933 + $0x24] sm:$0xf]
      %v4944 = vld [vmem:[%s4933 + $0x28] sm:$0xf]
      %v4945 = vld [vmem:[%s4933 + $0x2c] sm:$0xf]
      %v4946 = vld [vmem:[%s4933 + $0x30] sm:$0xf]
      %v4947 = vld [vmem:[%s4933 + $0x34] sm:$0xf]
      %v4948 = vld [vmem:[%s4933 + $0x38] sm:$0xf]
      %v4949 = vld [vmem:[%s4933 + $0x3c] sm:$0xf]
      %v4950 = vunpack.c.l.b16 %v4824
      %v4951 = vunpack.c.l.b16 %v4827
      %v4952 = vunpack.c.l.b16 %v4831
      %v4953 = vunpack.c.l.b16 %v4834
      %v4954 = vunpack.c.l.b16 %v4838
      %v4955 = vunpack.c.l.b16 %v4841
      %v4956 = vunpack.c.l.b16 %v4845
      %v4957 = vunpack.c.l.b16 %v4848
      %v4958 = vunpack.c.l.b16 %v4852
      %v4959 = vunpack.c.l.b16 %v4855
      %v4960 = vunpack.c.l.b16 %v4859
      %v4961 = vunpack.c.l.b16 %v4862
      %v4962 = vunpack.c.l.b16 %v4866
      %v4963 = vunpack.c.l.b16 %v4869
      %v4964 = vunpack.c.l.b16 %v4873
      %v4965 = vunpack.c.l.b16 %v4876
      %v4966 = vunpack.c.l.b16 %v4880
      %v4967 = vunpack.c.l.b16 %v4883
      %v4968 = vunpack.c.l.b16 %v4887
      %v4969 = vunpack.c.l.b16 %v4890
      %v4970 = vunpack.c.l.b16 %v4894
      %v4971 = vunpack.c.l.b16 %v4897
      %v4972 = vunpack.c.l.b16 %v4901
      %v4973 = vunpack.c.l.b16 %v4904
      %v4974 = vunpack.c.l.b16 %v4908
      %v4975 = vunpack.c.l.b16 %v4911
      %v4976 = vunpack.c.l.b16 %v4915
      %v4977 = vunpack.c.l.b16 %v4918
      %v4978 = vunpack.c.l.b16 %v4922
      %v4979 = vunpack.c.l.b16 %v4925
      %v4980 = vunpack.c.l.b16 %v4929
      %v4981 = vunpack.c.l.b16 %v4932
      %v4982 = vpack.c.b16 %v4951, %v4950
      %v4983 = vpack.c.b16 %v4953, %v4952
      %v4984 = vpack.c.b16 %v4955, %v4954
      %v4985 = vpack.c.b16 %v4957, %v4956
      %v4986 = vpack.c.b16 %v4959, %v4958
      %v4987 = vpack.c.b16 %v4961, %v4960
      %v4988 = vpack.c.b16 %v4963, %v4962
      %v4989 = vpack.c.b16 %v4965, %v4964
      %v4990 = vpack.c.b16 %v4967, %v4966
      %v4991 = vpack.c.b16 %v4969, %v4968
      %v4992 = vpack.c.b16 %v4971, %v4970
      %v4993 = vpack.c.b16 %v4973, %v4972
      %v4994 = vpack.c.b16 %v4975, %v4974
      %v4995 = vpack.c.b16 %v4977, %v4976
      %v4996 = vpack.c.b16 %v4979, %v4978
      %v4997 = vpack.c.b16 %v4981, %v4980
      %v5030 = vunpack.c.l.b16 %v4934
      %v5031 = vunpack.c.l.b16 %v4935
      %v5032 = vunpack.c.l.b16 %v4936
      %v5033 = vunpack.c.l.b16 %v4937
      %v5034 = vunpack.c.l.b16 %v4938
      %v5035 = vunpack.c.l.b16 %v4939
      %v5036 = vunpack.c.l.b16 %v4940
      %v5037 = vunpack.c.l.b16 %v4941
      %v5038 = vunpack.c.l.b16 %v4942
      %v5039 = vunpack.c.l.b16 %v4943
      %v5040 = vunpack.c.l.b16 %v4944
      %v5041 = vunpack.c.l.b16 %v4945
      %v5042 = vunpack.c.l.b16 %v4946
      %v5043 = vunpack.c.l.b16 %v4947
      %v5044 = vunpack.c.l.b16 %v4948
      %v5045 = vunpack.c.l.b16 %v4949
      %v5046 = vpack.c.b16 %v5031, %v5030
      %v5047 = vpack.c.b16 %v5033, %v5032
      %v5048 = vpack.c.b16 %v5035, %v5034
      %v5049 = vpack.c.b16 %v5037, %v5036
      %v5050 = vpack.c.b16 %v5039, %v5038
      %v5051 = vpack.c.b16 %v5041, %v5040
      %v5052 = vpack.c.b16 %v5043, %v5042
      %v5053 = vpack.c.b16 %v5045, %v5044
      %5062 = vmatpush.bf16.msra.mxu0 %v5053
      %5063 = vmatpush.bf16.msra.mxu0 %v5052
      %5064 = vmatpush.bf16.msra.mxu0 %v5051
      %5065 = vmatpush.bf16.msra.mxu0 %v5050
      %5066 = vmatpush.bf16.msra.mxu0 %v5049
      %5067 = vmatpush.bf16.msra.mxu0 %v5048
      %5068 = vmatpush.bf16.msra.mxu0 %v5047
      %5069 = vmatpush.bf16.msra.mxu0 %v5046
      %5070 = vmatmul.bf16.gmra.mxu0 %v4982
      %v5071 = vpop.f32.mrf.mxu0
      %v5072 = vadd.f32 0.0, %v5071
      %v5073 = vpop.f32.mrf.mxu0
      %v5074 = vadd.f32 0.0, %v5073
      %5075 = vmatmul.bf16.gmra.mxu0 %v4983
      %v5076 = vpop.f32.mrf.mxu0
      %v5077 = vadd.f32 0.0, %v5076
      %v5078 = vpop.f32.mrf.mxu0
      %v5079 = vadd.f32 0.0, %v5078
      %5080 = vmatmul.bf16.gmra.mxu0 %v4984
      %v5081 = vpop.f32.mrf.mxu0
      %v5082 = vadd.f32 0.0, %v5081
      %v5083 = vpop.f32.mrf.mxu0
      %v5084 = vadd.f32 0.0, %v5083
      %5085 = vmatmul.bf16.gmra.mxu0 %v4985
      %v5086 = vpop.f32.mrf.mxu0
      %v5087 = vadd.f32 0.0, %v5086
      %v5088 = vpop.f32.mrf.mxu0
      %v5089 = vadd.f32 0.0, %v5088
      %5090 = vmatmul.bf16.gmra.mxu0 %v4986
      %v5091 = vpop.f32.mrf.mxu0
      %v5092 = vadd.f32 0.0, %v5091
      %v5093 = vpop.f32.mrf.mxu0
      %v5094 = vadd.f32 0.0, %v5093
      %5095 = vmatmul.bf16.gmra.mxu0 %v4987
      %v5096 = vpop.f32.mrf.mxu0
      %v5097 = vadd.f32 0.0, %v5096
      %v5098 = vpop.f32.mrf.mxu0
      %v5099 = vadd.f32 0.0, %v5098
      %5100 = vmatmul.bf16.gmra.mxu0 %v4988
      %v5101 = vpop.f32.mrf.mxu0
      %v5102 = vadd.f32 0.0, %v5101
      %v5103 = vpop.f32.mrf.mxu0
      %v5104 = vadd.f32 0.0, %v5103
      %5105 = vmatmul.bf16.gmra.mxu0 %v4989
      %v5106 = vpop.f32.mrf.mxu0
      %v5107 = vadd.f32 0.0, %v5106
      %v5108 = vpop.f32.mrf.mxu0
      %v5109 = vadd.f32 0.0, %v5108
      %5110 = vmatmul.bf16.gmra.mxu0 %v4990
      %v5111 = vpop.f32.mrf.mxu0
      %v5112 = vadd.f32 0.0, %v5111
      %v5113 = vpop.f32.mrf.mxu0
      %v5114 = vadd.f32 0.0, %v5113
      %5115 = vmatmul.bf16.gmra.mxu0 %v4991
      %v5116 = vpop.f32.mrf.mxu0
      %v5117 = vadd.f32 0.0, %v5116
      %v5118 = vpop.f32.mrf.mxu0
      %v5119 = vadd.f32 0.0, %v5118
      %5120 = vmatmul.bf16.gmra.mxu0 %v4992
      %v5121 = vpop.f32.mrf.mxu0
      %v5122 = vadd.f32 0.0, %v5121
      %v5123 = vpop.f32.mrf.mxu0
      %v5124 = vadd.f32 0.0, %v5123
      %5125 = vmatmul.bf16.gmra.mxu0 %v4993
      %v5126 = vpop.f32.mrf.mxu0
      %v5127 = vadd.f32 0.0, %v5126
      %v5128 = vpop.f32.mrf.mxu0
      %v5129 = vadd.f32 0.0, %v5128
      %5130 = vmatmul.bf16.gmra.mxu0 %v4994
      %v5131 = vpop.f32.mrf.mxu0
      %v5132 = vadd.f32 0.0, %v5131
      %v5133 = vpop.f32.mrf.mxu0
      %v5134 = vadd.f32 0.0, %v5133
      %5135 = vmatmul.bf16.gmra.mxu0 %v4995
      %v5136 = vpop.f32.mrf.mxu0
      %v5137 = vadd.f32 0.0, %v5136
      %v5138 = vpop.f32.mrf.mxu0
      %v5139 = vadd.f32 0.0, %v5138
      %5140 = vmatmul.bf16.gmra.mxu0 %v4996
      %v5141 = vpop.f32.mrf.mxu0
      %v5142 = vadd.f32 0.0, %v5141
      %v5143 = vpop.f32.mrf.mxu0
      %v5144 = vadd.f32 0.0, %v5143
      %5145 = vmatmul.bf16.gmra.mxu0 %v4997
      %v5146 = vpop.f32.mrf.mxu0
      %v5147 = vadd.f32 0.0, %v5146
      %v5148 = vpop.f32.mrf.mxu0
      %v5149 = vadd.f32 0.0, %v5148
      %5150 = vdwg.mxu0
      %v5151 = vadd.f32 %v4725, %v5072
      %v5152 = vadd.f32 %v4726, %v5074
      %v5153 = vadd.f32 %v4727, %v5077
      %v5154 = vadd.f32 %v4728, %v5079
      %v5155 = vadd.f32 %v4729, %v5082
      %v5156 = vadd.f32 %v4730, %v5084
      %v5157 = vadd.f32 %v4731, %v5087
      %v5158 = vadd.f32 %v4732, %v5089
      %v5159 = vadd.f32 %v4733, %v5092
      %v5160 = vadd.f32 %v4734, %v5094
      %v5161 = vadd.f32 %v4735, %v5097
      %v5162 = vadd.f32 %v4736, %v5099
      %v5163 = vadd.f32 %v4737, %v5102
      %v5164 = vadd.f32 %v4738, %v5104
      %v5165 = vadd.f32 %v4739, %v5107
      %v5166 = vadd.f32 %v4740, %v5109
      %v5167 = vadd.f32 %v4741, %v5112
      %v5168 = vadd.f32 %v4742, %v5114
      %v5169 = vadd.f32 %v4743, %v5117
      %v5170 = vadd.f32 %v4744, %v5119
      %v5171 = vadd.f32 %v4745, %v5122
      %v5172 = vadd.f32 %v4746, %v5124
      %v5173 = vadd.f32 %v4747, %v5127
      %v5174 = vadd.f32 %v4748, %v5129
      %v5175 = vadd.f32 %v4749, %v5132
      %v5176 = vadd.f32 %v4750, %v5134
      %v5177 = vadd.f32 %v4751, %v5137
      %v5178 = vadd.f32 %v4752, %v5139
      %v5179 = vadd.f32 %v4753, %v5142
      %v5180 = vadd.f32 %v4754, %v5144
      %v5181 = vadd.f32 %v4755, %v5147
      %v5182 = vadd.f32 %v4756, %v5149
      %v5183 = vpack.c.bf16 %v5151, %v5151
      %v5184 = vpack.c.bf16 %v5152, %v5152
      %v5185 = vpack.c.bf16 %v5153, %v5153
      %v5186 = vpack.c.bf16 %v5154, %v5154
      %v5187 = vpack.c.bf16 %v5155, %v5155
      %v5188 = vpack.c.bf16 %v5156, %v5156
      %v5189 = vpack.c.bf16 %v5157, %v5157
      %v5190 = vpack.c.bf16 %v5158, %v5158
      %v5191 = vpack.c.bf16 %v5159, %v5159
      %v5192 = vpack.c.bf16 %v5160, %v5160
      %v5193 = vpack.c.bf16 %v5161, %v5161
      %v5194 = vpack.c.bf16 %v5162, %v5162
      %v5195 = vpack.c.bf16 %v5163, %v5163
      %v5196 = vpack.c.bf16 %v5164, %v5164
      %v5197 = vpack.c.bf16 %v5165, %v5165
      %v5198 = vpack.c.bf16 %v5166, %v5166
      %v5199 = vpack.c.bf16 %v5167, %v5167
      %v5200 = vpack.c.bf16 %v5168, %v5168
      %v5201 = vpack.c.bf16 %v5169, %v5169
      %v5202 = vpack.c.bf16 %v5170, %v5170
      %v5203 = vpack.c.bf16 %v5171, %v5171
      %v5204 = vpack.c.bf16 %v5172, %v5172
      %v5205 = vpack.c.bf16 %v5173, %v5173
      %v5206 = vpack.c.bf16 %v5174, %v5174
      %v5207 = vpack.c.bf16 %v5175, %v5175
      %v5208 = vpack.c.bf16 %v5176, %v5176
      %v5209 = vpack.c.bf16 %v5177, %v5177
      %v5210 = vpack.c.bf16 %v5178, %v5178
      %v5211 = vpack.c.bf16 %v5179, %v5179
      %v5212 = vpack.c.bf16 %v5180, %v5180
      %v5213 = vpack.c.bf16 %v5181, %v5181
      %v5214 = vpack.c.bf16 %v5182, %v5182
      %5215 = vst [vmem:[%s255] sm:$0xf] %v5183
      %5216 = vst [vmem:[%s255 + $0x4] sm:$0xf] %v5184
      %5217 = vst [vmem:[%s255 + $0x8] sm:$0xf] %v5185
      %5218 = vst [vmem:[%s255 + $0xc] sm:$0xf] %v5186
      %5219 = vst [vmem:[%s255 + $0x10] sm:$0xf] %v5187
      %5220 = vst [vmem:[%s255 + $0x14] sm:$0xf] %v5188
      %5221 = vst [vmem:[%s255 + $0x18] sm:$0xf] %v5189
      %5222 = vst [vmem:[%s255 + $0x1c] sm:$0xf] %v5190
      %5223 = vst [vmem:[%s255 + $0x20] sm:$0xf] %v5191
      %5224 = vst [vmem:[%s255 + $0x24] sm:$0xf] %v5192
      %5225 = vst [vmem:[%s255 + $0x28] sm:$0xf] %v5193
      %5226 = vst [vmem:[%s255 + $0x2c] sm:$0xf] %v5194
      %5227 = vst [vmem:[%s255 + $0x30] sm:$0xf] %v5195
      %5228 = vst [vmem:[%s255 + $0x34] sm:$0xf] %v5196
      %5229 = vst [vmem:[%s255 + $0x38] sm:$0xf] %v5197
      %5230 = vst [vmem:[%s255 + $0x3c] sm:$0xf] %v5198
      %5231 = vst [vmem:[%s255 + $0x40] sm:$0xf] %v5199
      %5232 = vst [vmem:[%s255 + $0x44] sm:$0xf] %v5200
      %5233 = vst [vmem:[%s255 + $0x48] sm:$0xf] %v5201
      %5234 = vst [vmem:[%s255 + $0x4c] sm:$0xf] %v5202
      %5235 = vst [vmem:[%s255 + $0x50] sm:$0xf] %v5203
      %5236 = vst [vmem:[%s255 + $0x54] sm:$0xf] %v5204
      %5237 = vst [vmem:[%s255 + $0x58] sm:$0xf] %v5205
      %5238 = vst [vmem:[%s255 + $0x5c] sm:$0xf] %v5206
      %5239 = vst [vmem:[%s255 + $0x60] sm:$0xf] %v5207
      %5240 = vst [vmem:[%s255 + $0x64] sm:$0xf] %v5208
      %5241 = vst [vmem:[%s255 + $0x68] sm:$0xf] %v5209
      %5242 = vst [vmem:[%s255 + $0x6c] sm:$0xf] %v5210
      %5243 = vst [vmem:[%s255 + $0x70] sm:$0xf] %v5211
      %5244 = vst [vmem:[%s255 + $0x74] sm:$0xf] %v5212
      %5245 = vst [vmem:[%s255 + $0x78] sm:$0xf] %v5213
      %5246 = vst [vmem:[%s255 + $0x7c] sm:$0xf] %v5214
      %v5247 = vld [vmem:[%s260] sm:$0x1]
      %v5248 = vadd.f32 %v5151, %v5152
      %v5249 = vadd.f32 %v5248, %v5153
      %v5250 = vadd.f32 %v5249, %v5154
      %v5251 = vadd.f32 %v5250, %v5155
      %v5252 = vadd.f32 %v5251, %v5156
      %v5253 = vadd.f32 %v5252, %v5157
      %v5254 = vadd.f32 %v5253, %v5158
      %v5255 = vadd.f32 %v5254, %v5159
      %v5256 = vadd.f32 %v5255, %v5160
      %v5257 = vadd.f32 %v5256, %v5161
      %v5258 = vadd.f32 %v5257, %v5162
      %v5259 = vadd.f32 %v5258, %v5163
      %v5260 = vadd.f32 %v5259, %v5164
      %v5261 = vadd.f32 %v5260, %v5165
      %v5262 = vadd.f32 %v5261, %v5166
      %v5263 = vadd.f32 %v5262, %v5167
      %v5264 = vadd.f32 %v5263, %v5168
      %v5265 = vadd.f32 %v5264, %v5169
      %v5266 = vadd.f32 %v5265, %v5170
      %v5267 = vadd.f32 %v5266, %v5171
      %v5268 = vadd.f32 %v5267, %v5172
      %v5269 = vadd.f32 %v5268, %v5173
      %v5270 = vadd.f32 %v5269, %v5174
      %v5271 = vadd.f32 %v5270, %v5175
      %v5272 = vadd.f32 %v5271, %v5176
      %v5273 = vadd.f32 %v5272, %v5177
      %v5274 = vadd.f32 %v5273, %v5178
      %v5275 = vadd.f32 %v5274, %v5179
      %v5276 = vadd.f32 %v5275, %v5180
      %v5277 = vadd.f32 %v5276, %v5181
      %v5278 = vadd.f32 %v5277, %v5182
      %v5279 = vrot.slane %v5278, 4
      %v5280 = vadd.f32 %v5278, %v5279
      %v5281 = vrot.slane %v5280, 2
      %v5282 = vadd.f32 %v5280, %v5281
      %v5283 = vrot.slane %v5282, 1
      %v5284 = vadd.f32 %v5282, %v5283
      %v5285 = vadd.f32 %v5247, %v5284
      %5286 = vst [vmem:[%s260] sm:$0x1] %v5285
      %v5287 = vld [vmem:[%s260 + $0x1] sm:$0x1]
      %v5288 = vmul.f32 %v5151, %v5151
      %v5289 = vmul.f32 %v5152, %v5152
      %v5290 = vmul.f32 %v5153, %v5153
      %v5291 = vmul.f32 %v5154, %v5154
      %v5292 = vmul.f32 %v5155, %v5155
      %v5293 = vmul.f32 %v5156, %v5156
      %v5294 = vmul.f32 %v5157, %v5157
      %v5295 = vmul.f32 %v5158, %v5158
      %v5296 = vmul.f32 %v5159, %v5159
      %v5297 = vmul.f32 %v5160, %v5160
      %v5298 = vmul.f32 %v5161, %v5161
      %v5299 = vmul.f32 %v5162, %v5162
      %v5300 = vmul.f32 %v5163, %v5163
      %v5301 = vmul.f32 %v5164, %v5164
      %v5302 = vmul.f32 %v5165, %v5165
      %v5303 = vmul.f32 %v5166, %v5166
      %v5304 = vmul.f32 %v5167, %v5167
      %v5305 = vmul.f32 %v5168, %v5168
      %v5306 = vmul.f32 %v5169, %v5169
      %v5307 = vmul.f32 %v5170, %v5170
      %v5308 = vmul.f32 %v5171, %v5171
      %v5309 = vmul.f32 %v5172, %v5172
      %v5310 = vmul.f32 %v5173, %v5173
      %v5311 = vmul.f32 %v5174, %v5174
      %v5312 = vmul.f32 %v5175, %v5175
      %v5313 = vmul.f32 %v5176, %v5176
      %v5314 = vmul.f32 %v5177, %v5177
      %v5315 = vmul.f32 %v5178, %v5178
      %v5316 = vmul.f32 %v5179, %v5179
      %v5317 = vmul.f32 %v5180, %v5180
      %v5318 = vmul.f32 %v5181, %v5181
      %v5319 = vmul.f32 %v5182, %v5182
      %v5320 = vadd.f32 %v5288, %v5289
      %v5321 = vadd.f32 %v5320, %v5290
      %v5322 = vadd.f32 %v5321, %v5291
      %v5323 = vadd.f32 %v5322, %v5292
      %v5324 = vadd.f32 %v5323, %v5293
      %v5325 = vadd.f32 %v5324, %v5294
      %v5326 = vadd.f32 %v5325, %v5295
      %v5327 = vadd.f32 %v5326, %v5296
      %v5328 = vadd.f32 %v5327, %v5297
      %v5329 = vadd.f32 %v5328, %v5298
      %v5330 = vadd.f32 %v5329, %v5299
      %v5331 = vadd.f32 %v5330, %v5300
      %v5332 = vadd.f32 %v5331, %v5301
      %v5333 = vadd.f32 %v5332, %v5302
      %v5334 = vadd.f32 %v5333, %v5303
      %v5335 = vadd.f32 %v5334, %v5304
      %v5336 = vadd.f32 %v5335, %v5305
      %v5337 = vadd.f32 %v5336, %v5306
      %v5338 = vadd.f32 %v5337, %v5307
      %v5339 = vadd.f32 %v5338, %v5308
      %v5340 = vadd.f32 %v5339, %v5309
      %v5341 = vadd.f32 %v5340, %v5310
      %v5342 = vadd.f32 %v5341, %v5311
      %v5343 = vadd.f32 %v5342, %v5312
      %v5344 = vadd.f32 %v5343, %v5313
      %v5345 = vadd.f32 %v5344, %v5314
      %v5346 = vadd.f32 %v5345, %v5315
      %v5347 = vadd.f32 %v5346, %v5316
      %v5348 = vadd.f32 %v5347, %v5317
      %v5349 = vadd.f32 %v5348, %v5318
      %v5350 = vadd.f32 %v5349, %v5319
      %v5351 = vrot.slane %v5350, 4
      %v5352 = vadd.f32 %v5350, %v5351
      %v5353 = vrot.slane %v5352, 2
      %v5354 = vadd.f32 %v5352, %v5353
      %v5355 = vrot.slane %v5354, 1
      %v5356 = vadd.f32 %v5354, %v5355
      %v5357 = vadd.f32 %v5287, %v5356
      %5358 = vst [vmem:[%s260 + $0x1] sm:$0x1] %v5357
      %s5359 = smul.u32 16, %s22
      %p5360 = scmp.lt.s32.totalorder %s21, 1
      %s5361 = scalar_select %p5360, %s21, 1
      %p5362 = scmp.lt.s32.totalorder %s5359, 15
      %s5363 = scalar_select %p5362, %s5359, 15
      %s5364 = smul.addr %s5363, 2
      %s5365 = smul.addr %s5361, 32
      %s5366 = sadd.s32 %s5364, %s5365
      %s5367 = smul.addr %s5366, 4
      %s5368 = scalar_lea.vmem %s4, %s5367
      %p5369 = scmp.lt.s32.totalorder %s21, 1
      %s5370 = scalar_select %p5369, %s21, 1
      %s5371 = smul.addr %s5370, 2
      %s5372 = scalar_lea.vmem %s5, %s5371
      // Predicated region
      $region41: #{tripple_conv.5} parent=35 // pred_check
        %p5373 = pneg %p138
      $region42: #{tripple_conv.5} parent=35 // pred_check_branch
        %5375 = sbr.rel (%p5373) target = $region44
      $region43: #{tripple_conv.5} parent=35 // pred_region
        %s5376 = smul.u32 16, %s22
      $region44: #{tripple_conv.5} parent=35 // pred_fallthru
        _
      // Predicated region
      $region45: #{tripple_conv.5} parent=35 // pred_check
        %p5377 = pneg %p164
      $region46: #{tripple_conv.5} parent=35 // pred_check_branch
        %5379 = sbr.rel (%p5377) target = $region48
      $region47: #{tripple_conv.5} parent=35 // pred_region
        _
      $region48: #{tripple_conv.5} parent=35 // pred_fallthru
        _
    $region36: #{tripple_conv.5} parent=5 // pred_fallthru
      _
    %p5380 = scmp.le.s32.totalorder 2, %s12
    // Predicated region
    $region49: #{tripple_conv.5} parent=5 // pred_check
      %p5381 = pneg %p5380
    $region50: #{tripple_conv.5} parent=5 // pred_check_branch
      %5383 = sbr.rel (%p5381) target = $region52
    $region51: #{tripple_conv.5} parent=5 // pred_region
      %s5384 = ssub.s32 %s12, 2
      // Predicated region
      $region53: #{tripple_conv.5} parent=51 // pred_check
        %p5385 = pneg %p144
      $region54: #{tripple_conv.5} parent=51 // pred_check_branch
        %5387 = sbr.rel (%p5385) target = $region56
      $region55: #{tripple_conv.5} parent=51 // pred_region
        %s5388 = smul.u32 16, %s24
        %p5389 = scmp.lt.s32.totalorder %s23, 1
        %s5390 = scalar_select %p5389, %s23, 1
        %p5391 = scmp.lt.s32.totalorder %s5388, 15
        %s5392 = scalar_select %p5391, %s5388, 15
        %s5393 = smul.addr %s5392, 2
        %s5394 = smul.addr %s5390, 32
        %s5395 = sadd.s32 %s5393, %s5394
        %s5396 = smul.addr %s5395, 4
        %s5397 = scalar_lea.vmem %s4, %s5396
      $region56: #{tripple_conv.5} parent=51 // pred_fallthru
        _
      // Predicated region
      $region57: #{tripple_conv.5} parent=51 // pred_check
        %p5398 = pneg %p170
      $region58: #{tripple_conv.5} parent=51 // pred_check_branch
        %5400 = sbr.rel (%p5398) target = $region60
      $region59: #{tripple_conv.5} parent=51 // pred_region
        %p5401 = scmp.lt.s32.totalorder %s23, 1
        %s5402 = scalar_select %p5401, %s23, 1
        %s5403 = smul.addr %s5402, 2
        %s5404 = scalar_lea.vmem %s5, %s5403
      $region60: #{tripple_conv.5} parent=51 // pred_fallthru
        _
    $region52: #{tripple_conv.5} parent=5 // pred_fallthru
      _
  $region6: #{tripple_conv.5} parent=0 // loop_footer
    %s16 = sadd.s32 1, %s12
  $region7: #{tripple_conv.5} parent=0 // loop_footer_branch
    %11 = sbr.rel target = $region3
  $region8: #{tripple_conv.5} parent=0 // loop_exit
    _

</llo_original>
